<compile_context>
chip_gen: v6e
topology: v6e:2x2x1
jax: 0.10.0
libtpu: 0.0.40
codegen_flags: <defaults>
</compile_context>

<pallas_src>
import functools

import numpy as np
import jax
import jax.numpy as jnp
from jax import lax
from jax.experimental import pallas as pl
from jax.experimental.pallas import tpu as pltpu


def _fused_kernel(x_ref, m_ref, g1_ref, b1_ref, w_ref, g2_ref, b2_ref, o_ref,
                  *, hw, w_stride, eps):
    hwp = x_ref.shape[1]
    inv_n = 1.0 / float(hw)

    x = x_ref[...]                      # (C, HWp) f32
    wl = m_ref[0:1, :]                  # (1, HWp)  (h, w-1) tap stays in-row
    wr = m_ref[1:2, :]                  # (1, HWp)  (h, w+1) tap stays in-row
    valid = m_ref[2:3, :]               # (1, HWp)  real (non-padding) position

    # ---- BatchNorm #1 (training-mode batch stats) + ReLU, folded to scale/shift ----
    s1 = jnp.sum(x, axis=1, keepdims=True)          # (C, 1)
    q1 = jnp.sum(x * x, axis=1, keepdims=True)      # (C, 1)
    mean1 = s1 * inv_n
    var1 = q1 * inv_n - mean1 * mean1               # biased variance
    scale1 = g1_ref[...] * lax.rsqrt(var1 + eps)
    shift1 = b1_ref[...] - mean1 * scale1
    xh = jnp.maximum(x * scale1 + shift1, 0.0) * valid   # zero the padded tail rows

    # ---- Depthwise 3x3, stride 1, pad 1: lane rolls + boundary masks ----
    # Column-shifted taps (dj = -1 / +1); row shifts are rolls by +-W. Because the
    # padded tail of xh / u_l / u_r is zero, the +-W rolls automatically supply the
    # top/bottom zero padding (no extra row masks needed).
    wts = [w_ref[k] for k in range(9)]              # nine (C, 1) per-channel weights
    u_l = pltpu.roll(xh, 1, axis=1) * wl            # reads column w-1
    u_r = pltpu.roll(xh, hwp - 1, axis=1) * wr      # reads column w+1
    dn = hwp - w_stride                             # roll amount that reads row h+1

    acc = u_l * wts[3] + xh * wts[4] + u_r * wts[5]           # (h, w-1/w/w+1)
    acc = acc + pltpu.roll(u_l, w_stride, axis=1) * wts[0]    # (h-1, w-1)
    acc = acc + pltpu.roll(xh, w_stride, axis=1) * wts[1]     # (h-1, w)
    acc = acc + pltpu.roll(u_r, w_stride, axis=1) * wts[2]    # (h-1, w+1)
    acc = acc + pltpu.roll(u_l, dn, axis=1) * wts[6]          # (h+1, w-1)
    acc = acc + pltpu.roll(xh, dn, axis=1) * wts[7]           # (h+1, w)
    acc = acc + pltpu.roll(u_r, dn, axis=1) * wts[8]          # (h+1, w+1)
    acc = acc * valid                                         # drop garbage in pad tail

    # ---- BatchNorm #2 (training-mode batch stats on conv output) + ReLU ----
    s2 = jnp.sum(acc, axis=1, keepdims=True)
    q2 = jnp.sum(acc * acc, axis=1, keepdims=True)
    mean2 = s2 * inv_n
    var2 = q2 * inv_n - mean2 * mean2
    scale2 = g2_ref[...] * lax.rsqrt(var2 + eps)
    shift2 = b2_ref[...] - mean2 * scale2
    y = jnp.maximum(acc * scale2 + shift2, 0.0)

    o_ref[...] = y[:, :hw].astype(o_ref.dtype)


def bn_relu_dwconv_bn_relu(x_nchw, gamma1, beta1, w_dw, gamma2, beta2, eps=1e-5):
    """x_nchw: (1, C, H, W) f32; w_dw: (C, 1, 3, 3) depthwise weights."""
    N, C, H, W = x_nchw.shape
    assert N == 1, "kernel specialized for batch size 1 (as in the PyTorch trace)"
    HW = H * W
    HWp = ((HW + 127) // 128) * 128

    # NCHW (N=1) -> (C, H*W): pure reshape (no transpose). Pad spatial axis to a
    # lane-aligned width so the kernel only sees full 128-lane groups.
    x_flat = x_nchw.reshape(C, HW).astype(jnp.float32)
    x_pad = jnp.pad(x_flat, ((0, 0), (0, HWp - HW)))

    g1 = gamma1.reshape(C, 1).astype(jnp.float32)
    b1 = beta1.reshape(C, 1).astype(jnp.float32)
    g2 = gamma2.reshape(C, 1).astype(jnp.float32)
    b2 = beta2.reshape(C, 1).astype(jnp.float32)
    # (C,1,3,3) -> (9, C, 1): w9[k] is the per-channel weight of kernel tap (k//3, k%3)
    w9 = jnp.transpose(w_dw.reshape(C, 9), (1, 0)).reshape(9, C, 1).astype(jnp.float32)

    # Static boundary masks over the flattened (padded) spatial axis, built host-side.
    pos = np.arange(HWp)
    col = pos % W
    inside = pos < HW
    masks = jnp.asarray(np.stack([
        (col >= 1) & inside,          # left-neighbor tap (w-1) valid
        (col <= W - 2) & inside,      # right-neighbor tap (w+1) valid
        inside,                       # real image position
    ]).astype(np.float32))            # (3, HWp)

    out_flat = pl.pallas_call(
        functools.partial(_fused_kernel, hw=HW, w_stride=W, eps=eps),
        out_shape=jax.ShapeDtypeStruct((C, HW), jnp.float32),
        in_specs=[pl.BlockSpec(memory_space=pltpu.MemorySpace.VMEM)] * 7,
        out_specs=pl.BlockSpec(memory_space=pltpu.MemorySpace.VMEM),
    )(x_pad, masks, g1, b1, w9, g2, b2)

    return out_flat.reshape(1, C, H, W)


def _reference(x, g1, b1, w, g2, b2, eps=1e-5):
    """Pure-JAX reference matching the PyTorch forward (training-mode BN)."""
    def bn(z, g, b):
        m = jnp.mean(z, axis=(0, 2, 3), keepdims=True)
        v = jnp.mean((z - m) ** 2, axis=(0, 2, 3), keepdims=True)
        return (z - m) * lax.rsqrt(v + eps) * g.reshape(1, -1, 1, 1) + b.reshape(1, -1, 1, 1)

    z = jax.nn.relu(bn(x, g1, b1))
    z = lax.conv_general_dilated(
        z, w, window_strides=(1, 1), padding=((1, 1), (1, 1)),
        feature_group_count=x.shape[1],
        dimension_numbers=("NCHW", "OIHW", "NCHW"),
    )
    return jax.nn.relu(bn(z, g2, b2))


if __name__ == "__main__":
    # Shapes from the PyTorch module: x59 = randn(1, 120, 28, 28)
    C, H, W = 120, 28, 28

    key = jax.random.PRNGKey(0)
    k = jax.random.split(key, 6)
    x = jax.random.normal(k[0], (1, C, H, W), jnp.float32)
    gamma1 = 1.0 + 0.1 * jax.random.normal(k[1], (C,), jnp.float32)
    beta1 = 0.1 * jax.random.normal(k[2], (C,), jnp.float32)
    w_dw = 0.1 * jax.random.normal(k[3], (C, 1, 3, 3), jnp.float32)
    gamma2 = 1.0 + 0.1 * jax.random.normal(k[4], (C,), jnp.float32)
    beta2 = 0.1 * jax.random.normal(k[5], (C,), jnp.float32)

    out = bn_relu_dwconv_bn_relu(x, gamma1, beta1, w_dw, gamma2, beta2)
    out = jax.block_until_ready(out)

    ref = jax.block_until_ready(_reference(x, gamma1, beta1, w_dw, gamma2, beta2))
    assert out.shape == (1, C, H, W)
    assert jnp.allclose(out, ref, atol=1e-4, rtol=1e-4), float(jnp.max(jnp.abs(out - ref)))

    print("KERNEL_OK")
</pallas_src>

<mosaic_0001>
module attributes {stable_mosaic.version = 11 : i64} {
  func.func @_fused_kernel(%arg0: memref<120x896xf32, #tpu.memory_space<vmem>>, %arg1: memref<3x896xf32, #tpu.memory_space<vmem>>, %arg2: memref<120x1xf32, #tpu.memory_space<vmem>>, %arg3: memref<120x1xf32, #tpu.memory_space<vmem>>, %arg4: memref<9x120x1xf32, #tpu.memory_space<vmem>>, %arg5: memref<120x1xf32, #tpu.memory_space<vmem>>, %arg6: memref<120x1xf32, #tpu.memory_space<vmem>>, %arg7: memref<120x784xf32, #tpu.memory_space<vmem>>) attributes {dimension_semantics = [], scalar_prefetch = 0 : i64, scratch_operands = 0 : i64, tpu.core_type = #tpu.core_type<tc>} {
    %c0 = arith.constant 0 : index
    %c0_0 = arith.constant 0 : index
    %0 = vector.load %arg0[%c0, %c0_0] : memref<120x896xf32, #tpu.memory_space<vmem>>, vector<120x896xf32>
    %c0_1 = arith.constant 0 : index
    %c0_2 = arith.constant 0 : index
    %1 = vector.load %arg1[%c0_1, %c0_2] : memref<3x896xf32, #tpu.memory_space<vmem>>, vector<1x896xf32>
    %c1 = arith.constant 1 : index
    %c0_3 = arith.constant 0 : index
    %2 = vector.load %arg1[%c1, %c0_3] : memref<3x896xf32, #tpu.memory_space<vmem>>, vector<1x896xf32>
    %c2 = arith.constant 2 : index
    %c0_4 = arith.constant 0 : index
    %3 = vector.load %arg1[%c2, %c0_4] : memref<3x896xf32, #tpu.memory_space<vmem>>, vector<1x896xf32>
    %cst = arith.constant dense<0.000000e+00> : vector<120xf32>
    %4 = vector.multi_reduction <add>, %0, %cst [1] : vector<120x896xf32> to vector<120xf32>
    %5 = vector.shape_cast %4 : vector<120xf32> to vector<120x1xf32>
    %6 = arith.mulf %0, %0 : vector<120x896xf32>
    %cst_5 = arith.constant dense<0.000000e+00> : vector<120xf32>
    %7 = vector.multi_reduction <add>, %6, %cst_5 [1] : vector<120x896xf32> to vector<120xf32>
    %8 = vector.shape_cast %7 : vector<120xf32> to vector<120x1xf32>
    %cst_6 = arith.constant 0.00127551018 : f32
    %9 = vector.broadcast %cst_6 : f32 to vector<120x1xf32>
    %10 = arith.mulf %5, %9 : vector<120x1xf32>
    %cst_7 = arith.constant 0.00127551018 : f32
    %11 = vector.broadcast %cst_7 : f32 to vector<120x1xf32>
    %12 = arith.mulf %8, %11 : vector<120x1xf32>
    %13 = arith.mulf %10, %10 : vector<120x1xf32>
    %14 = arith.subf %12, %13 : vector<120x1xf32>
    %c0_8 = arith.constant 0 : index
    %c0_9 = arith.constant 0 : index
    %15 = vector.load %arg2[%c0_8, %c0_9] : memref<120x1xf32, #tpu.memory_space<vmem>>, vector<120x1xf32>
    %cst_10 = arith.constant 9.99999974E-6 : f32
    %16 = vector.broadcast %cst_10 : f32 to vector<120x1xf32>
    %17 = arith.addf %14, %16 : vector<120x1xf32>
    %18 = math.rsqrt %17 : vector<120x1xf32>
    %19 = arith.mulf %15, %18 : vector<120x1xf32>
    %c0_11 = arith.constant 0 : index
    %c0_12 = arith.constant 0 : index
    %20 = vector.load %arg3[%c0_11, %c0_12] : memref<120x1xf32, #tpu.memory_space<vmem>>, vector<120x1xf32>
    %21 = arith.mulf %10, %19 : vector<120x1xf32>
    %22 = arith.subf %20, %21 : vector<120x1xf32>
    %23 = vector.broadcast %19 : vector<120x1xf32> to vector<120x896xf32>
    %24 = arith.mulf %0, %23 : vector<120x896xf32>
    %25 = vector.broadcast %22 : vector<120x1xf32> to vector<120x896xf32>
    %26 = arith.addf %24, %25 : vector<120x896xf32>
    %cst_13 = arith.constant 0.000000e+00 : f32
    %27 = vector.broadcast %cst_13 : f32 to vector<120x896xf32>
    %28 = arith.maximumf %26, %27 : vector<120x896xf32>
    %29 = vector.broadcast %3 : vector<1x896xf32> to vector<120x896xf32>
    %30 = arith.mulf %28, %29 : vector<120x896xf32>
    %c0_14 = arith.constant 0 : index
    %c0_15 = arith.constant 0 : index
    %c0_16 = arith.constant 0 : index
    %31 = vector.load %arg4[%c0_14, %c0_15, %c0_16] : memref<9x120x1xf32, #tpu.memory_space<vmem>>, vector<1x120x1xf32>
    %32 = vector.shape_cast %31 : vector<1x120x1xf32> to vector<120x1xf32>
    %c1_17 = arith.constant 1 : index
    %c0_18 = arith.constant 0 : index
    %c0_19 = arith.constant 0 : index
    %33 = vector.load %arg4[%c1_17, %c0_18, %c0_19] : memref<9x120x1xf32, #tpu.memory_space<vmem>>, vector<1x120x1xf32>
    %34 = vector.shape_cast %33 : vector<1x120x1xf32> to vector<120x1xf32>
    %c2_20 = arith.constant 2 : index
    %c0_21 = arith.constant 0 : index
    %c0_22 = arith.constant 0 : index
    %35 = vector.load %arg4[%c2_20, %c0_21, %c0_22] : memref<9x120x1xf32, #tpu.memory_space<vmem>>, vector<1x120x1xf32>
    %36 = vector.shape_cast %35 : vector<1x120x1xf32> to vector<120x1xf32>
    %c3 = arith.constant 3 : index
    %c0_23 = arith.constant 0 : index
    %c0_24 = arith.constant 0 : index
    %37 = vector.load %arg4[%c3, %c0_23, %c0_24] : memref<9x120x1xf32, #tpu.memory_space<vmem>>, vector<1x120x1xf32>
    %38 = vector.shape_cast %37 : vector<1x120x1xf32> to vector<120x1xf32>
    %c4 = arith.constant 4 : index
    %c0_25 = arith.constant 0 : index
    %c0_26 = arith.constant 0 : index
    %39 = vector.load %arg4[%c4, %c0_25, %c0_26] : memref<9x120x1xf32, #tpu.memory_space<vmem>>, vector<1x120x1xf32>
    %40 = vector.shape_cast %39 : vector<1x120x1xf32> to vector<120x1xf32>
    %c5 = arith.constant 5 : index
    %c0_27 = arith.constant 0 : index
    %c0_28 = arith.constant 0 : index
    %41 = vector.load %arg4[%c5, %c0_27, %c0_28] : memref<9x120x1xf32, #tpu.memory_space<vmem>>, vector<1x120x1xf32>
    %42 = vector.shape_cast %41 : vector<1x120x1xf32> to vector<120x1xf32>
    %c6 = arith.constant 6 : index
    %c0_29 = arith.constant 0 : index
    %c0_30 = arith.constant 0 : index
    %43 = vector.load %arg4[%c6, %c0_29, %c0_30] : memref<9x120x1xf32, #tpu.memory_space<vmem>>, vector<1x120x1xf32>
    %44 = vector.shape_cast %43 : vector<1x120x1xf32> to vector<120x1xf32>
    %c7 = arith.constant 7 : index
    %c0_31 = arith.constant 0 : index
    %c0_32 = arith.constant 0 : index
    %45 = vector.load %arg4[%c7, %c0_31, %c0_32] : memref<9x120x1xf32, #tpu.memory_space<vmem>>, vector<1x120x1xf32>
    %46 = vector.shape_cast %45 : vector<1x120x1xf32> to vector<120x1xf32>
    %c8 = arith.constant 8 : index
    %c0_33 = arith.constant 0 : index
    %c0_34 = arith.constant 0 : index
    %47 = vector.load %arg4[%c8, %c0_33, %c0_34] : memref<9x120x1xf32, #tpu.memory_space<vmem>>, vector<1x120x1xf32>
    %48 = vector.shape_cast %47 : vector<1x120x1xf32> to vector<120x1xf32>
    %c1_i32 = arith.constant 1 : i32
    %49 = tpu.dynamic_rotate %30 by %c1_i32 dim 1 : vector<120x896xf32>, i32 -> vector<120x896xf32>
    %50 = vector.broadcast %1 : vector<1x896xf32> to vector<120x896xf32>
    %51 = arith.mulf %49, %50 : vector<120x896xf32>
    %c895_i32 = arith.constant 895 : i32
    %52 = tpu.dynamic_rotate %30 by %c895_i32 dim 1 : vector<120x896xf32>, i32 -> vector<120x896xf32>
    %53 = vector.broadcast %2 : vector<1x896xf32> to vector<120x896xf32>
    %54 = arith.mulf %52, %53 : vector<120x896xf32>
    %55 = vector.broadcast %38 : vector<120x1xf32> to vector<120x896xf32>
    %56 = arith.mulf %51, %55 : vector<120x896xf32>
    %57 = vector.broadcast %40 : vector<120x1xf32> to vector<120x896xf32>
    %58 = arith.mulf %30, %57 : vector<120x896xf32>
    %59 = arith.addf %56, %58 : vector<120x896xf32>
    %60 = vector.broadcast %42 : vector<120x1xf32> to vector<120x896xf32>
    %61 = arith.mulf %54, %60 : vector<120x896xf32>
    %62 = arith.addf %59, %61 : vector<120x896xf32>
    %c28_i32 = arith.constant 28 : i32
    %63 = tpu.dynamic_rotate %51 by %c28_i32 dim 1 : vector<120x896xf32>, i32 -> vector<120x896xf32>
    %64 = vector.broadcast %32 : vector<120x1xf32> to vector<120x896xf32>
    %65 = arith.mulf %63, %64 : vector<120x896xf32>
    %66 = arith.addf %62, %65 : vector<120x896xf32>
    %c28_i32_35 = arith.constant 28 : i32
    %67 = tpu.dynamic_rotate %30 by %c28_i32_35 dim 1 : vector<120x896xf32>, i32 -> vector<120x896xf32>
    %68 = vector.broadcast %34 : vector<120x1xf32> to vector<120x896xf32>
    %69 = arith.mulf %67, %68 : vector<120x896xf32>
    %70 = arith.addf %66, %69 : vector<120x896xf32>
    %c28_i32_36 = arith.constant 28 : i32
    %71 = tpu.dynamic_rotate %54 by %c28_i32_36 dim 1 : vector<120x896xf32>, i32 -> vector<120x896xf32>
    %72 = vector.broadcast %36 : vector<120x1xf32> to vector<120x896xf32>
    %73 = arith.mulf %71, %72 : vector<120x896xf32>
    %74 = arith.addf %70, %73 : vector<120x896xf32>
    %c868_i32 = arith.constant 868 : i32
    %75 = tpu.dynamic_rotate %51 by %c868_i32 dim 1 : vector<120x896xf32>, i32 -> vector<120x896xf32>
    %76 = vector.broadcast %44 : vector<120x1xf32> to vector<120x896xf32>
    %77 = arith.mulf %75, %76 : vector<120x896xf32>
    %78 = arith.addf %74, %77 : vector<120x896xf32>
    %c868_i32_37 = arith.constant 868 : i32
    %79 = tpu.dynamic_rotate %30 by %c868_i32_37 dim 1 : vector<120x896xf32>, i32 -> vector<120x896xf32>
    %80 = vector.broadcast %46 : vector<120x1xf32> to vector<120x896xf32>
    %81 = arith.mulf %79, %80 : vector<120x896xf32>
    %82 = arith.addf %78, %81 : vector<120x896xf32>
    %c868_i32_38 = arith.constant 868 : i32
    %83 = tpu.dynamic_rotate %54 by %c868_i32_38 dim 1 : vector<120x896xf32>, i32 -> vector<120x896xf32>
    %84 = vector.broadcast %48 : vector<120x1xf32> to vector<120x896xf32>
    %85 = arith.mulf %83, %84 : vector<120x896xf32>
    %86 = arith.addf %82, %85 : vector<120x896xf32>
    %87 = vector.broadcast %3 : vector<1x896xf32> to vector<120x896xf32>
    %88 = arith.mulf %86, %87 : vector<120x896xf32>
    %cst_39 = arith.constant dense<0.000000e+00> : vector<120xf32>
    %89 = vector.multi_reduction <add>, %88, %cst_39 [1] : vector<120x896xf32> to vector<120xf32>
    %90 = vector.shape_cast %89 : vector<120xf32> to vector<120x1xf32>
    %91 = arith.mulf %88, %88 : vector<120x896xf32>
    %cst_40 = arith.constant dense<0.000000e+00> : vector<120xf32>
    %92 = vector.multi_reduction <add>, %91, %cst_40 [1] : vector<120x896xf32> to vector<120xf32>
    %93 = vector.shape_cast %92 : vector<120xf32> to vector<120x1xf32>
    %cst_41 = arith.constant 0.00127551018 : f32
    %94 = vector.broadcast %cst_41 : f32 to vector<120x1xf32>
    %95 = arith.mulf %90, %94 : vector<120x1xf32>
    %cst_42 = arith.constant 0.00127551018 : f32
    %96 = vector.broadcast %cst_42 : f32 to vector<120x1xf32>
    %97 = arith.mulf %93, %96 : vector<120x1xf32>
    %98 = arith.mulf %95, %95 : vector<120x1xf32>
    %99 = arith.subf %97, %98 : vector<120x1xf32>
    %c0_43 = arith.constant 0 : index
    %c0_44 = arith.constant 0 : index
    %100 = vector.load %arg5[%c0_43, %c0_44] : memref<120x1xf32, #tpu.memory_space<vmem>>, vector<120x1xf32>
    %cst_45 = arith.constant 9.99999974E-6 : f32
    %101 = vector.broadcast %cst_45 : f32 to vector<120x1xf32>
    %102 = arith.addf %99, %101 : vector<120x1xf32>
    %103 = math.rsqrt %102 : vector<120x1xf32>
    %104 = arith.mulf %100, %103 : vector<120x1xf32>
    %c0_46 = arith.constant 0 : index
    %c0_47 = arith.constant 0 : index
    %105 = vector.load %arg6[%c0_46, %c0_47] : memref<120x1xf32, #tpu.memory_space<vmem>>, vector<120x1xf32>
    %106 = arith.mulf %95, %104 : vector<120x1xf32>
    %107 = arith.subf %105, %106 : vector<120x1xf32>
    %108 = vector.broadcast %104 : vector<120x1xf32> to vector<120x896xf32>
    %109 = arith.mulf %88, %108 : vector<120x896xf32>
    %110 = vector.broadcast %107 : vector<120x1xf32> to vector<120x896xf32>
    %111 = arith.addf %109, %110 : vector<120x896xf32>
    %cst_48 = arith.constant 0.000000e+00 : f32
    %112 = vector.broadcast %cst_48 : f32 to vector<120x896xf32>
    %113 = arith.maximumf %111, %112 : vector<120x896xf32>
    %114 = vector.extract_strided_slice %113 {offsets = [0, 0], sizes = [120, 784], strides = [1, 1]} : vector<120x896xf32> to vector<120x784xf32>
    %c0_49 = arith.constant 0 : index
    %c0_50 = arith.constant 0 : index
    %115 = vector.load %arg7[%c0_49, %c0_50] : memref<120x784xf32, #tpu.memory_space<vmem>>, vector<120x784xf32>
    tpu.vector_store %arg7[%c0_49, %c0_50], %114 {strides = array<i32>} : memref<120x784xf32, #tpu.memory_space<vmem>>, vector<120x784xf32>,
    return
  }
}

</mosaic_0001>

<llo_original>
// kernel: tpu_custom_call.1
$region0: #{tpu_custom_call.1}
  #allocation0 [shape = 'u32[]', space=smem, size = 0x4, offset = 0x4, fixed_abs, tag = 'smem constant byte address 0x4 - core index']
  #allocation1 [shape = 'u32[144,128]{1,0:T(1,128)}', space=vmem, size = 0x12000, scoped, tag = 'internal scratch']
  %s0 = inlined_call_operand.vmem [shape: f32[120,896], index: 0, kind: input, shape index: {}]
  %s1 = inlined_call_operand.vmem [shape: f32[3,896], index: 1, kind: input, shape index: {}]
  %s2 = inlined_call_operand.vmem [shape: f32[120,1], index: 2, kind: input, shape index: {}]
  %s3 = inlined_call_operand.vmem [shape: f32[120,1], index: 3, kind: input, shape index: {}]
  %s4 = inlined_call_operand.vmem [shape: f32[9,120,1], index: 4, kind: input, shape index: {}]
  %s5 = inlined_call_operand.vmem [shape: f32[120,1], index: 5, kind: input, shape index: {}]
  %s6 = inlined_call_operand.vmem [shape: f32[120,1], index: 6, kind: input, shape index: {}]
  %s7 = inlined_call_operand.vmem [shape: f32[120,784], index: 7, kind: output, shape index: {}]
  %s8 = sld [smem:[#allocation0]]
  $region38: #{tpu_custom_call.1} parent=0
    _
  %s10 = ssub.s32 1, %s8
  %s11 = scalar_select 0, %s10, %s8
  // Predicated region
  $region2: #{tpu_custom_call.1} parent=0 // pred_check
    _
  $region3: #{tpu_custom_call.1} parent=0 // pred_check_branch
    %13 = sbr.rel (0) target = $region5
  $region4: #{tpu_custom_call.1} parent=0 // pred_region
    _
  $region5: #{tpu_custom_call.1} parent=0 // pred_fallthru
    _
  // Predicated region
  $region6: #{tpu_custom_call.1} parent=0 // pred_check
    _
  $region7: #{tpu_custom_call.1} parent=0 // pred_check_branch
    %15 = sbr.rel (0) target = $region9
  $region8: #{tpu_custom_call.1} parent=0 // pred_region
    _
  $region9: #{tpu_custom_call.1} parent=0 // pred_fallthru
    _
  // Predicated region
  $region10: #{tpu_custom_call.1} parent=0 // pred_check
    _
  $region11: #{tpu_custom_call.1} parent=0 // pred_check_branch
    %17 = sbr.rel (0) target = $region13
  $region12: #{tpu_custom_call.1} parent=0 // pred_region
    _
  $region13: #{tpu_custom_call.1} parent=0 // pred_fallthru
    _
  // Predicated region
  $region14: #{tpu_custom_call.1} parent=0 // pred_check
    _
  $region15: #{tpu_custom_call.1} parent=0 // pred_check_branch
    %19 = sbr.rel (0) target = $region17
  $region16: #{tpu_custom_call.1} parent=0 // pred_region
    _
  $region17: #{tpu_custom_call.1} parent=0 // pred_fallthru
    _
  // Predicated region
  $region18: #{tpu_custom_call.1} parent=0 // pred_check
    _
  $region19: #{tpu_custom_call.1} parent=0 // pred_check_branch
    %21 = sbr.rel (0) target = $region21
  $region20: #{tpu_custom_call.1} parent=0 // pred_region
    _
  $region21: #{tpu_custom_call.1} parent=0 // pred_fallthru
    _
  // Predicated region
  $region22: #{tpu_custom_call.1} parent=0 // pred_check
    _
  $region23: #{tpu_custom_call.1} parent=0 // pred_check_branch
    %23 = sbr.rel (0) target = $region25
  $region24: #{tpu_custom_call.1} parent=0 // pred_region
    _
  $region25: #{tpu_custom_call.1} parent=0 // pred_fallthru
    _
  // Predicated region
  $region26: #{tpu_custom_call.1} parent=0 // pred_check
    _
  $region27: #{tpu_custom_call.1} parent=0 // pred_check_branch
    %25 = sbr.rel (0) target = $region29
  $region28: #{tpu_custom_call.1} parent=0 // pred_region
    _
  $region29: #{tpu_custom_call.1} parent=0 // pred_fallthru
    _
  %v26 = vld [vmem:[%s0] sm:$0xff]
  %v27 = vld [vmem:[%s0 + $0x8] sm:$0xff]
  %v28 = vld [vmem:[%s0 + $0x10] sm:$0xff]
  %v29 = vld [vmem:[%s0 + $0x18] sm:$0xff]
  %v30 = vld [vmem:[%s0 + $0x20] sm:$0xff]
  %v31 = vld [vmem:[%s0 + $0x28] sm:$0xff]
  %v32 = vld [vmem:[%s0 + $0x30] sm:$0xff]
  %v33 = vld [vmem:[%s0 + $0x38] sm:$0xff]
  %v34 = vld [vmem:[%s0 + $0x40] sm:$0xff]
  %v35 = vld [vmem:[%s0 + $0x48] sm:$0xff]
  %v36 = vld [vmem:[%s0 + $0x50] sm:$0xff]
  %v37 = vld [vmem:[%s0 + $0x58] sm:$0xff]
  %v38 = vld [vmem:[%s0 + $0x60] sm:$0xff]
  %v39 = vld [vmem:[%s0 + $0x68] sm:$0xff]
  %v40 = vld [vmem:[%s0 + $0x70] sm:$0xff]
  %v41 = vld [vmem:[%s0 + $0x78] sm:$0xff]
  %v42 = vld [vmem:[%s0 + $0x80] sm:$0xff]
  %v43 = vld [vmem:[%s0 + $0x88] sm:$0xff]
  %v44 = vld [vmem:[%s0 + $0x90] sm:$0xff]
  %v45 = vld [vmem:[%s0 + $0x98] sm:$0xff]
  %v46 = vld [vmem:[%s0 + $0xa0] sm:$0xff]
  %v47 = vld [vmem:[%s0 + $0xa8] sm:$0xff]
  %v48 = vld [vmem:[%s0 + $0xb0] sm:$0xff]
  %v49 = vld [vmem:[%s0 + $0xb8] sm:$0xff]
  %v50 = vld [vmem:[%s0 + $0xc0] sm:$0xff]
  %v51 = vld [vmem:[%s0 + $0xc8] sm:$0xff]
  %v52 = vld [vmem:[%s0 + $0xd0] sm:$0xff]
  %v53 = vld [vmem:[%s0 + $0xd8] sm:$0xff]
  %v54 = vld [vmem:[%s0 + $0xe0] sm:$0xff]
  %v55 = vld [vmem:[%s0 + $0xe8] sm:$0xff]
  %v56 = vld [vmem:[%s0 + $0xf0] sm:$0xff]
  %v57 = vld [vmem:[%s0 + $0xf8] sm:$0xff]
  %v58 = vld [vmem:[%s0 + $0x100] sm:$0xff]
  %v59 = vld [vmem:[%s0 + $0x108] sm:$0xff]
  %v60 = vld [vmem:[%s0 + $0x110] sm:$0xff]
  %v61 = vld [vmem:[%s0 + $0x118] sm:$0xff]
  %v62 = vld [vmem:[%s0 + $0x120] sm:$0xff]
  %v63 = vld [vmem:[%s0 + $0x128] sm:$0xff]
  %v64 = vld [vmem:[%s0 + $0x130] sm:$0xff]
  %v65 = vld [vmem:[%s0 + $0x138] sm:$0xff]
  %v66 = vld [vmem:[%s0 + $0x140] sm:$0xff]
  %v67 = vld [vmem:[%s0 + $0x148] sm:$0xff]
  %v68 = vld [vmem:[%s0 + $0x150] sm:$0xff]
  %v69 = vld [vmem:[%s0 + $0x158] sm:$0xff]
  %v70 = vld [vmem:[%s0 + $0x160] sm:$0xff]
  %v71 = vld [vmem:[%s0 + $0x168] sm:$0xff]
  %v72 = vld [vmem:[%s0 + $0x170] sm:$0xff]
  %v73 = vld [vmem:[%s0 + $0x178] sm:$0xff]
  %v74 = vld [vmem:[%s0 + $0x180] sm:$0xff]
  %v75 = vld [vmem:[%s0 + $0x188] sm:$0xff]
  %v76 = vld [vmem:[%s0 + $0x190] sm:$0xff]
  %v77 = vld [vmem:[%s0 + $0x198] sm:$0xff]
  %v78 = vld [vmem:[%s0 + $0x1a0] sm:$0xff]
  %v79 = vld [vmem:[%s0 + $0x1a8] sm:$0xff]
  %v80 = vld [vmem:[%s0 + $0x1b0] sm:$0xff]
  %v81 = vld [vmem:[%s0 + $0x1b8] sm:$0xff]
  %v82 = vld [vmem:[%s0 + $0x1c0] sm:$0xff]
  %v83 = vld [vmem:[%s0 + $0x1c8] sm:$0xff]
  %v84 = vld [vmem:[%s0 + $0x1d0] sm:$0xff]
  %v85 = vld [vmem:[%s0 + $0x1d8] sm:$0xff]
  %v86 = vld [vmem:[%s0 + $0x1e0] sm:$0xff]
  %v87 = vld [vmem:[%s0 + $0x1e8] sm:$0xff]
  %v88 = vld [vmem:[%s0 + $0x1f0] sm:$0xff]
  %v89 = vld [vmem:[%s0 + $0x1f8] sm:$0xff]
  %v90 = vld [vmem:[%s0 + $0x200] sm:$0xff]
  %v91 = vld [vmem:[%s0 + $0x208] sm:$0xff]
  %v92 = vld [vmem:[%s0 + $0x210] sm:$0xff]
  %v93 = vld [vmem:[%s0 + $0x218] sm:$0xff]
  %v94 = vld [vmem:[%s0 + $0x220] sm:$0xff]
  %v95 = vld [vmem:[%s0 + $0x228] sm:$0xff]
  %v96 = vld [vmem:[%s0 + $0x230] sm:$0xff]
  %v97 = vld [vmem:[%s0 + $0x238] sm:$0xff]
  %v98 = vld [vmem:[%s0 + $0x240] sm:$0xff]
  %v99 = vld [vmem:[%s0 + $0x248] sm:$0xff]
  %v100 = vld [vmem:[%s0 + $0x250] sm:$0xff]
  %v101 = vld [vmem:[%s0 + $0x258] sm:$0xff]
  %v102 = vld [vmem:[%s0 + $0x260] sm:$0xff]
  %v103 = vld [vmem:[%s0 + $0x268] sm:$0xff]
  %v104 = vld [vmem:[%s0 + $0x270] sm:$0xff]
  %v105 = vld [vmem:[%s0 + $0x278] sm:$0xff]
  %v106 = vld [vmem:[%s0 + $0x280] sm:$0xff]
  %v107 = vld [vmem:[%s0 + $0x288] sm:$0xff]
  %v108 = vld [vmem:[%s0 + $0x290] sm:$0xff]
  %v109 = vld [vmem:[%s0 + $0x298] sm:$0xff]
  %v110 = vld [vmem:[%s0 + $0x2a0] sm:$0xff]
  %v111 = vld [vmem:[%s0 + $0x2a8] sm:$0xff]
  %v112 = vld [vmem:[%s0 + $0x2b0] sm:$0xff]
  %v113 = vld [vmem:[%s0 + $0x2b8] sm:$0xff]
  %v114 = vld [vmem:[%s0 + $0x2c0] sm:$0xff]
  %v115 = vld [vmem:[%s0 + $0x2c8] sm:$0xff]
  %v116 = vld [vmem:[%s0 + $0x2d0] sm:$0xff]
  %v117 = vld [vmem:[%s0 + $0x2d8] sm:$0xff]
  %v118 = vld [vmem:[%s0 + $0x2e0] sm:$0xff]
  %v119 = vld [vmem:[%s0 + $0x2e8] sm:$0xff]
  %v120 = vld [vmem:[%s0 + $0x2f0] sm:$0xff]
  %v121 = vld [vmem:[%s0 + $0x2f8] sm:$0xff]
  %v122 = vld [vmem:[%s0 + $0x300] sm:$0xff]
  %v123 = vld [vmem:[%s0 + $0x308] sm:$0xff]
  %v124 = vld [vmem:[%s0 + $0x310] sm:$0xff]
  %v125 = vld [vmem:[%s0 + $0x318] sm:$0xff]
  %v126 = vld [vmem:[%s0 + $0x320] sm:$0xff]
  %v127 = vld [vmem:[%s0 + $0x328] sm:$0xff]
  %v128 = vld [vmem:[%s0 + $0x330] sm:$0xff]
  %v129 = vld [vmem:[%s0 + $0x338] sm:$0xff]
  %v130 = vld [vmem:[%s0 + $0x340] sm:$0xff]
  %v131 = vld [vmem:[%s1] ss:$4 sm:$0xff]
  %s132 = scalar_lea.vmem %s1, 1
  %v133 = vld [vmem:[%s132] ss:$4 sm:$0xff]
  %s134 = scalar_lea.vmem %s1, 2
  %v135 = vld [vmem:[%s134] ss:$4 sm:$0xff]
  %v136 = vadd.f32 %v26, %v27
  %v137 = vadd.f32 %v136, %v28
  %v138 = vadd.f32 %v137, %v29
  %v139 = vadd.f32 %v138, %v30
  %v140 = vadd.f32 %v139, %v31
  %v141 = vadd.f32 %v140, %v32
  %142 = vadd.xlane.f32.xlu0 %v141
  %v143 = vpop.xlane.xlu0 %142
  %v144 = vadd.f32 %v33, %v34
  %v145 = vadd.f32 %v144, %v35
  %v146 = vadd.f32 %v145, %v36
  %v147 = vadd.f32 %v146, %v37
  %v148 = vadd.f32 %v147, %v38
  %v149 = vadd.f32 %v148, %v39
  %150 = vadd.xlane.f32.xlu0 %v149
  %v151 = vpop.xlane.xlu0 %150
  %v152 = vadd.f32 %v40, %v41
  %v153 = vadd.f32 %v152, %v42
  %v154 = vadd.f32 %v153, %v43
  %v155 = vadd.f32 %v154, %v44
  %v156 = vadd.f32 %v155, %v45
  %v157 = vadd.f32 %v156, %v46
  %158 = vadd.xlane.f32.xlu0 %v157
  %v159 = vpop.xlane.xlu0 %158
  %v160 = vadd.f32 %v47, %v48
  %v161 = vadd.f32 %v160, %v49
  %v162 = vadd.f32 %v161, %v50
  %v163 = vadd.f32 %v162, %v51
  %v164 = vadd.f32 %v163, %v52
  %v165 = vadd.f32 %v164, %v53
  %166 = vadd.xlane.f32.xlu0 %v165
  %v167 = vpop.xlane.xlu0 %166
  %v168 = vadd.f32 %v54, %v55
  %v169 = vadd.f32 %v168, %v56
  %v170 = vadd.f32 %v169, %v57
  %v171 = vadd.f32 %v170, %v58
  %v172 = vadd.f32 %v171, %v59
  %v173 = vadd.f32 %v172, %v60
  %174 = vadd.xlane.f32.xlu0 %v173
  %v175 = vpop.xlane.xlu0 %174
  %v176 = vadd.f32 %v61, %v62
  %v177 = vadd.f32 %v176, %v63
  %v178 = vadd.f32 %v177, %v64
  %v179 = vadd.f32 %v178, %v65
  %v180 = vadd.f32 %v179, %v66
  %v181 = vadd.f32 %v180, %v67
  %182 = vadd.xlane.f32.xlu0 %v181
  %v183 = vpop.xlane.xlu0 %182
  %v184 = vadd.f32 %v68, %v69
  %v185 = vadd.f32 %v184, %v70
  %v186 = vadd.f32 %v185, %v71
  %v187 = vadd.f32 %v186, %v72
  %v188 = vadd.f32 %v187, %v73
  %v189 = vadd.f32 %v188, %v74
  %190 = vadd.xlane.f32.xlu0 %v189
  %v191 = vpop.xlane.xlu0 %190
  %v192 = vadd.f32 %v75, %v76
  %v193 = vadd.f32 %v192, %v77
  %v194 = vadd.f32 %v193, %v78
  %v195 = vadd.f32 %v194, %v79
  %v196 = vadd.f32 %v195, %v80
  %v197 = vadd.f32 %v196, %v81
  %198 = vadd.xlane.f32.xlu0 %v197
  %v199 = vpop.xlane.xlu0 %198
  %v200 = vadd.f32 %v82, %v83
  %v201 = vadd.f32 %v200, %v84
  %v202 = vadd.f32 %v201, %v85
  %v203 = vadd.f32 %v202, %v86
  %v204 = vadd.f32 %v203, %v87
  %v205 = vadd.f32 %v204, %v88
  %206 = vadd.xlane.f32.xlu0 %v205
  %v207 = vpop.xlane.xlu0 %206
  %v208 = vadd.f32 %v89, %v90
  %v209 = vadd.f32 %v208, %v91
  %v210 = vadd.f32 %v209, %v92
  %v211 = vadd.f32 %v210, %v93
  %v212 = vadd.f32 %v211, %v94
  %v213 = vadd.f32 %v212, %v95
  %214 = vadd.xlane.f32.xlu0 %v213
  %v215 = vpop.xlane.xlu0 %214
  %v216 = vadd.f32 %v96, %v97
  %v217 = vadd.f32 %v216, %v98
  %v218 = vadd.f32 %v217, %v99
  %v219 = vadd.f32 %v218, %v100
  %v220 = vadd.f32 %v219, %v101
  %v221 = vadd.f32 %v220, %v102
  %222 = vadd.xlane.f32.xlu0 %v221
  %v223 = vpop.xlane.xlu0 %222
  %v224 = vadd.f32 %v103, %v104
  %v225 = vadd.f32 %v224, %v105
  %v226 = vadd.f32 %v225, %v106
  %v227 = vadd.f32 %v226, %v107
  %v228 = vadd.f32 %v227, %v108
  %v229 = vadd.f32 %v228, %v109
  %230 = vadd.xlane.f32.xlu0 %v229
  %v231 = vpop.xlane.xlu0 %230
  %v232 = vadd.f32 %v110, %v111
  %v233 = vadd.f32 %v232, %v112
  %v234 = vadd.f32 %v233, %v113
  %v235 = vadd.f32 %v234, %v114
  %v236 = vadd.f32 %v235, %v115
  %v237 = vadd.f32 %v236, %v116
  %238 = vadd.xlane.f32.xlu0 %v237
  %v239 = vpop.xlane.xlu0 %238
  %v240 = vadd.f32 %v117, %v118
  %v241 = vadd.f32 %v240, %v119
  %v242 = vadd.f32 %v241, %v120
  %v243 = vadd.f32 %v242, %v121
  %v244 = vadd.f32 %v243, %v122
  %v245 = vadd.f32 %v244, %v123
  %246 = vadd.xlane.f32.xlu0 %v245
  %v247 = vpop.xlane.xlu0 %246
  %v248 = vadd.f32 %v124, %v125
  %v249 = vadd.f32 %v248, %v126
  %v250 = vadd.f32 %v249, %v127
  %v251 = vadd.f32 %v250, %v128
  %v252 = vadd.f32 %v251, %v129
  %v253 = vadd.f32 %v252, %v130
  %254 = vadd.xlane.f32.xlu0 %v253
  %v255 = vpop.xlane.xlu0 %254
  %v256 = vmul.f32 %v26, %v26
  %v257 = vmul.f32 %v27, %v27
  %v258 = vmul.f32 %v28, %v28
  %v259 = vmul.f32 %v29, %v29
  %v260 = vmul.f32 %v30, %v30
  %v261 = vmul.f32 %v31, %v31
  %v262 = vmul.f32 %v32, %v32
  %v263 = vmul.f32 %v33, %v33
  %v264 = vmul.f32 %v34, %v34
  %v265 = vmul.f32 %v35, %v35
  %v266 = vmul.f32 %v36, %v36
  %v267 = vmul.f32 %v37, %v37
  %v268 = vmul.f32 %v38, %v38
  %v269 = vmul.f32 %v39, %v39
  %v270 = vmul.f32 %v40, %v40
  %v271 = vmul.f32 %v41, %v41
  %v272 = vmul.f32 %v42, %v42
  %v273 = vmul.f32 %v43, %v43
  %v274 = vmul.f32 %v44, %v44
  %v275 = vmul.f32 %v45, %v45
  %v276 = vmul.f32 %v46, %v46
  %v277 = vmul.f32 %v47, %v47
  %v278 = vmul.f32 %v48, %v48
  %v279 = vmul.f32 %v49, %v49
  %v280 = vmul.f32 %v50, %v50
  %v281 = vmul.f32 %v51, %v51
  %v282 = vmul.f32 %v52, %v52
  %v283 = vmul.f32 %v53, %v53
  %v284 = vmul.f32 %v54, %v54
  %v285 = vmul.f32 %v55, %v55
  %v286 = vmul.f32 %v56, %v56
  %v287 = vmul.f32 %v57, %v57
  %v288 = vmul.f32 %v58, %v58
  %v289 = vmul.f32 %v59, %v59
  %v290 = vmul.f32 %v60, %v60
  %v291 = vmul.f32 %v61, %v61
  %v292 = vmul.f32 %v62, %v62
  %v293 = vmul.f32 %v63, %v63
  %v294 = vmul.f32 %v64, %v64
  %v295 = vmul.f32 %v65, %v65
  %v296 = vmul.f32 %v66, %v66
  %v297 = vmul.f32 %v67, %v67
  %v298 = vmul.f32 %v68, %v68
  %v299 = vmul.f32 %v69, %v69
  %v300 = vmul.f32 %v70, %v70
  %v301 = vmul.f32 %v71, %v71
  %v302 = vmul.f32 %v72, %v72
  %v303 = vmul.f32 %v73, %v73
  %v304 = vmul.f32 %v74, %v74
  %v305 = vmul.f32 %v75, %v75
  %v306 = vmul.f32 %v76, %v76
  %v307 = vmul.f32 %v77, %v77
  %v308 = vmul.f32 %v78, %v78
  %v309 = vmul.f32 %v79, %v79
  %v310 = vmul.f32 %v80, %v80
  %v311 = vmul.f32 %v81, %v81
  %v312 = vmul.f32 %v82, %v82
  %v313 = vmul.f32 %v83, %v83
  %v314 = vmul.f32 %v84, %v84
  %v315 = vmul.f32 %v85, %v85
  %v316 = vmul.f32 %v86, %v86
  %v317 = vmul.f32 %v87, %v87
  %v318 = vmul.f32 %v88, %v88
  %v319 = vmul.f32 %v89, %v89
  %v320 = vmul.f32 %v90, %v90
  %v321 = vmul.f32 %v91, %v91
  %v322 = vmul.f32 %v92, %v92
  %v323 = vmul.f32 %v93, %v93
  %v324 = vmul.f32 %v94, %v94
  %v325 = vmul.f32 %v95, %v95
  %v326 = vmul.f32 %v96, %v96
  %v327 = vmul.f32 %v97, %v97
  %v328 = vmul.f32 %v98, %v98
  %v329 = vmul.f32 %v99, %v99
  %v330 = vmul.f32 %v100, %v100
  %v331 = vmul.f32 %v101, %v101
  %v332 = vmul.f32 %v102, %v102
  %v333 = vmul.f32 %v103, %v103
  %v334 = vmul.f32 %v104, %v104
  %v335 = vmul.f32 %v105, %v105
  %v336 = vmul.f32 %v106, %v106
  %v337 = vmul.f32 %v107, %v107
  %v338 = vmul.f32 %v108, %v108
  %v339 = vmul.f32 %v109, %v109
  %v340 = vmul.f32 %v110, %v110
  %v341 = vmul.f32 %v111, %v111
  %v342 = vmul.f32 %v112, %v112
  %v343 = vmul.f32 %v113, %v113
  %v344 = vmul.f32 %v114, %v114
  %v345 = vmul.f32 %v115, %v115
  %v346 = vmul.f32 %v116, %v116
  %v347 = vmul.f32 %v117, %v117
  %v348 = vmul.f32 %v118, %v118
  %v349 = vmul.f32 %v119, %v119
  %v350 = vmul.f32 %v120, %v120
  %v351 = vmul.f32 %v121, %v121
  %v352 = vmul.f32 %v122, %v122
  %v353 = vmul.f32 %v123, %v123
  %v354 = vmul.f32 %v124, %v124
  %v355 = vmul.f32 %v125, %v125
  %v356 = vmul.f32 %v126, %v126
  %v357 = vmul.f32 %v127, %v127
  %v358 = vmul.f32 %v128, %v128
  %v359 = vmul.f32 %v129, %v129
  %v360 = vmul.f32 %v130, %v130
  %v361 = vadd.f32 %v256, %v257
  %v362 = vadd.f32 %v361, %v258
  %v363 = vadd.f32 %v362, %v259
  %v364 = vadd.f32 %v363, %v260
  %v365 = vadd.f32 %v364, %v261
  %v366 = vadd.f32 %v365, %v262
  %367 = vadd.xlane.f32.xlu0 %v366
  %v368 = vpop.xlane.xlu0 %367
  %v369 = vadd.f32 %v263, %v264
  %v370 = vadd.f32 %v369, %v265
  %v371 = vadd.f32 %v370, %v266
  %v372 = vadd.f32 %v371, %v267
  %v373 = vadd.f32 %v372, %v268
  %v374 = vadd.f32 %v373, %v269
  %375 = vadd.xlane.f32.xlu0 %v374
  %v376 = vpop.xlane.xlu0 %375
  %v377 = vadd.f32 %v270, %v271
  %v378 = vadd.f32 %v377, %v272
  %v379 = vadd.f32 %v378, %v273
  %v380 = vadd.f32 %v379, %v274
  %v381 = vadd.f32 %v380, %v275
  %v382 = vadd.f32 %v381, %v276
  %383 = vadd.xlane.f32.xlu0 %v382
  %v384 = vpop.xlane.xlu0 %383
  %v385 = vadd.f32 %v277, %v278
  %v386 = vadd.f32 %v385, %v279
  %v387 = vadd.f32 %v386, %v280
  %v388 = vadd.f32 %v387, %v281
  %v389 = vadd.f32 %v388, %v282
  %v390 = vadd.f32 %v389, %v283
  %391 = vadd.xlane.f32.xlu0 %v390
  %v392 = vpop.xlane.xlu0 %391
  %v393 = vadd.f32 %v284, %v285
  %v394 = vadd.f32 %v393, %v286
  %v395 = vadd.f32 %v394, %v287
  %v396 = vadd.f32 %v395, %v288
  %v397 = vadd.f32 %v396, %v289
  %v398 = vadd.f32 %v397, %v290
  %399 = vadd.xlane.f32.xlu0 %v398
  %v400 = vpop.xlane.xlu0 %399
  %v401 = vadd.f32 %v291, %v292
  %v402 = vadd.f32 %v401, %v293
  %v403 = vadd.f32 %v402, %v294
  %v404 = vadd.f32 %v403, %v295
  %v405 = vadd.f32 %v404, %v296
  %v406 = vadd.f32 %v405, %v297
  %407 = vadd.xlane.f32.xlu0 %v406
  %v408 = vpop.xlane.xlu0 %407
  %v409 = vadd.f32 %v298, %v299
  %v410 = vadd.f32 %v409, %v300
  %v411 = vadd.f32 %v410, %v301
  %v412 = vadd.f32 %v411, %v302
  %v413 = vadd.f32 %v412, %v303
  %v414 = vadd.f32 %v413, %v304
  %415 = vadd.xlane.f32.xlu0 %v414
  %v416 = vpop.xlane.xlu0 %415
  %v417 = vadd.f32 %v305, %v306
  %v418 = vadd.f32 %v417, %v307
  %v419 = vadd.f32 %v418, %v308
  %v420 = vadd.f32 %v419, %v309
  %v421 = vadd.f32 %v420, %v310
  %v422 = vadd.f32 %v421, %v311
  %423 = vadd.xlane.f32.xlu0 %v422
  %v424 = vpop.xlane.xlu0 %423
  %v425 = vadd.f32 %v312, %v313
  %v426 = vadd.f32 %v425, %v314
  %v427 = vadd.f32 %v426, %v315
  %v428 = vadd.f32 %v427, %v316
  %v429 = vadd.f32 %v428, %v317
  %v430 = vadd.f32 %v429, %v318
  %431 = vadd.xlane.f32.xlu0 %v430
  %v432 = vpop.xlane.xlu0 %431
  %v433 = vadd.f32 %v319, %v320
  %v434 = vadd.f32 %v433, %v321
  %v435 = vadd.f32 %v434, %v322
  %v436 = vadd.f32 %v435, %v323
  %v437 = vadd.f32 %v436, %v324
  %v438 = vadd.f32 %v437, %v325
  %439 = vadd.xlane.f32.xlu0 %v438
  %v440 = vpop.xlane.xlu0 %439
  %v441 = vadd.f32 %v326, %v327
  %v442 = vadd.f32 %v441, %v328
  %v443 = vadd.f32 %v442, %v329
  %v444 = vadd.f32 %v443, %v330
  %v445 = vadd.f32 %v444, %v331
  %v446 = vadd.f32 %v445, %v332
  %447 = vadd.xlane.f32.xlu0 %v446
  %v448 = vpop.xlane.xlu0 %447
  %v449 = vadd.f32 %v333, %v334
  %v450 = vadd.f32 %v449, %v335
  %v451 = vadd.f32 %v450, %v336
  %v452 = vadd.f32 %v451, %v337
  %v453 = vadd.f32 %v452, %v338
  %v454 = vadd.f32 %v453, %v339
  %455 = vadd.xlane.f32.xlu0 %v454
  %v456 = vpop.xlane.xlu0 %455
  %v457 = vadd.f32 %v340, %v341
  %v458 = vadd.f32 %v457, %v342
  %v459 = vadd.f32 %v458, %v343
  %v460 = vadd.f32 %v459, %v344
  %v461 = vadd.f32 %v460, %v345
  %v462 = vadd.f32 %v461, %v346
  %463 = vadd.xlane.f32.xlu0 %v462
  %v464 = vpop.xlane.xlu0 %463
  %v465 = vadd.f32 %v347, %v348
  %v466 = vadd.f32 %v465, %v349
  %v467 = vadd.f32 %v466, %v350
  %v468 = vadd.f32 %v467, %v351
  %v469 = vadd.f32 %v468, %v352
  %v470 = vadd.f32 %v469, %v353
  %471 = vadd.xlane.f32.xlu0 %v470
  %v472 = vpop.xlane.xlu0 %471
  %v473 = vadd.f32 %v354, %v355
  %v474 = vadd.f32 %v473, %v356
  %v475 = vadd.f32 %v474, %v357
  %v476 = vadd.f32 %v475, %v358
  %v477 = vadd.f32 %v476, %v359
  %v478 = vadd.f32 %v477, %v360
  %479 = vadd.xlane.f32.xlu0 %v478
  %v480 = vpop.xlane.xlu0 %479
  %v481 = vmul.f32 %v143, 0.0012755102
  %v482 = vmul.f32 %v151, 0.0012755102
  %v483 = vmul.f32 %v159, 0.0012755102
  %v484 = vmul.f32 %v167, 0.0012755102
  %v485 = vmul.f32 %v175, 0.0012755102
  %v486 = vmul.f32 %v183, 0.0012755102
  %v487 = vmul.f32 %v191, 0.0012755102
  %v488 = vmul.f32 %v199, 0.0012755102
  %v489 = vmul.f32 %v207, 0.0012755102
  %v490 = vmul.f32 %v215, 0.0012755102
  %v491 = vmul.f32 %v223, 0.0012755102
  %v492 = vmul.f32 %v231, 0.0012755102
  %v493 = vmul.f32 %v239, 0.0012755102
  %v494 = vmul.f32 %v247, 0.0012755102
  %v495 = vmul.f32 %v255, 0.0012755102
  %v496 = vmul.f32 %v368, 0.0012755102
  %v497 = vmul.f32 %v376, 0.0012755102
  %v498 = vmul.f32 %v384, 0.0012755102
  %v499 = vmul.f32 %v392, 0.0012755102
  %v500 = vmul.f32 %v400, 0.0012755102
  %v501 = vmul.f32 %v408, 0.0012755102
  %v502 = vmul.f32 %v416, 0.0012755102
  %v503 = vmul.f32 %v424, 0.0012755102
  %v504 = vmul.f32 %v432, 0.0012755102
  %v505 = vmul.f32 %v440, 0.0012755102
  %v506 = vmul.f32 %v448, 0.0012755102
  %v507 = vmul.f32 %v456, 0.0012755102
  %v508 = vmul.f32 %v464, 0.0012755102
  %v509 = vmul.f32 %v472, 0.0012755102
  %v510 = vmul.f32 %v480, 0.0012755102
  %v511 = vmul.f32 %v481, %v481
  %v512 = vmul.f32 %v482, %v482
  %v513 = vmul.f32 %v483, %v483
  %v514 = vmul.f32 %v484, %v484
  %v515 = vmul.f32 %v485, %v485
  %v516 = vmul.f32 %v486, %v486
  %v517 = vmul.f32 %v487, %v487
  %v518 = vmul.f32 %v488, %v488
  %v519 = vmul.f32 %v489, %v489
  %v520 = vmul.f32 %v490, %v490
  %v521 = vmul.f32 %v491, %v491
  %v522 = vmul.f32 %v492, %v492
  %v523 = vmul.f32 %v493, %v493
  %v524 = vmul.f32 %v494, %v494
  %v525 = vmul.f32 %v495, %v495
  %v526 = vsub.f32 %v496, %v511
  %v527 = vsub.f32 %v497, %v512
  %v528 = vsub.f32 %v498, %v513
  %v529 = vsub.f32 %v499, %v514
  %v530 = vsub.f32 %v500, %v515
  %v531 = vsub.f32 %v501, %v516
  %v532 = vsub.f32 %v502, %v517
  %v533 = vsub.f32 %v503, %v518
  %v534 = vsub.f32 %v504, %v519
  %v535 = vsub.f32 %v505, %v520
  %v536 = vsub.f32 %v506, %v521
  %v537 = vsub.f32 %v507, %v522
  %v538 = vsub.f32 %v508, %v523
  %v539 = vsub.f32 %v509, %v524
  %v540 = vsub.f32 %v510, %v525
  %v541 = vld [vmem:[%s2] sm:$0xff]
  %v542 = vld [vmem:[%s2 + $0x8] sm:$0xff]
  %v543 = vld [vmem:[%s2 + $0x10] sm:$0xff]
  %v544 = vld [vmem:[%s2 + $0x18] sm:$0xff]
  %v545 = vld [vmem:[%s2 + $0x20] sm:$0xff]
  %v546 = vld [vmem:[%s2 + $0x28] sm:$0xff]
  %v547 = vld [vmem:[%s2 + $0x30] sm:$0xff]
  %v548 = vld [vmem:[%s2 + $0x38] sm:$0xff]
  %v549 = vld [vmem:[%s2 + $0x40] sm:$0xff]
  %v550 = vld [vmem:[%s2 + $0x48] sm:$0xff]
  %v551 = vld [vmem:[%s2 + $0x50] sm:$0xff]
  %v552 = vld [vmem:[%s2 + $0x58] sm:$0xff]
  %v553 = vld [vmem:[%s2 + $0x60] sm:$0xff]
  %v554 = vld [vmem:[%s2 + $0x68] sm:$0xff]
  %v555 = vld [vmem:[%s2 + $0x70] sm:$0xff]
  %v556 = vadd.f32 %v526, 1e-05
  %v557 = vadd.f32 %v527, 1e-05
  %v558 = vadd.f32 %v528, 1e-05
  %v559 = vadd.f32 %v529, 1e-05
  %v560 = vadd.f32 %v530, 1e-05
  %v561 = vadd.f32 %v531, 1e-05
  %v562 = vadd.f32 %v532, 1e-05
  %v563 = vadd.f32 %v533, 1e-05
  %v564 = vadd.f32 %v534, 1e-05
  %v565 = vadd.f32 %v535, 1e-05
  %v566 = vadd.f32 %v536, 1e-05
  %v567 = vadd.f32 %v537, 1e-05
  %v568 = vadd.f32 %v538, 1e-05
  %v569 = vadd.f32 %v539, 1e-05
  %v570 = vadd.f32 %v540, 1e-05
  %v571 = vrsqrt.pop %v556
  %v572 = vrsqrt.pop %v557
  %v573 = vrsqrt.pop %v558
  %v574 = vrsqrt.pop %v559
  %v575 = vrsqrt.pop %v560
  %v576 = vrsqrt.pop %v561
  %v577 = vrsqrt.pop %v562
  %v578 = vrsqrt.pop %v563
  %v579 = vrsqrt.pop %v564
  %v580 = vrsqrt.pop %v565
  %v581 = vrsqrt.pop %v566
  %v582 = vrsqrt.pop %v567
  %v583 = vrsqrt.pop %v568
  %v584 = vrsqrt.pop %v569
  %v585 = vrsqrt.pop %v570
  %v586 = vmul.f32 %v541, %v571
  %v587 = vmul.f32 %v542, %v572
  %v588 = vmul.f32 %v543, %v573
  %v589 = vmul.f32 %v544, %v574
  %v590 = vmul.f32 %v545, %v575
  %v591 = vmul.f32 %v546, %v576
  %v592 = vmul.f32 %v547, %v577
  %v593 = vmul.f32 %v548, %v578
  %v594 = vmul.f32 %v549, %v579
  %v595 = vmul.f32 %v550, %v580
  %v596 = vmul.f32 %v551, %v581
  %v597 = vmul.f32 %v552, %v582
  %v598 = vmul.f32 %v553, %v583
  %v599 = vmul.f32 %v554, %v584
  %v600 = vmul.f32 %v555, %v585
  %v601 = vld [vmem:[%s3] sm:$0xff]
  %v602 = vld [vmem:[%s3 + $0x8] sm:$0xff]
  %v603 = vld [vmem:[%s3 + $0x10] sm:$0xff]
  %v604 = vld [vmem:[%s3 + $0x18] sm:$0xff]
  %v605 = vld [vmem:[%s3 + $0x20] sm:$0xff]
  %v606 = vld [vmem:[%s3 + $0x28] sm:$0xff]
  %v607 = vld [vmem:[%s3 + $0x30] sm:$0xff]
  %v608 = vld [vmem:[%s3 + $0x38] sm:$0xff]
  %v609 = vld [vmem:[%s3 + $0x40] sm:$0xff]
  %v610 = vld [vmem:[%s3 + $0x48] sm:$0xff]
  %v611 = vld [vmem:[%s3 + $0x50] sm:$0xff]
  %v612 = vld [vmem:[%s3 + $0x58] sm:$0xff]
  %v613 = vld [vmem:[%s3 + $0x60] sm:$0xff]
  %v614 = vld [vmem:[%s3 + $0x68] sm:$0xff]
  %v615 = vld [vmem:[%s3 + $0x70] sm:$0xff]
  %v616 = vmul.f32 %v481, %v586
  %v617 = vmul.f32 %v482, %v587
  %v618 = vmul.f32 %v483, %v588
  %v619 = vmul.f32 %v484, %v589
  %v620 = vmul.f32 %v485, %v590
  %v621 = vmul.f32 %v486, %v591
  %v622 = vmul.f32 %v487, %v592
  %v623 = vmul.f32 %v488, %v593
  %v624 = vmul.f32 %v489, %v594
  %v625 = vmul.f32 %v490, %v595
  %v626 = vmul.f32 %v491, %v596
  %v627 = vmul.f32 %v492, %v597
  %v628 = vmul.f32 %v493, %v598
  %v629 = vmul.f32 %v494, %v599
  %v630 = vmul.f32 %v495, %v600
  %v631 = vsub.f32 %v601, %v616
  %v632 = vsub.f32 %v602, %v617
  %v633 = vsub.f32 %v603, %v618
  %v634 = vsub.f32 %v604, %v619
  %v635 = vsub.f32 %v605, %v620
  %v636 = vsub.f32 %v606, %v621
  %v637 = vsub.f32 %v607, %v622
  %v638 = vsub.f32 %v608, %v623
  %v639 = vsub.f32 %v609, %v624
  %v640 = vsub.f32 %v610, %v625
  %v641 = vsub.f32 %v611, %v626
  %v642 = vsub.f32 %v612, %v627
  %v643 = vsub.f32 %v613, %v628
  %v644 = vsub.f32 %v614, %v629
  %v645 = vsub.f32 %v615, %v630
  %647 = vset.pattern.permute.xlu0 0
  %648 = vperm.xlu0 %647, %v586
  %v649 = vpop.permute.xlu0 %648
  %652 = vset.pattern.permute.xlu0 0
  %653 = vperm.xlu0 %652, %v587
  %v654 = vpop.permute.xlu0 %653
  %657 = vset.pattern.permute.xlu0 0
  %658 = vperm.xlu0 %657, %v588
  %v659 = vpop.permute.xlu0 %658
  %662 = vset.pattern.permute.xlu0 0
  %663 = vperm.xlu0 %662, %v589
  %v664 = vpop.permute.xlu0 %663
  %667 = vset.pattern.permute.xlu0 0
  %668 = vperm.xlu0 %667, %v590
  %v669 = vpop.permute.xlu0 %668
  %672 = vset.pattern.permute.xlu0 0
  %673 = vperm.xlu0 %672, %v591
  %v674 = vpop.permute.xlu0 %673
  %677 = vset.pattern.permute.xlu0 0
  %678 = vperm.xlu0 %677, %v592
  %v679 = vpop.permute.xlu0 %678
  %682 = vset.pattern.permute.xlu0 0
  %683 = vperm.xlu0 %682, %v593
  %v684 = vpop.permute.xlu0 %683
  %687 = vset.pattern.permute.xlu0 0
  %688 = vperm.xlu0 %687, %v594
  %v689 = vpop.permute.xlu0 %688
  %692 = vset.pattern.permute.xlu0 0
  %693 = vperm.xlu0 %692, %v595
  %v694 = vpop.permute.xlu0 %693
  %697 = vset.pattern.permute.xlu0 0
  %698 = vperm.xlu0 %697, %v596
  %v699 = vpop.permute.xlu0 %698
  %702 = vset.pattern.permute.xlu0 0
  %703 = vperm.xlu0 %702, %v597
  %v704 = vpop.permute.xlu0 %703
  %707 = vset.pattern.permute.xlu0 0
  %708 = vperm.xlu0 %707, %v598
  %v709 = vpop.permute.xlu0 %708
  %712 = vset.pattern.permute.xlu0 0
  %713 = vperm.xlu0 %712, %v599
  %v714 = vpop.permute.xlu0 %713
  %717 = vset.pattern.permute.xlu0 0
  %718 = vperm.xlu0 %717, %v600
  %v719 = vpop.permute.xlu0 %718
  %v721 = vmul.f32 %v26, %v649
  %v722 = vmul.f32 %v27, %v649
  %v723 = vmul.f32 %v28, %v649
  %v724 = vmul.f32 %v29, %v649
  %v725 = vmul.f32 %v30, %v649
  %v726 = vmul.f32 %v31, %v649
  %v727 = vmul.f32 %v32, %v649
  %v728 = vmul.f32 %v33, %v654
  %v729 = vmul.f32 %v34, %v654
  %v730 = vmul.f32 %v35, %v654
  %v731 = vmul.f32 %v36, %v654
  %v732 = vmul.f32 %v37, %v654
  %v733 = vmul.f32 %v38, %v654
  %v734 = vmul.f32 %v39, %v654
  %v735 = vmul.f32 %v40, %v659
  %v736 = vmul.f32 %v41, %v659
  %v737 = vmul.f32 %v42, %v659
  %v738 = vmul.f32 %v43, %v659
  %v739 = vmul.f32 %v44, %v659
  %v740 = vmul.f32 %v45, %v659
  %v741 = vmul.f32 %v46, %v659
  %v742 = vmul.f32 %v47, %v664
  %v743 = vmul.f32 %v48, %v664
  %v744 = vmul.f32 %v49, %v664
  %v745 = vmul.f32 %v50, %v664
  %v746 = vmul.f32 %v51, %v664
  %v747 = vmul.f32 %v52, %v664
  %v748 = vmul.f32 %v53, %v664
  %v749 = vmul.f32 %v54, %v669
  %v750 = vmul.f32 %v55, %v669
  %v751 = vmul.f32 %v56, %v669
  %v752 = vmul.f32 %v57, %v669
  %v753 = vmul.f32 %v58, %v669
  %v754 = vmul.f32 %v59, %v669
  %v755 = vmul.f32 %v60, %v669
  %v756 = vmul.f32 %v61, %v674
  %v757 = vmul.f32 %v62, %v674
  %v758 = vmul.f32 %v63, %v674
  %v759 = vmul.f32 %v64, %v674
  %v760 = vmul.f32 %v65, %v674
  %v761 = vmul.f32 %v66, %v674
  %v762 = vmul.f32 %v67, %v674
  %v763 = vmul.f32 %v68, %v679
  %v764 = vmul.f32 %v69, %v679
  %v765 = vmul.f32 %v70, %v679
  %v766 = vmul.f32 %v71, %v679
  %v767 = vmul.f32 %v72, %v679
  %v768 = vmul.f32 %v73, %v679
  %v769 = vmul.f32 %v74, %v679
  %v770 = vmul.f32 %v75, %v684
  %v771 = vmul.f32 %v76, %v684
  %v772 = vmul.f32 %v77, %v684
  %v773 = vmul.f32 %v78, %v684
  %v774 = vmul.f32 %v79, %v684
  %v775 = vmul.f32 %v80, %v684
  %v776 = vmul.f32 %v81, %v684
  %v777 = vmul.f32 %v82, %v689
  %v778 = vmul.f32 %v83, %v689
  %v779 = vmul.f32 %v84, %v689
  %v780 = vmul.f32 %v85, %v689
  %v781 = vmul.f32 %v86, %v689
  %v782 = vmul.f32 %v87, %v689
  %v783 = vmul.f32 %v88, %v689
  %v784 = vmul.f32 %v89, %v694
  %v785 = vmul.f32 %v90, %v694
  %v786 = vmul.f32 %v91, %v694
  %v787 = vmul.f32 %v92, %v694
  %v788 = vmul.f32 %v93, %v694
  %v789 = vmul.f32 %v94, %v694
  %v790 = vmul.f32 %v95, %v694
  %v791 = vmul.f32 %v96, %v699
  %v792 = vmul.f32 %v97, %v699
  %v793 = vmul.f32 %v98, %v699
  %v794 = vmul.f32 %v99, %v699
  %v795 = vmul.f32 %v100, %v699
  %v796 = vmul.f32 %v101, %v699
  %v797 = vmul.f32 %v102, %v699
  %v798 = vmul.f32 %v103, %v704
  %v799 = vmul.f32 %v104, %v704
  %v800 = vmul.f32 %v105, %v704
  %v801 = vmul.f32 %v106, %v704
  %v802 = vmul.f32 %v107, %v704
  %v803 = vmul.f32 %v108, %v704
  %v804 = vmul.f32 %v109, %v704
  %v805 = vmul.f32 %v110, %v709
  %v806 = vmul.f32 %v111, %v709
  %v807 = vmul.f32 %v112, %v709
  %v808 = vmul.f32 %v113, %v709
  %v809 = vmul.f32 %v114, %v709
  %v810 = vmul.f32 %v115, %v709
  %v811 = vmul.f32 %v116, %v709
  %v812 = vmul.f32 %v117, %v714
  %v813 = vmul.f32 %v118, %v714
  %v814 = vmul.f32 %v119, %v714
  %v815 = vmul.f32 %v120, %v714
  %v816 = vmul.f32 %v121, %v714
  %v817 = vmul.f32 %v122, %v714
  %v818 = vmul.f32 %v123, %v714
  %v819 = vmul.f32 %v124, %v719
  %v820 = vmul.f32 %v125, %v719
  %v821 = vmul.f32 %v126, %v719
  %v822 = vmul.f32 %v127, %v719
  %v823 = vmul.f32 %v128, %v719
  %v824 = vmul.f32 %v129, %v719
  %v825 = vmul.f32 %v130, %v719
  %827 = vset.pattern.permute.xlu0 0
  %828 = vperm.xlu0 %827, %v631
  %v829 = vpop.permute.xlu0 %828
  %832 = vset.pattern.permute.xlu0 0
  %833 = vperm.xlu0 %832, %v632
  %v834 = vpop.permute.xlu0 %833
  %837 = vset.pattern.permute.xlu0 0
  %838 = vperm.xlu0 %837, %v633
  %v839 = vpop.permute.xlu0 %838
  %842 = vset.pattern.permute.xlu0 0
  %843 = vperm.xlu0 %842, %v634
  %v844 = vpop.permute.xlu0 %843
  %847 = vset.pattern.permute.xlu0 0
  %848 = vperm.xlu0 %847, %v635
  %v849 = vpop.permute.xlu0 %848
  %852 = vset.pattern.permute.xlu0 0
  %853 = vperm.xlu0 %852, %v636
  %v854 = vpop.permute.xlu0 %853
  %857 = vset.pattern.permute.xlu0 0
  %858 = vperm.xlu0 %857, %v637
  %v859 = vpop.permute.xlu0 %858
  %862 = vset.pattern.permute.xlu0 0
  %863 = vperm.xlu0 %862, %v638
  %v864 = vpop.permute.xlu0 %863
  %867 = vset.pattern.permute.xlu0 0
  %868 = vperm.xlu0 %867, %v639
  %v869 = vpop.permute.xlu0 %868
  %872 = vset.pattern.permute.xlu0 0
  %873 = vperm.xlu0 %872, %v640
  %v874 = vpop.permute.xlu0 %873
  %877 = vset.pattern.permute.xlu0 0
  %878 = vperm.xlu0 %877, %v641
  %v879 = vpop.permute.xlu0 %878
  %882 = vset.pattern.permute.xlu0 0
  %883 = vperm.xlu0 %882, %v642
  %v884 = vpop.permute.xlu0 %883
  %887 = vset.pattern.permute.xlu0 0
  %888 = vperm.xlu0 %887, %v643
  %v889 = vpop.permute.xlu0 %888
  %892 = vset.pattern.permute.xlu0 0
  %893 = vperm.xlu0 %892, %v644
  %v894 = vpop.permute.xlu0 %893
  %897 = vset.pattern.permute.xlu0 0
  %898 = vperm.xlu0 %897, %v645
  %v899 = vpop.permute.xlu0 %898
  %v901 = vadd.f32 %v721, %v829
  %v902 = vadd.f32 %v722, %v829
  %v903 = vadd.f32 %v723, %v829
  %v904 = vadd.f32 %v724, %v829
  %v905 = vadd.f32 %v725, %v829
  %v906 = vadd.f32 %v726, %v829
  %v907 = vadd.f32 %v727, %v829
  %v908 = vadd.f32 %v728, %v834
  %v909 = vadd.f32 %v729, %v834
  %v910 = vadd.f32 %v730, %v834
  %v911 = vadd.f32 %v731, %v834
  %v912 = vadd.f32 %v732, %v834
  %v913 = vadd.f32 %v733, %v834
  %v914 = vadd.f32 %v734, %v834
  %v915 = vadd.f32 %v735, %v839
  %v916 = vadd.f32 %v736, %v839
  %v917 = vadd.f32 %v737, %v839
  %v918 = vadd.f32 %v738, %v839
  %v919 = vadd.f32 %v739, %v839
  %v920 = vadd.f32 %v740, %v839
  %v921 = vadd.f32 %v741, %v839
  %v922 = vadd.f32 %v742, %v844
  %v923 = vadd.f32 %v743, %v844
  %v924 = vadd.f32 %v744, %v844
  %v925 = vadd.f32 %v745, %v844
  %v926 = vadd.f32 %v746, %v844
  %v927 = vadd.f32 %v747, %v844
  %v928 = vadd.f32 %v748, %v844
  %v929 = vadd.f32 %v749, %v849
  %v930 = vadd.f32 %v750, %v849
  %v931 = vadd.f32 %v751, %v849
  %v932 = vadd.f32 %v752, %v849
  %v933 = vadd.f32 %v753, %v849
  %v934 = vadd.f32 %v754, %v849
  %v935 = vadd.f32 %v755, %v849
  %v936 = vadd.f32 %v756, %v854
  %v937 = vadd.f32 %v757, %v854
  %v938 = vadd.f32 %v758, %v854
  %v939 = vadd.f32 %v759, %v854
  %v940 = vadd.f32 %v760, %v854
  %v941 = vadd.f32 %v761, %v854
  %v942 = vadd.f32 %v762, %v854
  %v943 = vadd.f32 %v763, %v859
  %v944 = vadd.f32 %v764, %v859
  %v945 = vadd.f32 %v765, %v859
  %v946 = vadd.f32 %v766, %v859
  %v947 = vadd.f32 %v767, %v859
  %v948 = vadd.f32 %v768, %v859
  %v949 = vadd.f32 %v769, %v859
  %v950 = vadd.f32 %v770, %v864
  %v951 = vadd.f32 %v771, %v864
  %v952 = vadd.f32 %v772, %v864
  %v953 = vadd.f32 %v773, %v864
  %v954 = vadd.f32 %v774, %v864
  %v955 = vadd.f32 %v775, %v864
  %v956 = vadd.f32 %v776, %v864
  %v957 = vadd.f32 %v777, %v869
  %v958 = vadd.f32 %v778, %v869
  %v959 = vadd.f32 %v779, %v869
  %v960 = vadd.f32 %v780, %v869
  %v961 = vadd.f32 %v781, %v869
  %v962 = vadd.f32 %v782, %v869
  %v963 = vadd.f32 %v783, %v869
  %v964 = vadd.f32 %v784, %v874
  %v965 = vadd.f32 %v785, %v874
  %v966 = vadd.f32 %v786, %v874
  %v967 = vadd.f32 %v787, %v874
  %v968 = vadd.f32 %v788, %v874
  %v969 = vadd.f32 %v789, %v874
  %v970 = vadd.f32 %v790, %v874
  %v971 = vadd.f32 %v791, %v879
  %v972 = vadd.f32 %v792, %v879
  %v973 = vadd.f32 %v793, %v879
  %v974 = vadd.f32 %v794, %v879
  %v975 = vadd.f32 %v795, %v879
  %v976 = vadd.f32 %v796, %v879
  %v977 = vadd.f32 %v797, %v879
  %v978 = vadd.f32 %v798, %v884
  %v979 = vadd.f32 %v799, %v884
  %v980 = vadd.f32 %v800, %v884
  %v981 = vadd.f32 %v801, %v884
  %v982 = vadd.f32 %v802, %v884
  %v983 = vadd.f32 %v803, %v884
  %v984 = vadd.f32 %v804, %v884
  %v985 = vadd.f32 %v805, %v889
  %v986 = vadd.f32 %v806, %v889
  %v987 = vadd.f32 %v807, %v889
  %v988 = vadd.f32 %v808, %v889
  %v989 = vadd.f32 %v809, %v889
  %v990 = vadd.f32 %v810, %v889
  %v991 = vadd.f32 %v811, %v889
  %v992 = vadd.f32 %v812, %v894
  %v993 = vadd.f32 %v813, %v894
  %v994 = vadd.f32 %v814, %v894
  %v995 = vadd.f32 %v815, %v894
  %v996 = vadd.f32 %v816, %v894
  %v997 = vadd.f32 %v817, %v894
  %v998 = vadd.f32 %v818, %v894
  %v999 = vadd.f32 %v819, %v899
  %v1000 = vadd.f32 %v820, %v899
  %v1001 = vadd.f32 %v821, %v899
  %v1002 = vadd.f32 %v822, %v899
  %v1003 = vadd.f32 %v823, %v899
  %v1004 = vadd.f32 %v824, %v899
  %v1005 = vadd.f32 %v825, %v899
  %v1006 = vmax.f32 %v901, 0.0
  %v1007 = vmax.f32 %v902, 0.0
  %v1008 = vmax.f32 %v903, 0.0
  %v1009 = vmax.f32 %v904, 0.0
  %v1010 = vmax.f32 %v905, 0.0
  %v1011 = vmax.f32 %v906, 0.0
  %v1012 = vmax.f32 %v907, 0.0
  %v1013 = vmax.f32 %v908, 0.0
  %v1014 = vmax.f32 %v909, 0.0
  %v1015 = vmax.f32 %v910, 0.0
  %v1016 = vmax.f32 %v911, 0.0
  %v1017 = vmax.f32 %v912, 0.0
  %v1018 = vmax.f32 %v913, 0.0
  %v1019 = vmax.f32 %v914, 0.0
  %v1020 = vmax.f32 %v915, 0.0
  %v1021 = vmax.f32 %v916, 0.0
  %v1022 = vmax.f32 %v917, 0.0
  %v1023 = vmax.f32 %v918, 0.0
  %v1024 = vmax.f32 %v919, 0.0
  %v1025 = vmax.f32 %v920, 0.0
  %v1026 = vmax.f32 %v921, 0.0
  %v1027 = vmax.f32 %v922, 0.0
  %v1028 = vmax.f32 %v923, 0.0
  %v1029 = vmax.f32 %v924, 0.0
  %v1030 = vmax.f32 %v925, 0.0
  %v1031 = vmax.f32 %v926, 0.0
  %v1032 = vmax.f32 %v927, 0.0
  %v1033 = vmax.f32 %v928, 0.0
  %v1034 = vmax.f32 %v929, 0.0
  %v1035 = vmax.f32 %v930, 0.0
  %v1036 = vmax.f32 %v931, 0.0
  %v1037 = vmax.f32 %v932, 0.0
  %v1038 = vmax.f32 %v933, 0.0
  %v1039 = vmax.f32 %v934, 0.0
  %v1040 = vmax.f32 %v935, 0.0
  %v1041 = vmax.f32 %v936, 0.0
  %v1042 = vmax.f32 %v937, 0.0
  %v1043 = vmax.f32 %v938, 0.0
  %v1044 = vmax.f32 %v939, 0.0
  %v1045 = vmax.f32 %v940, 0.0
  %v1046 = vmax.f32 %v941, 0.0
  %v1047 = vmax.f32 %v942, 0.0
  %v1048 = vmax.f32 %v943, 0.0
  %v1049 = vmax.f32 %v944, 0.0
  %v1050 = vmax.f32 %v945, 0.0
  %v1051 = vmax.f32 %v946, 0.0
  %v1052 = vmax.f32 %v947, 0.0
  %v1053 = vmax.f32 %v948, 0.0
  %v1054 = vmax.f32 %v949, 0.0
  %v1055 = vmax.f32 %v950, 0.0
  %v1056 = vmax.f32 %v951, 0.0
  %v1057 = vmax.f32 %v952, 0.0
  %v1058 = vmax.f32 %v953, 0.0
  %v1059 = vmax.f32 %v954, 0.0
  %v1060 = vmax.f32 %v955, 0.0
  %v1061 = vmax.f32 %v956, 0.0
  %v1062 = vmax.f32 %v957, 0.0
  %v1063 = vmax.f32 %v958, 0.0
  %v1064 = vmax.f32 %v959, 0.0
  %v1065 = vmax.f32 %v960, 0.0
  %v1066 = vmax.f32 %v961, 0.0
  %v1067 = vmax.f32 %v962, 0.0
  %v1068 = vmax.f32 %v963, 0.0
  %v1069 = vmax.f32 %v964, 0.0
  %v1070 = vmax.f32 %v965, 0.0
  %v1071 = vmax.f32 %v966, 0.0
  %v1072 = vmax.f32 %v967, 0.0
  %v1073 = vmax.f32 %v968, 0.0
  %v1074 = vmax.f32 %v969, 0.0
  %v1075 = vmax.f32 %v970, 0.0
  %v1076 = vmax.f32 %v971, 0.0
  %v1077 = vmax.f32 %v972, 0.0
  %v1078 = vmax.f32 %v973, 0.0
  %v1079 = vmax.f32 %v974, 0.0
  %v1080 = vmax.f32 %v975, 0.0
  %v1081 = vmax.f32 %v976, 0.0
  %v1082 = vmax.f32 %v977, 0.0
  %v1083 = vmax.f32 %v978, 0.0
  %v1084 = vmax.f32 %v979, 0.0
  %v1085 = vmax.f32 %v980, 0.0
  %v1086 = vmax.f32 %v981, 0.0
  %v1087 = vmax.f32 %v982, 0.0
  %v1088 = vmax.f32 %v983, 0.0
  %v1089 = vmax.f32 %v984, 0.0
  %v1090 = vmax.f32 %v985, 0.0
  %v1091 = vmax.f32 %v986, 0.0
  %v1092 = vmax.f32 %v987, 0.0
  %v1093 = vmax.f32 %v988, 0.0
  %v1094 = vmax.f32 %v989, 0.0
  %v1095 = vmax.f32 %v990, 0.0
  %v1096 = vmax.f32 %v991, 0.0
  %v1097 = vmax.f32 %v992, 0.0
  %v1098 = vmax.f32 %v993, 0.0
  %v1099 = vmax.f32 %v994, 0.0
  %v1100 = vmax.f32 %v995, 0.0
  %v1101 = vmax.f32 %v996, 0.0
  %v1102 = vmax.f32 %v997, 0.0
  %v1103 = vmax.f32 %v998, 0.0
  %v1104 = vmax.f32 %v999, 0.0
  %v1105 = vmax.f32 %v1000, 0.0
  %v1106 = vmax.f32 %v1001, 0.0
  %v1107 = vmax.f32 %v1002, 0.0
  %v1108 = vmax.f32 %v1003, 0.0
  %v1109 = vmax.f32 %v1004, 0.0
  %v1110 = vmax.f32 %v1005, 0.0
  %v1112 = vlaneseq
  %v1113 = vshrl.u32 %v1112, 7
  %v1114 = vsub.s32 0, %v1113
  %v1115 = vrot.slane %v135, %v1114
  %v1116 = vlaneseq
  %v1117 = vshrl.u32 %v1116, 7
  %v1118 = vsub.s32 1, %v1117
  %v1119 = vrot.slane %v135, %v1118
  %v1120 = vlaneseq
  %v1121 = vshrl.u32 %v1120, 7
  %v1122 = vsub.s32 2, %v1121
  %v1123 = vrot.slane %v135, %v1122
  %v1124 = vlaneseq
  %v1125 = vshrl.u32 %v1124, 7
  %v1126 = vsub.s32 3, %v1125
  %v1127 = vrot.slane %v135, %v1126
  %v1128 = vlaneseq
  %v1129 = vshrl.u32 %v1128, 7
  %v1130 = vsub.s32 4, %v1129
  %v1131 = vrot.slane %v135, %v1130
  %v1132 = vlaneseq
  %v1133 = vshrl.u32 %v1132, 7
  %v1134 = vsub.s32 5, %v1133
  %v1135 = vrot.slane %v135, %v1134
  %v1136 = vlaneseq
  %v1137 = vshrl.u32 %v1136, 7
  %v1138 = vsub.s32 6, %v1137
  %v1139 = vrot.slane %v135, %v1138
  %v1147 = vmul.f32 %v1006, %v1115
  %v1148 = vmul.f32 %v1007, %v1119
  %v1149 = vmul.f32 %v1008, %v1123
  %v1150 = vmul.f32 %v1009, %v1127
  %v1151 = vmul.f32 %v1010, %v1131
  %v1152 = vmul.f32 %v1011, %v1135
  %v1153 = vmul.f32 %v1012, %v1139
  %v1154 = vmul.f32 %v1013, %v1115
  %v1155 = vmul.f32 %v1014, %v1119
  %v1156 = vmul.f32 %v1015, %v1123
  %v1157 = vmul.f32 %v1016, %v1127
  %v1158 = vmul.f32 %v1017, %v1131
  %v1159 = vmul.f32 %v1018, %v1135
  %v1160 = vmul.f32 %v1019, %v1139
  %v1161 = vmul.f32 %v1020, %v1115
  %v1162 = vmul.f32 %v1021, %v1119
  %v1163 = vmul.f32 %v1022, %v1123
  %v1164 = vmul.f32 %v1023, %v1127
  %v1165 = vmul.f32 %v1024, %v1131
  %v1166 = vmul.f32 %v1025, %v1135
  %v1167 = vmul.f32 %v1026, %v1139
  %v1168 = vmul.f32 %v1027, %v1115
  %v1169 = vmul.f32 %v1028, %v1119
  %v1170 = vmul.f32 %v1029, %v1123
  %v1171 = vmul.f32 %v1030, %v1127
  %v1172 = vmul.f32 %v1031, %v1131
  %v1173 = vmul.f32 %v1032, %v1135
  %v1174 = vmul.f32 %v1033, %v1139
  %v1175 = vmul.f32 %v1034, %v1115
  %v1176 = vmul.f32 %v1035, %v1119
  %v1177 = vmul.f32 %v1036, %v1123
  %v1178 = vmul.f32 %v1037, %v1127
  %v1179 = vmul.f32 %v1038, %v1131
  %v1180 = vmul.f32 %v1039, %v1135
  %v1181 = vmul.f32 %v1040, %v1139
  %v1182 = vmul.f32 %v1041, %v1115
  %v1183 = vmul.f32 %v1042, %v1119
  %v1184 = vmul.f32 %v1043, %v1123
  %v1185 = vmul.f32 %v1044, %v1127
  %v1186 = vmul.f32 %v1045, %v1131
  %v1187 = vmul.f32 %v1046, %v1135
  %v1188 = vmul.f32 %v1047, %v1139
  %v1189 = vmul.f32 %v1048, %v1115
  %v1190 = vmul.f32 %v1049, %v1119
  %v1191 = vmul.f32 %v1050, %v1123
  %v1192 = vmul.f32 %v1051, %v1127
  %v1193 = vmul.f32 %v1052, %v1131
  %v1194 = vmul.f32 %v1053, %v1135
  %v1195 = vmul.f32 %v1054, %v1139
  %v1196 = vmul.f32 %v1055, %v1115
  %v1197 = vmul.f32 %v1056, %v1119
  %v1198 = vmul.f32 %v1057, %v1123
  %v1199 = vmul.f32 %v1058, %v1127
  %v1200 = vmul.f32 %v1059, %v1131
  %v1201 = vmul.f32 %v1060, %v1135
  %v1202 = vmul.f32 %v1061, %v1139
  %v1203 = vmul.f32 %v1062, %v1115
  %v1204 = vmul.f32 %v1063, %v1119
  %v1205 = vmul.f32 %v1064, %v1123
  %v1206 = vmul.f32 %v1065, %v1127
  %v1207 = vmul.f32 %v1066, %v1131
  %v1208 = vmul.f32 %v1067, %v1135
  %v1209 = vmul.f32 %v1068, %v1139
  %v1210 = vmul.f32 %v1069, %v1115
  %v1211 = vmul.f32 %v1070, %v1119
  %v1212 = vmul.f32 %v1071, %v1123
  %v1213 = vmul.f32 %v1072, %v1127
  %v1214 = vmul.f32 %v1073, %v1131
  %v1215 = vmul.f32 %v1074, %v1135
  %v1216 = vmul.f32 %v1075, %v1139
  %v1217 = vmul.f32 %v1076, %v1115
  %v1218 = vmul.f32 %v1077, %v1119
  %v1219 = vmul.f32 %v1078, %v1123
  %v1220 = vmul.f32 %v1079, %v1127
  %v1221 = vmul.f32 %v1080, %v1131
  %v1222 = vmul.f32 %v1081, %v1135
  %v1223 = vmul.f32 %v1082, %v1139
  %v1224 = vmul.f32 %v1083, %v1115
  %v1225 = vmul.f32 %v1084, %v1119
  %v1226 = vmul.f32 %v1085, %v1123
  %v1227 = vmul.f32 %v1086, %v1127
  %v1228 = vmul.f32 %v1087, %v1131
  %v1229 = vmul.f32 %v1088, %v1135
  %v1230 = vmul.f32 %v1089, %v1139
  %v1231 = vmul.f32 %v1090, %v1115
  %v1232 = vmul.f32 %v1091, %v1119
  %v1233 = vmul.f32 %v1092, %v1123
  %v1234 = vmul.f32 %v1093, %v1127
  %v1235 = vmul.f32 %v1094, %v1131
  %v1236 = vmul.f32 %v1095, %v1135
  %v1237 = vmul.f32 %v1096, %v1139
  %v1238 = vmul.f32 %v1097, %v1115
  %v1239 = vmul.f32 %v1098, %v1119
  %v1240 = vmul.f32 %v1099, %v1123
  %v1241 = vmul.f32 %v1100, %v1127
  %v1242 = vmul.f32 %v1101, %v1131
  %v1243 = vmul.f32 %v1102, %v1135
  %v1244 = vmul.f32 %v1103, %v1139
  %v1245 = vmul.f32 %v1104, %v1115
  %v1246 = vmul.f32 %v1105, %v1119
  %v1247 = vmul.f32 %v1106, %v1123
  %v1248 = vmul.f32 %v1107, %v1127
  %v1249 = vmul.f32 %v1108, %v1131
  %v1250 = vmul.f32 %v1109, %v1135
  %v1251 = vmul.f32 %v1110, %v1139
  %v1252 = vld [vmem:[%s4] sm:$0xff]
  %v1253 = vld [vmem:[%s4 + $0x8] sm:$0xff]
  %v1254 = vld [vmem:[%s4 + $0x10] sm:$0xff]
  %v1255 = vld [vmem:[%s4 + $0x18] sm:$0xff]
  %v1256 = vld [vmem:[%s4 + $0x20] sm:$0xff]
  %v1257 = vld [vmem:[%s4 + $0x28] sm:$0xff]
  %v1258 = vld [vmem:[%s4 + $0x30] sm:$0xff]
  %v1259 = vld [vmem:[%s4 + $0x38] sm:$0xff]
  %v1260 = vld [vmem:[%s4 + $0x40] sm:$0xff]
  %v1261 = vld [vmem:[%s4 + $0x48] sm:$0xff]
  %v1262 = vld [vmem:[%s4 + $0x50] sm:$0xff]
  %v1263 = vld [vmem:[%s4 + $0x58] sm:$0xff]
  %v1264 = vld [vmem:[%s4 + $0x60] sm:$0xff]
  %v1265 = vld [vmem:[%s4 + $0x68] sm:$0xff]
  %v1266 = vld [vmem:[%s4 + $0x70] sm:$0xff]
  %s1267 = scalar_lea.vmem %s4, 120
  %v1268 = vld [vmem:[%s1267] sm:$0xff]
  %v1269 = vld [vmem:[%s1267 + $0x8] sm:$0xff]
  %v1270 = vld [vmem:[%s1267 + $0x10] sm:$0xff]
  %v1271 = vld [vmem:[%s1267 + $0x18] sm:$0xff]
  %v1272 = vld [vmem:[%s1267 + $0x20] sm:$0xff]
  %v1273 = vld [vmem:[%s1267 + $0x28] sm:$0xff]
  %v1274 = vld [vmem:[%s1267 + $0x30] sm:$0xff]
  %v1275 = vld [vmem:[%s1267 + $0x38] sm:$0xff]
  %v1276 = vld [vmem:[%s1267 + $0x40] sm:$0xff]
  %v1277 = vld [vmem:[%s1267 + $0x48] sm:$0xff]
  %v1278 = vld [vmem:[%s1267 + $0x50] sm:$0xff]
  %v1279 = vld [vmem:[%s1267 + $0x58] sm:$0xff]
  %v1280 = vld [vmem:[%s1267 + $0x60] sm:$0xff]
  %v1281 = vld [vmem:[%s1267 + $0x68] sm:$0xff]
  %v1282 = vld [vmem:[%s1267 + $0x70] sm:$0xff]
  %s1283 = scalar_lea.vmem %s4, 240
  %v1284 = vld [vmem:[%s1283] sm:$0xff]
  %v1285 = vld [vmem:[%s1283 + $0x8] sm:$0xff]
  %v1286 = vld [vmem:[%s1283 + $0x10] sm:$0xff]
  %v1287 = vld [vmem:[%s1283 + $0x18] sm:$0xff]
  %v1288 = vld [vmem:[%s1283 + $0x20] sm:$0xff]
  %v1289 = vld [vmem:[%s1283 + $0x28] sm:$0xff]
  %v1290 = vld [vmem:[%s1283 + $0x30] sm:$0xff]
  %v1291 = vld [vmem:[%s1283 + $0x38] sm:$0xff]
  %v1292 = vld [vmem:[%s1283 + $0x40] sm:$0xff]
  %v1293 = vld [vmem:[%s1283 + $0x48] sm:$0xff]
  %v1294 = vld [vmem:[%s1283 + $0x50] sm:$0xff]
  %v1295 = vld [vmem:[%s1283 + $0x58] sm:$0xff]
  %v1296 = vld [vmem:[%s1283 + $0x60] sm:$0xff]
  %v1297 = vld [vmem:[%s1283 + $0x68] sm:$0xff]
  %v1298 = vld [vmem:[%s1283 + $0x70] sm:$0xff]
  %s1299 = scalar_lea.vmem %s4, 360
  %v1300 = vld [vmem:[%s1299] sm:$0xff]
  %v1301 = vld [vmem:[%s1299 + $0x8] sm:$0xff]
  %v1302 = vld [vmem:[%s1299 + $0x10] sm:$0xff]
  %v1303 = vld [vmem:[%s1299 + $0x18] sm:$0xff]
  %v1304 = vld [vmem:[%s1299 + $0x20] sm:$0xff]
  %v1305 = vld [vmem:[%s1299 + $0x28] sm:$0xff]
  %v1306 = vld [vmem:[%s1299 + $0x30] sm:$0xff]
  %v1307 = vld [vmem:[%s1299 + $0x38] sm:$0xff]
  %v1308 = vld [vmem:[%s1299 + $0x40] sm:$0xff]
  %v1309 = vld [vmem:[%s1299 + $0x48] sm:$0xff]
  %v1310 = vld [vmem:[%s1299 + $0x50] sm:$0xff]
  %v1311 = vld [vmem:[%s1299 + $0x58] sm:$0xff]
  %v1312 = vld [vmem:[%s1299 + $0x60] sm:$0xff]
  %v1313 = vld [vmem:[%s1299 + $0x68] sm:$0xff]
  %v1314 = vld [vmem:[%s1299 + $0x70] sm:$0xff]
  %s1315 = scalar_lea.vmem %s4, 480
  %v1316 = vld [vmem:[%s1315] sm:$0xff]
  %v1317 = vld [vmem:[%s1315 + $0x8] sm:$0xff]
  %v1318 = vld [vmem:[%s1315 + $0x10] sm:$0xff]
  %v1319 = vld [vmem:[%s1315 + $0x18] sm:$0xff]
  %v1320 = vld [vmem:[%s1315 + $0x20] sm:$0xff]
  %v1321 = vld [vmem:[%s1315 + $0x28] sm:$0xff]
  %v1322 = vld [vmem:[%s1315 + $0x30] sm:$0xff]
  %v1323 = vld [vmem:[%s1315 + $0x38] sm:$0xff]
  %v1324 = vld [vmem:[%s1315 + $0x40] sm:$0xff]
  %v1325 = vld [vmem:[%s1315 + $0x48] sm:$0xff]
  %v1326 = vld [vmem:[%s1315 + $0x50] sm:$0xff]
  %v1327 = vld [vmem:[%s1315 + $0x58] sm:$0xff]
  %v1328 = vld [vmem:[%s1315 + $0x60] sm:$0xff]
  %v1329 = vld [vmem:[%s1315 + $0x68] sm:$0xff]
  %v1330 = vld [vmem:[%s1315 + $0x70] sm:$0xff]
  %s1331 = scalar_lea.vmem %s4, 600
  %v1332 = vld [vmem:[%s1331] sm:$0xff]
  %v1333 = vld [vmem:[%s1331 + $0x8] sm:$0xff]
  %v1334 = vld [vmem:[%s1331 + $0x10] sm:$0xff]
  %v1335 = vld [vmem:[%s1331 + $0x18] sm:$0xff]
  %v1336 = vld [vmem:[%s1331 + $0x20] sm:$0xff]
  %v1337 = vld [vmem:[%s1331 + $0x28] sm:$0xff]
  %v1338 = vld [vmem:[%s1331 + $0x30] sm:$0xff]
  %v1339 = vld [vmem:[%s1331 + $0x38] sm:$0xff]
  %v1340 = vld [vmem:[%s1331 + $0x40] sm:$0xff]
  %v1341 = vld [vmem:[%s1331 + $0x48] sm:$0xff]
  %v1342 = vld [vmem:[%s1331 + $0x50] sm:$0xff]
  %v1343 = vld [vmem:[%s1331 + $0x58] sm:$0xff]
  %v1344 = vld [vmem:[%s1331 + $0x60] sm:$0xff]
  %v1345 = vld [vmem:[%s1331 + $0x68] sm:$0xff]
  %v1346 = vld [vmem:[%s1331 + $0x70] sm:$0xff]
  %s1347 = scalar_lea.vmem %s4, 720
  %v1348 = vld [vmem:[%s1347] sm:$0xff]
  %v1349 = vld [vmem:[%s1347 + $0x8] sm:$0xff]
  %v1350 = vld [vmem:[%s1347 + $0x10] sm:$0xff]
  %v1351 = vld [vmem:[%s1347 + $0x18] sm:$0xff]
  %v1352 = vld [vmem:[%s1347 + $0x20] sm:$0xff]
  %v1353 = vld [vmem:[%s1347 + $0x28] sm:$0xff]
  %v1354 = vld [vmem:[%s1347 + $0x30] sm:$0xff]
  %v1355 = vld [vmem:[%s1347 + $0x38] sm:$0xff]
  %v1356 = vld [vmem:[%s1347 + $0x40] sm:$0xff]
  %v1357 = vld [vmem:[%s1347 + $0x48] sm:$0xff]
  %v1358 = vld [vmem:[%s1347 + $0x50] sm:$0xff]
  %v1359 = vld [vmem:[%s1347 + $0x58] sm:$0xff]
  %v1360 = vld [vmem:[%s1347 + $0x60] sm:$0xff]
  %v1361 = vld [vmem:[%s1347 + $0x68] sm:$0xff]
  %v1362 = vld [vmem:[%s1347 + $0x70] sm:$0xff]
  %s1363 = scalar_lea.vmem %s4, 840
  %v1364 = vld [vmem:[%s1363] sm:$0xff]
  %v1365 = vld [vmem:[%s1363 + $0x8] sm:$0xff]
  %v1366 = vld [vmem:[%s1363 + $0x10] sm:$0xff]
  %v1367 = vld [vmem:[%s1363 + $0x18] sm:$0xff]
  %v1368 = vld [vmem:[%s1363 + $0x20] sm:$0xff]
  %v1369 = vld [vmem:[%s1363 + $0x28] sm:$0xff]
  %v1370 = vld [vmem:[%s1363 + $0x30] sm:$0xff]
  %v1371 = vld [vmem:[%s1363 + $0x38] sm:$0xff]
  %v1372 = vld [vmem:[%s1363 + $0x40] sm:$0xff]
  %v1373 = vld [vmem:[%s1363 + $0x48] sm:$0xff]
  %v1374 = vld [vmem:[%s1363 + $0x50] sm:$0xff]
  %v1375 = vld [vmem:[%s1363 + $0x58] sm:$0xff]
  %v1376 = vld [vmem:[%s1363 + $0x60] sm:$0xff]
  %v1377 = vld [vmem:[%s1363 + $0x68] sm:$0xff]
  %v1378 = vld [vmem:[%s1363 + $0x70] sm:$0xff]
  %s1379 = scalar_lea.vmem %s4, 960
  %v1380 = vld [vmem:[%s1379] sm:$0xff]
  %v1381 = vld [vmem:[%s1379 + $0x8] sm:$0xff]
  %v1382 = vld [vmem:[%s1379 + $0x10] sm:$0xff]
  %v1383 = vld [vmem:[%s1379 + $0x18] sm:$0xff]
  %v1384 = vld [vmem:[%s1379 + $0x20] sm:$0xff]
  %v1385 = vld [vmem:[%s1379 + $0x28] sm:$0xff]
  %v1386 = vld [vmem:[%s1379 + $0x30] sm:$0xff]
  %v1387 = vld [vmem:[%s1379 + $0x38] sm:$0xff]
  %v1388 = vld [vmem:[%s1379 + $0x40] sm:$0xff]
  %v1389 = vld [vmem:[%s1379 + $0x48] sm:$0xff]
  %v1390 = vld [vmem:[%s1379 + $0x50] sm:$0xff]
  %v1391 = vld [vmem:[%s1379 + $0x58] sm:$0xff]
  %v1392 = vld [vmem:[%s1379 + $0x60] sm:$0xff]
  %v1393 = vld [vmem:[%s1379 + $0x68] sm:$0xff]
  %v1394 = vld [vmem:[%s1379 + $0x70] sm:$0xff]
  %1395 = vrot.lane.b32.xlu0 %v1147, 1
  %v1396 = vpop.permute.xlu0 %1395
  %1397 = vrot.lane.b32.xlu0 %v1154, 1
  %v1398 = vpop.permute.xlu0 %1397
  %1399 = vrot.lane.b32.xlu0 %v1161, 1
  %v1400 = vpop.permute.xlu0 %1399
  %1401 = vrot.lane.b32.xlu0 %v1168, 1
  %v1402 = vpop.permute.xlu0 %1401
  %1403 = vrot.lane.b32.xlu0 %v1175, 1
  %v1404 = vpop.permute.xlu0 %1403
  %1405 = vrot.lane.b32.xlu0 %v1182, 1
  %v1406 = vpop.permute.xlu0 %1405
  %1407 = vrot.lane.b32.xlu0 %v1189, 1
  %v1408 = vpop.permute.xlu0 %1407
  %1409 = vrot.lane.b32.xlu0 %v1196, 1
  %v1410 = vpop.permute.xlu0 %1409
  %1411 = vrot.lane.b32.xlu0 %v1203, 1
  %v1412 = vpop.permute.xlu0 %1411
  %1413 = vrot.lane.b32.xlu0 %v1210, 1
  %v1414 = vpop.permute.xlu0 %1413
  %1415 = vrot.lane.b32.xlu0 %v1217, 1
  %v1416 = vpop.permute.xlu0 %1415
  %1417 = vrot.lane.b32.xlu0 %v1224, 1
  %v1418 = vpop.permute.xlu0 %1417
  %1419 = vrot.lane.b32.xlu0 %v1231, 1
  %v1420 = vpop.permute.xlu0 %1419
  %1421 = vrot.lane.b32.xlu0 %v1238, 1
  %v1422 = vpop.permute.xlu0 %1421
  %1423 = vrot.lane.b32.xlu0 %v1245, 1
  %v1424 = vpop.permute.xlu0 %1423
  %1425 = vrot.lane.b32.xlu0 %v1148, 1
  %v1426 = vpop.permute.xlu0 %1425
  %1427 = vrot.lane.b32.xlu0 %v1155, 1
  %v1428 = vpop.permute.xlu0 %1427
  %1429 = vrot.lane.b32.xlu0 %v1162, 1
  %v1430 = vpop.permute.xlu0 %1429
  %1431 = vrot.lane.b32.xlu0 %v1169, 1
  %v1432 = vpop.permute.xlu0 %1431
  %1433 = vrot.lane.b32.xlu0 %v1176, 1
  %v1434 = vpop.permute.xlu0 %1433
  %1435 = vrot.lane.b32.xlu0 %v1183, 1
  %v1436 = vpop.permute.xlu0 %1435
  %1437 = vrot.lane.b32.xlu0 %v1190, 1
  %v1438 = vpop.permute.xlu0 %1437
  %1439 = vrot.lane.b32.xlu0 %v1197, 1
  %v1440 = vpop.permute.xlu0 %1439
  %1441 = vrot.lane.b32.xlu0 %v1204, 1
  %v1442 = vpop.permute.xlu0 %1441
  %1443 = vrot.lane.b32.xlu0 %v1211, 1
  %v1444 = vpop.permute.xlu0 %1443
  %1445 = vrot.lane.b32.xlu0 %v1218, 1
  %v1446 = vpop.permute.xlu0 %1445
  %1447 = vrot.lane.b32.xlu0 %v1225, 1
  %v1448 = vpop.permute.xlu0 %1447
  %1449 = vrot.lane.b32.xlu0 %v1232, 1
  %v1450 = vpop.permute.xlu0 %1449
  %1451 = vrot.lane.b32.xlu0 %v1239, 1
  %v1452 = vpop.permute.xlu0 %1451
  %1453 = vrot.lane.b32.xlu0 %v1246, 1
  %v1454 = vpop.permute.xlu0 %1453
  %1455 = vrot.lane.b32.xlu0 %v1149, 1
  %v1456 = vpop.permute.xlu0 %1455
  %1457 = vrot.lane.b32.xlu0 %v1156, 1
  %v1458 = vpop.permute.xlu0 %1457
  %1459 = vrot.lane.b32.xlu0 %v1163, 1
  %v1460 = vpop.permute.xlu0 %1459
  %1461 = vrot.lane.b32.xlu0 %v1170, 1
  %v1462 = vpop.permute.xlu0 %1461
  %1463 = vrot.lane.b32.xlu0 %v1177, 1
  %v1464 = vpop.permute.xlu0 %1463
  %1465 = vrot.lane.b32.xlu0 %v1184, 1
  %v1466 = vpop.permute.xlu0 %1465
  %1467 = vrot.lane.b32.xlu0 %v1191, 1
  %v1468 = vpop.permute.xlu0 %1467
  %1469 = vrot.lane.b32.xlu0 %v1198, 1
  %v1470 = vpop.permute.xlu0 %1469
  %1471 = vrot.lane.b32.xlu0 %v1205, 1
  %v1472 = vpop.permute.xlu0 %1471
  %1473 = vrot.lane.b32.xlu0 %v1212, 1
  %v1474 = vpop.permute.xlu0 %1473
  %1475 = vrot.lane.b32.xlu0 %v1219, 1
  %v1476 = vpop.permute.xlu0 %1475
  %1477 = vrot.lane.b32.xlu0 %v1226, 1
  %v1478 = vpop.permute.xlu0 %1477
  %1479 = vrot.lane.b32.xlu0 %v1233, 1
  %v1480 = vpop.permute.xlu0 %1479
  %1481 = vrot.lane.b32.xlu0 %v1240, 1
  %v1482 = vpop.permute.xlu0 %1481
  %1483 = vrot.lane.b32.xlu0 %v1247, 1
  %v1484 = vpop.permute.xlu0 %1483
  %1485 = vrot.lane.b32.xlu0 %v1150, 1
  %v1486 = vpop.permute.xlu0 %1485
  %1487 = vrot.lane.b32.xlu0 %v1157, 1
  %v1488 = vpop.permute.xlu0 %1487
  %1489 = vrot.lane.b32.xlu0 %v1164, 1
  %v1490 = vpop.permute.xlu0 %1489
  %1491 = vrot.lane.b32.xlu0 %v1171, 1
  %v1492 = vpop.permute.xlu0 %1491
  %1493 = vrot.lane.b32.xlu0 %v1178, 1
  %v1494 = vpop.permute.xlu0 %1493
  %1495 = vrot.lane.b32.xlu0 %v1185, 1
  %v1496 = vpop.permute.xlu0 %1495
  %1497 = vrot.lane.b32.xlu0 %v1192, 1
  %v1498 = vpop.permute.xlu0 %1497
  %1499 = vrot.lane.b32.xlu0 %v1199, 1
  %v1500 = vpop.permute.xlu0 %1499
  %1501 = vrot.lane.b32.xlu0 %v1206, 1
  %v1502 = vpop.permute.xlu0 %1501
  %1503 = vrot.lane.b32.xlu0 %v1213, 1
  %v1504 = vpop.permute.xlu0 %1503
  %1505 = vrot.lane.b32.xlu0 %v1220, 1
  %v1506 = vpop.permute.xlu0 %1505
  %1507 = vrot.lane.b32.xlu0 %v1227, 1
  %v1508 = vpop.permute.xlu0 %1507
  %1509 = vrot.lane.b32.xlu0 %v1234, 1
  %v1510 = vpop.permute.xlu0 %1509
  %1511 = vrot.lane.b32.xlu0 %v1241, 1
  %v1512 = vpop.permute.xlu0 %1511
  %1513 = vrot.lane.b32.xlu0 %v1248, 1
  %v1514 = vpop.permute.xlu0 %1513
  %1515 = vrot.lane.b32.xlu0 %v1151, 1
  %v1516 = vpop.permute.xlu0 %1515
  %1517 = vrot.lane.b32.xlu0 %v1158, 1
  %v1518 = vpop.permute.xlu0 %1517
  %1519 = vrot.lane.b32.xlu0 %v1165, 1
  %v1520 = vpop.permute.xlu0 %1519
  %1521 = vrot.lane.b32.xlu0 %v1172, 1
  %v1522 = vpop.permute.xlu0 %1521
  %1523 = vrot.lane.b32.xlu0 %v1179, 1
  %v1524 = vpop.permute.xlu0 %1523
  %1525 = vrot.lane.b32.xlu0 %v1186, 1
  %v1526 = vpop.permute.xlu0 %1525
  %1527 = vrot.lane.b32.xlu0 %v1193, 1
  %v1528 = vpop.permute.xlu0 %1527
  %1529 = vrot.lane.b32.xlu0 %v1200, 1
  %v1530 = vpop.permute.xlu0 %1529
  %1531 = vrot.lane.b32.xlu0 %v1207, 1
  %v1532 = vpop.permute.xlu0 %1531
  %1533 = vrot.lane.b32.xlu0 %v1214, 1
  %v1534 = vpop.permute.xlu0 %1533
  %1535 = vrot.lane.b32.xlu0 %v1221, 1
  %v1536 = vpop.permute.xlu0 %1535
  %1537 = vrot.lane.b32.xlu0 %v1228, 1
  %v1538 = vpop.permute.xlu0 %1537
  %1539 = vrot.lane.b32.xlu0 %v1235, 1
  %v1540 = vpop.permute.xlu0 %1539
  %1541 = vrot.lane.b32.xlu0 %v1242, 1
  %v1542 = vpop.permute.xlu0 %1541
  %1543 = vrot.lane.b32.xlu0 %v1249, 1
  %v1544 = vpop.permute.xlu0 %1543
  %1545 = vrot.lane.b32.xlu0 %v1152, 1
  %v1546 = vpop.permute.xlu0 %1545
  %1547 = vrot.lane.b32.xlu0 %v1159, 1
  %v1548 = vpop.permute.xlu0 %1547
  %1549 = vrot.lane.b32.xlu0 %v1166, 1
  %v1550 = vpop.permute.xlu0 %1549
  %1551 = vrot.lane.b32.xlu0 %v1173, 1
  %v1552 = vpop.permute.xlu0 %1551
  %1553 = vrot.lane.b32.xlu0 %v1180, 1
  %v1554 = vpop.permute.xlu0 %1553
  %1555 = vrot.lane.b32.xlu0 %v1187, 1
  %v1556 = vpop.permute.xlu0 %1555
  %1557 = vrot.lane.b32.xlu0 %v1194, 1
  %v1558 = vpop.permute.xlu0 %1557
  %1559 = vrot.lane.b32.xlu0 %v1201, 1
  %v1560 = vpop.permute.xlu0 %1559
  %1561 = vrot.lane.b32.xlu0 %v1208, 1
  %v1562 = vpop.permute.xlu0 %1561
  %1563 = vrot.lane.b32.xlu0 %v1215, 1
  %v1564 = vpop.permute.xlu0 %1563
  %1565 = vrot.lane.b32.xlu0 %v1222, 1
  %v1566 = vpop.permute.xlu0 %1565
  %1567 = vrot.lane.b32.xlu0 %v1229, 1
  %v1568 = vpop.permute.xlu0 %1567
  %1569 = vrot.lane.b32.xlu0 %v1236, 1
  %v1570 = vpop.permute.xlu0 %1569
  %1571 = vrot.lane.b32.xlu0 %v1243, 1
  %v1572 = vpop.permute.xlu0 %1571
  %1573 = vrot.lane.b32.xlu0 %v1250, 1
  %v1574 = vpop.permute.xlu0 %1573
  %1575 = vrot.lane.b32.xlu0 %v1153, 1
  %v1576 = vpop.permute.xlu0 %1575
  %1577 = vrot.lane.b32.xlu0 %v1160, 1
  %v1578 = vpop.permute.xlu0 %1577
  %1579 = vrot.lane.b32.xlu0 %v1167, 1
  %v1580 = vpop.permute.xlu0 %1579
  %1581 = vrot.lane.b32.xlu0 %v1174, 1
  %v1582 = vpop.permute.xlu0 %1581
  %1583 = vrot.lane.b32.xlu0 %v1181, 1
  %v1584 = vpop.permute.xlu0 %1583
  %1585 = vrot.lane.b32.xlu0 %v1188, 1
  %v1586 = vpop.permute.xlu0 %1585
  %1587 = vrot.lane.b32.xlu0 %v1195, 1
  %v1588 = vpop.permute.xlu0 %1587
  %1589 = vrot.lane.b32.xlu0 %v1202, 1
  %v1590 = vpop.permute.xlu0 %1589
  %1591 = vrot.lane.b32.xlu0 %v1209, 1
  %v1592 = vpop.permute.xlu0 %1591
  %1593 = vrot.lane.b32.xlu0 %v1216, 1
  %v1594 = vpop.permute.xlu0 %1593
  %1595 = vrot.lane.b32.xlu0 %v1223, 1
  %v1596 = vpop.permute.xlu0 %1595
  %1597 = vrot.lane.b32.xlu0 %v1230, 1
  %v1598 = vpop.permute.xlu0 %1597
  %1599 = vrot.lane.b32.xlu0 %v1237, 1
  %v1600 = vpop.permute.xlu0 %1599
  %1601 = vrot.lane.b32.xlu0 %v1244, 1
  %v1602 = vpop.permute.xlu0 %1601
  %1603 = vrot.lane.b32.xlu0 %v1251, 1
  %v1604 = vpop.permute.xlu0 %1603
  %v1605 = vlaneseq
  %v1606 = vand.u32 %v1605, 127
  %vm1607 = vcmp.lt.s32.totalorder %v1606, 1
  %v1608 = vsel %vm1607, %v1546, %v1576
  %v1609 = vsel %vm1607, %v1548, %v1578
  %v1610 = vsel %vm1607, %v1550, %v1580
  %v1611 = vsel %vm1607, %v1552, %v1582
  %v1612 = vsel %vm1607, %v1554, %v1584
  %v1613 = vsel %vm1607, %v1556, %v1586
  %v1614 = vsel %vm1607, %v1558, %v1588
  %v1615 = vsel %vm1607, %v1560, %v1590
  %v1616 = vsel %vm1607, %v1562, %v1592
  %v1617 = vsel %vm1607, %v1564, %v1594
  %v1618 = vsel %vm1607, %v1566, %v1596
  %v1619 = vsel %vm1607, %v1568, %v1598
  %v1620 = vsel %vm1607, %v1570, %v1600
  %v1621 = vsel %vm1607, %v1572, %v1602
  %v1622 = vsel %vm1607, %v1574, %v1604
  %v1623 = vsel %vm1607, %v1516, %v1546
  %v1624 = vsel %vm1607, %v1518, %v1548
  %v1625 = vsel %vm1607, %v1520, %v1550
  %v1626 = vsel %vm1607, %v1522, %v1552
  %v1627 = vsel %vm1607, %v1524, %v1554
  %v1628 = vsel %vm1607, %v1526, %v1556
  %v1629 = vsel %vm1607, %v1528, %v1558
  %v1630 = vsel %vm1607, %v1530, %v1560
  %v1631 = vsel %vm1607, %v1532, %v1562
  %v1632 = vsel %vm1607, %v1534, %v1564
  %v1633 = vsel %vm1607, %v1536, %v1566
  %v1634 = vsel %vm1607, %v1538, %v1568
  %v1635 = vsel %vm1607, %v1540, %v1570
  %v1636 = vsel %vm1607, %v1542, %v1572
  %v1637 = vsel %vm1607, %v1544, %v1574
  %v1638 = vsel %vm1607, %v1486, %v1516
  %v1639 = vsel %vm1607, %v1488, %v1518
  %v1640 = vsel %vm1607, %v1490, %v1520
  %v1641 = vsel %vm1607, %v1492, %v1522
  %v1642 = vsel %vm1607, %v1494, %v1524
  %v1643 = vsel %vm1607, %v1496, %v1526
  %v1644 = vsel %vm1607, %v1498, %v1528
  %v1645 = vsel %vm1607, %v1500, %v1530
  %v1646 = vsel %vm1607, %v1502, %v1532
  %v1647 = vsel %vm1607, %v1504, %v1534
  %v1648 = vsel %vm1607, %v1506, %v1536
  %v1649 = vsel %vm1607, %v1508, %v1538
  %v1650 = vsel %vm1607, %v1510, %v1540
  %v1651 = vsel %vm1607, %v1512, %v1542
  %v1652 = vsel %vm1607, %v1514, %v1544
  %v1653 = vsel %vm1607, %v1456, %v1486
  %v1654 = vsel %vm1607, %v1458, %v1488
  %v1655 = vsel %vm1607, %v1460, %v1490
  %v1656 = vsel %vm1607, %v1462, %v1492
  %v1657 = vsel %vm1607, %v1464, %v1494
  %v1658 = vsel %vm1607, %v1466, %v1496
  %v1659 = vsel %vm1607, %v1468, %v1498
  %v1660 = vsel %vm1607, %v1470, %v1500
  %v1661 = vsel %vm1607, %v1472, %v1502
  %v1662 = vsel %vm1607, %v1474, %v1504
  %v1663 = vsel %vm1607, %v1476, %v1506
  %v1664 = vsel %vm1607, %v1478, %v1508
  %v1665 = vsel %vm1607, %v1480, %v1510
  %v1666 = vsel %vm1607, %v1482, %v1512
  %v1667 = vsel %vm1607, %v1484, %v1514
  %v1668 = vsel %vm1607, %v1426, %v1456
  %v1669 = vsel %vm1607, %v1428, %v1458
  %v1670 = vsel %vm1607, %v1430, %v1460
  %v1671 = vsel %vm1607, %v1432, %v1462
  %v1672 = vsel %vm1607, %v1434, %v1464
  %v1673 = vsel %vm1607, %v1436, %v1466
  %v1674 = vsel %vm1607, %v1438, %v1468
  %v1675 = vsel %vm1607, %v1440, %v1470
  %v1676 = vsel %vm1607, %v1442, %v1472
  %v1677 = vsel %vm1607, %v1444, %v1474
  %v1678 = vsel %vm1607, %v1446, %v1476
  %v1679 = vsel %vm1607, %v1448, %v1478
  %v1680 = vsel %vm1607, %v1450, %v1480
  %v1681 = vsel %vm1607, %v1452, %v1482
  %v1682 = vsel %vm1607, %v1454, %v1484
  %v1683 = vsel %vm1607, %v1396, %v1426
  %v1684 = vsel %vm1607, %v1398, %v1428
  %v1685 = vsel %vm1607, %v1400, %v1430
  %v1686 = vsel %vm1607, %v1402, %v1432
  %v1687 = vsel %vm1607, %v1404, %v1434
  %v1688 = vsel %vm1607, %v1406, %v1436
  %v1689 = vsel %vm1607, %v1408, %v1438
  %v1690 = vsel %vm1607, %v1410, %v1440
  %v1691 = vsel %vm1607, %v1412, %v1442
  %v1692 = vsel %vm1607, %v1414, %v1444
  %v1693 = vsel %vm1607, %v1416, %v1446
  %v1694 = vsel %vm1607, %v1418, %v1448
  %v1695 = vsel %vm1607, %v1420, %v1450
  %v1696 = vsel %vm1607, %v1422, %v1452
  %v1697 = vsel %vm1607, %v1424, %v1454
  %v1698 = vsel %vm1607, %v1576, %v1396
  %v1699 = vsel %vm1607, %v1578, %v1398
  %v1700 = vsel %vm1607, %v1580, %v1400
  %v1701 = vsel %vm1607, %v1582, %v1402
  %v1702 = vsel %vm1607, %v1584, %v1404
  %v1703 = vsel %vm1607, %v1586, %v1406
  %v1704 = vsel %vm1607, %v1588, %v1408
  %v1705 = vsel %vm1607, %v1590, %v1410
  %v1706 = vsel %vm1607, %v1592, %v1412
  %v1707 = vsel %vm1607, %v1594, %v1414
  %v1708 = vsel %vm1607, %v1596, %v1416
  %v1709 = vsel %vm1607, %v1598, %v1418
  %v1710 = vsel %vm1607, %v1600, %v1420
  %v1711 = vsel %vm1607, %v1602, %v1422
  %v1712 = vsel %vm1607, %v1604, %v1424
  %v1714 = vlaneseq
  %v1715 = vshrl.u32 %v1714, 7
  %v1716 = vsub.s32 0, %v1715
  %v1717 = vrot.slane %v131, %v1716
  %v1718 = vlaneseq
  %v1719 = vshrl.u32 %v1718, 7
  %v1720 = vsub.s32 1, %v1719
  %v1721 = vrot.slane %v131, %v1720
  %v1722 = vlaneseq
  %v1723 = vshrl.u32 %v1722, 7
  %v1724 = vsub.s32 2, %v1723
  %v1725 = vrot.slane %v131, %v1724
  %v1726 = vlaneseq
  %v1727 = vshrl.u32 %v1726, 7
  %v1728 = vsub.s32 3, %v1727
  %v1729 = vrot.slane %v131, %v1728
  %v1730 = vlaneseq
  %v1731 = vshrl.u32 %v1730, 7
  %v1732 = vsub.s32 4, %v1731
  %v1733 = vrot.slane %v131, %v1732
  %v1734 = vlaneseq
  %v1735 = vshrl.u32 %v1734, 7
  %v1736 = vsub.s32 5, %v1735
  %v1737 = vrot.slane %v131, %v1736
  %v1738 = vlaneseq
  %v1739 = vshrl.u32 %v1738, 7
  %v1740 = vsub.s32 6, %v1739
  %v1741 = vrot.slane %v131, %v1740
  %v1749 = vmul.f32 %v1698, %v1717
  %v1750 = vmul.f32 %v1683, %v1721
  %v1751 = vmul.f32 %v1668, %v1725
  %v1752 = vmul.f32 %v1653, %v1729
  %v1753 = vmul.f32 %v1638, %v1733
  %v1754 = vmul.f32 %v1623, %v1737
  %v1755 = vmul.f32 %v1608, %v1741
  %v1756 = vmul.f32 %v1699, %v1717
  %v1757 = vmul.f32 %v1684, %v1721
  %v1758 = vmul.f32 %v1669, %v1725
  %v1759 = vmul.f32 %v1654, %v1729
  %v1760 = vmul.f32 %v1639, %v1733
  %v1761 = vmul.f32 %v1624, %v1737
  %v1762 = vmul.f32 %v1609, %v1741
  %v1763 = vmul.f32 %v1700, %v1717
  %v1764 = vmul.f32 %v1685, %v1721
  %v1765 = vmul.f32 %v1670, %v1725
  %v1766 = vmul.f32 %v1655, %v1729
  %v1767 = vmul.f32 %v1640, %v1733
  %v1768 = vmul.f32 %v1625, %v1737
  %v1769 = vmul.f32 %v1610, %v1741
  %v1770 = vmul.f32 %v1701, %v1717
  %v1771 = vmul.f32 %v1686, %v1721
  %v1772 = vmul.f32 %v1671, %v1725
  %v1773 = vmul.f32 %v1656, %v1729
  %v1774 = vmul.f32 %v1641, %v1733
  %v1775 = vmul.f32 %v1626, %v1737
  %v1776 = vmul.f32 %v1611, %v1741
  %v1777 = vmul.f32 %v1702, %v1717
  %v1778 = vmul.f32 %v1687, %v1721
  %v1779 = vmul.f32 %v1672, %v1725
  %v1780 = vmul.f32 %v1657, %v1729
  %v1781 = vmul.f32 %v1642, %v1733
  %v1782 = vmul.f32 %v1627, %v1737
  %v1783 = vmul.f32 %v1612, %v1741
  %v1784 = vmul.f32 %v1703, %v1717
  %v1785 = vmul.f32 %v1688, %v1721
  %v1786 = vmul.f32 %v1673, %v1725
  %v1787 = vmul.f32 %v1658, %v1729
  %v1788 = vmul.f32 %v1643, %v1733
  %v1789 = vmul.f32 %v1628, %v1737
  %v1790 = vmul.f32 %v1613, %v1741
  %v1791 = vmul.f32 %v1704, %v1717
  %v1792 = vmul.f32 %v1689, %v1721
  %v1793 = vmul.f32 %v1674, %v1725
  %v1794 = vmul.f32 %v1659, %v1729
  %v1795 = vmul.f32 %v1644, %v1733
  %v1796 = vmul.f32 %v1629, %v1737
  %v1797 = vmul.f32 %v1614, %v1741
  %v1798 = vmul.f32 %v1705, %v1717
  %v1799 = vmul.f32 %v1690, %v1721
  %v1800 = vmul.f32 %v1675, %v1725
  %v1801 = vmul.f32 %v1660, %v1729
  %v1802 = vmul.f32 %v1645, %v1733
  %v1803 = vmul.f32 %v1630, %v1737
  %v1804 = vmul.f32 %v1615, %v1741
  %v1805 = vmul.f32 %v1706, %v1717
  %v1806 = vmul.f32 %v1691, %v1721
  %v1807 = vmul.f32 %v1676, %v1725
  %v1808 = vmul.f32 %v1661, %v1729
  %v1809 = vmul.f32 %v1646, %v1733
  %v1810 = vmul.f32 %v1631, %v1737
  %v1811 = vmul.f32 %v1616, %v1741
  %v1812 = vmul.f32 %v1707, %v1717
  %v1813 = vmul.f32 %v1692, %v1721
  %v1814 = vmul.f32 %v1677, %v1725
  %v1815 = vmul.f32 %v1662, %v1729
  %v1816 = vmul.f32 %v1647, %v1733
  %v1817 = vmul.f32 %v1632, %v1737
  %v1818 = vmul.f32 %v1617, %v1741
  %v1819 = vmul.f32 %v1708, %v1717
  %v1820 = vmul.f32 %v1693, %v1721
  %v1821 = vmul.f32 %v1678, %v1725
  %v1822 = vmul.f32 %v1663, %v1729
  %v1823 = vmul.f32 %v1648, %v1733
  %v1824 = vmul.f32 %v1633, %v1737
  %v1825 = vmul.f32 %v1618, %v1741
  %v1826 = vmul.f32 %v1709, %v1717
  %v1827 = vmul.f32 %v1694, %v1721
  %v1828 = vmul.f32 %v1679, %v1725
  %v1829 = vmul.f32 %v1664, %v1729
  %v1830 = vmul.f32 %v1649, %v1733
  %v1831 = vmul.f32 %v1634, %v1737
  %v1832 = vmul.f32 %v1619, %v1741
  %v1833 = vmul.f32 %v1710, %v1717
  %v1834 = vmul.f32 %v1695, %v1721
  %v1835 = vmul.f32 %v1680, %v1725
  %v1836 = vmul.f32 %v1665, %v1729
  %v1837 = vmul.f32 %v1650, %v1733
  %v1838 = vmul.f32 %v1635, %v1737
  %v1839 = vmul.f32 %v1620, %v1741
  %v1840 = vmul.f32 %v1711, %v1717
  %v1841 = vmul.f32 %v1696, %v1721
  %v1842 = vmul.f32 %v1681, %v1725
  %v1843 = vmul.f32 %v1666, %v1729
  %v1844 = vmul.f32 %v1651, %v1733
  %v1845 = vmul.f32 %v1636, %v1737
  %v1846 = vmul.f32 %v1621, %v1741
  %v1847 = vmul.f32 %v1712, %v1717
  %v1848 = vmul.f32 %v1697, %v1721
  %v1849 = vmul.f32 %v1682, %v1725
  %v1850 = vmul.f32 %v1667, %v1729
  %v1851 = vmul.f32 %v1652, %v1733
  %v1852 = vmul.f32 %v1637, %v1737
  %v1853 = vmul.f32 %v1622, %v1741
  %1854 = vrot.lane.b32.xlu0 %v1147, 127
  %v1855 = vpop.permute.xlu0 %1854
  %1856 = vrot.lane.b32.xlu0 %v1154, 127
  %v1857 = vpop.permute.xlu0 %1856
  %1858 = vrot.lane.b32.xlu0 %v1161, 127
  %v1859 = vpop.permute.xlu0 %1858
  %1860 = vrot.lane.b32.xlu0 %v1168, 127
  %v1861 = vpop.permute.xlu0 %1860
  %1862 = vrot.lane.b32.xlu0 %v1175, 127
  %v1863 = vpop.permute.xlu0 %1862
  %1864 = vrot.lane.b32.xlu0 %v1182, 127
  %v1865 = vpop.permute.xlu0 %1864
  %1866 = vrot.lane.b32.xlu0 %v1189, 127
  %v1867 = vpop.permute.xlu0 %1866
  %1868 = vrot.lane.b32.xlu0 %v1196, 127
  %v1869 = vpop.permute.xlu0 %1868
  %1870 = vrot.lane.b32.xlu0 %v1203, 127
  %v1871 = vpop.permute.xlu0 %1870
  %1872 = vrot.lane.b32.xlu0 %v1210, 127
  %v1873 = vpop.permute.xlu0 %1872
  %1874 = vrot.lane.b32.xlu0 %v1217, 127
  %v1875 = vpop.permute.xlu0 %1874
  %1876 = vrot.lane.b32.xlu0 %v1224, 127
  %v1877 = vpop.permute.xlu0 %1876
  %1878 = vrot.lane.b32.xlu0 %v1231, 127
  %v1879 = vpop.permute.xlu0 %1878
  %1880 = vrot.lane.b32.xlu0 %v1238, 127
  %v1881 = vpop.permute.xlu0 %1880
  %1882 = vrot.lane.b32.xlu0 %v1245, 127
  %v1883 = vpop.permute.xlu0 %1882
  %1884 = vrot.lane.b32.xlu0 %v1148, 127
  %v1885 = vpop.permute.xlu0 %1884
  %1886 = vrot.lane.b32.xlu0 %v1155, 127
  %v1887 = vpop.permute.xlu0 %1886
  %1888 = vrot.lane.b32.xlu0 %v1162, 127
  %v1889 = vpop.permute.xlu0 %1888
  %1890 = vrot.lane.b32.xlu0 %v1169, 127
  %v1891 = vpop.permute.xlu0 %1890
  %1892 = vrot.lane.b32.xlu0 %v1176, 127
  %v1893 = vpop.permute.xlu0 %1892
  %1894 = vrot.lane.b32.xlu0 %v1183, 127
  %v1895 = vpop.permute.xlu0 %1894
  %1896 = vrot.lane.b32.xlu0 %v1190, 127
  %v1897 = vpop.permute.xlu0 %1896
  %1898 = vrot.lane.b32.xlu0 %v1197, 127
  %v1899 = vpop.permute.xlu0 %1898
  %1900 = vrot.lane.b32.xlu0 %v1204, 127
  %v1901 = vpop.permute.xlu0 %1900
  %1902 = vrot.lane.b32.xlu0 %v1211, 127
  %v1903 = vpop.permute.xlu0 %1902
  %1904 = vrot.lane.b32.xlu0 %v1218, 127
  %v1905 = vpop.permute.xlu0 %1904
  %1906 = vrot.lane.b32.xlu0 %v1225, 127
  %v1907 = vpop.permute.xlu0 %1906
  %1908 = vrot.lane.b32.xlu0 %v1232, 127
  %v1909 = vpop.permute.xlu0 %1908
  %1910 = vrot.lane.b32.xlu0 %v1239, 127
  %v1911 = vpop.permute.xlu0 %1910
  %1912 = vrot.lane.b32.xlu0 %v1246, 127
  %v1913 = vpop.permute.xlu0 %1912
  %1914 = vrot.lane.b32.xlu0 %v1149, 127
  %v1915 = vpop.permute.xlu0 %1914
  %1916 = vrot.lane.b32.xlu0 %v1156, 127
  %v1917 = vpop.permute.xlu0 %1916
  %1918 = vrot.lane.b32.xlu0 %v1163, 127
  %v1919 = vpop.permute.xlu0 %1918
  %1920 = vrot.lane.b32.xlu0 %v1170, 127
  %v1921 = vpop.permute.xlu0 %1920
  %1922 = vrot.lane.b32.xlu0 %v1177, 127
  %v1923 = vpop.permute.xlu0 %1922
  %1924 = vrot.lane.b32.xlu0 %v1184, 127
  %v1925 = vpop.permute.xlu0 %1924
  %1926 = vrot.lane.b32.xlu0 %v1191, 127
  %v1927 = vpop.permute.xlu0 %1926
  %1928 = vrot.lane.b32.xlu0 %v1198, 127
  %v1929 = vpop.permute.xlu0 %1928
  %1930 = vrot.lane.b32.xlu0 %v1205, 127
  %v1931 = vpop.permute.xlu0 %1930
  %1932 = vrot.lane.b32.xlu0 %v1212, 127
  %v1933 = vpop.permute.xlu0 %1932
  %1934 = vrot.lane.b32.xlu0 %v1219, 127
  %v1935 = vpop.permute.xlu0 %1934
  %1936 = vrot.lane.b32.xlu0 %v1226, 127
  %v1937 = vpop.permute.xlu0 %1936
  %1938 = vrot.lane.b32.xlu0 %v1233, 127
  %v1939 = vpop.permute.xlu0 %1938
  %1940 = vrot.lane.b32.xlu0 %v1240, 127
  %v1941 = vpop.permute.xlu0 %1940
  %1942 = vrot.lane.b32.xlu0 %v1247, 127
  %v1943 = vpop.permute.xlu0 %1942
  %1944 = vrot.lane.b32.xlu0 %v1150, 127
  %v1945 = vpop.permute.xlu0 %1944
  %1946 = vrot.lane.b32.xlu0 %v1157, 127
  %v1947 = vpop.permute.xlu0 %1946
  %1948 = vrot.lane.b32.xlu0 %v1164, 127
  %v1949 = vpop.permute.xlu0 %1948
  %1950 = vrot.lane.b32.xlu0 %v1171, 127
  %v1951 = vpop.permute.xlu0 %1950
  %1952 = vrot.lane.b32.xlu0 %v1178, 127
  %v1953 = vpop.permute.xlu0 %1952
  %1954 = vrot.lane.b32.xlu0 %v1185, 127
  %v1955 = vpop.permute.xlu0 %1954
  %1956 = vrot.lane.b32.xlu0 %v1192, 127
  %v1957 = vpop.permute.xlu0 %1956
  %1958 = vrot.lane.b32.xlu0 %v1199, 127
  %v1959 = vpop.permute.xlu0 %1958
  %1960 = vrot.lane.b32.xlu0 %v1206, 127
  %v1961 = vpop.permute.xlu0 %1960
  %1962 = vrot.lane.b32.xlu0 %v1213, 127
  %v1963 = vpop.permute.xlu0 %1962
  %1964 = vrot.lane.b32.xlu0 %v1220, 127
  %v1965 = vpop.permute.xlu0 %1964
  %1966 = vrot.lane.b32.xlu0 %v1227, 127
  %v1967 = vpop.permute.xlu0 %1966
  %1968 = vrot.lane.b32.xlu0 %v1234, 127
  %v1969 = vpop.permute.xlu0 %1968
  %1970 = vrot.lane.b32.xlu0 %v1241, 127
  %v1971 = vpop.permute.xlu0 %1970
  %1972 = vrot.lane.b32.xlu0 %v1248, 127
  %v1973 = vpop.permute.xlu0 %1972
  %1974 = vrot.lane.b32.xlu0 %v1151, 127
  %v1975 = vpop.permute.xlu0 %1974
  %1976 = vrot.lane.b32.xlu0 %v1158, 127
  %v1977 = vpop.permute.xlu0 %1976
  %1978 = vrot.lane.b32.xlu0 %v1165, 127
  %v1979 = vpop.permute.xlu0 %1978
  %1980 = vrot.lane.b32.xlu0 %v1172, 127
  %v1981 = vpop.permute.xlu0 %1980
  %1982 = vrot.lane.b32.xlu0 %v1179, 127
  %v1983 = vpop.permute.xlu0 %1982
  %1984 = vrot.lane.b32.xlu0 %v1186, 127
  %v1985 = vpop.permute.xlu0 %1984
  %1986 = vrot.lane.b32.xlu0 %v1193, 127
  %v1987 = vpop.permute.xlu0 %1986
  %1988 = vrot.lane.b32.xlu0 %v1200, 127
  %v1989 = vpop.permute.xlu0 %1988
  %1990 = vrot.lane.b32.xlu0 %v1207, 127
  %v1991 = vpop.permute.xlu0 %1990
  %1992 = vrot.lane.b32.xlu0 %v1214, 127
  %v1993 = vpop.permute.xlu0 %1992
  %1994 = vrot.lane.b32.xlu0 %v1221, 127
  %v1995 = vpop.permute.xlu0 %1994
  %1996 = vrot.lane.b32.xlu0 %v1228, 127
  %v1997 = vpop.permute.xlu0 %1996
  %1998 = vrot.lane.b32.xlu0 %v1235, 127
  %v1999 = vpop.permute.xlu0 %1998
  %2000 = vrot.lane.b32.xlu0 %v1242, 127
  %v2001 = vpop.permute.xlu0 %2000
  %2002 = vrot.lane.b32.xlu0 %v1249, 127
  %v2003 = vpop.permute.xlu0 %2002
  %2004 = vrot.lane.b32.xlu0 %v1152, 127
  %v2005 = vpop.permute.xlu0 %2004
  %2006 = vrot.lane.b32.xlu0 %v1159, 127
  %v2007 = vpop.permute.xlu0 %2006
  %2008 = vrot.lane.b32.xlu0 %v1166, 127
  %v2009 = vpop.permute.xlu0 %2008
  %2010 = vrot.lane.b32.xlu0 %v1173, 127
  %v2011 = vpop.permute.xlu0 %2010
  %2012 = vrot.lane.b32.xlu0 %v1180, 127
  %v2013 = vpop.permute.xlu0 %2012
  %2014 = vrot.lane.b32.xlu0 %v1187, 127
  %v2015 = vpop.permute.xlu0 %2014
  %2016 = vrot.lane.b32.xlu0 %v1194, 127
  %v2017 = vpop.permute.xlu0 %2016
  %2018 = vrot.lane.b32.xlu0 %v1201, 127
  %v2019 = vpop.permute.xlu0 %2018
  %2020 = vrot.lane.b32.xlu0 %v1208, 127
  %v2021 = vpop.permute.xlu0 %2020
  %2022 = vrot.lane.b32.xlu0 %v1215, 127
  %v2023 = vpop.permute.xlu0 %2022
  %2024 = vrot.lane.b32.xlu0 %v1222, 127
  %v2025 = vpop.permute.xlu0 %2024
  %2026 = vrot.lane.b32.xlu0 %v1229, 127
  %v2027 = vpop.permute.xlu0 %2026
  %2028 = vrot.lane.b32.xlu0 %v1236, 127
  %v2029 = vpop.permute.xlu0 %2028
  %2030 = vrot.lane.b32.xlu0 %v1243, 127
  %v2031 = vpop.permute.xlu0 %2030
  %2032 = vrot.lane.b32.xlu0 %v1250, 127
  %v2033 = vpop.permute.xlu0 %2032
  %2034 = vrot.lane.b32.xlu0 %v1153, 127
  %v2035 = vpop.permute.xlu0 %2034
  %2036 = vrot.lane.b32.xlu0 %v1160, 127
  %v2037 = vpop.permute.xlu0 %2036
  %2038 = vrot.lane.b32.xlu0 %v1167, 127
  %v2039 = vpop.permute.xlu0 %2038
  %2040 = vrot.lane.b32.xlu0 %v1174, 127
  %v2041 = vpop.permute.xlu0 %2040
  %2042 = vrot.lane.b32.xlu0 %v1181, 127
  %v2043 = vpop.permute.xlu0 %2042
  %2044 = vrot.lane.b32.xlu0 %v1188, 127
  %v2045 = vpop.permute.xlu0 %2044
  %2046 = vrot.lane.b32.xlu0 %v1195, 127
  %v2047 = vpop.permute.xlu0 %2046
  %2048 = vrot.lane.b32.xlu0 %v1202, 127
  %v2049 = vpop.permute.xlu0 %2048
  %2050 = vrot.lane.b32.xlu0 %v1209, 127
  %v2051 = vpop.permute.xlu0 %2050
  %2052 = vrot.lane.b32.xlu0 %v1216, 127
  %v2053 = vpop.permute.xlu0 %2052
  %2054 = vrot.lane.b32.xlu0 %v1223, 127
  %v2055 = vpop.permute.xlu0 %2054
  %2056 = vrot.lane.b32.xlu0 %v1230, 127
  %v2057 = vpop.permute.xlu0 %2056
  %2058 = vrot.lane.b32.xlu0 %v1237, 127
  %v2059 = vpop.permute.xlu0 %2058
  %2060 = vrot.lane.b32.xlu0 %v1244, 127
  %v2061 = vpop.permute.xlu0 %2060
  %2062 = vrot.lane.b32.xlu0 %v1251, 127
  %v2063 = vpop.permute.xlu0 %2062
  %vm2064 = vcmp.lt.s32.totalorder %v1606, 127
  %v2065 = vsel %vm2064, %v2005, %v2035
  %v2066 = vsel %vm2064, %v2007, %v2037
  %v2067 = vsel %vm2064, %v2009, %v2039
  %v2068 = vsel %vm2064, %v2011, %v2041
  %v2069 = vsel %vm2064, %v2013, %v2043
  %v2070 = vsel %vm2064, %v2015, %v2045
  %v2071 = vsel %vm2064, %v2017, %v2047
  %v2072 = vsel %vm2064, %v2019, %v2049
  %v2073 = vsel %vm2064, %v2021, %v2051
  %v2074 = vsel %vm2064, %v2023, %v2053
  %v2075 = vsel %vm2064, %v2025, %v2055
  %v2076 = vsel %vm2064, %v2027, %v2057
  %v2077 = vsel %vm2064, %v2029, %v2059
  %v2078 = vsel %vm2064, %v2031, %v2061
  %v2079 = vsel %vm2064, %v2033, %v2063
  %v2080 = vsel %vm2064, %v1975, %v2005
  %v2081 = vsel %vm2064, %v1977, %v2007
  %v2082 = vsel %vm2064, %v1979, %v2009
  %v2083 = vsel %vm2064, %v1981, %v2011
  %v2084 = vsel %vm2064, %v1983, %v2013
  %v2085 = vsel %vm2064, %v1985, %v2015
  %v2086 = vsel %vm2064, %v1987, %v2017
  %v2087 = vsel %vm2064, %v1989, %v2019
  %v2088 = vsel %vm2064, %v1991, %v2021
  %v2089 = vsel %vm2064, %v1993, %v2023
  %v2090 = vsel %vm2064, %v1995, %v2025
  %v2091 = vsel %vm2064, %v1997, %v2027
  %v2092 = vsel %vm2064, %v1999, %v2029
  %v2093 = vsel %vm2064, %v2001, %v2031
  %v2094 = vsel %vm2064, %v2003, %v2033
  %v2095 = vsel %vm2064, %v1945, %v1975
  %v2096 = vsel %vm2064, %v1947, %v1977
  %v2097 = vsel %vm2064, %v1949, %v1979
  %v2098 = vsel %vm2064, %v1951, %v1981
  %v2099 = vsel %vm2064, %v1953, %v1983
  %v2100 = vsel %vm2064, %v1955, %v1985
  %v2101 = vsel %vm2064, %v1957, %v1987
  %v2102 = vsel %vm2064, %v1959, %v1989
  %v2103 = vsel %vm2064, %v1961, %v1991
  %v2104 = vsel %vm2064, %v1963, %v1993
  %v2105 = vsel %vm2064, %v1965, %v1995
  %v2106 = vsel %vm2064, %v1967, %v1997
  %v2107 = vsel %vm2064, %v1969, %v1999
  %v2108 = vsel %vm2064, %v1971, %v2001
  %v2109 = vsel %vm2064, %v1973, %v2003
  %v2110 = vsel %vm2064, %v1915, %v1945
  %v2111 = vsel %vm2064, %v1917, %v1947
  %v2112 = vsel %vm2064, %v1919, %v1949
  %v2113 = vsel %vm2064, %v1921, %v1951
  %v2114 = vsel %vm2064, %v1923, %v1953
  %v2115 = vsel %vm2064, %v1925, %v1955
  %v2116 = vsel %vm2064, %v1927, %v1957
  %v2117 = vsel %vm2064, %v1929, %v1959
  %v2118 = vsel %vm2064, %v1931, %v1961
  %v2119 = vsel %vm2064, %v1933, %v1963
  %v2120 = vsel %vm2064, %v1935, %v1965
  %v2121 = vsel %vm2064, %v1937, %v1967
  %v2122 = vsel %vm2064, %v1939, %v1969
  %v2123 = vsel %vm2064, %v1941, %v1971
  %v2124 = vsel %vm2064, %v1943, %v1973
  %v2125 = vsel %vm2064, %v1885, %v1915
  %v2126 = vsel %vm2064, %v1887, %v1917
  %v2127 = vsel %vm2064, %v1889, %v1919
  %v2128 = vsel %vm2064, %v1891, %v1921
  %v2129 = vsel %vm2064, %v1893, %v1923
  %v2130 = vsel %vm2064, %v1895, %v1925
  %v2131 = vsel %vm2064, %v1897, %v1927
  %v2132 = vsel %vm2064, %v1899, %v1929
  %v2133 = vsel %vm2064, %v1901, %v1931
  %v2134 = vsel %vm2064, %v1903, %v1933
  %v2135 = vsel %vm2064, %v1905, %v1935
  %v2136 = vsel %vm2064, %v1907, %v1937
  %v2137 = vsel %vm2064, %v1909, %v1939
  %v2138 = vsel %vm2064, %v1911, %v1941
  %v2139 = vsel %vm2064, %v1913, %v1943
  %v2140 = vsel %vm2064, %v1855, %v1885
  %v2141 = vsel %vm2064, %v1857, %v1887
  %v2142 = vsel %vm2064, %v1859, %v1889
  %v2143 = vsel %vm2064, %v1861, %v1891
  %v2144 = vsel %vm2064, %v1863, %v1893
  %v2145 = vsel %vm2064, %v1865, %v1895
  %v2146 = vsel %vm2064, %v1867, %v1897
  %v2147 = vsel %vm2064, %v1869, %v1899
  %v2148 = vsel %vm2064, %v1871, %v1901
  %v2149 = vsel %vm2064, %v1873, %v1903
  %v2150 = vsel %vm2064, %v1875, %v1905
  %v2151 = vsel %vm2064, %v1877, %v1907
  %v2152 = vsel %vm2064, %v1879, %v1909
  %v2153 = vsel %vm2064, %v1881, %v1911
  %v2154 = vsel %vm2064, %v1883, %v1913
  %v2155 = vsel %vm2064, %v2035, %v1855
  %v2156 = vsel %vm2064, %v2037, %v1857
  %v2157 = vsel %vm2064, %v2039, %v1859
  %v2158 = vsel %vm2064, %v2041, %v1861
  %v2159 = vsel %vm2064, %v2043, %v1863
  %v2160 = vsel %vm2064, %v2045, %v1865
  %v2161 = vsel %vm2064, %v2047, %v1867
  %v2162 = vsel %vm2064, %v2049, %v1869
  %v2163 = vsel %vm2064, %v2051, %v1871
  %v2164 = vsel %vm2064, %v2053, %v1873
  %v2165 = vsel %vm2064, %v2055, %v1875
  %v2166 = vsel %vm2064, %v2057, %v1877
  %v2167 = vsel %vm2064, %v2059, %v1879
  %v2168 = vsel %vm2064, %v2061, %v1881
  %v2169 = vsel %vm2064, %v2063, %v1883
  %v2171 = vlaneseq
  %v2172 = vshrl.u32 %v2171, 7
  %v2173 = vsub.s32 0, %v2172
  %v2174 = vrot.slane %v133, %v2173
  %v2175 = vlaneseq
  %v2176 = vshrl.u32 %v2175, 7
  %v2177 = vsub.s32 1, %v2176
  %v2178 = vrot.slane %v133, %v2177
  %v2179 = vlaneseq
  %v2180 = vshrl.u32 %v2179, 7
  %v2181 = vsub.s32 2, %v2180
  %v2182 = vrot.slane %v133, %v2181
  %v2183 = vlaneseq
  %v2184 = vshrl.u32 %v2183, 7
  %v2185 = vsub.s32 3, %v2184
  %v2186 = vrot.slane %v133, %v2185
  %v2187 = vlaneseq
  %v2188 = vshrl.u32 %v2187, 7
  %v2189 = vsub.s32 4, %v2188
  %v2190 = vrot.slane %v133, %v2189
  %v2191 = vlaneseq
  %v2192 = vshrl.u32 %v2191, 7
  %v2193 = vsub.s32 5, %v2192
  %v2194 = vrot.slane %v133, %v2193
  %v2195 = vlaneseq
  %v2196 = vshrl.u32 %v2195, 7
  %v2197 = vsub.s32 6, %v2196
  %v2198 = vrot.slane %v133, %v2197
  %v2206 = vmul.f32 %v2140, %v2174
  %v2207 = vmul.f32 %v2125, %v2178
  %v2208 = vmul.f32 %v2110, %v2182
  %v2209 = vmul.f32 %v2095, %v2186
  %v2210 = vmul.f32 %v2080, %v2190
  %v2211 = vmul.f32 %v2065, %v2194
  %v2212 = vmul.f32 %v2155, %v2198
  %v2213 = vmul.f32 %v2141, %v2174
  %v2214 = vmul.f32 %v2126, %v2178
  %v2215 = vmul.f32 %v2111, %v2182
  %v2216 = vmul.f32 %v2096, %v2186
  %v2217 = vmul.f32 %v2081, %v2190
  %v2218 = vmul.f32 %v2066, %v2194
  %v2219 = vmul.f32 %v2156, %v2198
  %v2220 = vmul.f32 %v2142, %v2174
  %v2221 = vmul.f32 %v2127, %v2178
  %v2222 = vmul.f32 %v2112, %v2182
  %v2223 = vmul.f32 %v2097, %v2186
  %v2224 = vmul.f32 %v2082, %v2190
  %v2225 = vmul.f32 %v2067, %v2194
  %v2226 = vmul.f32 %v2157, %v2198
  %v2227 = vmul.f32 %v2143, %v2174
  %v2228 = vmul.f32 %v2128, %v2178
  %v2229 = vmul.f32 %v2113, %v2182
  %v2230 = vmul.f32 %v2098, %v2186
  %v2231 = vmul.f32 %v2083, %v2190
  %v2232 = vmul.f32 %v2068, %v2194
  %v2233 = vmul.f32 %v2158, %v2198
  %v2234 = vmul.f32 %v2144, %v2174
  %v2235 = vmul.f32 %v2129, %v2178
  %v2236 = vmul.f32 %v2114, %v2182
  %v2237 = vmul.f32 %v2099, %v2186
  %v2238 = vmul.f32 %v2084, %v2190
  %v2239 = vmul.f32 %v2069, %v2194
  %v2240 = vmul.f32 %v2159, %v2198
  %v2241 = vmul.f32 %v2145, %v2174
  %v2242 = vmul.f32 %v2130, %v2178
  %v2243 = vmul.f32 %v2115, %v2182
  %v2244 = vmul.f32 %v2100, %v2186
  %v2245 = vmul.f32 %v2085, %v2190
  %v2246 = vmul.f32 %v2070, %v2194
  %v2247 = vmul.f32 %v2160, %v2198
  %v2248 = vmul.f32 %v2146, %v2174
  %v2249 = vmul.f32 %v2131, %v2178
  %v2250 = vmul.f32 %v2116, %v2182
  %v2251 = vmul.f32 %v2101, %v2186
  %v2252 = vmul.f32 %v2086, %v2190
  %v2253 = vmul.f32 %v2071, %v2194
  %v2254 = vmul.f32 %v2161, %v2198
  %v2255 = vmul.f32 %v2147, %v2174
  %v2256 = vmul.f32 %v2132, %v2178
  %v2257 = vmul.f32 %v2117, %v2182
  %v2258 = vmul.f32 %v2102, %v2186
  %v2259 = vmul.f32 %v2087, %v2190
  %v2260 = vmul.f32 %v2072, %v2194
  %v2261 = vmul.f32 %v2162, %v2198
  %v2262 = vmul.f32 %v2148, %v2174
  %v2263 = vmul.f32 %v2133, %v2178
  %v2264 = vmul.f32 %v2118, %v2182
  %v2265 = vmul.f32 %v2103, %v2186
  %v2266 = vmul.f32 %v2088, %v2190
  %v2267 = vmul.f32 %v2073, %v2194
  %v2268 = vmul.f32 %v2163, %v2198
  %v2269 = vmul.f32 %v2149, %v2174
  %v2270 = vmul.f32 %v2134, %v2178
  %v2271 = vmul.f32 %v2119, %v2182
  %v2272 = vmul.f32 %v2104, %v2186
  %v2273 = vmul.f32 %v2089, %v2190
  %v2274 = vmul.f32 %v2074, %v2194
  %v2275 = vmul.f32 %v2164, %v2198
  %v2276 = vmul.f32 %v2150, %v2174
  %v2277 = vmul.f32 %v2135, %v2178
  %v2278 = vmul.f32 %v2120, %v2182
  %v2279 = vmul.f32 %v2105, %v2186
  %v2280 = vmul.f32 %v2090, %v2190
  %v2281 = vmul.f32 %v2075, %v2194
  %v2282 = vmul.f32 %v2165, %v2198
  %v2283 = vmul.f32 %v2151, %v2174
  %v2284 = vmul.f32 %v2136, %v2178
  %v2285 = vmul.f32 %v2121, %v2182
  %v2286 = vmul.f32 %v2106, %v2186
  %v2287 = vmul.f32 %v2091, %v2190
  %v2288 = vmul.f32 %v2076, %v2194
  %v2289 = vmul.f32 %v2166, %v2198
  %v2290 = vmul.f32 %v2152, %v2174
  %v2291 = vmul.f32 %v2137, %v2178
  %v2292 = vmul.f32 %v2122, %v2182
  %v2293 = vmul.f32 %v2107, %v2186
  %v2294 = vmul.f32 %v2092, %v2190
  %v2295 = vmul.f32 %v2077, %v2194
  %v2296 = vmul.f32 %v2167, %v2198
  %v2297 = vmul.f32 %v2153, %v2174
  %v2298 = vmul.f32 %v2138, %v2178
  %v2299 = vmul.f32 %v2123, %v2182
  %v2300 = vmul.f32 %v2108, %v2186
  %v2301 = vmul.f32 %v2093, %v2190
  %v2302 = vmul.f32 %v2078, %v2194
  %v2303 = vmul.f32 %v2168, %v2198
  %v2304 = vmul.f32 %v2154, %v2174
  %v2305 = vmul.f32 %v2139, %v2178
  %v2306 = vmul.f32 %v2124, %v2182
  %v2307 = vmul.f32 %v2109, %v2186
  %v2308 = vmul.f32 %v2094, %v2190
  %v2309 = vmul.f32 %v2079, %v2194
  %v2310 = vmul.f32 %v2169, %v2198
  %2312 = vset.pattern.permute.xlu0 0
  %2313 = vperm.xlu0 %2312, %v1300
  %v2314 = vpop.permute.xlu0 %2313
  %2317 = vset.pattern.permute.xlu0 0
  %2318 = vperm.xlu0 %2317, %v1301
  %v2319 = vpop.permute.xlu0 %2318
  %2322 = vset.pattern.permute.xlu0 0
  %2323 = vperm.xlu0 %2322, %v1302
  %v2324 = vpop.permute.xlu0 %2323
  %2327 = vset.pattern.permute.xlu0 0
  %2328 = vperm.xlu0 %2327, %v1303
  %v2329 = vpop.permute.xlu0 %2328
  %2332 = vset.pattern.permute.xlu0 0
  %2333 = vperm.xlu0 %2332, %v1304
  %v2334 = vpop.permute.xlu0 %2333
  %2337 = vset.pattern.permute.xlu0 0
  %2338 = vperm.xlu0 %2337, %v1305
  %v2339 = vpop.permute.xlu0 %2338
  %2342 = vset.pattern.permute.xlu0 0
  %2343 = vperm.xlu0 %2342, %v1306
  %v2344 = vpop.permute.xlu0 %2343
  %2347 = vset.pattern.permute.xlu0 0
  %2348 = vperm.xlu0 %2347, %v1307
  %v2349 = vpop.permute.xlu0 %2348
  %2352 = vset.pattern.permute.xlu0 0
  %2353 = vperm.xlu0 %2352, %v1308
  %v2354 = vpop.permute.xlu0 %2353
  %2357 = vset.pattern.permute.xlu0 0
  %2358 = vperm.xlu0 %2357, %v1309
  %v2359 = vpop.permute.xlu0 %2358
  %2362 = vset.pattern.permute.xlu0 0
  %2363 = vperm.xlu0 %2362, %v1310
  %v2364 = vpop.permute.xlu0 %2363
  %2367 = vset.pattern.permute.xlu0 0
  %2368 = vperm.xlu0 %2367, %v1311
  %v2369 = vpop.permute.xlu0 %2368
  %2372 = vset.pattern.permute.xlu0 0
  %2373 = vperm.xlu0 %2372, %v1312
  %v2374 = vpop.permute.xlu0 %2373
  %2377 = vset.pattern.permute.xlu0 0
  %2378 = vperm.xlu0 %2377, %v1313
  %v2379 = vpop.permute.xlu0 %2378
  %2382 = vset.pattern.permute.xlu0 0
  %2383 = vperm.xlu0 %2382, %v1314
  %v2384 = vpop.permute.xlu0 %2383
  %v2386 = vmul.f32 %v1749, %v2314
  %v2387 = vmul.f32 %v1750, %v2314
  %v2388 = vmul.f32 %v1751, %v2314
  %v2389 = vmul.f32 %v1752, %v2314
  %v2390 = vmul.f32 %v1753, %v2314
  %v2391 = vmul.f32 %v1754, %v2314
  %v2392 = vmul.f32 %v1755, %v2314
  %v2393 = vmul.f32 %v1756, %v2319
  %v2394 = vmul.f32 %v1757, %v2319
  %v2395 = vmul.f32 %v1758, %v2319
  %v2396 = vmul.f32 %v1759, %v2319
  %v2397 = vmul.f32 %v1760, %v2319
  %v2398 = vmul.f32 %v1761, %v2319
  %v2399 = vmul.f32 %v1762, %v2319
  %v2400 = vmul.f32 %v1763, %v2324
  %v2401 = vmul.f32 %v1764, %v2324
  %v2402 = vmul.f32 %v1765, %v2324
  %v2403 = vmul.f32 %v1766, %v2324
  %v2404 = vmul.f32 %v1767, %v2324
  %v2405 = vmul.f32 %v1768, %v2324
  %v2406 = vmul.f32 %v1769, %v2324
  %v2407 = vmul.f32 %v1770, %v2329
  %v2408 = vmul.f32 %v1771, %v2329
  %v2409 = vmul.f32 %v1772, %v2329
  %v2410 = vmul.f32 %v1773, %v2329
  %v2411 = vmul.f32 %v1774, %v2329
  %v2412 = vmul.f32 %v1775, %v2329
  %v2413 = vmul.f32 %v1776, %v2329
  %v2414 = vmul.f32 %v1777, %v2334
  %v2415 = vmul.f32 %v1778, %v2334
  %v2416 = vmul.f32 %v1779, %v2334
  %v2417 = vmul.f32 %v1780, %v2334
  %v2418 = vmul.f32 %v1781, %v2334
  %v2419 = vmul.f32 %v1782, %v2334
  %v2420 = vmul.f32 %v1783, %v2334
  %v2421 = vmul.f32 %v1784, %v2339
  %v2422 = vmul.f32 %v1785, %v2339
  %v2423 = vmul.f32 %v1786, %v2339
  %v2424 = vmul.f32 %v1787, %v2339
  %v2425 = vmul.f32 %v1788, %v2339
  %v2426 = vmul.f32 %v1789, %v2339
  %v2427 = vmul.f32 %v1790, %v2339
  %v2428 = vmul.f32 %v1791, %v2344
  %v2429 = vmul.f32 %v1792, %v2344
  %v2430 = vmul.f32 %v1793, %v2344
  %v2431 = vmul.f32 %v1794, %v2344
  %v2432 = vmul.f32 %v1795, %v2344
  %v2433 = vmul.f32 %v1796, %v2344
  %v2434 = vmul.f32 %v1797, %v2344
  %v2435 = vmul.f32 %v1798, %v2349
  %v2436 = vmul.f32 %v1799, %v2349
  %v2437 = vmul.f32 %v1800, %v2349
  %v2438 = vmul.f32 %v1801, %v2349
  %v2439 = vmul.f32 %v1802, %v2349
  %v2440 = vmul.f32 %v1803, %v2349
  %v2441 = vmul.f32 %v1804, %v2349
  %v2442 = vmul.f32 %v1805, %v2354
  %v2443 = vmul.f32 %v1806, %v2354
  %v2444 = vmul.f32 %v1807, %v2354
  %v2445 = vmul.f32 %v1808, %v2354
  %v2446 = vmul.f32 %v1809, %v2354
  %v2447 = vmul.f32 %v1810, %v2354
  %v2448 = vmul.f32 %v1811, %v2354
  %v2449 = vmul.f32 %v1812, %v2359
  %v2450 = vmul.f32 %v1813, %v2359
  %v2451 = vmul.f32 %v1814, %v2359
  %v2452 = vmul.f32 %v1815, %v2359
  %v2453 = vmul.f32 %v1816, %v2359
  %v2454 = vmul.f32 %v1817, %v2359
  %v2455 = vmul.f32 %v1818, %v2359
  %v2456 = vmul.f32 %v1819, %v2364
  %v2457 = vmul.f32 %v1820, %v2364
  %v2458 = vmul.f32 %v1821, %v2364
  %v2459 = vmul.f32 %v1822, %v2364
  %v2460 = vmul.f32 %v1823, %v2364
  %v2461 = vmul.f32 %v1824, %v2364
  %v2462 = vmul.f32 %v1825, %v2364
  %v2463 = vmul.f32 %v1826, %v2369
  %v2464 = vmul.f32 %v1827, %v2369
  %v2465 = vmul.f32 %v1828, %v2369
  %v2466 = vmul.f32 %v1829, %v2369
  %v2467 = vmul.f32 %v1830, %v2369
  %v2468 = vmul.f32 %v1831, %v2369
  %v2469 = vmul.f32 %v1832, %v2369
  %v2470 = vmul.f32 %v1833, %v2374
  %v2471 = vmul.f32 %v1834, %v2374
  %v2472 = vmul.f32 %v1835, %v2374
  %v2473 = vmul.f32 %v1836, %v2374
  %v2474 = vmul.f32 %v1837, %v2374
  %v2475 = vmul.f32 %v1838, %v2374
  %v2476 = vmul.f32 %v1839, %v2374
  %v2477 = vmul.f32 %v1840, %v2379
  %v2478 = vmul.f32 %v1841, %v2379
  %v2479 = vmul.f32 %v1842, %v2379
  %v2480 = vmul.f32 %v1843, %v2379
  %v2481 = vmul.f32 %v1844, %v2379
  %v2482 = vmul.f32 %v1845, %v2379
  %v2483 = vmul.f32 %v1846, %v2379
  %v2484 = vmul.f32 %v1847, %v2384
  %v2485 = vmul.f32 %v1848, %v2384
  %v2486 = vmul.f32 %v1849, %v2384
  %v2487 = vmul.f32 %v1850, %v2384
  %v2488 = vmul.f32 %v1851, %v2384
  %v2489 = vmul.f32 %v1852, %v2384
  %v2490 = vmul.f32 %v1853, %v2384
  %2492 = vset.pattern.permute.xlu0 0
  %2493 = vperm.xlu0 %2492, %v1316
  %v2494 = vpop.permute.xlu0 %2493
  %2497 = vset.pattern.permute.xlu0 0
  %2498 = vperm.xlu0 %2497, %v1317
  %v2499 = vpop.permute.xlu0 %2498
  %2502 = vset.pattern.permute.xlu0 0
  %2503 = vperm.xlu0 %2502, %v1318
  %v2504 = vpop.permute.xlu0 %2503
  %2507 = vset.pattern.permute.xlu0 0
  %2508 = vperm.xlu0 %2507, %v1319
  %v2509 = vpop.permute.xlu0 %2508
  %2512 = vset.pattern.permute.xlu0 0
  %2513 = vperm.xlu0 %2512, %v1320
  %v2514 = vpop.permute.xlu0 %2513
  %2517 = vset.pattern.permute.xlu0 0
  %2518 = vperm.xlu0 %2517, %v1321
  %v2519 = vpop.permute.xlu0 %2518
  %2522 = vset.pattern.permute.xlu0 0
  %2523 = vperm.xlu0 %2522, %v1322
  %v2524 = vpop.permute.xlu0 %2523
  %2527 = vset.pattern.permute.xlu0 0
  %2528 = vperm.xlu0 %2527, %v1323
  %v2529 = vpop.permute.xlu0 %2528
  %2532 = vset.pattern.permute.xlu0 0
  %2533 = vperm.xlu0 %2532, %v1324
  %v2534 = vpop.permute.xlu0 %2533
  %2537 = vset.pattern.permute.xlu0 0
  %2538 = vperm.xlu0 %2537, %v1325
  %v2539 = vpop.permute.xlu0 %2538
  %2542 = vset.pattern.permute.xlu0 0
  %2543 = vperm.xlu0 %2542, %v1326
  %v2544 = vpop.permute.xlu0 %2543
  %2547 = vset.pattern.permute.xlu0 0
  %2548 = vperm.xlu0 %2547, %v1327
  %v2549 = vpop.permute.xlu0 %2548
  %2552 = vset.pattern.permute.xlu0 0
  %2553 = vperm.xlu0 %2552, %v1328
  %v2554 = vpop.permute.xlu0 %2553
  %2557 = vset.pattern.permute.xlu0 0
  %2558 = vperm.xlu0 %2557, %v1329
  %v2559 = vpop.permute.xlu0 %2558
  %2562 = vset.pattern.permute.xlu0 0
  %2563 = vperm.xlu0 %2562, %v1330
  %v2564 = vpop.permute.xlu0 %2563
  %v2566 = vmul.f32 %v1147, %v2494
  %v2567 = vmul.f32 %v1148, %v2494
  %v2568 = vmul.f32 %v1149, %v2494
  %v2569 = vmul.f32 %v1150, %v2494
  %v2570 = vmul.f32 %v1151, %v2494
  %v2571 = vmul.f32 %v1152, %v2494
  %v2572 = vmul.f32 %v1153, %v2494
  %v2573 = vmul.f32 %v1154, %v2499
  %v2574 = vmul.f32 %v1155, %v2499
  %v2575 = vmul.f32 %v1156, %v2499
  %v2576 = vmul.f32 %v1157, %v2499
  %v2577 = vmul.f32 %v1158, %v2499
  %v2578 = vmul.f32 %v1159, %v2499
  %v2579 = vmul.f32 %v1160, %v2499
  %v2580 = vmul.f32 %v1161, %v2504
  %v2581 = vmul.f32 %v1162, %v2504
  %v2582 = vmul.f32 %v1163, %v2504
  %v2583 = vmul.f32 %v1164, %v2504
  %v2584 = vmul.f32 %v1165, %v2504
  %v2585 = vmul.f32 %v1166, %v2504
  %v2586 = vmul.f32 %v1167, %v2504
  %v2587 = vmul.f32 %v1168, %v2509
  %v2588 = vmul.f32 %v1169, %v2509
  %v2589 = vmul.f32 %v1170, %v2509
  %v2590 = vmul.f32 %v1171, %v2509
  %v2591 = vmul.f32 %v1172, %v2509
  %v2592 = vmul.f32 %v1173, %v2509
  %v2593 = vmul.f32 %v1174, %v2509
  %v2594 = vmul.f32 %v1175, %v2514
  %v2595 = vmul.f32 %v1176, %v2514
  %v2596 = vmul.f32 %v1177, %v2514
  %v2597 = vmul.f32 %v1178, %v2514
  %v2598 = vmul.f32 %v1179, %v2514
  %v2599 = vmul.f32 %v1180, %v2514
  %v2600 = vmul.f32 %v1181, %v2514
  %v2601 = vmul.f32 %v1182, %v2519
  %v2602 = vmul.f32 %v1183, %v2519
  %v2603 = vmul.f32 %v1184, %v2519
  %v2604 = vmul.f32 %v1185, %v2519
  %v2605 = vmul.f32 %v1186, %v2519
  %v2606 = vmul.f32 %v1187, %v2519
  %v2607 = vmul.f32 %v1188, %v2519
  %v2608 = vmul.f32 %v1189, %v2524
  %v2609 = vmul.f32 %v1190, %v2524
  %v2610 = vmul.f32 %v1191, %v2524
  %v2611 = vmul.f32 %v1192, %v2524
  %v2612 = vmul.f32 %v1193, %v2524
  %v2613 = vmul.f32 %v1194, %v2524
  %v2614 = vmul.f32 %v1195, %v2524
  %v2615 = vmul.f32 %v1196, %v2529
  %v2616 = vmul.f32 %v1197, %v2529
  %v2617 = vmul.f32 %v1198, %v2529
  %v2618 = vmul.f32 %v1199, %v2529
  %v2619 = vmul.f32 %v1200, %v2529
  %v2620 = vmul.f32 %v1201, %v2529
  %v2621 = vmul.f32 %v1202, %v2529
  %v2622 = vmul.f32 %v1203, %v2534
  %v2623 = vmul.f32 %v1204, %v2534
  %v2624 = vmul.f32 %v1205, %v2534
  %v2625 = vmul.f32 %v1206, %v2534
  %v2626 = vmul.f32 %v1207, %v2534
  %v2627 = vmul.f32 %v1208, %v2534
  %v2628 = vmul.f32 %v1209, %v2534
  %v2629 = vmul.f32 %v1210, %v2539
  %v2630 = vmul.f32 %v1211, %v2539
  %v2631 = vmul.f32 %v1212, %v2539
  %v2632 = vmul.f32 %v1213, %v2539
  %v2633 = vmul.f32 %v1214, %v2539
  %v2634 = vmul.f32 %v1215, %v2539
  %v2635 = vmul.f32 %v1216, %v2539
  %v2636 = vmul.f32 %v1217, %v2544
  %v2637 = vmul.f32 %v1218, %v2544
  %v2638 = vmul.f32 %v1219, %v2544
  %v2639 = vmul.f32 %v1220, %v2544
  %v2640 = vmul.f32 %v1221, %v2544
  %v2641 = vmul.f32 %v1222, %v2544
  %v2642 = vmul.f32 %v1223, %v2544
  %v2643 = vmul.f32 %v1224, %v2549
  %v2644 = vmul.f32 %v1225, %v2549
  %v2645 = vmul.f32 %v1226, %v2549
  %v2646 = vmul.f32 %v1227, %v2549
  %v2647 = vmul.f32 %v1228, %v2549
  %v2648 = vmul.f32 %v1229, %v2549
  %v2649 = vmul.f32 %v1230, %v2549
  %v2650 = vmul.f32 %v1231, %v2554
  %v2651 = vmul.f32 %v1232, %v2554
  %v2652 = vmul.f32 %v1233, %v2554
  %v2653 = vmul.f32 %v1234, %v2554
  %v2654 = vmul.f32 %v1235, %v2554
  %v2655 = vmul.f32 %v1236, %v2554
  %v2656 = vmul.f32 %v1237, %v2554
  %v2657 = vmul.f32 %v1238, %v2559
  %v2658 = vmul.f32 %v1239, %v2559
  %v2659 = vmul.f32 %v1240, %v2559
  %v2660 = vmul.f32 %v1241, %v2559
  %v2661 = vmul.f32 %v1242, %v2559
  %v2662 = vmul.f32 %v1243, %v2559
  %v2663 = vmul.f32 %v1244, %v2559
  %v2664 = vmul.f32 %v1245, %v2564
  %v2665 = vmul.f32 %v1246, %v2564
  %v2666 = vmul.f32 %v1247, %v2564
  %v2667 = vmul.f32 %v1248, %v2564
  %v2668 = vmul.f32 %v1249, %v2564
  %v2669 = vmul.f32 %v1250, %v2564
  %v2670 = vmul.f32 %v1251, %v2564
  %v2671 = vadd.f32 %v2386, %v2566
  %v2672 = vadd.f32 %v2387, %v2567
  %v2673 = vadd.f32 %v2388, %v2568
  %v2674 = vadd.f32 %v2389, %v2569
  %v2675 = vadd.f32 %v2390, %v2570
  %v2676 = vadd.f32 %v2391, %v2571
  %v2677 = vadd.f32 %v2392, %v2572
  %v2678 = vadd.f32 %v2393, %v2573
  %v2679 = vadd.f32 %v2394, %v2574
  %v2680 = vadd.f32 %v2395, %v2575
  %v2681 = vadd.f32 %v2396, %v2576
  %v2682 = vadd.f32 %v2397, %v2577
  %v2683 = vadd.f32 %v2398, %v2578
  %v2684 = vadd.f32 %v2399, %v2579
  %v2685 = vadd.f32 %v2400, %v2580
  %v2686 = vadd.f32 %v2401, %v2581
  %v2687 = vadd.f32 %v2402, %v2582
  %v2688 = vadd.f32 %v2403, %v2583
  %v2689 = vadd.f32 %v2404, %v2584
  %v2690 = vadd.f32 %v2405, %v2585
  %v2691 = vadd.f32 %v2406, %v2586
  %v2692 = vadd.f32 %v2407, %v2587
  %v2693 = vadd.f32 %v2408, %v2588
  %v2694 = vadd.f32 %v2409, %v2589
  %v2695 = vadd.f32 %v2410, %v2590
  %v2696 = vadd.f32 %v2411, %v2591
  %v2697 = vadd.f32 %v2412, %v2592
  %v2698 = vadd.f32 %v2413, %v2593
  %v2699 = vadd.f32 %v2414, %v2594
  %v2700 = vadd.f32 %v2415, %v2595
  %v2701 = vadd.f32 %v2416, %v2596
  %v2702 = vadd.f32 %v2417, %v2597
  %v2703 = vadd.f32 %v2418, %v2598
  %v2704 = vadd.f32 %v2419, %v2599
  %v2705 = vadd.f32 %v2420, %v2600
  %v2706 = vadd.f32 %v2421, %v2601
  %v2707 = vadd.f32 %v2422, %v2602
  %v2708 = vadd.f32 %v2423, %v2603
  %v2709 = vadd.f32 %v2424, %v2604
  %v2710 = vadd.f32 %v2425, %v2605
  %v2711 = vadd.f32 %v2426, %v2606
  %v2712 = vadd.f32 %v2427, %v2607
  %v2713 = vadd.f32 %v2428, %v2608
  %v2714 = vadd.f32 %v2429, %v2609
  %v2715 = vadd.f32 %v2430, %v2610
  %v2716 = vadd.f32 %v2431, %v2611
  %v2717 = vadd.f32 %v2432, %v2612
  %v2718 = vadd.f32 %v2433, %v2613
  %v2719 = vadd.f32 %v2434, %v2614
  %v2720 = vadd.f32 %v2435, %v2615
  %v2721 = vadd.f32 %v2436, %v2616
  %v2722 = vadd.f32 %v2437, %v2617
  %v2723 = vadd.f32 %v2438, %v2618
  %v2724 = vadd.f32 %v2439, %v2619
  %v2725 = vadd.f32 %v2440, %v2620
  %v2726 = vadd.f32 %v2441, %v2621
  %v2727 = vadd.f32 %v2442, %v2622
  %v2728 = vadd.f32 %v2443, %v2623
  %v2729 = vadd.f32 %v2444, %v2624
  %v2730 = vadd.f32 %v2445, %v2625
  %v2731 = vadd.f32 %v2446, %v2626
  %v2732 = vadd.f32 %v2447, %v2627
  %v2733 = vadd.f32 %v2448, %v2628
  %v2734 = vadd.f32 %v2449, %v2629
  %v2735 = vadd.f32 %v2450, %v2630
  %v2736 = vadd.f32 %v2451, %v2631
  %v2737 = vadd.f32 %v2452, %v2632
  %v2738 = vadd.f32 %v2453, %v2633
  %v2739 = vadd.f32 %v2454, %v2634
  %v2740 = vadd.f32 %v2455, %v2635
  %v2741 = vadd.f32 %v2456, %v2636
  %v2742 = vadd.f32 %v2457, %v2637
  %v2743 = vadd.f32 %v2458, %v2638
  %v2744 = vadd.f32 %v2459, %v2639
  %v2745 = vadd.f32 %v2460, %v2640
  %v2746 = vadd.f32 %v2461, %v2641
  %v2747 = vadd.f32 %v2462, %v2642
  %v2748 = vadd.f32 %v2463, %v2643
  %v2749 = vadd.f32 %v2464, %v2644
  %v2750 = vadd.f32 %v2465, %v2645
  %v2751 = vadd.f32 %v2466, %v2646
  %v2752 = vadd.f32 %v2467, %v2647
  %v2753 = vadd.f32 %v2468, %v2648
  %v2754 = vadd.f32 %v2469, %v2649
  %v2755 = vadd.f32 %v2470, %v2650
  %v2756 = vadd.f32 %v2471, %v2651
  %v2757 = vadd.f32 %v2472, %v2652
  %v2758 = vadd.f32 %v2473, %v2653
  %v2759 = vadd.f32 %v2474, %v2654
  %v2760 = vadd.f32 %v2475, %v2655
  %v2761 = vadd.f32 %v2476, %v2656
  %v2762 = vadd.f32 %v2477, %v2657
  %v2763 = vadd.f32 %v2478, %v2658
  %v2764 = vadd.f32 %v2479, %v2659
  %v2765 = vadd.f32 %v2480, %v2660
  %v2766 = vadd.f32 %v2481, %v2661
  %v2767 = vadd.f32 %v2482, %v2662
  %v2768 = vadd.f32 %v2483, %v2663
  %v2769 = vadd.f32 %v2484, %v2664
  %v2770 = vadd.f32 %v2485, %v2665
  %v2771 = vadd.f32 %v2486, %v2666
  %v2772 = vadd.f32 %v2487, %v2667
  %v2773 = vadd.f32 %v2488, %v2668
  %v2774 = vadd.f32 %v2489, %v2669
  %v2775 = vadd.f32 %v2490, %v2670
  %2777 = vset.pattern.permute.xlu0 0
  %2778 = vperm.xlu0 %2777, %v1332
  %v2779 = vpop.permute.xlu0 %2778
  %2782 = vset.pattern.permute.xlu0 0
  %2783 = vperm.xlu0 %2782, %v1333
  %v2784 = vpop.permute.xlu0 %2783
  %2787 = vset.pattern.permute.xlu0 0
  %2788 = vperm.xlu0 %2787, %v1334
  %v2789 = vpop.permute.xlu0 %2788
  %2792 = vset.pattern.permute.xlu0 0
  %2793 = vperm.xlu0 %2792, %v1335
  %v2794 = vpop.permute.xlu0 %2793
  %2797 = vset.pattern.permute.xlu0 0
  %2798 = vperm.xlu0 %2797, %v1336
  %v2799 = vpop.permute.xlu0 %2798
  %2802 = vset.pattern.permute.xlu0 0
  %2803 = vperm.xlu0 %2802, %v1337
  %v2804 = vpop.permute.xlu0 %2803
  %2807 = vset.pattern.permute.xlu0 0
  %2808 = vperm.xlu0 %2807, %v1338
  %v2809 = vpop.permute.xlu0 %2808
  %2812 = vset.pattern.permute.xlu0 0
  %2813 = vperm.xlu0 %2812, %v1339
  %v2814 = vpop.permute.xlu0 %2813
  %2817 = vset.pattern.permute.xlu0 0
  %2818 = vperm.xlu0 %2817, %v1340
  %v2819 = vpop.permute.xlu0 %2818
  %2822 = vset.pattern.permute.xlu0 0
  %2823 = vperm.xlu0 %2822, %v1341
  %v2824 = vpop.permute.xlu0 %2823
  %2827 = vset.pattern.permute.xlu0 0
  %2828 = vperm.xlu0 %2827, %v1342
  %v2829 = vpop.permute.xlu0 %2828
  %2832 = vset.pattern.permute.xlu0 0
  %2833 = vperm.xlu0 %2832, %v1343
  %v2834 = vpop.permute.xlu0 %2833
  %2837 = vset.pattern.permute.xlu0 0
  %2838 = vperm.xlu0 %2837, %v1344
  %v2839 = vpop.permute.xlu0 %2838
  %2842 = vset.pattern.permute.xlu0 0
  %2843 = vperm.xlu0 %2842, %v1345
  %v2844 = vpop.permute.xlu0 %2843
  %2847 = vset.pattern.permute.xlu0 0
  %2848 = vperm.xlu0 %2847, %v1346
  %v2849 = vpop.permute.xlu0 %2848
  %v2851 = vmul.f32 %v2206, %v2779
  %v2852 = vmul.f32 %v2207, %v2779
  %v2853 = vmul.f32 %v2208, %v2779
  %v2854 = vmul.f32 %v2209, %v2779
  %v2855 = vmul.f32 %v2210, %v2779
  %v2856 = vmul.f32 %v2211, %v2779
  %v2857 = vmul.f32 %v2212, %v2779
  %v2858 = vmul.f32 %v2213, %v2784
  %v2859 = vmul.f32 %v2214, %v2784
  %v2860 = vmul.f32 %v2215, %v2784
  %v2861 = vmul.f32 %v2216, %v2784
  %v2862 = vmul.f32 %v2217, %v2784
  %v2863 = vmul.f32 %v2218, %v2784
  %v2864 = vmul.f32 %v2219, %v2784
  %v2865 = vmul.f32 %v2220, %v2789
  %v2866 = vmul.f32 %v2221, %v2789
  %v2867 = vmul.f32 %v2222, %v2789
  %v2868 = vmul.f32 %v2223, %v2789
  %v2869 = vmul.f32 %v2224, %v2789
  %v2870 = vmul.f32 %v2225, %v2789
  %v2871 = vmul.f32 %v2226, %v2789
  %v2872 = vmul.f32 %v2227, %v2794
  %v2873 = vmul.f32 %v2228, %v2794
  %v2874 = vmul.f32 %v2229, %v2794
  %v2875 = vmul.f32 %v2230, %v2794
  %v2876 = vmul.f32 %v2231, %v2794
  %v2877 = vmul.f32 %v2232, %v2794
  %v2878 = vmul.f32 %v2233, %v2794
  %v2879 = vmul.f32 %v2234, %v2799
  %v2880 = vmul.f32 %v2235, %v2799
  %v2881 = vmul.f32 %v2236, %v2799
  %v2882 = vmul.f32 %v2237, %v2799
  %v2883 = vmul.f32 %v2238, %v2799
  %v2884 = vmul.f32 %v2239, %v2799
  %v2885 = vmul.f32 %v2240, %v2799
  %v2886 = vmul.f32 %v2241, %v2804
  %v2887 = vmul.f32 %v2242, %v2804
  %v2888 = vmul.f32 %v2243, %v2804
  %v2889 = vmul.f32 %v2244, %v2804
  %v2890 = vmul.f32 %v2245, %v2804
  %v2891 = vmul.f32 %v2246, %v2804
  %v2892 = vmul.f32 %v2247, %v2804
  %v2893 = vmul.f32 %v2248, %v2809
  %v2894 = vmul.f32 %v2249, %v2809
  %v2895 = vmul.f32 %v2250, %v2809
  %v2896 = vmul.f32 %v2251, %v2809
  %v2897 = vmul.f32 %v2252, %v2809
  %v2898 = vmul.f32 %v2253, %v2809
  %v2899 = vmul.f32 %v2254, %v2809
  %v2900 = vmul.f32 %v2255, %v2814
  %v2901 = vmul.f32 %v2256, %v2814
  %v2902 = vmul.f32 %v2257, %v2814
  %v2903 = vmul.f32 %v2258, %v2814
  %v2904 = vmul.f32 %v2259, %v2814
  %v2905 = vmul.f32 %v2260, %v2814
  %v2906 = vmul.f32 %v2261, %v2814
  %v2907 = vmul.f32 %v2262, %v2819
  %v2908 = vmul.f32 %v2263, %v2819
  %v2909 = vmul.f32 %v2264, %v2819
  %v2910 = vmul.f32 %v2265, %v2819
  %v2911 = vmul.f32 %v2266, %v2819
  %v2912 = vmul.f32 %v2267, %v2819
  %v2913 = vmul.f32 %v2268, %v2819
  %v2914 = vmul.f32 %v2269, %v2824
  %v2915 = vmul.f32 %v2270, %v2824
  %v2916 = vmul.f32 %v2271, %v2824
  %v2917 = vmul.f32 %v2272, %v2824
  %v2918 = vmul.f32 %v2273, %v2824
  %v2919 = vmul.f32 %v2274, %v2824
  %v2920 = vmul.f32 %v2275, %v2824
  %v2921 = vmul.f32 %v2276, %v2829
  %v2922 = vmul.f32 %v2277, %v2829
  %v2923 = vmul.f32 %v2278, %v2829
  %v2924 = vmul.f32 %v2279, %v2829
  %v2925 = vmul.f32 %v2280, %v2829
  %v2926 = vmul.f32 %v2281, %v2829
  %v2927 = vmul.f32 %v2282, %v2829
  %v2928 = vmul.f32 %v2283, %v2834
  %v2929 = vmul.f32 %v2284, %v2834
  %v2930 = vmul.f32 %v2285, %v2834
  %v2931 = vmul.f32 %v2286, %v2834
  %v2932 = vmul.f32 %v2287, %v2834
  %v2933 = vmul.f32 %v2288, %v2834
  %v2934 = vmul.f32 %v2289, %v2834
  %v2935 = vmul.f32 %v2290, %v2839
  %v2936 = vmul.f32 %v2291, %v2839
  %v2937 = vmul.f32 %v2292, %v2839
  %v2938 = vmul.f32 %v2293, %v2839
  %v2939 = vmul.f32 %v2294, %v2839
  %v2940 = vmul.f32 %v2295, %v2839
  %v2941 = vmul.f32 %v2296, %v2839
  %v2942 = vmul.f32 %v2297, %v2844
  %v2943 = vmul.f32 %v2298, %v2844
  %v2944 = vmul.f32 %v2299, %v2844
  %v2945 = vmul.f32 %v2300, %v2844
  %v2946 = vmul.f32 %v2301, %v2844
  %v2947 = vmul.f32 %v2302, %v2844
  %v2948 = vmul.f32 %v2303, %v2844
  %v2949 = vmul.f32 %v2304, %v2849
  %v2950 = vmul.f32 %v2305, %v2849
  %v2951 = vmul.f32 %v2306, %v2849
  %v2952 = vmul.f32 %v2307, %v2849
  %v2953 = vmul.f32 %v2308, %v2849
  %v2954 = vmul.f32 %v2309, %v2849
  %v2955 = vmul.f32 %v2310, %v2849
  %v2956 = vadd.f32 %v2671, %v2851
  %v2957 = vadd.f32 %v2672, %v2852
  %v2958 = vadd.f32 %v2673, %v2853
  %v2959 = vadd.f32 %v2674, %v2854
  %v2960 = vadd.f32 %v2675, %v2855
  %v2961 = vadd.f32 %v2676, %v2856
  %v2962 = vadd.f32 %v2677, %v2857
  %v2963 = vadd.f32 %v2678, %v2858
  %v2964 = vadd.f32 %v2679, %v2859
  %v2965 = vadd.f32 %v2680, %v2860
  %v2966 = vadd.f32 %v2681, %v2861
  %v2967 = vadd.f32 %v2682, %v2862
  %v2968 = vadd.f32 %v2683, %v2863
  %v2969 = vadd.f32 %v2684, %v2864
  %v2970 = vadd.f32 %v2685, %v2865
  %v2971 = vadd.f32 %v2686, %v2866
  %v2972 = vadd.f32 %v2687, %v2867
  %v2973 = vadd.f32 %v2688, %v2868
  %v2974 = vadd.f32 %v2689, %v2869
  %v2975 = vadd.f32 %v2690, %v2870
  %v2976 = vadd.f32 %v2691, %v2871
  %v2977 = vadd.f32 %v2692, %v2872
  %v2978 = vadd.f32 %v2693, %v2873
  %v2979 = vadd.f32 %v2694, %v2874
  %v2980 = vadd.f32 %v2695, %v2875
  %v2981 = vadd.f32 %v2696, %v2876
  %v2982 = vadd.f32 %v2697, %v2877
  %v2983 = vadd.f32 %v2698, %v2878
  %v2984 = vadd.f32 %v2699, %v2879
  %v2985 = vadd.f32 %v2700, %v2880
  %v2986 = vadd.f32 %v2701, %v2881
  %v2987 = vadd.f32 %v2702, %v2882
  %v2988 = vadd.f32 %v2703, %v2883
  %v2989 = vadd.f32 %v2704, %v2884
  %v2990 = vadd.f32 %v2705, %v2885
  %v2991 = vadd.f32 %v2706, %v2886
  %v2992 = vadd.f32 %v2707, %v2887
  %v2993 = vadd.f32 %v2708, %v2888
  %v2994 = vadd.f32 %v2709, %v2889
  %v2995 = vadd.f32 %v2710, %v2890
  %v2996 = vadd.f32 %v2711, %v2891
  %v2997 = vadd.f32 %v2712, %v2892
  %v2998 = vadd.f32 %v2713, %v2893
  %v2999 = vadd.f32 %v2714, %v2894
  %v3000 = vadd.f32 %v2715, %v2895
  %v3001 = vadd.f32 %v2716, %v2896
  %v3002 = vadd.f32 %v2717, %v2897
  %v3003 = vadd.f32 %v2718, %v2898
  %v3004 = vadd.f32 %v2719, %v2899
  %v3005 = vadd.f32 %v2720, %v2900
  %v3006 = vadd.f32 %v2721, %v2901
  %v3007 = vadd.f32 %v2722, %v2902
  %v3008 = vadd.f32 %v2723, %v2903
  %v3009 = vadd.f32 %v2724, %v2904
  %v3010 = vadd.f32 %v2725, %v2905
  %v3011 = vadd.f32 %v2726, %v2906
  %v3012 = vadd.f32 %v2727, %v2907
  %v3013 = vadd.f32 %v2728, %v2908
  %v3014 = vadd.f32 %v2729, %v2909
  %v3015 = vadd.f32 %v2730, %v2910
  %v3016 = vadd.f32 %v2731, %v2911
  %v3017 = vadd.f32 %v2732, %v2912
  %v3018 = vadd.f32 %v2733, %v2913
  %v3019 = vadd.f32 %v2734, %v2914
  %v3020 = vadd.f32 %v2735, %v2915
  %v3021 = vadd.f32 %v2736, %v2916
  %v3022 = vadd.f32 %v2737, %v2917
  %v3023 = vadd.f32 %v2738, %v2918
  %v3024 = vadd.f32 %v2739, %v2919
  %v3025 = vadd.f32 %v2740, %v2920
  %v3026 = vadd.f32 %v2741, %v2921
  %v3027 = vadd.f32 %v2742, %v2922
  %v3028 = vadd.f32 %v2743, %v2923
  %v3029 = vadd.f32 %v2744, %v2924
  %v3030 = vadd.f32 %v2745, %v2925
  %v3031 = vadd.f32 %v2746, %v2926
  %v3032 = vadd.f32 %v2747, %v2927
  %v3033 = vadd.f32 %v2748, %v2928
  %v3034 = vadd.f32 %v2749, %v2929
  %v3035 = vadd.f32 %v2750, %v2930
  %v3036 = vadd.f32 %v2751, %v2931
  %v3037 = vadd.f32 %v2752, %v2932
  %v3038 = vadd.f32 %v2753, %v2933
  %v3039 = vadd.f32 %v2754, %v2934
  %v3040 = vadd.f32 %v2755, %v2935
  %v3041 = vadd.f32 %v2756, %v2936
  %v3042 = vadd.f32 %v2757, %v2937
  %v3043 = vadd.f32 %v2758, %v2938
  %v3044 = vadd.f32 %v2759, %v2939
  %v3045 = vadd.f32 %v2760, %v2940
  %v3046 = vadd.f32 %v2761, %v2941
  %v3047 = vadd.f32 %v2762, %v2942
  %v3048 = vadd.f32 %v2763, %v2943
  %v3049 = vadd.f32 %v2764, %v2944
  %v3050 = vadd.f32 %v2765, %v2945
  %v3051 = vadd.f32 %v2766, %v2946
  %v3052 = vadd.f32 %v2767, %v2947
  %v3053 = vadd.f32 %v2768, %v2948
  %v3054 = vadd.f32 %v2769, %v2949
  %v3055 = vadd.f32 %v2770, %v2950
  %v3056 = vadd.f32 %v2771, %v2951
  %v3057 = vadd.f32 %v2772, %v2952
  %v3058 = vadd.f32 %v2773, %v2953
  %v3059 = vadd.f32 %v2774, %v2954
  %v3060 = vadd.f32 %v2775, %v2955
  %3061 = vrot.lane.b32.xlu0 %v1749, 28
  %v3062 = vpop.permute.xlu0 %3061
  %3063 = vrot.lane.b32.xlu0 %v1756, 28
  %v3064 = vpop.permute.xlu0 %3063
  %3065 = vrot.lane.b32.xlu0 %v1763, 28
  %v3066 = vpop.permute.xlu0 %3065
  %3067 = vrot.lane.b32.xlu0 %v1770, 28
  %v3068 = vpop.permute.xlu0 %3067
  %3069 = vrot.lane.b32.xlu0 %v1777, 28
  %v3070 = vpop.permute.xlu0 %3069
  %3071 = vrot.lane.b32.xlu0 %v1784, 28
  %v3072 = vpop.permute.xlu0 %3071
  %3073 = vrot.lane.b32.xlu0 %v1791, 28
  %v3074 = vpop.permute.xlu0 %3073
  %3075 = vrot.lane.b32.xlu0 %v1798, 28
  %v3076 = vpop.permute.xlu0 %3075
  %3077 = vrot.lane.b32.xlu0 %v1805, 28
  %v3078 = vpop.permute.xlu0 %3077
  %3079 = vrot.lane.b32.xlu0 %v1812, 28
  %v3080 = vpop.permute.xlu0 %3079
  %3081 = vrot.lane.b32.xlu0 %v1819, 28
  %v3082 = vpop.permute.xlu0 %3081
  %3083 = vrot.lane.b32.xlu0 %v1826, 28
  %v3084 = vpop.permute.xlu0 %3083
  %3085 = vrot.lane.b32.xlu0 %v1833, 28
  %v3086 = vpop.permute.xlu0 %3085
  %3087 = vrot.lane.b32.xlu0 %v1840, 28
  %v3088 = vpop.permute.xlu0 %3087
  %3089 = vrot.lane.b32.xlu0 %v1847, 28
  %v3090 = vpop.permute.xlu0 %3089
  %3091 = vrot.lane.b32.xlu0 %v1750, 28
  %v3092 = vpop.permute.xlu0 %3091
  %3093 = vrot.lane.b32.xlu0 %v1757, 28
  %v3094 = vpop.permute.xlu0 %3093
  %3095 = vrot.lane.b32.xlu0 %v1764, 28
  %v3096 = vpop.permute.xlu0 %3095
  %3097 = vrot.lane.b32.xlu0 %v1771, 28
  %v3098 = vpop.permute.xlu0 %3097
  %3099 = vrot.lane.b32.xlu0 %v1778, 28
  %v3100 = vpop.permute.xlu0 %3099
  %3101 = vrot.lane.b32.xlu0 %v1785, 28
  %v3102 = vpop.permute.xlu0 %3101
  %3103 = vrot.lane.b32.xlu0 %v1792, 28
  %v3104 = vpop.permute.xlu0 %3103
  %3105 = vrot.lane.b32.xlu0 %v1799, 28
  %v3106 = vpop.permute.xlu0 %3105
  %3107 = vrot.lane.b32.xlu0 %v1806, 28
  %v3108 = vpop.permute.xlu0 %3107
  %3109 = vrot.lane.b32.xlu0 %v1813, 28
  %v3110 = vpop.permute.xlu0 %3109
  %3111 = vrot.lane.b32.xlu0 %v1820, 28
  %v3112 = vpop.permute.xlu0 %3111
  %3113 = vrot.lane.b32.xlu0 %v1827, 28
  %v3114 = vpop.permute.xlu0 %3113
  %3115 = vrot.lane.b32.xlu0 %v1834, 28
  %v3116 = vpop.permute.xlu0 %3115
  %3117 = vrot.lane.b32.xlu0 %v1841, 28
  %v3118 = vpop.permute.xlu0 %3117
  %3119 = vrot.lane.b32.xlu0 %v1848, 28
  %v3120 = vpop.permute.xlu0 %3119
  %3121 = vrot.lane.b32.xlu0 %v1751, 28
  %v3122 = vpop.permute.xlu0 %3121
  %3123 = vrot.lane.b32.xlu0 %v1758, 28
  %v3124 = vpop.permute.xlu0 %3123
  %3125 = vrot.lane.b32.xlu0 %v1765, 28
  %v3126 = vpop.permute.xlu0 %3125
  %3127 = vrot.lane.b32.xlu0 %v1772, 28
  %v3128 = vpop.permute.xlu0 %3127
  %3129 = vrot.lane.b32.xlu0 %v1779, 28
  %v3130 = vpop.permute.xlu0 %3129
  %3131 = vrot.lane.b32.xlu0 %v1786, 28
  %v3132 = vpop.permute.xlu0 %3131
  %3133 = vrot.lane.b32.xlu0 %v1793, 28
  %v3134 = vpop.permute.xlu0 %3133
  %3135 = vrot.lane.b32.xlu0 %v1800, 28
  %v3136 = vpop.permute.xlu0 %3135
  %3137 = vrot.lane.b32.xlu0 %v1807, 28
  %v3138 = vpop.permute.xlu0 %3137
  %3139 = vrot.lane.b32.xlu0 %v1814, 28
  %v3140 = vpop.permute.xlu0 %3139
  %3141 = vrot.lane.b32.xlu0 %v1821, 28
  %v3142 = vpop.permute.xlu0 %3141
  %3143 = vrot.lane.b32.xlu0 %v1828, 28
  %v3144 = vpop.permute.xlu0 %3143
  %3145 = vrot.lane.b32.xlu0 %v1835, 28
  %v3146 = vpop.permute.xlu0 %3145
  %3147 = vrot.lane.b32.xlu0 %v1842, 28
  %v3148 = vpop.permute.xlu0 %3147
  %3149 = vrot.lane.b32.xlu0 %v1849, 28
  %v3150 = vpop.permute.xlu0 %3149
  %3151 = vrot.lane.b32.xlu0 %v1752, 28
  %v3152 = vpop.permute.xlu0 %3151
  %3153 = vrot.lane.b32.xlu0 %v1759, 28
  %v3154 = vpop.permute.xlu0 %3153
  %3155 = vrot.lane.b32.xlu0 %v1766, 28
  %v3156 = vpop.permute.xlu0 %3155
  %3157 = vrot.lane.b32.xlu0 %v1773, 28
  %v3158 = vpop.permute.xlu0 %3157
  %3159 = vrot.lane.b32.xlu0 %v1780, 28
  %v3160 = vpop.permute.xlu0 %3159
  %3161 = vrot.lane.b32.xlu0 %v1787, 28
  %v3162 = vpop.permute.xlu0 %3161
  %3163 = vrot.lane.b32.xlu0 %v1794, 28
  %v3164 = vpop.permute.xlu0 %3163
  %3165 = vrot.lane.b32.xlu0 %v1801, 28
  %v3166 = vpop.permute.xlu0 %3165
  %3167 = vrot.lane.b32.xlu0 %v1808, 28
  %v3168 = vpop.permute.xlu0 %3167
  %3169 = vrot.lane.b32.xlu0 %v1815, 28
  %v3170 = vpop.permute.xlu0 %3169
  %3171 = vrot.lane.b32.xlu0 %v1822, 28
  %v3172 = vpop.permute.xlu0 %3171
  %3173 = vrot.lane.b32.xlu0 %v1829, 28
  %v3174 = vpop.permute.xlu0 %3173
  %3175 = vrot.lane.b32.xlu0 %v1836, 28
  %v3176 = vpop.permute.xlu0 %3175
  %3177 = vrot.lane.b32.xlu0 %v1843, 28
  %v3178 = vpop.permute.xlu0 %3177
  %3179 = vrot.lane.b32.xlu0 %v1850, 28
  %v3180 = vpop.permute.xlu0 %3179
  %3181 = vrot.lane.b32.xlu0 %v1753, 28
  %v3182 = vpop.permute.xlu0 %3181
  %3183 = vrot.lane.b32.xlu0 %v1760, 28
  %v3184 = vpop.permute.xlu0 %3183
  %3185 = vrot.lane.b32.xlu0 %v1767, 28
  %v3186 = vpop.permute.xlu0 %3185
  %3187 = vrot.lane.b32.xlu0 %v1774, 28
  %v3188 = vpop.permute.xlu0 %3187
  %3189 = vrot.lane.b32.xlu0 %v1781, 28
  %v3190 = vpop.permute.xlu0 %3189
  %3191 = vrot.lane.b32.xlu0 %v1788, 28
  %v3192 = vpop.permute.xlu0 %3191
  %3193 = vrot.lane.b32.xlu0 %v1795, 28
  %v3194 = vpop.permute.xlu0 %3193
  %3195 = vrot.lane.b32.xlu0 %v1802, 28
  %v3196 = vpop.permute.xlu0 %3195
  %3197 = vrot.lane.b32.xlu0 %v1809, 28
  %v3198 = vpop.permute.xlu0 %3197
  %3199 = vrot.lane.b32.xlu0 %v1816, 28
  %v3200 = vpop.permute.xlu0 %3199
  %3201 = vrot.lane.b32.xlu0 %v1823, 28
  %v3202 = vpop.permute.xlu0 %3201
  %3203 = vrot.lane.b32.xlu0 %v1830, 28
  %v3204 = vpop.permute.xlu0 %3203
  %3205 = vrot.lane.b32.xlu0 %v1837, 28
  %v3206 = vpop.permute.xlu0 %3205
  %3207 = vrot.lane.b32.xlu0 %v1844, 28
  %v3208 = vpop.permute.xlu0 %3207
  %3209 = vrot.lane.b32.xlu0 %v1851, 28
  %v3210 = vpop.permute.xlu0 %3209
  %3211 = vrot.lane.b32.xlu0 %v1754, 28
  %v3212 = vpop.permute.xlu0 %3211
  %3213 = vrot.lane.b32.xlu0 %v1761, 28
  %v3214 = vpop.permute.xlu0 %3213
  %3215 = vrot.lane.b32.xlu0 %v1768, 28
  %v3216 = vpop.permute.xlu0 %3215
  %3217 = vrot.lane.b32.xlu0 %v1775, 28
  %v3218 = vpop.permute.xlu0 %3217
  %3219 = vrot.lane.b32.xlu0 %v1782, 28
  %v3220 = vpop.permute.xlu0 %3219
  %3221 = vrot.lane.b32.xlu0 %v1789, 28
  %v3222 = vpop.permute.xlu0 %3221
  %3223 = vrot.lane.b32.xlu0 %v1796, 28
  %v3224 = vpop.permute.xlu0 %3223
  %3225 = vrot.lane.b32.xlu0 %v1803, 28
  %v3226 = vpop.permute.xlu0 %3225
  %3227 = vrot.lane.b32.xlu0 %v1810, 28
  %v3228 = vpop.permute.xlu0 %3227
  %3229 = vrot.lane.b32.xlu0 %v1817, 28
  %v3230 = vpop.permute.xlu0 %3229
  %3231 = vrot.lane.b32.xlu0 %v1824, 28
  %v3232 = vpop.permute.xlu0 %3231
  %3233 = vrot.lane.b32.xlu0 %v1831, 28
  %v3234 = vpop.permute.xlu0 %3233
  %3235 = vrot.lane.b32.xlu0 %v1838, 28
  %v3236 = vpop.permute.xlu0 %3235
  %3237 = vrot.lane.b32.xlu0 %v1845, 28
  %v3238 = vpop.permute.xlu0 %3237
  %3239 = vrot.lane.b32.xlu0 %v1852, 28
  %v3240 = vpop.permute.xlu0 %3239
  %3241 = vrot.lane.b32.xlu0 %v1755, 28
  %v3242 = vpop.permute.xlu0 %3241
  %3243 = vrot.lane.b32.xlu0 %v1762, 28
  %v3244 = vpop.permute.xlu0 %3243
  %3245 = vrot.lane.b32.xlu0 %v1769, 28
  %v3246 = vpop.permute.xlu0 %3245
  %3247 = vrot.lane.b32.xlu0 %v1776, 28
  %v3248 = vpop.permute.xlu0 %3247
  %3249 = vrot.lane.b32.xlu0 %v1783, 28
  %v3250 = vpop.permute.xlu0 %3249
  %3251 = vrot.lane.b32.xlu0 %v1790, 28
  %v3252 = vpop.permute.xlu0 %3251
  %3253 = vrot.lane.b32.xlu0 %v1797, 28
  %v3254 = vpop.permute.xlu0 %3253
  %3255 = vrot.lane.b32.xlu0 %v1804, 28
  %v3256 = vpop.permute.xlu0 %3255
  %3257 = vrot.lane.b32.xlu0 %v1811, 28
  %v3258 = vpop.permute.xlu0 %3257
  %3259 = vrot.lane.b32.xlu0 %v1818, 28
  %v3260 = vpop.permute.xlu0 %3259
  %3261 = vrot.lane.b32.xlu0 %v1825, 28
  %v3262 = vpop.permute.xlu0 %3261
  %3263 = vrot.lane.b32.xlu0 %v1832, 28
  %v3264 = vpop.permute.xlu0 %3263
  %3265 = vrot.lane.b32.xlu0 %v1839, 28
  %v3266 = vpop.permute.xlu0 %3265
  %3267 = vrot.lane.b32.xlu0 %v1846, 28
  %v3268 = vpop.permute.xlu0 %3267
  %3269 = vrot.lane.b32.xlu0 %v1853, 28
  %v3270 = vpop.permute.xlu0 %3269
  %vm3271 = vcmp.lt.s32.totalorder %v1606, 28
  %v3272 = vsel %vm3271, %v3212, %v3242
  %v3273 = vsel %vm3271, %v3214, %v3244
  %v3274 = vsel %vm3271, %v3216, %v3246
  %v3275 = vsel %vm3271, %v3218, %v3248
  %v3276 = vsel %vm3271, %v3220, %v3250
  %v3277 = vsel %vm3271, %v3222, %v3252
  %v3278 = vsel %vm3271, %v3224, %v3254
  %v3279 = vsel %vm3271, %v3226, %v3256
  %v3280 = vsel %vm3271, %v3228, %v3258
  %v3281 = vsel %vm3271, %v3230, %v3260
  %v3282 = vsel %vm3271, %v3232, %v3262
  %v3283 = vsel %vm3271, %v3234, %v3264
  %v3284 = vsel %vm3271, %v3236, %v3266
  %v3285 = vsel %vm3271, %v3238, %v3268
  %v3286 = vsel %vm3271, %v3240, %v3270
  %v3287 = vsel %vm3271, %v3182, %v3212
  %v3288 = vsel %vm3271, %v3184, %v3214
  %v3289 = vsel %vm3271, %v3186, %v3216
  %v3290 = vsel %vm3271, %v3188, %v3218
  %v3291 = vsel %vm3271, %v3190, %v3220
  %v3292 = vsel %vm3271, %v3192, %v3222
  %v3293 = vsel %vm3271, %v3194, %v3224
  %v3294 = vsel %vm3271, %v3196, %v3226
  %v3295 = vsel %vm3271, %v3198, %v3228
  %v3296 = vsel %vm3271, %v3200, %v3230
  %v3297 = vsel %vm3271, %v3202, %v3232
  %v3298 = vsel %vm3271, %v3204, %v3234
  %v3299 = vsel %vm3271, %v3206, %v3236
  %v3300 = vsel %vm3271, %v3208, %v3238
  %v3301 = vsel %vm3271, %v3210, %v3240
  %v3302 = vsel %vm3271, %v3152, %v3182
  %v3303 = vsel %vm3271, %v3154, %v3184
  %v3304 = vsel %vm3271, %v3156, %v3186
  %v3305 = vsel %vm3271, %v3158, %v3188
  %v3306 = vsel %vm3271, %v3160, %v3190
  %v3307 = vsel %vm3271, %v3162, %v3192
  %v3308 = vsel %vm3271, %v3164, %v3194
  %v3309 = vsel %vm3271, %v3166, %v3196
  %v3310 = vsel %vm3271, %v3168, %v3198
  %v3311 = vsel %vm3271, %v3170, %v3200
  %v3312 = vsel %vm3271, %v3172, %v3202
  %v3313 = vsel %vm3271, %v3174, %v3204
  %v3314 = vsel %vm3271, %v3176, %v3206
  %v3315 = vsel %vm3271, %v3178, %v3208
  %v3316 = vsel %vm3271, %v3180, %v3210
  %v3317 = vsel %vm3271, %v3122, %v3152
  %v3318 = vsel %vm3271, %v3124, %v3154
  %v3319 = vsel %vm3271, %v3126, %v3156
  %v3320 = vsel %vm3271, %v3128, %v3158
  %v3321 = vsel %vm3271, %v3130, %v3160
  %v3322 = vsel %vm3271, %v3132, %v3162
  %v3323 = vsel %vm3271, %v3134, %v3164
  %v3324 = vsel %vm3271, %v3136, %v3166
  %v3325 = vsel %vm3271, %v3138, %v3168
  %v3326 = vsel %vm3271, %v3140, %v3170
  %v3327 = vsel %vm3271, %v3142, %v3172
  %v3328 = vsel %vm3271, %v3144, %v3174
  %v3329 = vsel %vm3271, %v3146, %v3176
  %v3330 = vsel %vm3271, %v3148, %v3178
  %v3331 = vsel %vm3271, %v3150, %v3180
  %v3332 = vsel %vm3271, %v3092, %v3122
  %v3333 = vsel %vm3271, %v3094, %v3124
  %v3334 = vsel %vm3271, %v3096, %v3126
  %v3335 = vsel %vm3271, %v3098, %v3128
  %v3336 = vsel %vm3271, %v3100, %v3130
  %v3337 = vsel %vm3271, %v3102, %v3132
  %v3338 = vsel %vm3271, %v3104, %v3134
  %v3339 = vsel %vm3271, %v3106, %v3136
  %v3340 = vsel %vm3271, %v3108, %v3138
  %v3341 = vsel %vm3271, %v3110, %v3140
  %v3342 = vsel %vm3271, %v3112, %v3142
  %v3343 = vsel %vm3271, %v3114, %v3144
  %v3344 = vsel %vm3271, %v3116, %v3146
  %v3345 = vsel %vm3271, %v3118, %v3148
  %v3346 = vsel %vm3271, %v3120, %v3150
  %v3347 = vsel %vm3271, %v3062, %v3092
  %v3348 = vsel %vm3271, %v3064, %v3094
  %v3349 = vsel %vm3271, %v3066, %v3096
  %v3350 = vsel %vm3271, %v3068, %v3098
  %v3351 = vsel %vm3271, %v3070, %v3100
  %v3352 = vsel %vm3271, %v3072, %v3102
  %v3353 = vsel %vm3271, %v3074, %v3104
  %v3354 = vsel %vm3271, %v3076, %v3106
  %v3355 = vsel %vm3271, %v3078, %v3108
  %v3356 = vsel %vm3271, %v3080, %v3110
  %v3357 = vsel %vm3271, %v3082, %v3112
  %v3358 = vsel %vm3271, %v3084, %v3114
  %v3359 = vsel %vm3271, %v3086, %v3116
  %v3360 = vsel %vm3271, %v3088, %v3118
  %v3361 = vsel %vm3271, %v3090, %v3120
  %v3362 = vsel %vm3271, %v3242, %v3062
  %v3363 = vsel %vm3271, %v3244, %v3064
  %v3364 = vsel %vm3271, %v3246, %v3066
  %v3365 = vsel %vm3271, %v3248, %v3068
  %v3366 = vsel %vm3271, %v3250, %v3070
  %v3367 = vsel %vm3271, %v3252, %v3072
  %v3368 = vsel %vm3271, %v3254, %v3074
  %v3369 = vsel %vm3271, %v3256, %v3076
  %v3370 = vsel %vm3271, %v3258, %v3078
  %v3371 = vsel %vm3271, %v3260, %v3080
  %v3372 = vsel %vm3271, %v3262, %v3082
  %v3373 = vsel %vm3271, %v3264, %v3084
  %v3374 = vsel %vm3271, %v3266, %v3086
  %v3375 = vsel %vm3271, %v3268, %v3088
  %v3376 = vsel %vm3271, %v3270, %v3090
  %3378 = vset.pattern.permute.xlu0 0
  %3379 = vperm.xlu0 %3378, %v1252
  %v3380 = vpop.permute.xlu0 %3379
  %3383 = vset.pattern.permute.xlu0 0
  %3384 = vperm.xlu0 %3383, %v1253
  %v3385 = vpop.permute.xlu0 %3384
  %3388 = vset.pattern.permute.xlu0 0
  %3389 = vperm.xlu0 %3388, %v1254
  %v3390 = vpop.permute.xlu0 %3389
  %3393 = vset.pattern.permute.xlu0 0
  %3394 = vperm.xlu0 %3393, %v1255
  %v3395 = vpop.permute.xlu0 %3394
  %3398 = vset.pattern.permute.xlu0 0
  %3399 = vperm.xlu0 %3398, %v1256
  %v3400 = vpop.permute.xlu0 %3399
  %3403 = vset.pattern.permute.xlu0 0
  %3404 = vperm.xlu0 %3403, %v1257
  %v3405 = vpop.permute.xlu0 %3404
  %3408 = vset.pattern.permute.xlu0 0
  %3409 = vperm.xlu0 %3408, %v1258
  %v3410 = vpop.permute.xlu0 %3409
  %3413 = vset.pattern.permute.xlu0 0
  %3414 = vperm.xlu0 %3413, %v1259
  %v3415 = vpop.permute.xlu0 %3414
  %3418 = vset.pattern.permute.xlu0 0
  %3419 = vperm.xlu0 %3418, %v1260
  %v3420 = vpop.permute.xlu0 %3419
  %3423 = vset.pattern.permute.xlu0 0
  %3424 = vperm.xlu0 %3423, %v1261
  %v3425 = vpop.permute.xlu0 %3424
  %3428 = vset.pattern.permute.xlu0 0
  %3429 = vperm.xlu0 %3428, %v1262
  %v3430 = vpop.permute.xlu0 %3429
  %3433 = vset.pattern.permute.xlu0 0
  %3434 = vperm.xlu0 %3433, %v1263
  %v3435 = vpop.permute.xlu0 %3434
  %3438 = vset.pattern.permute.xlu0 0
  %3439 = vperm.xlu0 %3438, %v1264
  %v3440 = vpop.permute.xlu0 %3439
  %3443 = vset.pattern.permute.xlu0 0
  %3444 = vperm.xlu0 %3443, %v1265
  %v3445 = vpop.permute.xlu0 %3444
  %3448 = vset.pattern.permute.xlu0 0
  %3449 = vperm.xlu0 %3448, %v1266
  %v3450 = vpop.permute.xlu0 %3449
  %v3452 = vmul.f32 %v3362, %v3380
  %v3453 = vmul.f32 %v3347, %v3380
  %v3454 = vmul.f32 %v3332, %v3380
  %v3455 = vmul.f32 %v3317, %v3380
  %v3456 = vmul.f32 %v3302, %v3380
  %v3457 = vmul.f32 %v3287, %v3380
  %v3458 = vmul.f32 %v3272, %v3380
  %v3459 = vmul.f32 %v3363, %v3385
  %v3460 = vmul.f32 %v3348, %v3385
  %v3461 = vmul.f32 %v3333, %v3385
  %v3462 = vmul.f32 %v3318, %v3385
  %v3463 = vmul.f32 %v3303, %v3385
  %v3464 = vmul.f32 %v3288, %v3385
  %v3465 = vmul.f32 %v3273, %v3385
  %v3466 = vmul.f32 %v3364, %v3390
  %v3467 = vmul.f32 %v3349, %v3390
  %v3468 = vmul.f32 %v3334, %v3390
  %v3469 = vmul.f32 %v3319, %v3390
  %v3470 = vmul.f32 %v3304, %v3390
  %v3471 = vmul.f32 %v3289, %v3390
  %v3472 = vmul.f32 %v3274, %v3390
  %v3473 = vmul.f32 %v3365, %v3395
  %v3474 = vmul.f32 %v3350, %v3395
  %v3475 = vmul.f32 %v3335, %v3395
  %v3476 = vmul.f32 %v3320, %v3395
  %v3477 = vmul.f32 %v3305, %v3395
  %v3478 = vmul.f32 %v3290, %v3395
  %v3479 = vmul.f32 %v3275, %v3395
  %v3480 = vmul.f32 %v3366, %v3400
  %v3481 = vmul.f32 %v3351, %v3400
  %v3482 = vmul.f32 %v3336, %v3400
  %v3483 = vmul.f32 %v3321, %v3400
  %v3484 = vmul.f32 %v3306, %v3400
  %v3485 = vmul.f32 %v3291, %v3400
  %v3486 = vmul.f32 %v3276, %v3400
  %v3487 = vmul.f32 %v3367, %v3405
  %v3488 = vmul.f32 %v3352, %v3405
  %v3489 = vmul.f32 %v3337, %v3405
  %v3490 = vmul.f32 %v3322, %v3405
  %v3491 = vmul.f32 %v3307, %v3405
  %v3492 = vmul.f32 %v3292, %v3405
  %v3493 = vmul.f32 %v3277, %v3405
  %v3494 = vmul.f32 %v3368, %v3410
  %v3495 = vmul.f32 %v3353, %v3410
  %v3496 = vmul.f32 %v3338, %v3410
  %v3497 = vmul.f32 %v3323, %v3410
  %v3498 = vmul.f32 %v3308, %v3410
  %v3499 = vmul.f32 %v3293, %v3410
  %v3500 = vmul.f32 %v3278, %v3410
  %v3501 = vmul.f32 %v3369, %v3415
  %v3502 = vmul.f32 %v3354, %v3415
  %v3503 = vmul.f32 %v3339, %v3415
  %v3504 = vmul.f32 %v3324, %v3415
  %v3505 = vmul.f32 %v3309, %v3415
  %v3506 = vmul.f32 %v3294, %v3415
  %v3507 = vmul.f32 %v3279, %v3415
  %v3508 = vmul.f32 %v3370, %v3420
  %v3509 = vmul.f32 %v3355, %v3420
  %v3510 = vmul.f32 %v3340, %v3420
  %v3511 = vmul.f32 %v3325, %v3420
  %v3512 = vmul.f32 %v3310, %v3420
  %v3513 = vmul.f32 %v3295, %v3420
  %v3514 = vmul.f32 %v3280, %v3420
  %v3515 = vmul.f32 %v3371, %v3425
  %v3516 = vmul.f32 %v3356, %v3425
  %v3517 = vmul.f32 %v3341, %v3425
  %v3518 = vmul.f32 %v3326, %v3425
  %v3519 = vmul.f32 %v3311, %v3425
  %v3520 = vmul.f32 %v3296, %v3425
  %v3521 = vmul.f32 %v3281, %v3425
  %v3522 = vmul.f32 %v3372, %v3430
  %v3523 = vmul.f32 %v3357, %v3430
  %v3524 = vmul.f32 %v3342, %v3430
  %v3525 = vmul.f32 %v3327, %v3430
  %v3526 = vmul.f32 %v3312, %v3430
  %v3527 = vmul.f32 %v3297, %v3430
  %v3528 = vmul.f32 %v3282, %v3430
  %v3529 = vmul.f32 %v3373, %v3435
  %v3530 = vmul.f32 %v3358, %v3435
  %v3531 = vmul.f32 %v3343, %v3435
  %v3532 = vmul.f32 %v3328, %v3435
  %v3533 = vmul.f32 %v3313, %v3435
  %v3534 = vmul.f32 %v3298, %v3435
  %v3535 = vmul.f32 %v3283, %v3435
  %v3536 = vmul.f32 %v3374, %v3440
  %v3537 = vmul.f32 %v3359, %v3440
  %v3538 = vmul.f32 %v3344, %v3440
  %v3539 = vmul.f32 %v3329, %v3440
  %v3540 = vmul.f32 %v3314, %v3440
  %v3541 = vmul.f32 %v3299, %v3440
  %v3542 = vmul.f32 %v3284, %v3440
  %v3543 = vmul.f32 %v3375, %v3445
  %v3544 = vmul.f32 %v3360, %v3445
  %v3545 = vmul.f32 %v3345, %v3445
  %v3546 = vmul.f32 %v3330, %v3445
  %v3547 = vmul.f32 %v3315, %v3445
  %v3548 = vmul.f32 %v3300, %v3445
  %v3549 = vmul.f32 %v3285, %v3445
  %v3550 = vmul.f32 %v3376, %v3450
  %v3551 = vmul.f32 %v3361, %v3450
  %v3552 = vmul.f32 %v3346, %v3450
  %v3553 = vmul.f32 %v3331, %v3450
  %v3554 = vmul.f32 %v3316, %v3450
  %v3555 = vmul.f32 %v3301, %v3450
  %v3556 = vmul.f32 %v3286, %v3450
  %v3557 = vadd.f32 %v2956, %v3452
  %v3558 = vadd.f32 %v2957, %v3453
  %v3559 = vadd.f32 %v2958, %v3454
  %v3560 = vadd.f32 %v2959, %v3455
  %v3561 = vadd.f32 %v2960, %v3456
  %v3562 = vadd.f32 %v2961, %v3457
  %v3563 = vadd.f32 %v2962, %v3458
  %v3564 = vadd.f32 %v2963, %v3459
  %v3565 = vadd.f32 %v2964, %v3460
  %v3566 = vadd.f32 %v2965, %v3461
  %v3567 = vadd.f32 %v2966, %v3462
  %v3568 = vadd.f32 %v2967, %v3463
  %v3569 = vadd.f32 %v2968, %v3464
  %v3570 = vadd.f32 %v2969, %v3465
  %v3571 = vadd.f32 %v2970, %v3466
  %v3572 = vadd.f32 %v2971, %v3467
  %v3573 = vadd.f32 %v2972, %v3468
  %v3574 = vadd.f32 %v2973, %v3469
  %v3575 = vadd.f32 %v2974, %v3470
  %v3576 = vadd.f32 %v2975, %v3471
  %v3577 = vadd.f32 %v2976, %v3472
  %v3578 = vadd.f32 %v2977, %v3473
  %v3579 = vadd.f32 %v2978, %v3474
  %v3580 = vadd.f32 %v2979, %v3475
  %v3581 = vadd.f32 %v2980, %v3476
  %v3582 = vadd.f32 %v2981, %v3477
  %v3583 = vadd.f32 %v2982, %v3478
  %v3584 = vadd.f32 %v2983, %v3479
  %v3585 = vadd.f32 %v2984, %v3480
  %v3586 = vadd.f32 %v2985, %v3481
  %v3587 = vadd.f32 %v2986, %v3482
  %v3588 = vadd.f32 %v2987, %v3483
  %v3589 = vadd.f32 %v2988, %v3484
  %v3590 = vadd.f32 %v2989, %v3485
  %v3591 = vadd.f32 %v2990, %v3486
  %v3592 = vadd.f32 %v2991, %v3487
  %v3593 = vadd.f32 %v2992, %v3488
  %v3594 = vadd.f32 %v2993, %v3489
  %v3595 = vadd.f32 %v2994, %v3490
  %v3596 = vadd.f32 %v2995, %v3491
  %v3597 = vadd.f32 %v2996, %v3492
  %v3598 = vadd.f32 %v2997, %v3493
  %v3599 = vadd.f32 %v2998, %v3494
  %v3600 = vadd.f32 %v2999, %v3495
  %v3601 = vadd.f32 %v3000, %v3496
  %v3602 = vadd.f32 %v3001, %v3497
  %v3603 = vadd.f32 %v3002, %v3498
  %v3604 = vadd.f32 %v3003, %v3499
  %v3605 = vadd.f32 %v3004, %v3500
  %v3606 = vadd.f32 %v3005, %v3501
  %v3607 = vadd.f32 %v3006, %v3502
  %v3608 = vadd.f32 %v3007, %v3503
  %v3609 = vadd.f32 %v3008, %v3504
  %v3610 = vadd.f32 %v3009, %v3505
  %v3611 = vadd.f32 %v3010, %v3506
  %v3612 = vadd.f32 %v3011, %v3507
  %v3613 = vadd.f32 %v3012, %v3508
  %v3614 = vadd.f32 %v3013, %v3509
  %v3615 = vadd.f32 %v3014, %v3510
  %v3616 = vadd.f32 %v3015, %v3511
  %v3617 = vadd.f32 %v3016, %v3512
  %v3618 = vadd.f32 %v3017, %v3513
  %v3619 = vadd.f32 %v3018, %v3514
  %v3620 = vadd.f32 %v3019, %v3515
  %v3621 = vadd.f32 %v3020, %v3516
  %v3622 = vadd.f32 %v3021, %v3517
  %v3623 = vadd.f32 %v3022, %v3518
  %v3624 = vadd.f32 %v3023, %v3519
  %v3625 = vadd.f32 %v3024, %v3520
  %v3626 = vadd.f32 %v3025, %v3521
  %v3627 = vadd.f32 %v3026, %v3522
  %v3628 = vadd.f32 %v3027, %v3523
  %v3629 = vadd.f32 %v3028, %v3524
  %v3630 = vadd.f32 %v3029, %v3525
  %v3631 = vadd.f32 %v3030, %v3526
  %v3632 = vadd.f32 %v3031, %v3527
  %v3633 = vadd.f32 %v3032, %v3528
  %v3634 = vadd.f32 %v3033, %v3529
  %v3635 = vadd.f32 %v3034, %v3530
  %v3636 = vadd.f32 %v3035, %v3531
  %v3637 = vadd.f32 %v3036, %v3532
  %v3638 = vadd.f32 %v3037, %v3533
  %v3639 = vadd.f32 %v3038, %v3534
  %v3640 = vadd.f32 %v3039, %v3535
  %v3641 = vadd.f32 %v3040, %v3536
  %v3642 = vadd.f32 %v3041, %v3537
  %v3643 = vadd.f32 %v3042, %v3538
  %v3644 = vadd.f32 %v3043, %v3539
  %v3645 = vadd.f32 %v3044, %v3540
  %v3646 = vadd.f32 %v3045, %v3541
  %v3647 = vadd.f32 %v3046, %v3542
  %v3648 = vadd.f32 %v3047, %v3543
  %v3649 = vadd.f32 %v3048, %v3544
  %v3650 = vadd.f32 %v3049, %v3545
  %v3651 = vadd.f32 %v3050, %v3546
  %v3652 = vadd.f32 %v3051, %v3547
  %v3653 = vadd.f32 %v3052, %v3548
  %v3654 = vadd.f32 %v3053, %v3549
  %v3655 = vadd.f32 %v3054, %v3550
  %v3656 = vadd.f32 %v3055, %v3551
  %v3657 = vadd.f32 %v3056, %v3552
  %v3658 = vadd.f32 %v3057, %v3553
  %v3659 = vadd.f32 %v3058, %v3554
  %v3660 = vadd.f32 %v3059, %v3555
  %v3661 = vadd.f32 %v3060, %v3556
  %3662 = vrot.lane.b32.xlu0 %v1147, 28
  %v3663 = vpop.permute.xlu0 %3662
  %3664 = vrot.lane.b32.xlu0 %v1154, 28
  %v3665 = vpop.permute.xlu0 %3664
  %3666 = vrot.lane.b32.xlu0 %v1161, 28
  %v3667 = vpop.permute.xlu0 %3666
  %3668 = vrot.lane.b32.xlu0 %v1168, 28
  %v3669 = vpop.permute.xlu0 %3668
  %3670 = vrot.lane.b32.xlu0 %v1175, 28
  %v3671 = vpop.permute.xlu0 %3670
  %3672 = vrot.lane.b32.xlu0 %v1182, 28
  %v3673 = vpop.permute.xlu0 %3672
  %3674 = vrot.lane.b32.xlu0 %v1189, 28
  %v3675 = vpop.permute.xlu0 %3674
  %3676 = vrot.lane.b32.xlu0 %v1196, 28
  %v3677 = vpop.permute.xlu0 %3676
  %3678 = vrot.lane.b32.xlu0 %v1203, 28
  %v3679 = vpop.permute.xlu0 %3678
  %3680 = vrot.lane.b32.xlu0 %v1210, 28
  %v3681 = vpop.permute.xlu0 %3680
  %3682 = vrot.lane.b32.xlu0 %v1217, 28
  %v3683 = vpop.permute.xlu0 %3682
  %3684 = vrot.lane.b32.xlu0 %v1224, 28
  %v3685 = vpop.permute.xlu0 %3684
  %3686 = vrot.lane.b32.xlu0 %v1231, 28
  %v3687 = vpop.permute.xlu0 %3686
  %3688 = vrot.lane.b32.xlu0 %v1238, 28
  %v3689 = vpop.permute.xlu0 %3688
  %3690 = vrot.lane.b32.xlu0 %v1245, 28
  %v3691 = vpop.permute.xlu0 %3690
  %3692 = vrot.lane.b32.xlu0 %v1148, 28
  %v3693 = vpop.permute.xlu0 %3692
  %3694 = vrot.lane.b32.xlu0 %v1155, 28
  %v3695 = vpop.permute.xlu0 %3694
  %3696 = vrot.lane.b32.xlu0 %v1162, 28
  %v3697 = vpop.permute.xlu0 %3696
  %3698 = vrot.lane.b32.xlu0 %v1169, 28
  %v3699 = vpop.permute.xlu0 %3698
  %3700 = vrot.lane.b32.xlu0 %v1176, 28
  %v3701 = vpop.permute.xlu0 %3700
  %3702 = vrot.lane.b32.xlu0 %v1183, 28
  %v3703 = vpop.permute.xlu0 %3702
  %3704 = vrot.lane.b32.xlu0 %v1190, 28
  %v3705 = vpop.permute.xlu0 %3704
  %3706 = vrot.lane.b32.xlu0 %v1197, 28
  %v3707 = vpop.permute.xlu0 %3706
  %3708 = vrot.lane.b32.xlu0 %v1204, 28
  %v3709 = vpop.permute.xlu0 %3708
  %3710 = vrot.lane.b32.xlu0 %v1211, 28
  %v3711 = vpop.permute.xlu0 %3710
  %3712 = vrot.lane.b32.xlu0 %v1218, 28
  %v3713 = vpop.permute.xlu0 %3712
  %3714 = vrot.lane.b32.xlu0 %v1225, 28
  %v3715 = vpop.permute.xlu0 %3714
  %3716 = vrot.lane.b32.xlu0 %v1232, 28
  %v3717 = vpop.permute.xlu0 %3716
  %3718 = vrot.lane.b32.xlu0 %v1239, 28
  %v3719 = vpop.permute.xlu0 %3718
  %3720 = vrot.lane.b32.xlu0 %v1246, 28
  %v3721 = vpop.permute.xlu0 %3720
  %3722 = vrot.lane.b32.xlu0 %v1149, 28
  %v3723 = vpop.permute.xlu0 %3722
  %3724 = vrot.lane.b32.xlu0 %v1156, 28
  %v3725 = vpop.permute.xlu0 %3724
  %3726 = vrot.lane.b32.xlu0 %v1163, 28
  %v3727 = vpop.permute.xlu0 %3726
  %3728 = vrot.lane.b32.xlu0 %v1170, 28
  %v3729 = vpop.permute.xlu0 %3728
  %3730 = vrot.lane.b32.xlu0 %v1177, 28
  %v3731 = vpop.permute.xlu0 %3730
  %3732 = vrot.lane.b32.xlu0 %v1184, 28
  %v3733 = vpop.permute.xlu0 %3732
  %3734 = vrot.lane.b32.xlu0 %v1191, 28
  %v3735 = vpop.permute.xlu0 %3734
  %3736 = vrot.lane.b32.xlu0 %v1198, 28
  %v3737 = vpop.permute.xlu0 %3736
  %3738 = vrot.lane.b32.xlu0 %v1205, 28
  %v3739 = vpop.permute.xlu0 %3738
  %3740 = vrot.lane.b32.xlu0 %v1212, 28
  %v3741 = vpop.permute.xlu0 %3740
  %3742 = vrot.lane.b32.xlu0 %v1219, 28
  %v3743 = vpop.permute.xlu0 %3742
  %3744 = vrot.lane.b32.xlu0 %v1226, 28
  %v3745 = vpop.permute.xlu0 %3744
  %3746 = vrot.lane.b32.xlu0 %v1233, 28
  %v3747 = vpop.permute.xlu0 %3746
  %3748 = vrot.lane.b32.xlu0 %v1240, 28
  %v3749 = vpop.permute.xlu0 %3748
  %3750 = vrot.lane.b32.xlu0 %v1247, 28
  %v3751 = vpop.permute.xlu0 %3750
  %3752 = vrot.lane.b32.xlu0 %v1150, 28
  %v3753 = vpop.permute.xlu0 %3752
  %3754 = vrot.lane.b32.xlu0 %v1157, 28
  %v3755 = vpop.permute.xlu0 %3754
  %3756 = vrot.lane.b32.xlu0 %v1164, 28
  %v3757 = vpop.permute.xlu0 %3756
  %3758 = vrot.lane.b32.xlu0 %v1171, 28
  %v3759 = vpop.permute.xlu0 %3758
  %3760 = vrot.lane.b32.xlu0 %v1178, 28
  %v3761 = vpop.permute.xlu0 %3760
  %3762 = vrot.lane.b32.xlu0 %v1185, 28
  %v3763 = vpop.permute.xlu0 %3762
  %3764 = vrot.lane.b32.xlu0 %v1192, 28
  %v3765 = vpop.permute.xlu0 %3764
  %3766 = vrot.lane.b32.xlu0 %v1199, 28
  %v3767 = vpop.permute.xlu0 %3766
  %3768 = vrot.lane.b32.xlu0 %v1206, 28
  %v3769 = vpop.permute.xlu0 %3768
  %3770 = vrot.lane.b32.xlu0 %v1213, 28
  %v3771 = vpop.permute.xlu0 %3770
  %3772 = vrot.lane.b32.xlu0 %v1220, 28
  %v3773 = vpop.permute.xlu0 %3772
  %3774 = vrot.lane.b32.xlu0 %v1227, 28
  %v3775 = vpop.permute.xlu0 %3774
  %3776 = vrot.lane.b32.xlu0 %v1234, 28
  %v3777 = vpop.permute.xlu0 %3776
  %3778 = vrot.lane.b32.xlu0 %v1241, 28
  %v3779 = vpop.permute.xlu0 %3778
  %3780 = vrot.lane.b32.xlu0 %v1248, 28
  %v3781 = vpop.permute.xlu0 %3780
  %3782 = vrot.lane.b32.xlu0 %v1151, 28
  %v3783 = vpop.permute.xlu0 %3782
  %3784 = vrot.lane.b32.xlu0 %v1158, 28
  %v3785 = vpop.permute.xlu0 %3784
  %3786 = vrot.lane.b32.xlu0 %v1165, 28
  %v3787 = vpop.permute.xlu0 %3786
  %3788 = vrot.lane.b32.xlu0 %v1172, 28
  %v3789 = vpop.permute.xlu0 %3788
  %3790 = vrot.lane.b32.xlu0 %v1179, 28
  %v3791 = vpop.permute.xlu0 %3790
  %3792 = vrot.lane.b32.xlu0 %v1186, 28
  %v3793 = vpop.permute.xlu0 %3792
  %3794 = vrot.lane.b32.xlu0 %v1193, 28
  %v3795 = vpop.permute.xlu0 %3794
  %3796 = vrot.lane.b32.xlu0 %v1200, 28
  %v3797 = vpop.permute.xlu0 %3796
  %3798 = vrot.lane.b32.xlu0 %v1207, 28
  %v3799 = vpop.permute.xlu0 %3798
  %3800 = vrot.lane.b32.xlu0 %v1214, 28
  %v3801 = vpop.permute.xlu0 %3800
  %3802 = vrot.lane.b32.xlu0 %v1221, 28
  %v3803 = vpop.permute.xlu0 %3802
  %3804 = vrot.lane.b32.xlu0 %v1228, 28
  %v3805 = vpop.permute.xlu0 %3804
  %3806 = vrot.lane.b32.xlu0 %v1235, 28
  %v3807 = vpop.permute.xlu0 %3806
  %3808 = vrot.lane.b32.xlu0 %v1242, 28
  %v3809 = vpop.permute.xlu0 %3808
  %3810 = vrot.lane.b32.xlu0 %v1249, 28
  %v3811 = vpop.permute.xlu0 %3810
  %3812 = vrot.lane.b32.xlu0 %v1152, 28
  %v3813 = vpop.permute.xlu0 %3812
  %3814 = vrot.lane.b32.xlu0 %v1159, 28
  %v3815 = vpop.permute.xlu0 %3814
  %3816 = vrot.lane.b32.xlu0 %v1166, 28
  %v3817 = vpop.permute.xlu0 %3816
  %3818 = vrot.lane.b32.xlu0 %v1173, 28
  %v3819 = vpop.permute.xlu0 %3818
  %3820 = vrot.lane.b32.xlu0 %v1180, 28
  %v3821 = vpop.permute.xlu0 %3820
  %3822 = vrot.lane.b32.xlu0 %v1187, 28
  %v3823 = vpop.permute.xlu0 %3822
  %3824 = vrot.lane.b32.xlu0 %v1194, 28
  %v3825 = vpop.permute.xlu0 %3824
  %3826 = vrot.lane.b32.xlu0 %v1201, 28
  %v3827 = vpop.permute.xlu0 %3826
  %3828 = vrot.lane.b32.xlu0 %v1208, 28
  %v3829 = vpop.permute.xlu0 %3828
  %3830 = vrot.lane.b32.xlu0 %v1215, 28
  %v3831 = vpop.permute.xlu0 %3830
  %3832 = vrot.lane.b32.xlu0 %v1222, 28
  %v3833 = vpop.permute.xlu0 %3832
  %3834 = vrot.lane.b32.xlu0 %v1229, 28
  %v3835 = vpop.permute.xlu0 %3834
  %3836 = vrot.lane.b32.xlu0 %v1236, 28
  %v3837 = vpop.permute.xlu0 %3836
  %3838 = vrot.lane.b32.xlu0 %v1243, 28
  %v3839 = vpop.permute.xlu0 %3838
  %3840 = vrot.lane.b32.xlu0 %v1250, 28
  %v3841 = vpop.permute.xlu0 %3840
  %3842 = vrot.lane.b32.xlu0 %v1153, 28
  %v3843 = vpop.permute.xlu0 %3842
  %3844 = vrot.lane.b32.xlu0 %v1160, 28
  %v3845 = vpop.permute.xlu0 %3844
  %3846 = vrot.lane.b32.xlu0 %v1167, 28
  %v3847 = vpop.permute.xlu0 %3846
  %3848 = vrot.lane.b32.xlu0 %v1174, 28
  %v3849 = vpop.permute.xlu0 %3848
  %3850 = vrot.lane.b32.xlu0 %v1181, 28
  %v3851 = vpop.permute.xlu0 %3850
  %3852 = vrot.lane.b32.xlu0 %v1188, 28
  %v3853 = vpop.permute.xlu0 %3852
  %3854 = vrot.lane.b32.xlu0 %v1195, 28
  %v3855 = vpop.permute.xlu0 %3854
  %3856 = vrot.lane.b32.xlu0 %v1202, 28
  %v3857 = vpop.permute.xlu0 %3856
  %3858 = vrot.lane.b32.xlu0 %v1209, 28
  %v3859 = vpop.permute.xlu0 %3858
  %3860 = vrot.lane.b32.xlu0 %v1216, 28
  %v3861 = vpop.permute.xlu0 %3860
  %3862 = vrot.lane.b32.xlu0 %v1223, 28
  %v3863 = vpop.permute.xlu0 %3862
  %3864 = vrot.lane.b32.xlu0 %v1230, 28
  %v3865 = vpop.permute.xlu0 %3864
  %3866 = vrot.lane.b32.xlu0 %v1237, 28
  %v3867 = vpop.permute.xlu0 %3866
  %3868 = vrot.lane.b32.xlu0 %v1244, 28
  %v3869 = vpop.permute.xlu0 %3868
  %3870 = vrot.lane.b32.xlu0 %v1251, 28
  %v3871 = vpop.permute.xlu0 %3870
  %v3872 = vsel %vm3271, %v3813, %v3843
  %v3873 = vsel %vm3271, %v3815, %v3845
  %v3874 = vsel %vm3271, %v3817, %v3847
  %v3875 = vsel %vm3271, %v3819, %v3849
  %v3876 = vsel %vm3271, %v3821, %v3851
  %v3877 = vsel %vm3271, %v3823, %v3853
  %v3878 = vsel %vm3271, %v3825, %v3855
  %v3879 = vsel %vm3271, %v3827, %v3857
  %v3880 = vsel %vm3271, %v3829, %v3859
  %v3881 = vsel %vm3271, %v3831, %v3861
  %v3882 = vsel %vm3271, %v3833, %v3863
  %v3883 = vsel %vm3271, %v3835, %v3865
  %v3884 = vsel %vm3271, %v3837, %v3867
  %v3885 = vsel %vm3271, %v3839, %v3869
  %v3886 = vsel %vm3271, %v3841, %v3871
  %v3887 = vsel %vm3271, %v3783, %v3813
  %v3888 = vsel %vm3271, %v3785, %v3815
  %v3889 = vsel %vm3271, %v3787, %v3817
  %v3890 = vsel %vm3271, %v3789, %v3819
  %v3891 = vsel %vm3271, %v3791, %v3821
  %v3892 = vsel %vm3271, %v3793, %v3823
  %v3893 = vsel %vm3271, %v3795, %v3825
  %v3894 = vsel %vm3271, %v3797, %v3827
  %v3895 = vsel %vm3271, %v3799, %v3829
  %v3896 = vsel %vm3271, %v3801, %v3831
  %v3897 = vsel %vm3271, %v3803, %v3833
  %v3898 = vsel %vm3271, %v3805, %v3835
  %v3899 = vsel %vm3271, %v3807, %v3837
  %v3900 = vsel %vm3271, %v3809, %v3839
  %v3901 = vsel %vm3271, %v3811, %v3841
  %v3902 = vsel %vm3271, %v3753, %v3783
  %v3903 = vsel %vm3271, %v3755, %v3785
  %v3904 = vsel %vm3271, %v3757, %v3787
  %v3905 = vsel %vm3271, %v3759, %v3789
  %v3906 = vsel %vm3271, %v3761, %v3791
  %v3907 = vsel %vm3271, %v3763, %v3793
  %v3908 = vsel %vm3271, %v3765, %v3795
  %v3909 = vsel %vm3271, %v3767, %v3797
  %v3910 = vsel %vm3271, %v3769, %v3799
  %v3911 = vsel %vm3271, %v3771, %v3801
  %v3912 = vsel %vm3271, %v3773, %v3803
  %v3913 = vsel %vm3271, %v3775, %v3805
  %v3914 = vsel %vm3271, %v3777, %v3807
  %v3915 = vsel %vm3271, %v3779, %v3809
  %v3916 = vsel %vm3271, %v3781, %v3811
  %v3917 = vsel %vm3271, %v3723, %v3753
  %v3918 = vsel %vm3271, %v3725, %v3755
  %v3919 = vsel %vm3271, %v3727, %v3757
  %v3920 = vsel %vm3271, %v3729, %v3759
  %v3921 = vsel %vm3271, %v3731, %v3761
  %v3922 = vsel %vm3271, %v3733, %v3763
  %v3923 = vsel %vm3271, %v3735, %v3765
  %v3924 = vsel %vm3271, %v3737, %v3767
  %v3925 = vsel %vm3271, %v3739, %v3769
  %v3926 = vsel %vm3271, %v3741, %v3771
  %v3927 = vsel %vm3271, %v3743, %v3773
  %v3928 = vsel %vm3271, %v3745, %v3775
  %v3929 = vsel %vm3271, %v3747, %v3777
  %v3930 = vsel %vm3271, %v3749, %v3779
  %v3931 = vsel %vm3271, %v3751, %v3781
  %v3932 = vsel %vm3271, %v3693, %v3723
  %v3933 = vsel %vm3271, %v3695, %v3725
  %v3934 = vsel %vm3271, %v3697, %v3727
  %v3935 = vsel %vm3271, %v3699, %v3729
  %v3936 = vsel %vm3271, %v3701, %v3731
  %v3937 = vsel %vm3271, %v3703, %v3733
  %v3938 = vsel %vm3271, %v3705, %v3735
  %v3939 = vsel %vm3271, %v3707, %v3737
  %v3940 = vsel %vm3271, %v3709, %v3739
  %v3941 = vsel %vm3271, %v3711, %v3741
  %v3942 = vsel %vm3271, %v3713, %v3743
  %v3943 = vsel %vm3271, %v3715, %v3745
  %v3944 = vsel %vm3271, %v3717, %v3747
  %v3945 = vsel %vm3271, %v3719, %v3749
  %v3946 = vsel %vm3271, %v3721, %v3751
  %v3947 = vsel %vm3271, %v3663, %v3693
  %v3948 = vsel %vm3271, %v3665, %v3695
  %v3949 = vsel %vm3271, %v3667, %v3697
  %v3950 = vsel %vm3271, %v3669, %v3699
  %v3951 = vsel %vm3271, %v3671, %v3701
  %v3952 = vsel %vm3271, %v3673, %v3703
  %v3953 = vsel %vm3271, %v3675, %v3705
  %v3954 = vsel %vm3271, %v3677, %v3707
  %v3955 = vsel %vm3271, %v3679, %v3709
  %v3956 = vsel %vm3271, %v3681, %v3711
  %v3957 = vsel %vm3271, %v3683, %v3713
  %v3958 = vsel %vm3271, %v3685, %v3715
  %v3959 = vsel %vm3271, %v3687, %v3717
  %v3960 = vsel %vm3271, %v3689, %v3719
  %v3961 = vsel %vm3271, %v3691, %v3721
  %v3962 = vsel %vm3271, %v3843, %v3663
  %v3963 = vsel %vm3271, %v3845, %v3665
  %v3964 = vsel %vm3271, %v3847, %v3667
  %v3965 = vsel %vm3271, %v3849, %v3669
  %v3966 = vsel %vm3271, %v3851, %v3671
  %v3967 = vsel %vm3271, %v3853, %v3673
  %v3968 = vsel %vm3271, %v3855, %v3675
  %v3969 = vsel %vm3271, %v3857, %v3677
  %v3970 = vsel %vm3271, %v3859, %v3679
  %v3971 = vsel %vm3271, %v3861, %v3681
  %v3972 = vsel %vm3271, %v3863, %v3683
  %v3973 = vsel %vm3271, %v3865, %v3685
  %v3974 = vsel %vm3271, %v3867, %v3687
  %v3975 = vsel %vm3271, %v3869, %v3689
  %v3976 = vsel %vm3271, %v3871, %v3691
  %3978 = vset.pattern.permute.xlu0 0
  %3979 = vperm.xlu0 %3978, %v1268
  %v3980 = vpop.permute.xlu0 %3979
  %3983 = vset.pattern.permute.xlu0 0
  %3984 = vperm.xlu0 %3983, %v1269
  %v3985 = vpop.permute.xlu0 %3984
  %3988 = vset.pattern.permute.xlu0 0
  %3989 = vperm.xlu0 %3988, %v1270
  %v3990 = vpop.permute.xlu0 %3989
  %3993 = vset.pattern.permute.xlu0 0
  %3994 = vperm.xlu0 %3993, %v1271
  %v3995 = vpop.permute.xlu0 %3994
  %3998 = vset.pattern.permute.xlu0 0
  %3999 = vperm.xlu0 %3998, %v1272
  %v4000 = vpop.permute.xlu0 %3999
  %4003 = vset.pattern.permute.xlu0 0
  %4004 = vperm.xlu0 %4003, %v1273
  %v4005 = vpop.permute.xlu0 %4004
  %4008 = vset.pattern.permute.xlu0 0
  %4009 = vperm.xlu0 %4008, %v1274
  %v4010 = vpop.permute.xlu0 %4009
  %4013 = vset.pattern.permute.xlu0 0
  %4014 = vperm.xlu0 %4013, %v1275
  %v4015 = vpop.permute.xlu0 %4014
  %4018 = vset.pattern.permute.xlu0 0
  %4019 = vperm.xlu0 %4018, %v1276
  %v4020 = vpop.permute.xlu0 %4019
  %4023 = vset.pattern.permute.xlu0 0
  %4024 = vperm.xlu0 %4023, %v1277
  %v4025 = vpop.permute.xlu0 %4024
  %4028 = vset.pattern.permute.xlu0 0
  %4029 = vperm.xlu0 %4028, %v1278
  %v4030 = vpop.permute.xlu0 %4029
  %4033 = vset.pattern.permute.xlu0 0
  %4034 = vperm.xlu0 %4033, %v1279
  %v4035 = vpop.permute.xlu0 %4034
  %4038 = vset.pattern.permute.xlu0 0
  %4039 = vperm.xlu0 %4038, %v1280
  %v4040 = vpop.permute.xlu0 %4039
  %4043 = vset.pattern.permute.xlu0 0
  %4044 = vperm.xlu0 %4043, %v1281
  %v4045 = vpop.permute.xlu0 %4044
  %4048 = vset.pattern.permute.xlu0 0
  %4049 = vperm.xlu0 %4048, %v1282
  %v4050 = vpop.permute.xlu0 %4049
  %v4052 = vmul.f32 %v3962, %v3980
  %v4053 = vmul.f32 %v3947, %v3980
  %v4054 = vmul.f32 %v3932, %v3980
  %v4055 = vmul.f32 %v3917, %v3980
  %v4056 = vmul.f32 %v3902, %v3980
  %v4057 = vmul.f32 %v3887, %v3980
  %v4058 = vmul.f32 %v3872, %v3980
  %v4059 = vmul.f32 %v3963, %v3985
  %v4060 = vmul.f32 %v3948, %v3985
  %v4061 = vmul.f32 %v3933, %v3985
  %v4062 = vmul.f32 %v3918, %v3985
  %v4063 = vmul.f32 %v3903, %v3985
  %v4064 = vmul.f32 %v3888, %v3985
  %v4065 = vmul.f32 %v3873, %v3985
  %v4066 = vmul.f32 %v3964, %v3990
  %v4067 = vmul.f32 %v3949, %v3990
  %v4068 = vmul.f32 %v3934, %v3990
  %v4069 = vmul.f32 %v3919, %v3990
  %v4070 = vmul.f32 %v3904, %v3990
  %v4071 = vmul.f32 %v3889, %v3990
  %v4072 = vmul.f32 %v3874, %v3990
  %v4073 = vmul.f32 %v3965, %v3995
  %v4074 = vmul.f32 %v3950, %v3995
  %v4075 = vmul.f32 %v3935, %v3995
  %v4076 = vmul.f32 %v3920, %v3995
  %v4077 = vmul.f32 %v3905, %v3995
  %v4078 = vmul.f32 %v3890, %v3995
  %v4079 = vmul.f32 %v3875, %v3995
  %v4080 = vmul.f32 %v3966, %v4000
  %v4081 = vmul.f32 %v3951, %v4000
  %v4082 = vmul.f32 %v3936, %v4000
  %v4083 = vmul.f32 %v3921, %v4000
  %v4084 = vmul.f32 %v3906, %v4000
  %v4085 = vmul.f32 %v3891, %v4000
  %v4086 = vmul.f32 %v3876, %v4000
  %v4087 = vmul.f32 %v3967, %v4005
  %v4088 = vmul.f32 %v3952, %v4005
  %v4089 = vmul.f32 %v3937, %v4005
  %v4090 = vmul.f32 %v3922, %v4005
  %v4091 = vmul.f32 %v3907, %v4005
  %v4092 = vmul.f32 %v3892, %v4005
  %v4093 = vmul.f32 %v3877, %v4005
  %v4094 = vmul.f32 %v3968, %v4010
  %v4095 = vmul.f32 %v3953, %v4010
  %v4096 = vmul.f32 %v3938, %v4010
  %v4097 = vmul.f32 %v3923, %v4010
  %v4098 = vmul.f32 %v3908, %v4010
  %v4099 = vmul.f32 %v3893, %v4010
  %v4100 = vmul.f32 %v3878, %v4010
  %v4101 = vmul.f32 %v3969, %v4015
  %v4102 = vmul.f32 %v3954, %v4015
  %v4103 = vmul.f32 %v3939, %v4015
  %v4104 = vmul.f32 %v3924, %v4015
  %v4105 = vmul.f32 %v3909, %v4015
  %v4106 = vmul.f32 %v3894, %v4015
  %v4107 = vmul.f32 %v3879, %v4015
  %v4108 = vmul.f32 %v3970, %v4020
  %v4109 = vmul.f32 %v3955, %v4020
  %v4110 = vmul.f32 %v3940, %v4020
  %v4111 = vmul.f32 %v3925, %v4020
  %v4112 = vmul.f32 %v3910, %v4020
  %v4113 = vmul.f32 %v3895, %v4020
  %v4114 = vmul.f32 %v3880, %v4020
  %v4115 = vmul.f32 %v3971, %v4025
  %v4116 = vmul.f32 %v3956, %v4025
  %v4117 = vmul.f32 %v3941, %v4025
  %v4118 = vmul.f32 %v3926, %v4025
  %v4119 = vmul.f32 %v3911, %v4025
  %v4120 = vmul.f32 %v3896, %v4025
  %v4121 = vmul.f32 %v3881, %v4025
  %v4122 = vmul.f32 %v3972, %v4030
  %v4123 = vmul.f32 %v3957, %v4030
  %v4124 = vmul.f32 %v3942, %v4030
  %v4125 = vmul.f32 %v3927, %v4030
  %v4126 = vmul.f32 %v3912, %v4030
  %v4127 = vmul.f32 %v3897, %v4030
  %v4128 = vmul.f32 %v3882, %v4030
  %v4129 = vmul.f32 %v3973, %v4035
  %v4130 = vmul.f32 %v3958, %v4035
  %v4131 = vmul.f32 %v3943, %v4035
  %v4132 = vmul.f32 %v3928, %v4035
  %v4133 = vmul.f32 %v3913, %v4035
  %v4134 = vmul.f32 %v3898, %v4035
  %v4135 = vmul.f32 %v3883, %v4035
  %v4136 = vmul.f32 %v3974, %v4040
  %v4137 = vmul.f32 %v3959, %v4040
  %v4138 = vmul.f32 %v3944, %v4040
  %v4139 = vmul.f32 %v3929, %v4040
  %v4140 = vmul.f32 %v3914, %v4040
  %v4141 = vmul.f32 %v3899, %v4040
  %v4142 = vmul.f32 %v3884, %v4040
  %v4143 = vmul.f32 %v3975, %v4045
  %v4144 = vmul.f32 %v3960, %v4045
  %v4145 = vmul.f32 %v3945, %v4045
  %v4146 = vmul.f32 %v3930, %v4045
  %v4147 = vmul.f32 %v3915, %v4045
  %v4148 = vmul.f32 %v3900, %v4045
  %v4149 = vmul.f32 %v3885, %v4045
  %v4150 = vmul.f32 %v3976, %v4050
  %v4151 = vmul.f32 %v3961, %v4050
  %v4152 = vmul.f32 %v3946, %v4050
  %v4153 = vmul.f32 %v3931, %v4050
  %v4154 = vmul.f32 %v3916, %v4050
  %v4155 = vmul.f32 %v3901, %v4050
  %v4156 = vmul.f32 %v3886, %v4050
  %v4157 = vadd.f32 %v3557, %v4052
  %v4158 = vadd.f32 %v3558, %v4053
  %v4159 = vadd.f32 %v3559, %v4054
  %v4160 = vadd.f32 %v3560, %v4055
  %v4161 = vadd.f32 %v3561, %v4056
  %v4162 = vadd.f32 %v3562, %v4057
  %v4163 = vadd.f32 %v3563, %v4058
  %v4164 = vadd.f32 %v3564, %v4059
  %v4165 = vadd.f32 %v3565, %v4060
  %v4166 = vadd.f32 %v3566, %v4061
  %v4167 = vadd.f32 %v3567, %v4062
  %v4168 = vadd.f32 %v3568, %v4063
  %v4169 = vadd.f32 %v3569, %v4064
  %v4170 = vadd.f32 %v3570, %v4065
  %v4171 = vadd.f32 %v3571, %v4066
  %v4172 = vadd.f32 %v3572, %v4067
  %v4173 = vadd.f32 %v3573, %v4068
  %v4174 = vadd.f32 %v3574, %v4069
  %v4175 = vadd.f32 %v3575, %v4070
  %v4176 = vadd.f32 %v3576, %v4071
  %v4177 = vadd.f32 %v3577, %v4072
  %v4178 = vadd.f32 %v3578, %v4073
  %v4179 = vadd.f32 %v3579, %v4074
  %v4180 = vadd.f32 %v3580, %v4075
  %v4181 = vadd.f32 %v3581, %v4076
  %v4182 = vadd.f32 %v3582, %v4077
  %v4183 = vadd.f32 %v3583, %v4078
  %v4184 = vadd.f32 %v3584, %v4079
  %v4185 = vadd.f32 %v3585, %v4080
  %v4186 = vadd.f32 %v3586, %v4081
  %v4187 = vadd.f32 %v3587, %v4082
  %v4188 = vadd.f32 %v3588, %v4083
  %v4189 = vadd.f32 %v3589, %v4084
  %v4190 = vadd.f32 %v3590, %v4085
  %v4191 = vadd.f32 %v3591, %v4086
  %v4192 = vadd.f32 %v3592, %v4087
  %v4193 = vadd.f32 %v3593, %v4088
  %v4194 = vadd.f32 %v3594, %v4089
  %v4195 = vadd.f32 %v3595, %v4090
  %v4196 = vadd.f32 %v3596, %v4091
  %v4197 = vadd.f32 %v3597, %v4092
  %v4198 = vadd.f32 %v3598, %v4093
  %v4199 = vadd.f32 %v3599, %v4094
  %v4200 = vadd.f32 %v3600, %v4095
  %v4201 = vadd.f32 %v3601, %v4096
  %v4202 = vadd.f32 %v3602, %v4097
  %v4203 = vadd.f32 %v3603, %v4098
  %v4204 = vadd.f32 %v3604, %v4099
  %v4205 = vadd.f32 %v3605, %v4100
  %v4206 = vadd.f32 %v3606, %v4101
  %v4207 = vadd.f32 %v3607, %v4102
  %v4208 = vadd.f32 %v3608, %v4103
  %v4209 = vadd.f32 %v3609, %v4104
  %v4210 = vadd.f32 %v3610, %v4105
  %v4211 = vadd.f32 %v3611, %v4106
  %v4212 = vadd.f32 %v3612, %v4107
  %v4213 = vadd.f32 %v3613, %v4108
  %v4214 = vadd.f32 %v3614, %v4109
  %v4215 = vadd.f32 %v3615, %v4110
  %v4216 = vadd.f32 %v3616, %v4111
  %v4217 = vadd.f32 %v3617, %v4112
  %v4218 = vadd.f32 %v3618, %v4113
  %v4219 = vadd.f32 %v3619, %v4114
  %v4220 = vadd.f32 %v3620, %v4115
  %v4221 = vadd.f32 %v3621, %v4116
  %v4222 = vadd.f32 %v3622, %v4117
  %v4223 = vadd.f32 %v3623, %v4118
  %v4224 = vadd.f32 %v3624, %v4119
  %v4225 = vadd.f32 %v3625, %v4120
  %v4226 = vadd.f32 %v3626, %v4121
  %v4227 = vadd.f32 %v3627, %v4122
  %v4228 = vadd.f32 %v3628, %v4123
  %v4229 = vadd.f32 %v3629, %v4124
  %v4230 = vadd.f32 %v3630, %v4125
  %v4231 = vadd.f32 %v3631, %v4126
  %v4232 = vadd.f32 %v3632, %v4127
  %v4233 = vadd.f32 %v3633, %v4128
  %v4234 = vadd.f32 %v3634, %v4129
  %v4235 = vadd.f32 %v3635, %v4130
  %v4236 = vadd.f32 %v3636, %v4131
  %v4237 = vadd.f32 %v3637, %v4132
  %v4238 = vadd.f32 %v3638, %v4133
  %v4239 = vadd.f32 %v3639, %v4134
  %v4240 = vadd.f32 %v3640, %v4135
  %v4241 = vadd.f32 %v3641, %v4136
  %v4242 = vadd.f32 %v3642, %v4137
  %v4243 = vadd.f32 %v3643, %v4138
  %v4244 = vadd.f32 %v3644, %v4139
  %v4245 = vadd.f32 %v3645, %v4140
  %v4246 = vadd.f32 %v3646, %v4141
  %v4247 = vadd.f32 %v3647, %v4142
  %v4248 = vadd.f32 %v3648, %v4143
  %v4249 = vadd.f32 %v3649, %v4144
  %v4250 = vadd.f32 %v3650, %v4145
  %v4251 = vadd.f32 %v3651, %v4146
  %v4252 = vadd.f32 %v3652, %v4147
  %v4253 = vadd.f32 %v3653, %v4148
  %v4254 = vadd.f32 %v3654, %v4149
  %v4255 = vadd.f32 %v3655, %v4150
  %v4256 = vadd.f32 %v3656, %v4151
  %v4257 = vadd.f32 %v3657, %v4152
  %v4258 = vadd.f32 %v3658, %v4153
  %v4259 = vadd.f32 %v3659, %v4154
  %v4260 = vadd.f32 %v3660, %v4155
  %v4261 = vadd.f32 %v3661, %v4156
  %4262 = vrot.lane.b32.xlu0 %v2206, 28
  %v4263 = vpop.permute.xlu0 %4262
  %4264 = vrot.lane.b32.xlu0 %v2213, 28
  %v4265 = vpop.permute.xlu0 %4264
  %4266 = vrot.lane.b32.xlu0 %v2220, 28
  %v4267 = vpop.permute.xlu0 %4266
  %4268 = vrot.lane.b32.xlu0 %v2227, 28
  %v4269 = vpop.permute.xlu0 %4268
  %4270 = vrot.lane.b32.xlu0 %v2234, 28
  %v4271 = vpop.permute.xlu0 %4270
  %4272 = vrot.lane.b32.xlu0 %v2241, 28
  %v4273 = vpop.permute.xlu0 %4272
  %4274 = vrot.lane.b32.xlu0 %v2248, 28
  %v4275 = vpop.permute.xlu0 %4274
  %4276 = vrot.lane.b32.xlu0 %v2255, 28
  %v4277 = vpop.permute.xlu0 %4276
  %4278 = vrot.lane.b32.xlu0 %v2262, 28
  %v4279 = vpop.permute.xlu0 %4278
  %4280 = vrot.lane.b32.xlu0 %v2269, 28
  %v4281 = vpop.permute.xlu0 %4280
  %4282 = vrot.lane.b32.xlu0 %v2276, 28
  %v4283 = vpop.permute.xlu0 %4282
  %4284 = vrot.lane.b32.xlu0 %v2283, 28
  %v4285 = vpop.permute.xlu0 %4284
  %4286 = vrot.lane.b32.xlu0 %v2290, 28
  %v4287 = vpop.permute.xlu0 %4286
  %4288 = vrot.lane.b32.xlu0 %v2297, 28
  %v4289 = vpop.permute.xlu0 %4288
  %4290 = vrot.lane.b32.xlu0 %v2304, 28
  %v4291 = vpop.permute.xlu0 %4290
  %4292 = vrot.lane.b32.xlu0 %v2207, 28
  %v4293 = vpop.permute.xlu0 %4292
  %4294 = vrot.lane.b32.xlu0 %v2214, 28
  %v4295 = vpop.permute.xlu0 %4294
  %4296 = vrot.lane.b32.xlu0 %v2221, 28
  %v4297 = vpop.permute.xlu0 %4296
  %4298 = vrot.lane.b32.xlu0 %v2228, 28
  %v4299 = vpop.permute.xlu0 %4298
  %4300 = vrot.lane.b32.xlu0 %v2235, 28
  %v4301 = vpop.permute.xlu0 %4300
  %4302 = vrot.lane.b32.xlu0 %v2242, 28
  %v4303 = vpop.permute.xlu0 %4302
  %4304 = vrot.lane.b32.xlu0 %v2249, 28
  %v4305 = vpop.permute.xlu0 %4304
  %4306 = vrot.lane.b32.xlu0 %v2256, 28
  %v4307 = vpop.permute.xlu0 %4306
  %4308 = vrot.lane.b32.xlu0 %v2263, 28
  %v4309 = vpop.permute.xlu0 %4308
  %4310 = vrot.lane.b32.xlu0 %v2270, 28
  %v4311 = vpop.permute.xlu0 %4310
  %4312 = vrot.lane.b32.xlu0 %v2277, 28
  %v4313 = vpop.permute.xlu0 %4312
  %4314 = vrot.lane.b32.xlu0 %v2284, 28
  %v4315 = vpop.permute.xlu0 %4314
  %4316 = vrot.lane.b32.xlu0 %v2291, 28
  %v4317 = vpop.permute.xlu0 %4316
  %4318 = vrot.lane.b32.xlu0 %v2298, 28
  %v4319 = vpop.permute.xlu0 %4318
  %4320 = vrot.lane.b32.xlu0 %v2305, 28
  %v4321 = vpop.permute.xlu0 %4320
  %4322 = vrot.lane.b32.xlu0 %v2208, 28
  %v4323 = vpop.permute.xlu0 %4322
  %4324 = vrot.lane.b32.xlu0 %v2215, 28
  %v4325 = vpop.permute.xlu0 %4324
  %4326 = vrot.lane.b32.xlu0 %v2222, 28
  %v4327 = vpop.permute.xlu0 %4326
  %4328 = vrot.lane.b32.xlu0 %v2229, 28
  %v4329 = vpop.permute.xlu0 %4328
  %4330 = vrot.lane.b32.xlu0 %v2236, 28
  %v4331 = vpop.permute.xlu0 %4330
  %4332 = vrot.lane.b32.xlu0 %v2243, 28
  %v4333 = vpop.permute.xlu0 %4332
  %4334 = vrot.lane.b32.xlu0 %v2250, 28
  %v4335 = vpop.permute.xlu0 %4334
  %4336 = vrot.lane.b32.xlu0 %v2257, 28
  %v4337 = vpop.permute.xlu0 %4336
  %4338 = vrot.lane.b32.xlu0 %v2264, 28
  %v4339 = vpop.permute.xlu0 %4338
  %4340 = vrot.lane.b32.xlu0 %v2271, 28
  %v4341 = vpop.permute.xlu0 %4340
  %4342 = vrot.lane.b32.xlu0 %v2278, 28
  %v4343 = vpop.permute.xlu0 %4342
  %4344 = vrot.lane.b32.xlu0 %v2285, 28
  %v4345 = vpop.permute.xlu0 %4344
  %4346 = vrot.lane.b32.xlu0 %v2292, 28
  %v4347 = vpop.permute.xlu0 %4346
  %4348 = vrot.lane.b32.xlu0 %v2299, 28
  %v4349 = vpop.permute.xlu0 %4348
  %4350 = vrot.lane.b32.xlu0 %v2306, 28
  %v4351 = vpop.permute.xlu0 %4350
  %4352 = vrot.lane.b32.xlu0 %v2209, 28
  %v4353 = vpop.permute.xlu0 %4352
  %4354 = vrot.lane.b32.xlu0 %v2216, 28
  %v4355 = vpop.permute.xlu0 %4354
  %4356 = vrot.lane.b32.xlu0 %v2223, 28
  %v4357 = vpop.permute.xlu0 %4356
  %4358 = vrot.lane.b32.xlu0 %v2230, 28
  %v4359 = vpop.permute.xlu0 %4358
  %4360 = vrot.lane.b32.xlu0 %v2237, 28
  %v4361 = vpop.permute.xlu0 %4360
  %4362 = vrot.lane.b32.xlu0 %v2244, 28
  %v4363 = vpop.permute.xlu0 %4362
  %4364 = vrot.lane.b32.xlu0 %v2251, 28
  %v4365 = vpop.permute.xlu0 %4364
  %4366 = vrot.lane.b32.xlu0 %v2258, 28
  %v4367 = vpop.permute.xlu0 %4366
  %4368 = vrot.lane.b32.xlu0 %v2265, 28
  %v4369 = vpop.permute.xlu0 %4368
  %4370 = vrot.lane.b32.xlu0 %v2272, 28
  %v4371 = vpop.permute.xlu0 %4370
  %4372 = vrot.lane.b32.xlu0 %v2279, 28
  %v4373 = vpop.permute.xlu0 %4372
  %4374 = vrot.lane.b32.xlu0 %v2286, 28
  %v4375 = vpop.permute.xlu0 %4374
  %4376 = vrot.lane.b32.xlu0 %v2293, 28
  %v4377 = vpop.permute.xlu0 %4376
  %4378 = vrot.lane.b32.xlu0 %v2300, 28
  %v4379 = vpop.permute.xlu0 %4378
  %4380 = vrot.lane.b32.xlu0 %v2307, 28
  %v4381 = vpop.permute.xlu0 %4380
  %4382 = vrot.lane.b32.xlu0 %v2210, 28
  %v4383 = vpop.permute.xlu0 %4382
  %4384 = vrot.lane.b32.xlu0 %v2217, 28
  %v4385 = vpop.permute.xlu0 %4384
  %4386 = vrot.lane.b32.xlu0 %v2224, 28
  %v4387 = vpop.permute.xlu0 %4386
  %4388 = vrot.lane.b32.xlu0 %v2231, 28
  %v4389 = vpop.permute.xlu0 %4388
  %4390 = vrot.lane.b32.xlu0 %v2238, 28
  %v4391 = vpop.permute.xlu0 %4390
  %4392 = vrot.lane.b32.xlu0 %v2245, 28
  %v4393 = vpop.permute.xlu0 %4392
  %4394 = vrot.lane.b32.xlu0 %v2252, 28
  %v4395 = vpop.permute.xlu0 %4394
  %4396 = vrot.lane.b32.xlu0 %v2259, 28
  %v4397 = vpop.permute.xlu0 %4396
  %4398 = vrot.lane.b32.xlu0 %v2266, 28
  %v4399 = vpop.permute.xlu0 %4398
  %4400 = vrot.lane.b32.xlu0 %v2273, 28
  %v4401 = vpop.permute.xlu0 %4400
  %4402 = vrot.lane.b32.xlu0 %v2280, 28
  %v4403 = vpop.permute.xlu0 %4402
  %4404 = vrot.lane.b32.xlu0 %v2287, 28
  %v4405 = vpop.permute.xlu0 %4404
  %4406 = vrot.lane.b32.xlu0 %v2294, 28
  %v4407 = vpop.permute.xlu0 %4406
  %4408 = vrot.lane.b32.xlu0 %v2301, 28
  %v4409 = vpop.permute.xlu0 %4408
  %4410 = vrot.lane.b32.xlu0 %v2308, 28
  %v4411 = vpop.permute.xlu0 %4410
  %4412 = vrot.lane.b32.xlu0 %v2211, 28
  %v4413 = vpop.permute.xlu0 %4412
  %4414 = vrot.lane.b32.xlu0 %v2218, 28
  %v4415 = vpop.permute.xlu0 %4414
  %4416 = vrot.lane.b32.xlu0 %v2225, 28
  %v4417 = vpop.permute.xlu0 %4416
  %4418 = vrot.lane.b32.xlu0 %v2232, 28
  %v4419 = vpop.permute.xlu0 %4418
  %4420 = vrot.lane.b32.xlu0 %v2239, 28
  %v4421 = vpop.permute.xlu0 %4420
  %4422 = vrot.lane.b32.xlu0 %v2246, 28
  %v4423 = vpop.permute.xlu0 %4422
  %4424 = vrot.lane.b32.xlu0 %v2253, 28
  %v4425 = vpop.permute.xlu0 %4424
  %4426 = vrot.lane.b32.xlu0 %v2260, 28
  %v4427 = vpop.permute.xlu0 %4426
  %4428 = vrot.lane.b32.xlu0 %v2267, 28
  %v4429 = vpop.permute.xlu0 %4428
  %4430 = vrot.lane.b32.xlu0 %v2274, 28
  %v4431 = vpop.permute.xlu0 %4430
  %4432 = vrot.lane.b32.xlu0 %v2281, 28
  %v4433 = vpop.permute.xlu0 %4432
  %4434 = vrot.lane.b32.xlu0 %v2288, 28
  %v4435 = vpop.permute.xlu0 %4434
  %4436 = vrot.lane.b32.xlu0 %v2295, 28
  %v4437 = vpop.permute.xlu0 %4436
  %4438 = vrot.lane.b32.xlu0 %v2302, 28
  %v4439 = vpop.permute.xlu0 %4438
  %4440 = vrot.lane.b32.xlu0 %v2309, 28
  %v4441 = vpop.permute.xlu0 %4440
  %4442 = vrot.lane.b32.xlu0 %v2212, 28
  %v4443 = vpop.permute.xlu0 %4442
  %4444 = vrot.lane.b32.xlu0 %v2219, 28
  %v4445 = vpop.permute.xlu0 %4444
  %4446 = vrot.lane.b32.xlu0 %v2226, 28
  %v4447 = vpop.permute.xlu0 %4446
  %4448 = vrot.lane.b32.xlu0 %v2233, 28
  %v4449 = vpop.permute.xlu0 %4448
  %4450 = vrot.lane.b32.xlu0 %v2240, 28
  %v4451 = vpop.permute.xlu0 %4450
  %4452 = vrot.lane.b32.xlu0 %v2247, 28
  %v4453 = vpop.permute.xlu0 %4452
  %4454 = vrot.lane.b32.xlu0 %v2254, 28
  %v4455 = vpop.permute.xlu0 %4454
  %4456 = vrot.lane.b32.xlu0 %v2261, 28
  %v4457 = vpop.permute.xlu0 %4456
  %4458 = vrot.lane.b32.xlu0 %v2268, 28
  %v4459 = vpop.permute.xlu0 %4458
  %4460 = vrot.lane.b32.xlu0 %v2275, 28
  %v4461 = vpop.permute.xlu0 %4460
  %4462 = vrot.lane.b32.xlu0 %v2282, 28
  %v4463 = vpop.permute.xlu0 %4462
  %4464 = vrot.lane.b32.xlu0 %v2289, 28
  %v4465 = vpop.permute.xlu0 %4464
  %4466 = vrot.lane.b32.xlu0 %v2296, 28
  %v4467 = vpop.permute.xlu0 %4466
  %4468 = vrot.lane.b32.xlu0 %v2303, 28
  %v4469 = vpop.permute.xlu0 %4468
  %4470 = vrot.lane.b32.xlu0 %v2310, 28
  %v4471 = vpop.permute.xlu0 %4470
  %v4472 = vsel %vm3271, %v4413, %v4443
  %v4473 = vsel %vm3271, %v4415, %v4445
  %v4474 = vsel %vm3271, %v4417, %v4447
  %v4475 = vsel %vm3271, %v4419, %v4449
  %v4476 = vsel %vm3271, %v4421, %v4451
  %v4477 = vsel %vm3271, %v4423, %v4453
  %v4478 = vsel %vm3271, %v4425, %v4455
  %v4479 = vsel %vm3271, %v4427, %v4457
  %v4480 = vsel %vm3271, %v4429, %v4459
  %v4481 = vsel %vm3271, %v4431, %v4461
  %v4482 = vsel %vm3271, %v4433, %v4463
  %v4483 = vsel %vm3271, %v4435, %v4465
  %v4484 = vsel %vm3271, %v4437, %v4467
  %v4485 = vsel %vm3271, %v4439, %v4469
  %v4486 = vsel %vm3271, %v4441, %v4471
  %v4487 = vsel %vm3271, %v4383, %v4413
  %v4488 = vsel %vm3271, %v4385, %v4415
  %v4489 = vsel %vm3271, %v4387, %v4417
  %v4490 = vsel %vm3271, %v4389, %v4419
  %v4491 = vsel %vm3271, %v4391, %v4421
  %v4492 = vsel %vm3271, %v4393, %v4423
  %v4493 = vsel %vm3271, %v4395, %v4425
  %v4494 = vsel %vm3271, %v4397, %v4427
  %v4495 = vsel %vm3271, %v4399, %v4429
  %v4496 = vsel %vm3271, %v4401, %v4431
  %v4497 = vsel %vm3271, %v4403, %v4433
  %v4498 = vsel %vm3271, %v4405, %v4435
  %v4499 = vsel %vm3271, %v4407, %v4437
  %v4500 = vsel %vm3271, %v4409, %v4439
  %v4501 = vsel %vm3271, %v4411, %v4441
  %v4502 = vsel %vm3271, %v4353, %v4383
  %v4503 = vsel %vm3271, %v4355, %v4385
  %v4504 = vsel %vm3271, %v4357, %v4387
  %v4505 = vsel %vm3271, %v4359, %v4389
  %v4506 = vsel %vm3271, %v4361, %v4391
  %v4507 = vsel %vm3271, %v4363, %v4393
  %v4508 = vsel %vm3271, %v4365, %v4395
  %v4509 = vsel %vm3271, %v4367, %v4397
  %v4510 = vsel %vm3271, %v4369, %v4399
  %v4511 = vsel %vm3271, %v4371, %v4401
  %v4512 = vsel %vm3271, %v4373, %v4403
  %v4513 = vsel %vm3271, %v4375, %v4405
  %v4514 = vsel %vm3271, %v4377, %v4407
  %v4515 = vsel %vm3271, %v4379, %v4409
  %v4516 = vsel %vm3271, %v4381, %v4411
  %v4517 = vsel %vm3271, %v4323, %v4353
  %v4518 = vsel %vm3271, %v4325, %v4355
  %v4519 = vsel %vm3271, %v4327, %v4357
  %v4520 = vsel %vm3271, %v4329, %v4359
  %v4521 = vsel %vm3271, %v4331, %v4361
  %v4522 = vsel %vm3271, %v4333, %v4363
  %v4523 = vsel %vm3271, %v4335, %v4365
  %v4524 = vsel %vm3271, %v4337, %v4367
  %v4525 = vsel %vm3271, %v4339, %v4369
  %v4526 = vsel %vm3271, %v4341, %v4371
  %v4527 = vsel %vm3271, %v4343, %v4373
  %v4528 = vsel %vm3271, %v4345, %v4375
  %v4529 = vsel %vm3271, %v4347, %v4377
  %v4530 = vsel %vm3271, %v4349, %v4379
  %v4531 = vsel %vm3271, %v4351, %v4381
  %v4532 = vsel %vm3271, %v4293, %v4323
  %v4533 = vsel %vm3271, %v4295, %v4325
  %v4534 = vsel %vm3271, %v4297, %v4327
  %v4535 = vsel %vm3271, %v4299, %v4329
  %v4536 = vsel %vm3271, %v4301, %v4331
  %v4537 = vsel %vm3271, %v4303, %v4333
  %v4538 = vsel %vm3271, %v4305, %v4335
  %v4539 = vsel %vm3271, %v4307, %v4337
  %v4540 = vsel %vm3271, %v4309, %v4339
  %v4541 = vsel %vm3271, %v4311, %v4341
  %v4542 = vsel %vm3271, %v4313, %v4343
  %v4543 = vsel %vm3271, %v4315, %v4345
  %v4544 = vsel %vm3271, %v4317, %v4347
  %v4545 = vsel %vm3271, %v4319, %v4349
  %v4546 = vsel %vm3271, %v4321, %v4351
  %v4547 = vsel %vm3271, %v4263, %v4293
  %v4548 = vsel %vm3271, %v4265, %v4295
  %v4549 = vsel %vm3271, %v4267, %v4297
  %v4550 = vsel %vm3271, %v4269, %v4299
  %v4551 = vsel %vm3271, %v4271, %v4301
  %v4552 = vsel %vm3271, %v4273, %v4303
  %v4553 = vsel %vm3271, %v4275, %v4305
  %v4554 = vsel %vm3271, %v4277, %v4307
  %v4555 = vsel %vm3271, %v4279, %v4309
  %v4556 = vsel %vm3271, %v4281, %v4311
  %v4557 = vsel %vm3271, %v4283, %v4313
  %v4558 = vsel %vm3271, %v4285, %v4315
  %v4559 = vsel %vm3271, %v4287, %v4317
  %v4560 = vsel %vm3271, %v4289, %v4319
  %v4561 = vsel %vm3271, %v4291, %v4321
  %v4562 = vsel %vm3271, %v4443, %v4263
  %v4563 = vsel %vm3271, %v4445, %v4265
  %v4564 = vsel %vm3271, %v4447, %v4267
  %v4565 = vsel %vm3271, %v4449, %v4269
  %v4566 = vsel %vm3271, %v4451, %v4271
  %v4567 = vsel %vm3271, %v4453, %v4273
  %v4568 = vsel %vm3271, %v4455, %v4275
  %v4569 = vsel %vm3271, %v4457, %v4277
  %v4570 = vsel %vm3271, %v4459, %v4279
  %v4571 = vsel %vm3271, %v4461, %v4281
  %v4572 = vsel %vm3271, %v4463, %v4283
  %v4573 = vsel %vm3271, %v4465, %v4285
  %v4574 = vsel %vm3271, %v4467, %v4287
  %v4575 = vsel %vm3271, %v4469, %v4289
  %v4576 = vsel %vm3271, %v4471, %v4291
  %4578 = vset.pattern.permute.xlu0 0
  %4579 = vperm.xlu0 %4578, %v1284
  %v4580 = vpop.permute.xlu0 %4579
  %4583 = vset.pattern.permute.xlu0 0
  %4584 = vperm.xlu0 %4583, %v1285
  %v4585 = vpop.permute.xlu0 %4584
  %4588 = vset.pattern.permute.xlu0 0
  %4589 = vperm.xlu0 %4588, %v1286
  %v4590 = vpop.permute.xlu0 %4589
  %4593 = vset.pattern.permute.xlu0 0
  %4594 = vperm.xlu0 %4593, %v1287
  %v4595 = vpop.permute.xlu0 %4594
  %4598 = vset.pattern.permute.xlu0 0
  %4599 = vperm.xlu0 %4598, %v1288
  %v4600 = vpop.permute.xlu0 %4599
  %4603 = vset.pattern.permute.xlu0 0
  %4604 = vperm.xlu0 %4603, %v1289
  %v4605 = vpop.permute.xlu0 %4604
  %4608 = vset.pattern.permute.xlu0 0
  %4609 = vperm.xlu0 %4608, %v1290
  %v4610 = vpop.permute.xlu0 %4609
  %4613 = vset.pattern.permute.xlu0 0
  %4614 = vperm.xlu0 %4613, %v1291
  %v4615 = vpop.permute.xlu0 %4614
  %4618 = vset.pattern.permute.xlu0 0
  %4619 = vperm.xlu0 %4618, %v1292
  %v4620 = vpop.permute.xlu0 %4619
  %4623 = vset.pattern.permute.xlu0 0
  %4624 = vperm.xlu0 %4623, %v1293
  %v4625 = vpop.permute.xlu0 %4624
  %4628 = vset.pattern.permute.xlu0 0
  %4629 = vperm.xlu0 %4628, %v1294
  %v4630 = vpop.permute.xlu0 %4629
  %4633 = vset.pattern.permute.xlu0 0
  %4634 = vperm.xlu0 %4633, %v1295
  %v4635 = vpop.permute.xlu0 %4634
  %4638 = vset.pattern.permute.xlu0 0
  %4639 = vperm.xlu0 %4638, %v1296
  %v4640 = vpop.permute.xlu0 %4639
  %4643 = vset.pattern.permute.xlu0 0
  %4644 = vperm.xlu0 %4643, %v1297
  %v4645 = vpop.permute.xlu0 %4644
  %4648 = vset.pattern.permute.xlu0 0
  %4649 = vperm.xlu0 %4648, %v1298
  %v4650 = vpop.permute.xlu0 %4649
  %v4652 = vmul.f32 %v4562, %v4580
  %v4653 = vmul.f32 %v4547, %v4580
  %v4654 = vmul.f32 %v4532, %v4580
  %v4655 = vmul.f32 %v4517, %v4580
  %v4656 = vmul.f32 %v4502, %v4580
  %v4657 = vmul.f32 %v4487, %v4580
  %v4658 = vmul.f32 %v4472, %v4580
  %v4659 = vmul.f32 %v4563, %v4585
  %v4660 = vmul.f32 %v4548, %v4585
  %v4661 = vmul.f32 %v4533, %v4585
  %v4662 = vmul.f32 %v4518, %v4585
  %v4663 = vmul.f32 %v4503, %v4585
  %v4664 = vmul.f32 %v4488, %v4585
  %v4665 = vmul.f32 %v4473, %v4585
  %v4666 = vmul.f32 %v4564, %v4590
  %v4667 = vmul.f32 %v4549, %v4590
  %v4668 = vmul.f32 %v4534, %v4590
  %v4669 = vmul.f32 %v4519, %v4590
  %v4670 = vmul.f32 %v4504, %v4590
  %v4671 = vmul.f32 %v4489, %v4590
  %v4672 = vmul.f32 %v4474, %v4590
  %v4673 = vmul.f32 %v4565, %v4595
  %v4674 = vmul.f32 %v4550, %v4595
  %v4675 = vmul.f32 %v4535, %v4595
  %v4676 = vmul.f32 %v4520, %v4595
  %v4677 = vmul.f32 %v4505, %v4595
  %v4678 = vmul.f32 %v4490, %v4595
  %v4679 = vmul.f32 %v4475, %v4595
  %v4680 = vmul.f32 %v4566, %v4600
  %v4681 = vmul.f32 %v4551, %v4600
  %v4682 = vmul.f32 %v4536, %v4600
  %v4683 = vmul.f32 %v4521, %v4600
  %v4684 = vmul.f32 %v4506, %v4600
  %v4685 = vmul.f32 %v4491, %v4600
  %v4686 = vmul.f32 %v4476, %v4600
  %v4687 = vmul.f32 %v4567, %v4605
  %v4688 = vmul.f32 %v4552, %v4605
  %v4689 = vmul.f32 %v4537, %v4605
  %v4690 = vmul.f32 %v4522, %v4605
  %v4691 = vmul.f32 %v4507, %v4605
  %v4692 = vmul.f32 %v4492, %v4605
  %v4693 = vmul.f32 %v4477, %v4605
  %v4694 = vmul.f32 %v4568, %v4610
  %v4695 = vmul.f32 %v4553, %v4610
  %v4696 = vmul.f32 %v4538, %v4610
  %v4697 = vmul.f32 %v4523, %v4610
  %v4698 = vmul.f32 %v4508, %v4610
  %v4699 = vmul.f32 %v4493, %v4610
  %v4700 = vmul.f32 %v4478, %v4610
  %v4701 = vmul.f32 %v4569, %v4615
  %v4702 = vmul.f32 %v4554, %v4615
  %v4703 = vmul.f32 %v4539, %v4615
  %v4704 = vmul.f32 %v4524, %v4615
  %v4705 = vmul.f32 %v4509, %v4615
  %v4706 = vmul.f32 %v4494, %v4615
  %v4707 = vmul.f32 %v4479, %v4615
  %v4708 = vmul.f32 %v4570, %v4620
  %v4709 = vmul.f32 %v4555, %v4620
  %v4710 = vmul.f32 %v4540, %v4620
  %v4711 = vmul.f32 %v4525, %v4620
  %v4712 = vmul.f32 %v4510, %v4620
  %v4713 = vmul.f32 %v4495, %v4620
  %v4714 = vmul.f32 %v4480, %v4620
  %v4715 = vmul.f32 %v4571, %v4625
  %v4716 = vmul.f32 %v4556, %v4625
  %v4717 = vmul.f32 %v4541, %v4625
  %v4718 = vmul.f32 %v4526, %v4625
  %v4719 = vmul.f32 %v4511, %v4625
  %v4720 = vmul.f32 %v4496, %v4625
  %v4721 = vmul.f32 %v4481, %v4625
  %v4722 = vmul.f32 %v4572, %v4630
  %v4723 = vmul.f32 %v4557, %v4630
  %v4724 = vmul.f32 %v4542, %v4630
  %v4725 = vmul.f32 %v4527, %v4630
  %v4726 = vmul.f32 %v4512, %v4630
  %v4727 = vmul.f32 %v4497, %v4630
  %v4728 = vmul.f32 %v4482, %v4630
  %v4729 = vmul.f32 %v4573, %v4635
  %v4730 = vmul.f32 %v4558, %v4635
  %v4731 = vmul.f32 %v4543, %v4635
  %v4732 = vmul.f32 %v4528, %v4635
  %v4733 = vmul.f32 %v4513, %v4635
  %v4734 = vmul.f32 %v4498, %v4635
  %v4735 = vmul.f32 %v4483, %v4635
  %v4736 = vmul.f32 %v4574, %v4640
  %v4737 = vmul.f32 %v4559, %v4640
  %v4738 = vmul.f32 %v4544, %v4640
  %v4739 = vmul.f32 %v4529, %v4640
  %v4740 = vmul.f32 %v4514, %v4640
  %v4741 = vmul.f32 %v4499, %v4640
  %v4742 = vmul.f32 %v4484, %v4640
  %v4743 = vmul.f32 %v4575, %v4645
  %v4744 = vmul.f32 %v4560, %v4645
  %v4745 = vmul.f32 %v4545, %v4645
  %v4746 = vmul.f32 %v4530, %v4645
  %v4747 = vmul.f32 %v4515, %v4645
  %v4748 = vmul.f32 %v4500, %v4645
  %v4749 = vmul.f32 %v4485, %v4645
  %v4750 = vmul.f32 %v4576, %v4650
  %v4751 = vmul.f32 %v4561, %v4650
  %v4752 = vmul.f32 %v4546, %v4650
  %v4753 = vmul.f32 %v4531, %v4650
  %v4754 = vmul.f32 %v4516, %v4650
  %v4755 = vmul.f32 %v4501, %v4650
  %v4756 = vmul.f32 %v4486, %v4650
  %v4757 = vadd.f32 %v4157, %v4652
  %v4758 = vadd.f32 %v4158, %v4653
  %v4759 = vadd.f32 %v4159, %v4654
  %v4760 = vadd.f32 %v4160, %v4655
  %v4761 = vadd.f32 %v4161, %v4656
  %v4762 = vadd.f32 %v4162, %v4657
  %v4763 = vadd.f32 %v4163, %v4658
  %v4764 = vadd.f32 %v4164, %v4659
  %v4765 = vadd.f32 %v4165, %v4660
  %v4766 = vadd.f32 %v4166, %v4661
  %v4767 = vadd.f32 %v4167, %v4662
  %v4768 = vadd.f32 %v4168, %v4663
  %v4769 = vadd.f32 %v4169, %v4664
  %v4770 = vadd.f32 %v4170, %v4665
  %v4771 = vadd.f32 %v4171, %v4666
  %v4772 = vadd.f32 %v4172, %v4667
  %v4773 = vadd.f32 %v4173, %v4668
  %v4774 = vadd.f32 %v4174, %v4669
  %v4775 = vadd.f32 %v4175, %v4670
  %v4776 = vadd.f32 %v4176, %v4671
  %v4777 = vadd.f32 %v4177, %v4672
  %v4778 = vadd.f32 %v4178, %v4673
  %v4779 = vadd.f32 %v4179, %v4674
  %v4780 = vadd.f32 %v4180, %v4675
  %v4781 = vadd.f32 %v4181, %v4676
  %v4782 = vadd.f32 %v4182, %v4677
  %v4783 = vadd.f32 %v4183, %v4678
  %v4784 = vadd.f32 %v4184, %v4679
  %v4785 = vadd.f32 %v4185, %v4680
  %v4786 = vadd.f32 %v4186, %v4681
  %v4787 = vadd.f32 %v4187, %v4682
  %v4788 = vadd.f32 %v4188, %v4683
  %v4789 = vadd.f32 %v4189, %v4684
  %v4790 = vadd.f32 %v4190, %v4685
  %v4791 = vadd.f32 %v4191, %v4686
  %v4792 = vadd.f32 %v4192, %v4687
  %v4793 = vadd.f32 %v4193, %v4688
  %v4794 = vadd.f32 %v4194, %v4689
  %v4795 = vadd.f32 %v4195, %v4690
  %v4796 = vadd.f32 %v4196, %v4691
  %v4797 = vadd.f32 %v4197, %v4692
  %v4798 = vadd.f32 %v4198, %v4693
  %v4799 = vadd.f32 %v4199, %v4694
  %v4800 = vadd.f32 %v4200, %v4695
  %v4801 = vadd.f32 %v4201, %v4696
  %v4802 = vadd.f32 %v4202, %v4697
  %v4803 = vadd.f32 %v4203, %v4698
  %v4804 = vadd.f32 %v4204, %v4699
  %v4805 = vadd.f32 %v4205, %v4700
  %v4806 = vadd.f32 %v4206, %v4701
  %v4807 = vadd.f32 %v4207, %v4702
  %v4808 = vadd.f32 %v4208, %v4703
  %v4809 = vadd.f32 %v4209, %v4704
  %v4810 = vadd.f32 %v4210, %v4705
  %v4811 = vadd.f32 %v4211, %v4706
  %v4812 = vadd.f32 %v4212, %v4707
  %v4813 = vadd.f32 %v4213, %v4708
  %v4814 = vadd.f32 %v4214, %v4709
  %v4815 = vadd.f32 %v4215, %v4710
  %v4816 = vadd.f32 %v4216, %v4711
  %v4817 = vadd.f32 %v4217, %v4712
  %v4818 = vadd.f32 %v4218, %v4713
  %v4819 = vadd.f32 %v4219, %v4714
  %v4820 = vadd.f32 %v4220, %v4715
  %v4821 = vadd.f32 %v4221, %v4716
  %v4822 = vadd.f32 %v4222, %v4717
  %v4823 = vadd.f32 %v4223, %v4718
  %v4824 = vadd.f32 %v4224, %v4719
  %v4825 = vadd.f32 %v4225, %v4720
  %v4826 = vadd.f32 %v4226, %v4721
  %v4827 = vadd.f32 %v4227, %v4722
  %v4828 = vadd.f32 %v4228, %v4723
  %v4829 = vadd.f32 %v4229, %v4724
  %v4830 = vadd.f32 %v4230, %v4725
  %v4831 = vadd.f32 %v4231, %v4726
  %v4832 = vadd.f32 %v4232, %v4727
  %v4833 = vadd.f32 %v4233, %v4728
  %v4834 = vadd.f32 %v4234, %v4729
  %v4835 = vadd.f32 %v4235, %v4730
  %v4836 = vadd.f32 %v4236, %v4731
  %v4837 = vadd.f32 %v4237, %v4732
  %v4838 = vadd.f32 %v4238, %v4733
  %v4839 = vadd.f32 %v4239, %v4734
  %v4840 = vadd.f32 %v4240, %v4735
  %v4841 = vadd.f32 %v4241, %v4736
  %v4842 = vadd.f32 %v4242, %v4737
  %v4843 = vadd.f32 %v4243, %v4738
  %v4844 = vadd.f32 %v4244, %v4739
  %v4845 = vadd.f32 %v4245, %v4740
  %v4846 = vadd.f32 %v4246, %v4741
  %v4847 = vadd.f32 %v4247, %v4742
  %v4848 = vadd.f32 %v4248, %v4743
  %v4849 = vadd.f32 %v4249, %v4744
  %v4850 = vadd.f32 %v4250, %v4745
  %v4851 = vadd.f32 %v4251, %v4746
  %v4852 = vadd.f32 %v4252, %v4747
  %v4853 = vadd.f32 %v4253, %v4748
  %v4854 = vadd.f32 %v4254, %v4749
  %v4855 = vadd.f32 %v4255, %v4750
  %v4856 = vadd.f32 %v4256, %v4751
  %v4857 = vadd.f32 %v4257, %v4752
  %v4858 = vadd.f32 %v4258, %v4753
  %v4859 = vadd.f32 %v4259, %v4754
  %v4860 = vadd.f32 %v4260, %v4755
  %v4861 = vadd.f32 %v4261, %v4756
  %4862 = vrot.lane.b32.xlu0 %v1749, 100
  %v4863 = vpop.permute.xlu0 %4862
  %4864 = vrot.lane.b32.xlu0 %v1756, 100
  %v4865 = vpop.permute.xlu0 %4864
  %4866 = vrot.lane.b32.xlu0 %v1763, 100
  %v4867 = vpop.permute.xlu0 %4866
  %4868 = vrot.lane.b32.xlu0 %v1770, 100
  %v4869 = vpop.permute.xlu0 %4868
  %4870 = vrot.lane.b32.xlu0 %v1777, 100
  %v4871 = vpop.permute.xlu0 %4870
  %4872 = vrot.lane.b32.xlu0 %v1784, 100
  %v4873 = vpop.permute.xlu0 %4872
  %4874 = vrot.lane.b32.xlu0 %v1791, 100
  %v4875 = vpop.permute.xlu0 %4874
  %4876 = vrot.lane.b32.xlu0 %v1798, 100
  %v4877 = vpop.permute.xlu0 %4876
  %4878 = vrot.lane.b32.xlu0 %v1805, 100
  %v4879 = vpop.permute.xlu0 %4878
  %4880 = vrot.lane.b32.xlu0 %v1812, 100
  %v4881 = vpop.permute.xlu0 %4880
  %4882 = vrot.lane.b32.xlu0 %v1819, 100
  %v4883 = vpop.permute.xlu0 %4882
  %4884 = vrot.lane.b32.xlu0 %v1826, 100
  %v4885 = vpop.permute.xlu0 %4884
  %4886 = vrot.lane.b32.xlu0 %v1833, 100
  %v4887 = vpop.permute.xlu0 %4886
  %4888 = vrot.lane.b32.xlu0 %v1840, 100
  %v4889 = vpop.permute.xlu0 %4888
  %4890 = vrot.lane.b32.xlu0 %v1847, 100
  %v4891 = vpop.permute.xlu0 %4890
  %4892 = vrot.lane.b32.xlu0 %v1750, 100
  %v4893 = vpop.permute.xlu0 %4892
  %4894 = vrot.lane.b32.xlu0 %v1757, 100
  %v4895 = vpop.permute.xlu0 %4894
  %4896 = vrot.lane.b32.xlu0 %v1764, 100
  %v4897 = vpop.permute.xlu0 %4896
  %4898 = vrot.lane.b32.xlu0 %v1771, 100
  %v4899 = vpop.permute.xlu0 %4898
  %4900 = vrot.lane.b32.xlu0 %v1778, 100
  %v4901 = vpop.permute.xlu0 %4900
  %4902 = vrot.lane.b32.xlu0 %v1785, 100
  %v4903 = vpop.permute.xlu0 %4902
  %4904 = vrot.lane.b32.xlu0 %v1792, 100
  %v4905 = vpop.permute.xlu0 %4904
  %4906 = vrot.lane.b32.xlu0 %v1799, 100
  %v4907 = vpop.permute.xlu0 %4906
  %4908 = vrot.lane.b32.xlu0 %v1806, 100
  %v4909 = vpop.permute.xlu0 %4908
  %4910 = vrot.lane.b32.xlu0 %v1813, 100
  %v4911 = vpop.permute.xlu0 %4910
  %4912 = vrot.lane.b32.xlu0 %v1820, 100
  %v4913 = vpop.permute.xlu0 %4912
  %4914 = vrot.lane.b32.xlu0 %v1827, 100
  %v4915 = vpop.permute.xlu0 %4914
  %4916 = vrot.lane.b32.xlu0 %v1834, 100
  %v4917 = vpop.permute.xlu0 %4916
  %4918 = vrot.lane.b32.xlu0 %v1841, 100
  %v4919 = vpop.permute.xlu0 %4918
  %4920 = vrot.lane.b32.xlu0 %v1848, 100
  %v4921 = vpop.permute.xlu0 %4920
  %4922 = vrot.lane.b32.xlu0 %v1751, 100
  %v4923 = vpop.permute.xlu0 %4922
  %4924 = vrot.lane.b32.xlu0 %v1758, 100
  %v4925 = vpop.permute.xlu0 %4924
  %4926 = vrot.lane.b32.xlu0 %v1765, 100
  %v4927 = vpop.permute.xlu0 %4926
  %4928 = vrot.lane.b32.xlu0 %v1772, 100
  %v4929 = vpop.permute.xlu0 %4928
  %4930 = vrot.lane.b32.xlu0 %v1779, 100
  %v4931 = vpop.permute.xlu0 %4930
  %4932 = vrot.lane.b32.xlu0 %v1786, 100
  %v4933 = vpop.permute.xlu0 %4932
  %4934 = vrot.lane.b32.xlu0 %v1793, 100
  %v4935 = vpop.permute.xlu0 %4934
  %4936 = vrot.lane.b32.xlu0 %v1800, 100
  %v4937 = vpop.permute.xlu0 %4936
  %4938 = vrot.lane.b32.xlu0 %v1807, 100
  %v4939 = vpop.permute.xlu0 %4938
  %4940 = vrot.lane.b32.xlu0 %v1814, 100
  %v4941 = vpop.permute.xlu0 %4940
  %4942 = vrot.lane.b32.xlu0 %v1821, 100
  %v4943 = vpop.permute.xlu0 %4942
  %4944 = vrot.lane.b32.xlu0 %v1828, 100
  %v4945 = vpop.permute.xlu0 %4944
  %4946 = vrot.lane.b32.xlu0 %v1835, 100
  %v4947 = vpop.permute.xlu0 %4946
  %4948 = vrot.lane.b32.xlu0 %v1842, 100
  %v4949 = vpop.permute.xlu0 %4948
  %4950 = vrot.lane.b32.xlu0 %v1849, 100
  %v4951 = vpop.permute.xlu0 %4950
  %4952 = vrot.lane.b32.xlu0 %v1752, 100
  %v4953 = vpop.permute.xlu0 %4952
  %4954 = vrot.lane.b32.xlu0 %v1759, 100
  %v4955 = vpop.permute.xlu0 %4954
  %4956 = vrot.lane.b32.xlu0 %v1766, 100
  %v4957 = vpop.permute.xlu0 %4956
  %4958 = vrot.lane.b32.xlu0 %v1773, 100
  %v4959 = vpop.permute.xlu0 %4958
  %4960 = vrot.lane.b32.xlu0 %v1780, 100
  %v4961 = vpop.permute.xlu0 %4960
  %4962 = vrot.lane.b32.xlu0 %v1787, 100
  %v4963 = vpop.permute.xlu0 %4962
  %4964 = vrot.lane.b32.xlu0 %v1794, 100
  %v4965 = vpop.permute.xlu0 %4964
  %4966 = vrot.lane.b32.xlu0 %v1801, 100
  %v4967 = vpop.permute.xlu0 %4966
  %4968 = vrot.lane.b32.xlu0 %v1808, 100
  %v4969 = vpop.permute.xlu0 %4968
  %4970 = vrot.lane.b32.xlu0 %v1815, 100
  %v4971 = vpop.permute.xlu0 %4970
  %4972 = vrot.lane.b32.xlu0 %v1822, 100
  %v4973 = vpop.permute.xlu0 %4972
  %4974 = vrot.lane.b32.xlu0 %v1829, 100
  %v4975 = vpop.permute.xlu0 %4974
  %4976 = vrot.lane.b32.xlu0 %v1836, 100
  %v4977 = vpop.permute.xlu0 %4976
  %4978 = vrot.lane.b32.xlu0 %v1843, 100
  %v4979 = vpop.permute.xlu0 %4978
  %4980 = vrot.lane.b32.xlu0 %v1850, 100
  %v4981 = vpop.permute.xlu0 %4980
  %4982 = vrot.lane.b32.xlu0 %v1753, 100
  %v4983 = vpop.permute.xlu0 %4982
  %4984 = vrot.lane.b32.xlu0 %v1760, 100
  %v4985 = vpop.permute.xlu0 %4984
  %4986 = vrot.lane.b32.xlu0 %v1767, 100
  %v4987 = vpop.permute.xlu0 %4986
  %4988 = vrot.lane.b32.xlu0 %v1774, 100
  %v4989 = vpop.permute.xlu0 %4988
  %4990 = vrot.lane.b32.xlu0 %v1781, 100
  %v4991 = vpop.permute.xlu0 %4990
  %4992 = vrot.lane.b32.xlu0 %v1788, 100
  %v4993 = vpop.permute.xlu0 %4992
  %4994 = vrot.lane.b32.xlu0 %v1795, 100
  %v4995 = vpop.permute.xlu0 %4994
  %4996 = vrot.lane.b32.xlu0 %v1802, 100
  %v4997 = vpop.permute.xlu0 %4996
  %4998 = vrot.lane.b32.xlu0 %v1809, 100
  %v4999 = vpop.permute.xlu0 %4998
  %5000 = vrot.lane.b32.xlu0 %v1816, 100
  %v5001 = vpop.permute.xlu0 %5000
  %5002 = vrot.lane.b32.xlu0 %v1823, 100
  %v5003 = vpop.permute.xlu0 %5002
  %5004 = vrot.lane.b32.xlu0 %v1830, 100
  %v5005 = vpop.permute.xlu0 %5004
  %5006 = vrot.lane.b32.xlu0 %v1837, 100
  %v5007 = vpop.permute.xlu0 %5006
  %5008 = vrot.lane.b32.xlu0 %v1844, 100
  %v5009 = vpop.permute.xlu0 %5008
  %5010 = vrot.lane.b32.xlu0 %v1851, 100
  %v5011 = vpop.permute.xlu0 %5010
  %5012 = vrot.lane.b32.xlu0 %v1754, 100
  %v5013 = vpop.permute.xlu0 %5012
  %5014 = vrot.lane.b32.xlu0 %v1761, 100
  %v5015 = vpop.permute.xlu0 %5014
  %5016 = vrot.lane.b32.xlu0 %v1768, 100
  %v5017 = vpop.permute.xlu0 %5016
  %5018 = vrot.lane.b32.xlu0 %v1775, 100
  %v5019 = vpop.permute.xlu0 %5018
  %5020 = vrot.lane.b32.xlu0 %v1782, 100
  %v5021 = vpop.permute.xlu0 %5020
  %5022 = vrot.lane.b32.xlu0 %v1789, 100
  %v5023 = vpop.permute.xlu0 %5022
  %5024 = vrot.lane.b32.xlu0 %v1796, 100
  %v5025 = vpop.permute.xlu0 %5024
  %5026 = vrot.lane.b32.xlu0 %v1803, 100
  %v5027 = vpop.permute.xlu0 %5026
  %5028 = vrot.lane.b32.xlu0 %v1810, 100
  %v5029 = vpop.permute.xlu0 %5028
  %5030 = vrot.lane.b32.xlu0 %v1817, 100
  %v5031 = vpop.permute.xlu0 %5030
  %5032 = vrot.lane.b32.xlu0 %v1824, 100
  %v5033 = vpop.permute.xlu0 %5032
  %5034 = vrot.lane.b32.xlu0 %v1831, 100
  %v5035 = vpop.permute.xlu0 %5034
  %5036 = vrot.lane.b32.xlu0 %v1838, 100
  %v5037 = vpop.permute.xlu0 %5036
  %5038 = vrot.lane.b32.xlu0 %v1845, 100
  %v5039 = vpop.permute.xlu0 %5038
  %5040 = vrot.lane.b32.xlu0 %v1852, 100
  %v5041 = vpop.permute.xlu0 %5040
  %5042 = vrot.lane.b32.xlu0 %v1755, 100
  %v5043 = vpop.permute.xlu0 %5042
  %5044 = vrot.lane.b32.xlu0 %v1762, 100
  %v5045 = vpop.permute.xlu0 %5044
  %5046 = vrot.lane.b32.xlu0 %v1769, 100
  %v5047 = vpop.permute.xlu0 %5046
  %5048 = vrot.lane.b32.xlu0 %v1776, 100
  %v5049 = vpop.permute.xlu0 %5048
  %5050 = vrot.lane.b32.xlu0 %v1783, 100
  %v5051 = vpop.permute.xlu0 %5050
  %5052 = vrot.lane.b32.xlu0 %v1790, 100
  %v5053 = vpop.permute.xlu0 %5052
  %5054 = vrot.lane.b32.xlu0 %v1797, 100
  %v5055 = vpop.permute.xlu0 %5054
  %5056 = vrot.lane.b32.xlu0 %v1804, 100
  %v5057 = vpop.permute.xlu0 %5056
  %5058 = vrot.lane.b32.xlu0 %v1811, 100
  %v5059 = vpop.permute.xlu0 %5058
  %5060 = vrot.lane.b32.xlu0 %v1818, 100
  %v5061 = vpop.permute.xlu0 %5060
  %5062 = vrot.lane.b32.xlu0 %v1825, 100
  %v5063 = vpop.permute.xlu0 %5062
  %5064 = vrot.lane.b32.xlu0 %v1832, 100
  %v5065 = vpop.permute.xlu0 %5064
  %5066 = vrot.lane.b32.xlu0 %v1839, 100
  %v5067 = vpop.permute.xlu0 %5066
  %5068 = vrot.lane.b32.xlu0 %v1846, 100
  %v5069 = vpop.permute.xlu0 %5068
  %5070 = vrot.lane.b32.xlu0 %v1853, 100
  %v5071 = vpop.permute.xlu0 %5070
  %vm5072 = vcmp.lt.s32.totalorder %v1606, 100
  %v5073 = vsel %vm5072, %v5013, %v5043
  %v5074 = vsel %vm5072, %v5015, %v5045
  %v5075 = vsel %vm5072, %v5017, %v5047
  %v5076 = vsel %vm5072, %v5019, %v5049
  %v5077 = vsel %vm5072, %v5021, %v5051
  %v5078 = vsel %vm5072, %v5023, %v5053
  %v5079 = vsel %vm5072, %v5025, %v5055
  %v5080 = vsel %vm5072, %v5027, %v5057
  %v5081 = vsel %vm5072, %v5029, %v5059
  %v5082 = vsel %vm5072, %v5031, %v5061
  %v5083 = vsel %vm5072, %v5033, %v5063
  %v5084 = vsel %vm5072, %v5035, %v5065
  %v5085 = vsel %vm5072, %v5037, %v5067
  %v5086 = vsel %vm5072, %v5039, %v5069
  %v5087 = vsel %vm5072, %v5041, %v5071
  %v5088 = vsel %vm5072, %v4983, %v5013
  %v5089 = vsel %vm5072, %v4985, %v5015
  %v5090 = vsel %vm5072, %v4987, %v5017
  %v5091 = vsel %vm5072, %v4989, %v5019
  %v5092 = vsel %vm5072, %v4991, %v5021
  %v5093 = vsel %vm5072, %v4993, %v5023
  %v5094 = vsel %vm5072, %v4995, %v5025
  %v5095 = vsel %vm5072, %v4997, %v5027
  %v5096 = vsel %vm5072, %v4999, %v5029
  %v5097 = vsel %vm5072, %v5001, %v5031
  %v5098 = vsel %vm5072, %v5003, %v5033
  %v5099 = vsel %vm5072, %v5005, %v5035
  %v5100 = vsel %vm5072, %v5007, %v5037
  %v5101 = vsel %vm5072, %v5009, %v5039
  %v5102 = vsel %vm5072, %v5011, %v5041
  %v5103 = vsel %vm5072, %v4953, %v4983
  %v5104 = vsel %vm5072, %v4955, %v4985
  %v5105 = vsel %vm5072, %v4957, %v4987
  %v5106 = vsel %vm5072, %v4959, %v4989
  %v5107 = vsel %vm5072, %v4961, %v4991
  %v5108 = vsel %vm5072, %v4963, %v4993
  %v5109 = vsel %vm5072, %v4965, %v4995
  %v5110 = vsel %vm5072, %v4967, %v4997
  %v5111 = vsel %vm5072, %v4969, %v4999
  %v5112 = vsel %vm5072, %v4971, %v5001
  %v5113 = vsel %vm5072, %v4973, %v5003
  %v5114 = vsel %vm5072, %v4975, %v5005
  %v5115 = vsel %vm5072, %v4977, %v5007
  %v5116 = vsel %vm5072, %v4979, %v5009
  %v5117 = vsel %vm5072, %v4981, %v5011
  %v5118 = vsel %vm5072, %v4923, %v4953
  %v5119 = vsel %vm5072, %v4925, %v4955
  %v5120 = vsel %vm5072, %v4927, %v4957
  %v5121 = vsel %vm5072, %v4929, %v4959
  %v5122 = vsel %vm5072, %v4931, %v4961
  %v5123 = vsel %vm5072, %v4933, %v4963
  %v5124 = vsel %vm5072, %v4935, %v4965
  %v5125 = vsel %vm5072, %v4937, %v4967
  %v5126 = vsel %vm5072, %v4939, %v4969
  %v5127 = vsel %vm5072, %v4941, %v4971
  %v5128 = vsel %vm5072, %v4943, %v4973
  %v5129 = vsel %vm5072, %v4945, %v4975
  %v5130 = vsel %vm5072, %v4947, %v4977
  %v5131 = vsel %vm5072, %v4949, %v4979
  %v5132 = vsel %vm5072, %v4951, %v4981
  %v5133 = vsel %vm5072, %v4893, %v4923
  %v5134 = vsel %vm5072, %v4895, %v4925
  %v5135 = vsel %vm5072, %v4897, %v4927
  %v5136 = vsel %vm5072, %v4899, %v4929
  %v5137 = vsel %vm5072, %v4901, %v4931
  %v5138 = vsel %vm5072, %v4903, %v4933
  %v5139 = vsel %vm5072, %v4905, %v4935
  %v5140 = vsel %vm5072, %v4907, %v4937
  %v5141 = vsel %vm5072, %v4909, %v4939
  %v5142 = vsel %vm5072, %v4911, %v4941
  %v5143 = vsel %vm5072, %v4913, %v4943
  %v5144 = vsel %vm5072, %v4915, %v4945
  %v5145 = vsel %vm5072, %v4917, %v4947
  %v5146 = vsel %vm5072, %v4919, %v4949
  %v5147 = vsel %vm5072, %v4921, %v4951
  %v5148 = vsel %vm5072, %v4863, %v4893
  %v5149 = vsel %vm5072, %v4865, %v4895
  %v5150 = vsel %vm5072, %v4867, %v4897
  %v5151 = vsel %vm5072, %v4869, %v4899
  %v5152 = vsel %vm5072, %v4871, %v4901
  %v5153 = vsel %vm5072, %v4873, %v4903
  %v5154 = vsel %vm5072, %v4875, %v4905
  %v5155 = vsel %vm5072, %v4877, %v4907
  %v5156 = vsel %vm5072, %v4879, %v4909
  %v5157 = vsel %vm5072, %v4881, %v4911
  %v5158 = vsel %vm5072, %v4883, %v4913
  %v5159 = vsel %vm5072, %v4885, %v4915
  %v5160 = vsel %vm5072, %v4887, %v4917
  %v5161 = vsel %vm5072, %v4889, %v4919
  %v5162 = vsel %vm5072, %v4891, %v4921
  %v5163 = vsel %vm5072, %v5043, %v4863
  %v5164 = vsel %vm5072, %v5045, %v4865
  %v5165 = vsel %vm5072, %v5047, %v4867
  %v5166 = vsel %vm5072, %v5049, %v4869
  %v5167 = vsel %vm5072, %v5051, %v4871
  %v5168 = vsel %vm5072, %v5053, %v4873
  %v5169 = vsel %vm5072, %v5055, %v4875
  %v5170 = vsel %vm5072, %v5057, %v4877
  %v5171 = vsel %vm5072, %v5059, %v4879
  %v5172 = vsel %vm5072, %v5061, %v4881
  %v5173 = vsel %vm5072, %v5063, %v4883
  %v5174 = vsel %vm5072, %v5065, %v4885
  %v5175 = vsel %vm5072, %v5067, %v4887
  %v5176 = vsel %vm5072, %v5069, %v4889
  %v5177 = vsel %vm5072, %v5071, %v4891
  %5179 = vset.pattern.permute.xlu0 0
  %5180 = vperm.xlu0 %5179, %v1348
  %v5181 = vpop.permute.xlu0 %5180
  %5184 = vset.pattern.permute.xlu0 0
  %5185 = vperm.xlu0 %5184, %v1349
  %v5186 = vpop.permute.xlu0 %5185
  %5189 = vset.pattern.permute.xlu0 0
  %5190 = vperm.xlu0 %5189, %v1350
  %v5191 = vpop.permute.xlu0 %5190
  %5194 = vset.pattern.permute.xlu0 0
  %5195 = vperm.xlu0 %5194, %v1351
  %v5196 = vpop.permute.xlu0 %5195
  %5199 = vset.pattern.permute.xlu0 0
  %5200 = vperm.xlu0 %5199, %v1352
  %v5201 = vpop.permute.xlu0 %5200
  %5204 = vset.pattern.permute.xlu0 0
  %5205 = vperm.xlu0 %5204, %v1353
  %v5206 = vpop.permute.xlu0 %5205
  %5209 = vset.pattern.permute.xlu0 0
  %5210 = vperm.xlu0 %5209, %v1354
  %v5211 = vpop.permute.xlu0 %5210
  %5214 = vset.pattern.permute.xlu0 0
  %5215 = vperm.xlu0 %5214, %v1355
  %v5216 = vpop.permute.xlu0 %5215
  %5219 = vset.pattern.permute.xlu0 0
  %5220 = vperm.xlu0 %5219, %v1356
  %v5221 = vpop.permute.xlu0 %5220
  %5224 = vset.pattern.permute.xlu0 0
  %5225 = vperm.xlu0 %5224, %v1357
  %v5226 = vpop.permute.xlu0 %5225
  %5229 = vset.pattern.permute.xlu0 0
  %5230 = vperm.xlu0 %5229, %v1358
  %v5231 = vpop.permute.xlu0 %5230
  %5234 = vset.pattern.permute.xlu0 0
  %5235 = vperm.xlu0 %5234, %v1359
  %v5236 = vpop.permute.xlu0 %5235
  %5239 = vset.pattern.permute.xlu0 0
  %5240 = vperm.xlu0 %5239, %v1360
  %v5241 = vpop.permute.xlu0 %5240
  %5244 = vset.pattern.permute.xlu0 0
  %5245 = vperm.xlu0 %5244, %v1361
  %v5246 = vpop.permute.xlu0 %5245
  %5249 = vset.pattern.permute.xlu0 0
  %5250 = vperm.xlu0 %5249, %v1362
  %v5251 = vpop.permute.xlu0 %5250
  %v5253 = vmul.f32 %v5148, %v5181
  %v5254 = vmul.f32 %v5133, %v5181
  %v5255 = vmul.f32 %v5118, %v5181
  %v5256 = vmul.f32 %v5103, %v5181
  %v5257 = vmul.f32 %v5088, %v5181
  %v5258 = vmul.f32 %v5073, %v5181
  %v5259 = vmul.f32 %v5163, %v5181
  %v5260 = vmul.f32 %v5149, %v5186
  %v5261 = vmul.f32 %v5134, %v5186
  %v5262 = vmul.f32 %v5119, %v5186
  %v5263 = vmul.f32 %v5104, %v5186
  %v5264 = vmul.f32 %v5089, %v5186
  %v5265 = vmul.f32 %v5074, %v5186
  %v5266 = vmul.f32 %v5164, %v5186
  %v5267 = vmul.f32 %v5150, %v5191
  %v5268 = vmul.f32 %v5135, %v5191
  %v5269 = vmul.f32 %v5120, %v5191
  %v5270 = vmul.f32 %v5105, %v5191
  %v5271 = vmul.f32 %v5090, %v5191
  %v5272 = vmul.f32 %v5075, %v5191
  %v5273 = vmul.f32 %v5165, %v5191
  %v5274 = vmul.f32 %v5151, %v5196
  %v5275 = vmul.f32 %v5136, %v5196
  %v5276 = vmul.f32 %v5121, %v5196
  %v5277 = vmul.f32 %v5106, %v5196
  %v5278 = vmul.f32 %v5091, %v5196
  %v5279 = vmul.f32 %v5076, %v5196
  %v5280 = vmul.f32 %v5166, %v5196
  %v5281 = vmul.f32 %v5152, %v5201
  %v5282 = vmul.f32 %v5137, %v5201
  %v5283 = vmul.f32 %v5122, %v5201
  %v5284 = vmul.f32 %v5107, %v5201
  %v5285 = vmul.f32 %v5092, %v5201
  %v5286 = vmul.f32 %v5077, %v5201
  %v5287 = vmul.f32 %v5167, %v5201
  %v5288 = vmul.f32 %v5153, %v5206
  %v5289 = vmul.f32 %v5138, %v5206
  %v5290 = vmul.f32 %v5123, %v5206
  %v5291 = vmul.f32 %v5108, %v5206
  %v5292 = vmul.f32 %v5093, %v5206
  %v5293 = vmul.f32 %v5078, %v5206
  %v5294 = vmul.f32 %v5168, %v5206
  %v5295 = vmul.f32 %v5154, %v5211
  %v5296 = vmul.f32 %v5139, %v5211
  %v5297 = vmul.f32 %v5124, %v5211
  %v5298 = vmul.f32 %v5109, %v5211
  %v5299 = vmul.f32 %v5094, %v5211
  %v5300 = vmul.f32 %v5079, %v5211
  %v5301 = vmul.f32 %v5169, %v5211
  %v5302 = vmul.f32 %v5155, %v5216
  %v5303 = vmul.f32 %v5140, %v5216
  %v5304 = vmul.f32 %v5125, %v5216
  %v5305 = vmul.f32 %v5110, %v5216
  %v5306 = vmul.f32 %v5095, %v5216
  %v5307 = vmul.f32 %v5080, %v5216
  %v5308 = vmul.f32 %v5170, %v5216
  %v5309 = vmul.f32 %v5156, %v5221
  %v5310 = vmul.f32 %v5141, %v5221
  %v5311 = vmul.f32 %v5126, %v5221
  %v5312 = vmul.f32 %v5111, %v5221
  %v5313 = vmul.f32 %v5096, %v5221
  %v5314 = vmul.f32 %v5081, %v5221
  %v5315 = vmul.f32 %v5171, %v5221
  %v5316 = vmul.f32 %v5157, %v5226
  %v5317 = vmul.f32 %v5142, %v5226
  %v5318 = vmul.f32 %v5127, %v5226
  %v5319 = vmul.f32 %v5112, %v5226
  %v5320 = vmul.f32 %v5097, %v5226
  %v5321 = vmul.f32 %v5082, %v5226
  %v5322 = vmul.f32 %v5172, %v5226
  %v5323 = vmul.f32 %v5158, %v5231
  %v5324 = vmul.f32 %v5143, %v5231
  %v5325 = vmul.f32 %v5128, %v5231
  %v5326 = vmul.f32 %v5113, %v5231
  %v5327 = vmul.f32 %v5098, %v5231
  %v5328 = vmul.f32 %v5083, %v5231
  %v5329 = vmul.f32 %v5173, %v5231
  %v5330 = vmul.f32 %v5159, %v5236
  %v5331 = vmul.f32 %v5144, %v5236
  %v5332 = vmul.f32 %v5129, %v5236
  %v5333 = vmul.f32 %v5114, %v5236
  %v5334 = vmul.f32 %v5099, %v5236
  %v5335 = vmul.f32 %v5084, %v5236
  %v5336 = vmul.f32 %v5174, %v5236
  %v5337 = vmul.f32 %v5160, %v5241
  %v5338 = vmul.f32 %v5145, %v5241
  %v5339 = vmul.f32 %v5130, %v5241
  %v5340 = vmul.f32 %v5115, %v5241
  %v5341 = vmul.f32 %v5100, %v5241
  %v5342 = vmul.f32 %v5085, %v5241
  %v5343 = vmul.f32 %v5175, %v5241
  %v5344 = vmul.f32 %v5161, %v5246
  %v5345 = vmul.f32 %v5146, %v5246
  %v5346 = vmul.f32 %v5131, %v5246
  %v5347 = vmul.f32 %v5116, %v5246
  %v5348 = vmul.f32 %v5101, %v5246
  %v5349 = vmul.f32 %v5086, %v5246
  %v5350 = vmul.f32 %v5176, %v5246
  %v5351 = vmul.f32 %v5162, %v5251
  %v5352 = vmul.f32 %v5147, %v5251
  %v5353 = vmul.f32 %v5132, %v5251
  %v5354 = vmul.f32 %v5117, %v5251
  %v5355 = vmul.f32 %v5102, %v5251
  %v5356 = vmul.f32 %v5087, %v5251
  %v5357 = vmul.f32 %v5177, %v5251
  %v5358 = vadd.f32 %v4757, %v5253
  %v5359 = vadd.f32 %v4758, %v5254
  %v5360 = vadd.f32 %v4759, %v5255
  %v5361 = vadd.f32 %v4760, %v5256
  %v5362 = vadd.f32 %v4761, %v5257
  %v5363 = vadd.f32 %v4762, %v5258
  %v5364 = vadd.f32 %v4763, %v5259
  %v5365 = vadd.f32 %v4764, %v5260
  %v5366 = vadd.f32 %v4765, %v5261
  %v5367 = vadd.f32 %v4766, %v5262
  %v5368 = vadd.f32 %v4767, %v5263
  %v5369 = vadd.f32 %v4768, %v5264
  %v5370 = vadd.f32 %v4769, %v5265
  %v5371 = vadd.f32 %v4770, %v5266
  %v5372 = vadd.f32 %v4771, %v5267
  %v5373 = vadd.f32 %v4772, %v5268
  %v5374 = vadd.f32 %v4773, %v5269
  %v5375 = vadd.f32 %v4774, %v5270
  %v5376 = vadd.f32 %v4775, %v5271
  %v5377 = vadd.f32 %v4776, %v5272
  %v5378 = vadd.f32 %v4777, %v5273
  %v5379 = vadd.f32 %v4778, %v5274
  %v5380 = vadd.f32 %v4779, %v5275
  %v5381 = vadd.f32 %v4780, %v5276
  %v5382 = vadd.f32 %v4781, %v5277
  %v5383 = vadd.f32 %v4782, %v5278
  %v5384 = vadd.f32 %v4783, %v5279
  %v5385 = vadd.f32 %v4784, %v5280
  %v5386 = vadd.f32 %v4785, %v5281
  %v5387 = vadd.f32 %v4786, %v5282
  %v5388 = vadd.f32 %v4787, %v5283
  %v5389 = vadd.f32 %v4788, %v5284
  %v5390 = vadd.f32 %v4789, %v5285
  %v5391 = vadd.f32 %v4790, %v5286
  %v5392 = vadd.f32 %v4791, %v5287
  %v5393 = vadd.f32 %v4792, %v5288
  %v5394 = vadd.f32 %v4793, %v5289
  %v5395 = vadd.f32 %v4794, %v5290
  %v5396 = vadd.f32 %v4795, %v5291
  %v5397 = vadd.f32 %v4796, %v5292
  %v5398 = vadd.f32 %v4797, %v5293
  %v5399 = vadd.f32 %v4798, %v5294
  %v5400 = vadd.f32 %v4799, %v5295
  %v5401 = vadd.f32 %v4800, %v5296
  %v5402 = vadd.f32 %v4801, %v5297
  %v5403 = vadd.f32 %v4802, %v5298
  %v5404 = vadd.f32 %v4803, %v5299
  %v5405 = vadd.f32 %v4804, %v5300
  %v5406 = vadd.f32 %v4805, %v5301
  %v5407 = vadd.f32 %v4806, %v5302
  %v5408 = vadd.f32 %v4807, %v5303
  %v5409 = vadd.f32 %v4808, %v5304
  %v5410 = vadd.f32 %v4809, %v5305
  %v5411 = vadd.f32 %v4810, %v5306
  %v5412 = vadd.f32 %v4811, %v5307
  %v5413 = vadd.f32 %v4812, %v5308
  %v5414 = vadd.f32 %v4813, %v5309
  %v5415 = vadd.f32 %v4814, %v5310
  %v5416 = vadd.f32 %v4815, %v5311
  %v5417 = vadd.f32 %v4816, %v5312
  %v5418 = vadd.f32 %v4817, %v5313
  %v5419 = vadd.f32 %v4818, %v5314
  %v5420 = vadd.f32 %v4819, %v5315
  %v5421 = vadd.f32 %v4820, %v5316
  %v5422 = vadd.f32 %v4821, %v5317
  %v5423 = vadd.f32 %v4822, %v5318
  %v5424 = vadd.f32 %v4823, %v5319
  %v5425 = vadd.f32 %v4824, %v5320
  %v5426 = vadd.f32 %v4825, %v5321
  %v5427 = vadd.f32 %v4826, %v5322
  %v5428 = vadd.f32 %v4827, %v5323
  %v5429 = vadd.f32 %v4828, %v5324
  %v5430 = vadd.f32 %v4829, %v5325
  %v5431 = vadd.f32 %v4830, %v5326
  %v5432 = vadd.f32 %v4831, %v5327
  %v5433 = vadd.f32 %v4832, %v5328
  %v5434 = vadd.f32 %v4833, %v5329
  %v5435 = vadd.f32 %v4834, %v5330
  %v5436 = vadd.f32 %v4835, %v5331
  %v5437 = vadd.f32 %v4836, %v5332
  %v5438 = vadd.f32 %v4837, %v5333
  %v5439 = vadd.f32 %v4838, %v5334
  %v5440 = vadd.f32 %v4839, %v5335
  %v5441 = vadd.f32 %v4840, %v5336
  %v5442 = vadd.f32 %v4841, %v5337
  %v5443 = vadd.f32 %v4842, %v5338
  %v5444 = vadd.f32 %v4843, %v5339
  %v5445 = vadd.f32 %v4844, %v5340
  %v5446 = vadd.f32 %v4845, %v5341
  %v5447 = vadd.f32 %v4846, %v5342
  %v5448 = vadd.f32 %v4847, %v5343
  %v5449 = vadd.f32 %v4848, %v5344
  %v5450 = vadd.f32 %v4849, %v5345
  %v5451 = vadd.f32 %v4850, %v5346
  %v5452 = vadd.f32 %v4851, %v5347
  %v5453 = vadd.f32 %v4852, %v5348
  %v5454 = vadd.f32 %v4853, %v5349
  %v5455 = vadd.f32 %v4854, %v5350
  %v5456 = vadd.f32 %v4855, %v5351
  %v5457 = vadd.f32 %v4856, %v5352
  %v5458 = vadd.f32 %v4857, %v5353
  %v5459 = vadd.f32 %v4858, %v5354
  %v5460 = vadd.f32 %v4859, %v5355
  %v5461 = vadd.f32 %v4860, %v5356
  %v5462 = vadd.f32 %v4861, %v5357
  %5463 = vrot.lane.b32.xlu0 %v1147, 100
  %v5464 = vpop.permute.xlu0 %5463
  %5465 = vrot.lane.b32.xlu0 %v1154, 100
  %v5466 = vpop.permute.xlu0 %5465
  %5467 = vrot.lane.b32.xlu0 %v1161, 100
  %v5468 = vpop.permute.xlu0 %5467
  %5469 = vrot.lane.b32.xlu0 %v1168, 100
  %v5470 = vpop.permute.xlu0 %5469
  %5471 = vrot.lane.b32.xlu0 %v1175, 100
  %v5472 = vpop.permute.xlu0 %5471
  %5473 = vrot.lane.b32.xlu0 %v1182, 100
  %v5474 = vpop.permute.xlu0 %5473
  %5475 = vrot.lane.b32.xlu0 %v1189, 100
  %v5476 = vpop.permute.xlu0 %5475
  %5477 = vrot.lane.b32.xlu0 %v1196, 100
  %v5478 = vpop.permute.xlu0 %5477
  %5479 = vrot.lane.b32.xlu0 %v1203, 100
  %v5480 = vpop.permute.xlu0 %5479
  %5481 = vrot.lane.b32.xlu0 %v1210, 100
  %v5482 = vpop.permute.xlu0 %5481
  %5483 = vrot.lane.b32.xlu0 %v1217, 100
  %v5484 = vpop.permute.xlu0 %5483
  %5485 = vrot.lane.b32.xlu0 %v1224, 100
  %v5486 = vpop.permute.xlu0 %5485
  %5487 = vrot.lane.b32.xlu0 %v1231, 100
  %v5488 = vpop.permute.xlu0 %5487
  %5489 = vrot.lane.b32.xlu0 %v1238, 100
  %v5490 = vpop.permute.xlu0 %5489
  %5491 = vrot.lane.b32.xlu0 %v1245, 100
  %v5492 = vpop.permute.xlu0 %5491
  %5493 = vrot.lane.b32.xlu0 %v1148, 100
  %v5494 = vpop.permute.xlu0 %5493
  %5495 = vrot.lane.b32.xlu0 %v1155, 100
  %v5496 = vpop.permute.xlu0 %5495
  %5497 = vrot.lane.b32.xlu0 %v1162, 100
  %v5498 = vpop.permute.xlu0 %5497
  %5499 = vrot.lane.b32.xlu0 %v1169, 100
  %v5500 = vpop.permute.xlu0 %5499
  %5501 = vrot.lane.b32.xlu0 %v1176, 100
  %v5502 = vpop.permute.xlu0 %5501
  %5503 = vrot.lane.b32.xlu0 %v1183, 100
  %v5504 = vpop.permute.xlu0 %5503
  %5505 = vrot.lane.b32.xlu0 %v1190, 100
  %v5506 = vpop.permute.xlu0 %5505
  %5507 = vrot.lane.b32.xlu0 %v1197, 100
  %v5508 = vpop.permute.xlu0 %5507
  %5509 = vrot.lane.b32.xlu0 %v1204, 100
  %v5510 = vpop.permute.xlu0 %5509
  %5511 = vrot.lane.b32.xlu0 %v1211, 100
  %v5512 = vpop.permute.xlu0 %5511
  %5513 = vrot.lane.b32.xlu0 %v1218, 100
  %v5514 = vpop.permute.xlu0 %5513
  %5515 = vrot.lane.b32.xlu0 %v1225, 100
  %v5516 = vpop.permute.xlu0 %5515
  %5517 = vrot.lane.b32.xlu0 %v1232, 100
  %v5518 = vpop.permute.xlu0 %5517
  %5519 = vrot.lane.b32.xlu0 %v1239, 100
  %v5520 = vpop.permute.xlu0 %5519
  %5521 = vrot.lane.b32.xlu0 %v1246, 100
  %v5522 = vpop.permute.xlu0 %5521
  %5523 = vrot.lane.b32.xlu0 %v1149, 100
  %v5524 = vpop.permute.xlu0 %5523
  %5525 = vrot.lane.b32.xlu0 %v1156, 100
  %v5526 = vpop.permute.xlu0 %5525
  %5527 = vrot.lane.b32.xlu0 %v1163, 100
  %v5528 = vpop.permute.xlu0 %5527
  %5529 = vrot.lane.b32.xlu0 %v1170, 100
  %v5530 = vpop.permute.xlu0 %5529
  %5531 = vrot.lane.b32.xlu0 %v1177, 100
  %v5532 = vpop.permute.xlu0 %5531
  %5533 = vrot.lane.b32.xlu0 %v1184, 100
  %v5534 = vpop.permute.xlu0 %5533
  %5535 = vrot.lane.b32.xlu0 %v1191, 100
  %v5536 = vpop.permute.xlu0 %5535
  %5537 = vrot.lane.b32.xlu0 %v1198, 100
  %v5538 = vpop.permute.xlu0 %5537
  %5539 = vrot.lane.b32.xlu0 %v1205, 100
  %v5540 = vpop.permute.xlu0 %5539
  %5541 = vrot.lane.b32.xlu0 %v1212, 100
  %v5542 = vpop.permute.xlu0 %5541
  %5543 = vrot.lane.b32.xlu0 %v1219, 100
  %v5544 = vpop.permute.xlu0 %5543
  %5545 = vrot.lane.b32.xlu0 %v1226, 100
  %v5546 = vpop.permute.xlu0 %5545
  %5547 = vrot.lane.b32.xlu0 %v1233, 100
  %v5548 = vpop.permute.xlu0 %5547
  %5549 = vrot.lane.b32.xlu0 %v1240, 100
  %v5550 = vpop.permute.xlu0 %5549
  %5551 = vrot.lane.b32.xlu0 %v1247, 100
  %v5552 = vpop.permute.xlu0 %5551
  %5553 = vrot.lane.b32.xlu0 %v1150, 100
  %v5554 = vpop.permute.xlu0 %5553
  %5555 = vrot.lane.b32.xlu0 %v1157, 100
  %v5556 = vpop.permute.xlu0 %5555
  %5557 = vrot.lane.b32.xlu0 %v1164, 100
  %v5558 = vpop.permute.xlu0 %5557
  %5559 = vrot.lane.b32.xlu0 %v1171, 100
  %v5560 = vpop.permute.xlu0 %5559
  %5561 = vrot.lane.b32.xlu0 %v1178, 100
  %v5562 = vpop.permute.xlu0 %5561
  %5563 = vrot.lane.b32.xlu0 %v1185, 100
  %v5564 = vpop.permute.xlu0 %5563
  %5565 = vrot.lane.b32.xlu0 %v1192, 100
  %v5566 = vpop.permute.xlu0 %5565
  %5567 = vrot.lane.b32.xlu0 %v1199, 100
  %v5568 = vpop.permute.xlu0 %5567
  %5569 = vrot.lane.b32.xlu0 %v1206, 100
  %v5570 = vpop.permute.xlu0 %5569
  %5571 = vrot.lane.b32.xlu0 %v1213, 100
  %v5572 = vpop.permute.xlu0 %5571
  %5573 = vrot.lane.b32.xlu0 %v1220, 100
  %v5574 = vpop.permute.xlu0 %5573
  %5575 = vrot.lane.b32.xlu0 %v1227, 100
  %v5576 = vpop.permute.xlu0 %5575
  %5577 = vrot.lane.b32.xlu0 %v1234, 100
  %v5578 = vpop.permute.xlu0 %5577
  %5579 = vrot.lane.b32.xlu0 %v1241, 100
  %v5580 = vpop.permute.xlu0 %5579
  %5581 = vrot.lane.b32.xlu0 %v1248, 100
  %v5582 = vpop.permute.xlu0 %5581
  %5583 = vrot.lane.b32.xlu0 %v1151, 100
  %v5584 = vpop.permute.xlu0 %5583
  %5585 = vrot.lane.b32.xlu0 %v1158, 100
  %v5586 = vpop.permute.xlu0 %5585
  %5587 = vrot.lane.b32.xlu0 %v1165, 100
  %v5588 = vpop.permute.xlu0 %5587
  %5589 = vrot.lane.b32.xlu0 %v1172, 100
  %v5590 = vpop.permute.xlu0 %5589
  %5591 = vrot.lane.b32.xlu0 %v1179, 100
  %v5592 = vpop.permute.xlu0 %5591
  %5593 = vrot.lane.b32.xlu0 %v1186, 100
  %v5594 = vpop.permute.xlu0 %5593
  %5595 = vrot.lane.b32.xlu0 %v1193, 100
  %v5596 = vpop.permute.xlu0 %5595
  %5597 = vrot.lane.b32.xlu0 %v1200, 100
  %v5598 = vpop.permute.xlu0 %5597
  %5599 = vrot.lane.b32.xlu0 %v1207, 100
  %v5600 = vpop.permute.xlu0 %5599
  %5601 = vrot.lane.b32.xlu0 %v1214, 100
  %v5602 = vpop.permute.xlu0 %5601
  %5603 = vrot.lane.b32.xlu0 %v1221, 100
  %v5604 = vpop.permute.xlu0 %5603
  %5605 = vrot.lane.b32.xlu0 %v1228, 100
  %v5606 = vpop.permute.xlu0 %5605
  %5607 = vrot.lane.b32.xlu0 %v1235, 100
  %v5608 = vpop.permute.xlu0 %5607
  %5609 = vrot.lane.b32.xlu0 %v1242, 100
  %v5610 = vpop.permute.xlu0 %5609
  %5611 = vrot.lane.b32.xlu0 %v1249, 100
  %v5612 = vpop.permute.xlu0 %5611
  %5613 = vrot.lane.b32.xlu0 %v1152, 100
  %v5614 = vpop.permute.xlu0 %5613
  %5615 = vrot.lane.b32.xlu0 %v1159, 100
  %v5616 = vpop.permute.xlu0 %5615
  %5617 = vrot.lane.b32.xlu0 %v1166, 100
  %v5618 = vpop.permute.xlu0 %5617
  %5619 = vrot.lane.b32.xlu0 %v1173, 100
  %v5620 = vpop.permute.xlu0 %5619
  %5621 = vrot.lane.b32.xlu0 %v1180, 100
  %v5622 = vpop.permute.xlu0 %5621
  %5623 = vrot.lane.b32.xlu0 %v1187, 100
  %v5624 = vpop.permute.xlu0 %5623
  %5625 = vrot.lane.b32.xlu0 %v1194, 100
  %v5626 = vpop.permute.xlu0 %5625
  %5627 = vrot.lane.b32.xlu0 %v1201, 100
  %v5628 = vpop.permute.xlu0 %5627
  %5629 = vrot.lane.b32.xlu0 %v1208, 100
  %v5630 = vpop.permute.xlu0 %5629
  %5631 = vrot.lane.b32.xlu0 %v1215, 100
  %v5632 = vpop.permute.xlu0 %5631
  %5633 = vrot.lane.b32.xlu0 %v1222, 100
  %v5634 = vpop.permute.xlu0 %5633
  %5635 = vrot.lane.b32.xlu0 %v1229, 100
  %v5636 = vpop.permute.xlu0 %5635
  %5637 = vrot.lane.b32.xlu0 %v1236, 100
  %v5638 = vpop.permute.xlu0 %5637
  %5639 = vrot.lane.b32.xlu0 %v1243, 100
  %v5640 = vpop.permute.xlu0 %5639
  %5641 = vrot.lane.b32.xlu0 %v1250, 100
  %v5642 = vpop.permute.xlu0 %5641
  %5643 = vrot.lane.b32.xlu0 %v1153, 100
  %v5644 = vpop.permute.xlu0 %5643
  %5645 = vrot.lane.b32.xlu0 %v1160, 100
  %v5646 = vpop.permute.xlu0 %5645
  %5647 = vrot.lane.b32.xlu0 %v1167, 100
  %v5648 = vpop.permute.xlu0 %5647
  %5649 = vrot.lane.b32.xlu0 %v1174, 100
  %v5650 = vpop.permute.xlu0 %5649
  %5651 = vrot.lane.b32.xlu0 %v1181, 100
  %v5652 = vpop.permute.xlu0 %5651
  %5653 = vrot.lane.b32.xlu0 %v1188, 100
  %v5654 = vpop.permute.xlu0 %5653
  %5655 = vrot.lane.b32.xlu0 %v1195, 100
  %v5656 = vpop.permute.xlu0 %5655
  %5657 = vrot.lane.b32.xlu0 %v1202, 100
  %v5658 = vpop.permute.xlu0 %5657
  %5659 = vrot.lane.b32.xlu0 %v1209, 100
  %v5660 = vpop.permute.xlu0 %5659
  %5661 = vrot.lane.b32.xlu0 %v1216, 100
  %v5662 = vpop.permute.xlu0 %5661
  %5663 = vrot.lane.b32.xlu0 %v1223, 100
  %v5664 = vpop.permute.xlu0 %5663
  %5665 = vrot.lane.b32.xlu0 %v1230, 100
  %v5666 = vpop.permute.xlu0 %5665
  %5667 = vrot.lane.b32.xlu0 %v1237, 100
  %v5668 = vpop.permute.xlu0 %5667
  %5669 = vrot.lane.b32.xlu0 %v1244, 100
  %v5670 = vpop.permute.xlu0 %5669
  %5671 = vrot.lane.b32.xlu0 %v1251, 100
  %v5672 = vpop.permute.xlu0 %5671
  %v5673 = vsel %vm5072, %v5614, %v5644
  %v5674 = vsel %vm5072, %v5616, %v5646
  %v5675 = vsel %vm5072, %v5618, %v5648
  %v5676 = vsel %vm5072, %v5620, %v5650
  %v5677 = vsel %vm5072, %v5622, %v5652
  %v5678 = vsel %vm5072, %v5624, %v5654
  %v5679 = vsel %vm5072, %v5626, %v5656
  %v5680 = vsel %vm5072, %v5628, %v5658
  %v5681 = vsel %vm5072, %v5630, %v5660
  %v5682 = vsel %vm5072, %v5632, %v5662
  %v5683 = vsel %vm5072, %v5634, %v5664
  %v5684 = vsel %vm5072, %v5636, %v5666
  %v5685 = vsel %vm5072, %v5638, %v5668
  %v5686 = vsel %vm5072, %v5640, %v5670
  %v5687 = vsel %vm5072, %v5642, %v5672
  %v5688 = vsel %vm5072, %v5584, %v5614
  %v5689 = vsel %vm5072, %v5586, %v5616
  %v5690 = vsel %vm5072, %v5588, %v5618
  %v5691 = vsel %vm5072, %v5590, %v5620
  %v5692 = vsel %vm5072, %v5592, %v5622
  %v5693 = vsel %vm5072, %v5594, %v5624
  %v5694 = vsel %vm5072, %v5596, %v5626
  %v5695 = vsel %vm5072, %v5598, %v5628
  %v5696 = vsel %vm5072, %v5600, %v5630
  %v5697 = vsel %vm5072, %v5602, %v5632
  %v5698 = vsel %vm5072, %v5604, %v5634
  %v5699 = vsel %vm5072, %v5606, %v5636
  %v5700 = vsel %vm5072, %v5608, %v5638
  %v5701 = vsel %vm5072, %v5610, %v5640
  %v5702 = vsel %vm5072, %v5612, %v5642
  %v5703 = vsel %vm5072, %v5554, %v5584
  %v5704 = vsel %vm5072, %v5556, %v5586
  %v5705 = vsel %vm5072, %v5558, %v5588
  %v5706 = vsel %vm5072, %v5560, %v5590
  %v5707 = vsel %vm5072, %v5562, %v5592
  %v5708 = vsel %vm5072, %v5564, %v5594
  %v5709 = vsel %vm5072, %v5566, %v5596
  %v5710 = vsel %vm5072, %v5568, %v5598
  %v5711 = vsel %vm5072, %v5570, %v5600
  %v5712 = vsel %vm5072, %v5572, %v5602
  %v5713 = vsel %vm5072, %v5574, %v5604
  %v5714 = vsel %vm5072, %v5576, %v5606
  %v5715 = vsel %vm5072, %v5578, %v5608
  %v5716 = vsel %vm5072, %v5580, %v5610
  %v5717 = vsel %vm5072, %v5582, %v5612
  %v5718 = vsel %vm5072, %v5524, %v5554
  %v5719 = vsel %vm5072, %v5526, %v5556
  %v5720 = vsel %vm5072, %v5528, %v5558
  %v5721 = vsel %vm5072, %v5530, %v5560
  %v5722 = vsel %vm5072, %v5532, %v5562
  %v5723 = vsel %vm5072, %v5534, %v5564
  %v5724 = vsel %vm5072, %v5536, %v5566
  %v5725 = vsel %vm5072, %v5538, %v5568
  %v5726 = vsel %vm5072, %v5540, %v5570
  %v5727 = vsel %vm5072, %v5542, %v5572
  %v5728 = vsel %vm5072, %v5544, %v5574
  %v5729 = vsel %vm5072, %v5546, %v5576
  %v5730 = vsel %vm5072, %v5548, %v5578
  %v5731 = vsel %vm5072, %v5550, %v5580
  %v5732 = vsel %vm5072, %v5552, %v5582
  %v5733 = vsel %vm5072, %v5494, %v5524
  %v5734 = vsel %vm5072, %v5496, %v5526
  %v5735 = vsel %vm5072, %v5498, %v5528
  %v5736 = vsel %vm5072, %v5500, %v5530
  %v5737 = vsel %vm5072, %v5502, %v5532
  %v5738 = vsel %vm5072, %v5504, %v5534
  %v5739 = vsel %vm5072, %v5506, %v5536
  %v5740 = vsel %vm5072, %v5508, %v5538
  %v5741 = vsel %vm5072, %v5510, %v5540
  %v5742 = vsel %vm5072, %v5512, %v5542
  %v5743 = vsel %vm5072, %v5514, %v5544
  %v5744 = vsel %vm5072, %v5516, %v5546
  %v5745 = vsel %vm5072, %v5518, %v5548
  %v5746 = vsel %vm5072, %v5520, %v5550
  %v5747 = vsel %vm5072, %v5522, %v5552
  %v5748 = vsel %vm5072, %v5464, %v5494
  %v5749 = vsel %vm5072, %v5466, %v5496
  %v5750 = vsel %vm5072, %v5468, %v5498
  %v5751 = vsel %vm5072, %v5470, %v5500
  %v5752 = vsel %vm5072, %v5472, %v5502
  %v5753 = vsel %vm5072, %v5474, %v5504
  %v5754 = vsel %vm5072, %v5476, %v5506
  %v5755 = vsel %vm5072, %v5478, %v5508
  %v5756 = vsel %vm5072, %v5480, %v5510
  %v5757 = vsel %vm5072, %v5482, %v5512
  %v5758 = vsel %vm5072, %v5484, %v5514
  %v5759 = vsel %vm5072, %v5486, %v5516
  %v5760 = vsel %vm5072, %v5488, %v5518
  %v5761 = vsel %vm5072, %v5490, %v5520
  %v5762 = vsel %vm5072, %v5492, %v5522
  %v5763 = vsel %vm5072, %v5644, %v5464
  %v5764 = vsel %vm5072, %v5646, %v5466
  %v5765 = vsel %vm5072, %v5648, %v5468
  %v5766 = vsel %vm5072, %v5650, %v5470
  %v5767 = vsel %vm5072, %v5652, %v5472
  %v5768 = vsel %vm5072, %v5654, %v5474
  %v5769 = vsel %vm5072, %v5656, %v5476
  %v5770 = vsel %vm5072, %v5658, %v5478
  %v5771 = vsel %vm5072, %v5660, %v5480
  %v5772 = vsel %vm5072, %v5662, %v5482
  %v5773 = vsel %vm5072, %v5664, %v5484
  %v5774 = vsel %vm5072, %v5666, %v5486
  %v5775 = vsel %vm5072, %v5668, %v5488
  %v5776 = vsel %vm5072, %v5670, %v5490
  %v5777 = vsel %vm5072, %v5672, %v5492
  %5779 = vset.pattern.permute.xlu0 0
  %5780 = vperm.xlu0 %5779, %v1364
  %v5781 = vpop.permute.xlu0 %5780
  %5784 = vset.pattern.permute.xlu0 0
  %5785 = vperm.xlu0 %5784, %v1365
  %v5786 = vpop.permute.xlu0 %5785
  %5789 = vset.pattern.permute.xlu0 0
  %5790 = vperm.xlu0 %5789, %v1366
  %v5791 = vpop.permute.xlu0 %5790
  %5794 = vset.pattern.permute.xlu0 0
  %5795 = vperm.xlu0 %5794, %v1367
  %v5796 = vpop.permute.xlu0 %5795
  %5799 = vset.pattern.permute.xlu0 0
  %5800 = vperm.xlu0 %5799, %v1368
  %v5801 = vpop.permute.xlu0 %5800
  %5804 = vset.pattern.permute.xlu0 0
  %5805 = vperm.xlu0 %5804, %v1369
  %v5806 = vpop.permute.xlu0 %5805
  %5809 = vset.pattern.permute.xlu0 0
  %5810 = vperm.xlu0 %5809, %v1370
  %v5811 = vpop.permute.xlu0 %5810
  %5814 = vset.pattern.permute.xlu0 0
  %5815 = vperm.xlu0 %5814, %v1371
  %v5816 = vpop.permute.xlu0 %5815
  %5819 = vset.pattern.permute.xlu0 0
  %5820 = vperm.xlu0 %5819, %v1372
  %v5821 = vpop.permute.xlu0 %5820
  %5824 = vset.pattern.permute.xlu0 0
  %5825 = vperm.xlu0 %5824, %v1373
  %v5826 = vpop.permute.xlu0 %5825
  %5829 = vset.pattern.permute.xlu0 0
  %5830 = vperm.xlu0 %5829, %v1374
  %v5831 = vpop.permute.xlu0 %5830
  %5834 = vset.pattern.permute.xlu0 0
  %5835 = vperm.xlu0 %5834, %v1375
  %v5836 = vpop.permute.xlu0 %5835
  %5839 = vset.pattern.permute.xlu0 0
  %5840 = vperm.xlu0 %5839, %v1376
  %v5841 = vpop.permute.xlu0 %5840
  %5844 = vset.pattern.permute.xlu0 0
  %5845 = vperm.xlu0 %5844, %v1377
  %v5846 = vpop.permute.xlu0 %5845
  %5849 = vset.pattern.permute.xlu0 0
  %5850 = vperm.xlu0 %5849, %v1378
  %v5851 = vpop.permute.xlu0 %5850
  %v5853 = vmul.f32 %v5748, %v5781
  %v5854 = vmul.f32 %v5733, %v5781
  %v5855 = vmul.f32 %v5718, %v5781
  %v5856 = vmul.f32 %v5703, %v5781
  %v5857 = vmul.f32 %v5688, %v5781
  %v5858 = vmul.f32 %v5673, %v5781
  %v5859 = vmul.f32 %v5763, %v5781
  %v5860 = vmul.f32 %v5749, %v5786
  %v5861 = vmul.f32 %v5734, %v5786
  %v5862 = vmul.f32 %v5719, %v5786
  %v5863 = vmul.f32 %v5704, %v5786
  %v5864 = vmul.f32 %v5689, %v5786
  %v5865 = vmul.f32 %v5674, %v5786
  %v5866 = vmul.f32 %v5764, %v5786
  %v5867 = vmul.f32 %v5750, %v5791
  %v5868 = vmul.f32 %v5735, %v5791
  %v5869 = vmul.f32 %v5720, %v5791
  %v5870 = vmul.f32 %v5705, %v5791
  %v5871 = vmul.f32 %v5690, %v5791
  %v5872 = vmul.f32 %v5675, %v5791
  %v5873 = vmul.f32 %v5765, %v5791
  %v5874 = vmul.f32 %v5751, %v5796
  %v5875 = vmul.f32 %v5736, %v5796
  %v5876 = vmul.f32 %v5721, %v5796
  %v5877 = vmul.f32 %v5706, %v5796
  %v5878 = vmul.f32 %v5691, %v5796
  %v5879 = vmul.f32 %v5676, %v5796
  %v5880 = vmul.f32 %v5766, %v5796
  %v5881 = vmul.f32 %v5752, %v5801
  %v5882 = vmul.f32 %v5737, %v5801
  %v5883 = vmul.f32 %v5722, %v5801
  %v5884 = vmul.f32 %v5707, %v5801
  %v5885 = vmul.f32 %v5692, %v5801
  %v5886 = vmul.f32 %v5677, %v5801
  %v5887 = vmul.f32 %v5767, %v5801
  %v5888 = vmul.f32 %v5753, %v5806
  %v5889 = vmul.f32 %v5738, %v5806
  %v5890 = vmul.f32 %v5723, %v5806
  %v5891 = vmul.f32 %v5708, %v5806
  %v5892 = vmul.f32 %v5693, %v5806
  %v5893 = vmul.f32 %v5678, %v5806
  %v5894 = vmul.f32 %v5768, %v5806
  %v5895 = vmul.f32 %v5754, %v5811
  %v5896 = vmul.f32 %v5739, %v5811
  %v5897 = vmul.f32 %v5724, %v5811
  %v5898 = vmul.f32 %v5709, %v5811
  %v5899 = vmul.f32 %v5694, %v5811
  %v5900 = vmul.f32 %v5679, %v5811
  %v5901 = vmul.f32 %v5769, %v5811
  %v5902 = vmul.f32 %v5755, %v5816
  %v5903 = vmul.f32 %v5740, %v5816
  %v5904 = vmul.f32 %v5725, %v5816
  %v5905 = vmul.f32 %v5710, %v5816
  %v5906 = vmul.f32 %v5695, %v5816
  %v5907 = vmul.f32 %v5680, %v5816
  %v5908 = vmul.f32 %v5770, %v5816
  %v5909 = vmul.f32 %v5756, %v5821
  %v5910 = vmul.f32 %v5741, %v5821
  %v5911 = vmul.f32 %v5726, %v5821
  %v5912 = vmul.f32 %v5711, %v5821
  %v5913 = vmul.f32 %v5696, %v5821
  %v5914 = vmul.f32 %v5681, %v5821
  %v5915 = vmul.f32 %v5771, %v5821
  %v5916 = vmul.f32 %v5757, %v5826
  %v5917 = vmul.f32 %v5742, %v5826
  %v5918 = vmul.f32 %v5727, %v5826
  %v5919 = vmul.f32 %v5712, %v5826
  %v5920 = vmul.f32 %v5697, %v5826
  %v5921 = vmul.f32 %v5682, %v5826
  %v5922 = vmul.f32 %v5772, %v5826
  %v5923 = vmul.f32 %v5758, %v5831
  %v5924 = vmul.f32 %v5743, %v5831
  %v5925 = vmul.f32 %v5728, %v5831
  %v5926 = vmul.f32 %v5713, %v5831
  %v5927 = vmul.f32 %v5698, %v5831
  %v5928 = vmul.f32 %v5683, %v5831
  %v5929 = vmul.f32 %v5773, %v5831
  %v5930 = vmul.f32 %v5759, %v5836
  %v5931 = vmul.f32 %v5744, %v5836
  %v5932 = vmul.f32 %v5729, %v5836
  %v5933 = vmul.f32 %v5714, %v5836
  %v5934 = vmul.f32 %v5699, %v5836
  %v5935 = vmul.f32 %v5684, %v5836
  %v5936 = vmul.f32 %v5774, %v5836
  %v5937 = vmul.f32 %v5760, %v5841
  %v5938 = vmul.f32 %v5745, %v5841
  %v5939 = vmul.f32 %v5730, %v5841
  %v5940 = vmul.f32 %v5715, %v5841
  %v5941 = vmul.f32 %v5700, %v5841
  %v5942 = vmul.f32 %v5685, %v5841
  %v5943 = vmul.f32 %v5775, %v5841
  %v5944 = vmul.f32 %v5761, %v5846
  %v5945 = vmul.f32 %v5746, %v5846
  %v5946 = vmul.f32 %v5731, %v5846
  %v5947 = vmul.f32 %v5716, %v5846
  %v5948 = vmul.f32 %v5701, %v5846
  %v5949 = vmul.f32 %v5686, %v5846
  %v5950 = vmul.f32 %v5776, %v5846
  %v5951 = vmul.f32 %v5762, %v5851
  %v5952 = vmul.f32 %v5747, %v5851
  %v5953 = vmul.f32 %v5732, %v5851
  %v5954 = vmul.f32 %v5717, %v5851
  %v5955 = vmul.f32 %v5702, %v5851
  %v5956 = vmul.f32 %v5687, %v5851
  %v5957 = vmul.f32 %v5777, %v5851
  %v5958 = vadd.f32 %v5358, %v5853
  %v5959 = vadd.f32 %v5359, %v5854
  %v5960 = vadd.f32 %v5360, %v5855
  %v5961 = vadd.f32 %v5361, %v5856
  %v5962 = vadd.f32 %v5362, %v5857
  %v5963 = vadd.f32 %v5363, %v5858
  %v5964 = vadd.f32 %v5364, %v5859
  %v5965 = vadd.f32 %v5365, %v5860
  %v5966 = vadd.f32 %v5366, %v5861
  %v5967 = vadd.f32 %v5367, %v5862
  %v5968 = vadd.f32 %v5368, %v5863
  %v5969 = vadd.f32 %v5369, %v5864
  %v5970 = vadd.f32 %v5370, %v5865
  %v5971 = vadd.f32 %v5371, %v5866
  %v5972 = vadd.f32 %v5372, %v5867
  %v5973 = vadd.f32 %v5373, %v5868
  %v5974 = vadd.f32 %v5374, %v5869
  %v5975 = vadd.f32 %v5375, %v5870
  %v5976 = vadd.f32 %v5376, %v5871
  %v5977 = vadd.f32 %v5377, %v5872
  %v5978 = vadd.f32 %v5378, %v5873
  %v5979 = vadd.f32 %v5379, %v5874
  %v5980 = vadd.f32 %v5380, %v5875
  %v5981 = vadd.f32 %v5381, %v5876
  %v5982 = vadd.f32 %v5382, %v5877
  %v5983 = vadd.f32 %v5383, %v5878
  %v5984 = vadd.f32 %v5384, %v5879
  %v5985 = vadd.f32 %v5385, %v5880
  %v5986 = vadd.f32 %v5386, %v5881
  %v5987 = vadd.f32 %v5387, %v5882
  %v5988 = vadd.f32 %v5388, %v5883
  %v5989 = vadd.f32 %v5389, %v5884
  %v5990 = vadd.f32 %v5390, %v5885
  %v5991 = vadd.f32 %v5391, %v5886
  %v5992 = vadd.f32 %v5392, %v5887
  %v5993 = vadd.f32 %v5393, %v5888
  %v5994 = vadd.f32 %v5394, %v5889
  %v5995 = vadd.f32 %v5395, %v5890
  %v5996 = vadd.f32 %v5396, %v5891
  %v5997 = vadd.f32 %v5397, %v5892
  %v5998 = vadd.f32 %v5398, %v5893
  %v5999 = vadd.f32 %v5399, %v5894
  %v6000 = vadd.f32 %v5400, %v5895
  %v6001 = vadd.f32 %v5401, %v5896
  %v6002 = vadd.f32 %v5402, %v5897
  %v6003 = vadd.f32 %v5403, %v5898
  %v6004 = vadd.f32 %v5404, %v5899
  %v6005 = vadd.f32 %v5405, %v5900
  %v6006 = vadd.f32 %v5406, %v5901
  %v6007 = vadd.f32 %v5407, %v5902
  %v6008 = vadd.f32 %v5408, %v5903
  %v6009 = vadd.f32 %v5409, %v5904
  %v6010 = vadd.f32 %v5410, %v5905
  %v6011 = vadd.f32 %v5411, %v5906
  %v6012 = vadd.f32 %v5412, %v5907
  %v6013 = vadd.f32 %v5413, %v5908
  %v6014 = vadd.f32 %v5414, %v5909
  %v6015 = vadd.f32 %v5415, %v5910
  %v6016 = vadd.f32 %v5416, %v5911
  %v6017 = vadd.f32 %v5417, %v5912
  %v6018 = vadd.f32 %v5418, %v5913
  %v6019 = vadd.f32 %v5419, %v5914
  %v6020 = vadd.f32 %v5420, %v5915
  %v6021 = vadd.f32 %v5421, %v5916
  %v6022 = vadd.f32 %v5422, %v5917
  %v6023 = vadd.f32 %v5423, %v5918
  %v6024 = vadd.f32 %v5424, %v5919
  %v6025 = vadd.f32 %v5425, %v5920
  %v6026 = vadd.f32 %v5426, %v5921
  %v6027 = vadd.f32 %v5427, %v5922
  %v6028 = vadd.f32 %v5428, %v5923
  %v6029 = vadd.f32 %v5429, %v5924
  %v6030 = vadd.f32 %v5430, %v5925
  %v6031 = vadd.f32 %v5431, %v5926
  %v6032 = vadd.f32 %v5432, %v5927
  %v6033 = vadd.f32 %v5433, %v5928
  %v6034 = vadd.f32 %v5434, %v5929
  %v6035 = vadd.f32 %v5435, %v5930
  %v6036 = vadd.f32 %v5436, %v5931
  %v6037 = vadd.f32 %v5437, %v5932
  %v6038 = vadd.f32 %v5438, %v5933
  %v6039 = vadd.f32 %v5439, %v5934
  %v6040 = vadd.f32 %v5440, %v5935
  %v6041 = vadd.f32 %v5441, %v5936
  %v6042 = vadd.f32 %v5442, %v5937
  %v6043 = vadd.f32 %v5443, %v5938
  %v6044 = vadd.f32 %v5444, %v5939
  %v6045 = vadd.f32 %v5445, %v5940
  %v6046 = vadd.f32 %v5446, %v5941
  %v6047 = vadd.f32 %v5447, %v5942
  %v6048 = vadd.f32 %v5448, %v5943
  %v6049 = vadd.f32 %v5449, %v5944
  %v6050 = vadd.f32 %v5450, %v5945
  %v6051 = vadd.f32 %v5451, %v5946
  %v6052 = vadd.f32 %v5452, %v5947
  %v6053 = vadd.f32 %v5453, %v5948
  %v6054 = vadd.f32 %v5454, %v5949
  %v6055 = vadd.f32 %v5455, %v5950
  %v6056 = vadd.f32 %v5456, %v5951
  %v6057 = vadd.f32 %v5457, %v5952
  %v6058 = vadd.f32 %v5458, %v5953
  %v6059 = vadd.f32 %v5459, %v5954
  %v6060 = vadd.f32 %v5460, %v5955
  %v6061 = vadd.f32 %v5461, %v5956
  %v6062 = vadd.f32 %v5462, %v5957
  %6063 = vrot.lane.b32.xlu0 %v2206, 100
  %v6064 = vpop.permute.xlu0 %6063
  %6065 = vrot.lane.b32.xlu0 %v2213, 100
  %v6066 = vpop.permute.xlu0 %6065
  %6067 = vrot.lane.b32.xlu0 %v2220, 100
  %v6068 = vpop.permute.xlu0 %6067
  %6069 = vrot.lane.b32.xlu0 %v2227, 100
  %v6070 = vpop.permute.xlu0 %6069
  %6071 = vrot.lane.b32.xlu0 %v2234, 100
  %v6072 = vpop.permute.xlu0 %6071
  %6073 = vrot.lane.b32.xlu0 %v2241, 100
  %v6074 = vpop.permute.xlu0 %6073
  %6075 = vrot.lane.b32.xlu0 %v2248, 100
  %v6076 = vpop.permute.xlu0 %6075
  %6077 = vrot.lane.b32.xlu0 %v2255, 100
  %v6078 = vpop.permute.xlu0 %6077
  %6079 = vrot.lane.b32.xlu0 %v2262, 100
  %v6080 = vpop.permute.xlu0 %6079
  %6081 = vrot.lane.b32.xlu0 %v2269, 100
  %v6082 = vpop.permute.xlu0 %6081
  %6083 = vrot.lane.b32.xlu0 %v2276, 100
  %v6084 = vpop.permute.xlu0 %6083
  %6085 = vrot.lane.b32.xlu0 %v2283, 100
  %v6086 = vpop.permute.xlu0 %6085
  %6087 = vrot.lane.b32.xlu0 %v2290, 100
  %v6088 = vpop.permute.xlu0 %6087
  %6089 = vrot.lane.b32.xlu0 %v2297, 100
  %v6090 = vpop.permute.xlu0 %6089
  %6091 = vrot.lane.b32.xlu0 %v2304, 100
  %v6092 = vpop.permute.xlu0 %6091
  %6093 = vrot.lane.b32.xlu0 %v2207, 100
  %v6094 = vpop.permute.xlu0 %6093
  %6095 = vrot.lane.b32.xlu0 %v2214, 100
  %v6096 = vpop.permute.xlu0 %6095
  %6097 = vrot.lane.b32.xlu0 %v2221, 100
  %v6098 = vpop.permute.xlu0 %6097
  %6099 = vrot.lane.b32.xlu0 %v2228, 100
  %v6100 = vpop.permute.xlu0 %6099
  %6101 = vrot.lane.b32.xlu0 %v2235, 100
  %v6102 = vpop.permute.xlu0 %6101
  %6103 = vrot.lane.b32.xlu0 %v2242, 100
  %v6104 = vpop.permute.xlu0 %6103
  %6105 = vrot.lane.b32.xlu0 %v2249, 100
  %v6106 = vpop.permute.xlu0 %6105
  %6107 = vrot.lane.b32.xlu0 %v2256, 100
  %v6108 = vpop.permute.xlu0 %6107
  %6109 = vrot.lane.b32.xlu0 %v2263, 100
  %v6110 = vpop.permute.xlu0 %6109
  %6111 = vrot.lane.b32.xlu0 %v2270, 100
  %v6112 = vpop.permute.xlu0 %6111
  %6113 = vrot.lane.b32.xlu0 %v2277, 100
  %v6114 = vpop.permute.xlu0 %6113
  %6115 = vrot.lane.b32.xlu0 %v2284, 100
  %v6116 = vpop.permute.xlu0 %6115
  %6117 = vrot.lane.b32.xlu0 %v2291, 100
  %v6118 = vpop.permute.xlu0 %6117
  %6119 = vrot.lane.b32.xlu0 %v2298, 100
  %v6120 = vpop.permute.xlu0 %6119
  %6121 = vrot.lane.b32.xlu0 %v2305, 100
  %v6122 = vpop.permute.xlu0 %6121
  %6123 = vrot.lane.b32.xlu0 %v2208, 100
  %v6124 = vpop.permute.xlu0 %6123
  %6125 = vrot.lane.b32.xlu0 %v2215, 100
  %v6126 = vpop.permute.xlu0 %6125
  %6127 = vrot.lane.b32.xlu0 %v2222, 100
  %v6128 = vpop.permute.xlu0 %6127
  %6129 = vrot.lane.b32.xlu0 %v2229, 100
  %v6130 = vpop.permute.xlu0 %6129
  %6131 = vrot.lane.b32.xlu0 %v2236, 100
  %v6132 = vpop.permute.xlu0 %6131
  %6133 = vrot.lane.b32.xlu0 %v2243, 100
  %v6134 = vpop.permute.xlu0 %6133
  %6135 = vrot.lane.b32.xlu0 %v2250, 100
  %v6136 = vpop.permute.xlu0 %6135
  %6137 = vrot.lane.b32.xlu0 %v2257, 100
  %v6138 = vpop.permute.xlu0 %6137
  %6139 = vrot.lane.b32.xlu0 %v2264, 100
  %v6140 = vpop.permute.xlu0 %6139
  %6141 = vrot.lane.b32.xlu0 %v2271, 100
  %v6142 = vpop.permute.xlu0 %6141
  %6143 = vrot.lane.b32.xlu0 %v2278, 100
  %v6144 = vpop.permute.xlu0 %6143
  %6145 = vrot.lane.b32.xlu0 %v2285, 100
  %v6146 = vpop.permute.xlu0 %6145
  %6147 = vrot.lane.b32.xlu0 %v2292, 100
  %v6148 = vpop.permute.xlu0 %6147
  %6149 = vrot.lane.b32.xlu0 %v2299, 100
  %v6150 = vpop.permute.xlu0 %6149
  %6151 = vrot.lane.b32.xlu0 %v2306, 100
  %v6152 = vpop.permute.xlu0 %6151
  %6153 = vrot.lane.b32.xlu0 %v2209, 100
  %v6154 = vpop.permute.xlu0 %6153
  %6155 = vrot.lane.b32.xlu0 %v2216, 100
  %v6156 = vpop.permute.xlu0 %6155
  %6157 = vrot.lane.b32.xlu0 %v2223, 100
  %v6158 = vpop.permute.xlu0 %6157
  %6159 = vrot.lane.b32.xlu0 %v2230, 100
  %v6160 = vpop.permute.xlu0 %6159
  %6161 = vrot.lane.b32.xlu0 %v2237, 100
  %v6162 = vpop.permute.xlu0 %6161
  %6163 = vrot.lane.b32.xlu0 %v2244, 100
  %v6164 = vpop.permute.xlu0 %6163
  %6165 = vrot.lane.b32.xlu0 %v2251, 100
  %v6166 = vpop.permute.xlu0 %6165
  %6167 = vrot.lane.b32.xlu0 %v2258, 100
  %v6168 = vpop.permute.xlu0 %6167
  %6169 = vrot.lane.b32.xlu0 %v2265, 100
  %v6170 = vpop.permute.xlu0 %6169
  %6171 = vrot.lane.b32.xlu0 %v2272, 100
  %v6172 = vpop.permute.xlu0 %6171
  %6173 = vrot.lane.b32.xlu0 %v2279, 100
  %v6174 = vpop.permute.xlu0 %6173
  %6175 = vrot.lane.b32.xlu0 %v2286, 100
  %v6176 = vpop.permute.xlu0 %6175
  %6177 = vrot.lane.b32.xlu0 %v2293, 100
  %v6178 = vpop.permute.xlu0 %6177
  %6179 = vrot.lane.b32.xlu0 %v2300, 100
  %v6180 = vpop.permute.xlu0 %6179
  %6181 = vrot.lane.b32.xlu0 %v2307, 100
  %v6182 = vpop.permute.xlu0 %6181
  %6183 = vrot.lane.b32.xlu0 %v2210, 100
  %v6184 = vpop.permute.xlu0 %6183
  %6185 = vrot.lane.b32.xlu0 %v2217, 100
  %v6186 = vpop.permute.xlu0 %6185
  %6187 = vrot.lane.b32.xlu0 %v2224, 100
  %v6188 = vpop.permute.xlu0 %6187
  %6189 = vrot.lane.b32.xlu0 %v2231, 100
  %v6190 = vpop.permute.xlu0 %6189
  %6191 = vrot.lane.b32.xlu0 %v2238, 100
  %v6192 = vpop.permute.xlu0 %6191
  %6193 = vrot.lane.b32.xlu0 %v2245, 100
  %v6194 = vpop.permute.xlu0 %6193
  %6195 = vrot.lane.b32.xlu0 %v2252, 100
  %v6196 = vpop.permute.xlu0 %6195
  %6197 = vrot.lane.b32.xlu0 %v2259, 100
  %v6198 = vpop.permute.xlu0 %6197
  %6199 = vrot.lane.b32.xlu0 %v2266, 100
  %v6200 = vpop.permute.xlu0 %6199
  %6201 = vrot.lane.b32.xlu0 %v2273, 100
  %v6202 = vpop.permute.xlu0 %6201
  %6203 = vrot.lane.b32.xlu0 %v2280, 100
  %v6204 = vpop.permute.xlu0 %6203
  %6205 = vrot.lane.b32.xlu0 %v2287, 100
  %v6206 = vpop.permute.xlu0 %6205
  %6207 = vrot.lane.b32.xlu0 %v2294, 100
  %v6208 = vpop.permute.xlu0 %6207
  %6209 = vrot.lane.b32.xlu0 %v2301, 100
  %v6210 = vpop.permute.xlu0 %6209
  %6211 = vrot.lane.b32.xlu0 %v2308, 100
  %v6212 = vpop.permute.xlu0 %6211
  %6213 = vrot.lane.b32.xlu0 %v2211, 100
  %v6214 = vpop.permute.xlu0 %6213
  %6215 = vrot.lane.b32.xlu0 %v2218, 100
  %v6216 = vpop.permute.xlu0 %6215
  %6217 = vrot.lane.b32.xlu0 %v2225, 100
  %v6218 = vpop.permute.xlu0 %6217
  %6219 = vrot.lane.b32.xlu0 %v2232, 100
  %v6220 = vpop.permute.xlu0 %6219
  %6221 = vrot.lane.b32.xlu0 %v2239, 100
  %v6222 = vpop.permute.xlu0 %6221
  %6223 = vrot.lane.b32.xlu0 %v2246, 100
  %v6224 = vpop.permute.xlu0 %6223
  %6225 = vrot.lane.b32.xlu0 %v2253, 100
  %v6226 = vpop.permute.xlu0 %6225
  %6227 = vrot.lane.b32.xlu0 %v2260, 100
  %v6228 = vpop.permute.xlu0 %6227
  %6229 = vrot.lane.b32.xlu0 %v2267, 100
  %v6230 = vpop.permute.xlu0 %6229
  %6231 = vrot.lane.b32.xlu0 %v2274, 100
  %v6232 = vpop.permute.xlu0 %6231
  %6233 = vrot.lane.b32.xlu0 %v2281, 100
  %v6234 = vpop.permute.xlu0 %6233
  %6235 = vrot.lane.b32.xlu0 %v2288, 100
  %v6236 = vpop.permute.xlu0 %6235
  %6237 = vrot.lane.b32.xlu0 %v2295, 100
  %v6238 = vpop.permute.xlu0 %6237
  %6239 = vrot.lane.b32.xlu0 %v2302, 100
  %v6240 = vpop.permute.xlu0 %6239
  %6241 = vrot.lane.b32.xlu0 %v2309, 100
  %v6242 = vpop.permute.xlu0 %6241
  %6243 = vrot.lane.b32.xlu0 %v2212, 100
  %v6244 = vpop.permute.xlu0 %6243
  %6245 = vrot.lane.b32.xlu0 %v2219, 100
  %v6246 = vpop.permute.xlu0 %6245
  %6247 = vrot.lane.b32.xlu0 %v2226, 100
  %v6248 = vpop.permute.xlu0 %6247
  %6249 = vrot.lane.b32.xlu0 %v2233, 100
  %v6250 = vpop.permute.xlu0 %6249
  %6251 = vrot.lane.b32.xlu0 %v2240, 100
  %v6252 = vpop.permute.xlu0 %6251
  %6253 = vrot.lane.b32.xlu0 %v2247, 100
  %v6254 = vpop.permute.xlu0 %6253
  %6255 = vrot.lane.b32.xlu0 %v2254, 100
  %v6256 = vpop.permute.xlu0 %6255
  %6257 = vrot.lane.b32.xlu0 %v2261, 100
  %v6258 = vpop.permute.xlu0 %6257
  %6259 = vrot.lane.b32.xlu0 %v2268, 100
  %v6260 = vpop.permute.xlu0 %6259
  %6261 = vrot.lane.b32.xlu0 %v2275, 100
  %v6262 = vpop.permute.xlu0 %6261
  %6263 = vrot.lane.b32.xlu0 %v2282, 100
  %v6264 = vpop.permute.xlu0 %6263
  %6265 = vrot.lane.b32.xlu0 %v2289, 100
  %v6266 = vpop.permute.xlu0 %6265
  %6267 = vrot.lane.b32.xlu0 %v2296, 100
  %v6268 = vpop.permute.xlu0 %6267
  %6269 = vrot.lane.b32.xlu0 %v2303, 100
  %v6270 = vpop.permute.xlu0 %6269
  %6271 = vrot.lane.b32.xlu0 %v2310, 100
  %v6272 = vpop.permute.xlu0 %6271
  %v6273 = vsel %vm5072, %v6214, %v6244
  %v6274 = vsel %vm5072, %v6216, %v6246
  %v6275 = vsel %vm5072, %v6218, %v6248
  %v6276 = vsel %vm5072, %v6220, %v6250
  %v6277 = vsel %vm5072, %v6222, %v6252
  %v6278 = vsel %vm5072, %v6224, %v6254
  %v6279 = vsel %vm5072, %v6226, %v6256
  %v6280 = vsel %vm5072, %v6228, %v6258
  %v6281 = vsel %vm5072, %v6230, %v6260
  %v6282 = vsel %vm5072, %v6232, %v6262
  %v6283 = vsel %vm5072, %v6234, %v6264
  %v6284 = vsel %vm5072, %v6236, %v6266
  %v6285 = vsel %vm5072, %v6238, %v6268
  %v6286 = vsel %vm5072, %v6240, %v6270
  %v6287 = vsel %vm5072, %v6242, %v6272
  %v6288 = vsel %vm5072, %v6184, %v6214
  %v6289 = vsel %vm5072, %v6186, %v6216
  %v6290 = vsel %vm5072, %v6188, %v6218
  %v6291 = vsel %vm5072, %v6190, %v6220
  %v6292 = vsel %vm5072, %v6192, %v6222
  %v6293 = vsel %vm5072, %v6194, %v6224
  %v6294 = vsel %vm5072, %v6196, %v6226
  %v6295 = vsel %vm5072, %v6198, %v6228
  %v6296 = vsel %vm5072, %v6200, %v6230
  %v6297 = vsel %vm5072, %v6202, %v6232
  %v6298 = vsel %vm5072, %v6204, %v6234
  %v6299 = vsel %vm5072, %v6206, %v6236
  %v6300 = vsel %vm5072, %v6208, %v6238
  %v6301 = vsel %vm5072, %v6210, %v6240
  %v6302 = vsel %vm5072, %v6212, %v6242
  %v6303 = vsel %vm5072, %v6154, %v6184
  %v6304 = vsel %vm5072, %v6156, %v6186
  %v6305 = vsel %vm5072, %v6158, %v6188
  %v6306 = vsel %vm5072, %v6160, %v6190
  %v6307 = vsel %vm5072, %v6162, %v6192
  %v6308 = vsel %vm5072, %v6164, %v6194
  %v6309 = vsel %vm5072, %v6166, %v6196
  %v6310 = vsel %vm5072, %v6168, %v6198
  %v6311 = vsel %vm5072, %v6170, %v6200
  %v6312 = vsel %vm5072, %v6172, %v6202
  %v6313 = vsel %vm5072, %v6174, %v6204
  %v6314 = vsel %vm5072, %v6176, %v6206
  %v6315 = vsel %vm5072, %v6178, %v6208
  %v6316 = vsel %vm5072, %v6180, %v6210
  %v6317 = vsel %vm5072, %v6182, %v6212
  %v6318 = vsel %vm5072, %v6124, %v6154
  %v6319 = vsel %vm5072, %v6126, %v6156
  %v6320 = vsel %vm5072, %v6128, %v6158
  %v6321 = vsel %vm5072, %v6130, %v6160
  %v6322 = vsel %vm5072, %v6132, %v6162
  %v6323 = vsel %vm5072, %v6134, %v6164
  %v6324 = vsel %vm5072, %v6136, %v6166
  %v6325 = vsel %vm5072, %v6138, %v6168
  %v6326 = vsel %vm5072, %v6140, %v6170
  %v6327 = vsel %vm5072, %v6142, %v6172
  %v6328 = vsel %vm5072, %v6144, %v6174
  %v6329 = vsel %vm5072, %v6146, %v6176
  %v6330 = vsel %vm5072, %v6148, %v6178
  %v6331 = vsel %vm5072, %v6150, %v6180
  %v6332 = vsel %vm5072, %v6152, %v6182
  %v6333 = vsel %vm5072, %v6094, %v6124
  %v6334 = vsel %vm5072, %v6096, %v6126
  %v6335 = vsel %vm5072, %v6098, %v6128
  %v6336 = vsel %vm5072, %v6100, %v6130
  %v6337 = vsel %vm5072, %v6102, %v6132
  %v6338 = vsel %vm5072, %v6104, %v6134
  %v6339 = vsel %vm5072, %v6106, %v6136
  %v6340 = vsel %vm5072, %v6108, %v6138
  %v6341 = vsel %vm5072, %v6110, %v6140
  %v6342 = vsel %vm5072, %v6112, %v6142
  %v6343 = vsel %vm5072, %v6114, %v6144
  %v6344 = vsel %vm5072, %v6116, %v6146
  %v6345 = vsel %vm5072, %v6118, %v6148
  %v6346 = vsel %vm5072, %v6120, %v6150
  %v6347 = vsel %vm5072, %v6122, %v6152
  %v6348 = vsel %vm5072, %v6064, %v6094
  %v6349 = vsel %vm5072, %v6066, %v6096
  %v6350 = vsel %vm5072, %v6068, %v6098
  %v6351 = vsel %vm5072, %v6070, %v6100
  %v6352 = vsel %vm5072, %v6072, %v6102
  %v6353 = vsel %vm5072, %v6074, %v6104
  %v6354 = vsel %vm5072, %v6076, %v6106
  %v6355 = vsel %vm5072, %v6078, %v6108
  %v6356 = vsel %vm5072, %v6080, %v6110
  %v6357 = vsel %vm5072, %v6082, %v6112
  %v6358 = vsel %vm5072, %v6084, %v6114
  %v6359 = vsel %vm5072, %v6086, %v6116
  %v6360 = vsel %vm5072, %v6088, %v6118
  %v6361 = vsel %vm5072, %v6090, %v6120
  %v6362 = vsel %vm5072, %v6092, %v6122
  %v6363 = vsel %vm5072, %v6244, %v6064
  %v6364 = vsel %vm5072, %v6246, %v6066
  %v6365 = vsel %vm5072, %v6248, %v6068
  %v6366 = vsel %vm5072, %v6250, %v6070
  %v6367 = vsel %vm5072, %v6252, %v6072
  %v6368 = vsel %vm5072, %v6254, %v6074
  %v6369 = vsel %vm5072, %v6256, %v6076
  %v6370 = vsel %vm5072, %v6258, %v6078
  %v6371 = vsel %vm5072, %v6260, %v6080
  %v6372 = vsel %vm5072, %v6262, %v6082
  %v6373 = vsel %vm5072, %v6264, %v6084
  %v6374 = vsel %vm5072, %v6266, %v6086
  %v6375 = vsel %vm5072, %v6268, %v6088
  %v6376 = vsel %vm5072, %v6270, %v6090
  %v6377 = vsel %vm5072, %v6272, %v6092
  %6379 = vset.pattern.permute.xlu0 0
  %6380 = vperm.xlu0 %6379, %v1380
  %v6381 = vpop.permute.xlu0 %6380
  %6384 = vset.pattern.permute.xlu0 0
  %6385 = vperm.xlu0 %6384, %v1381
  %v6386 = vpop.permute.xlu0 %6385
  %6389 = vset.pattern.permute.xlu0 0
  %6390 = vperm.xlu0 %6389, %v1382
  %v6391 = vpop.permute.xlu0 %6390
  %6394 = vset.pattern.permute.xlu0 0
  %6395 = vperm.xlu0 %6394, %v1383
  %v6396 = vpop.permute.xlu0 %6395
  %6399 = vset.pattern.permute.xlu0 0
  %6400 = vperm.xlu0 %6399, %v1384
  %v6401 = vpop.permute.xlu0 %6400
  %6404 = vset.pattern.permute.xlu0 0
  %6405 = vperm.xlu0 %6404, %v1385
  %v6406 = vpop.permute.xlu0 %6405
  %6409 = vset.pattern.permute.xlu0 0
  %6410 = vperm.xlu0 %6409, %v1386
  %v6411 = vpop.permute.xlu0 %6410
  %6414 = vset.pattern.permute.xlu0 0
  %6415 = vperm.xlu0 %6414, %v1387
  %v6416 = vpop.permute.xlu0 %6415
  %6419 = vset.pattern.permute.xlu0 0
  %6420 = vperm.xlu0 %6419, %v1388
  %v6421 = vpop.permute.xlu0 %6420
  %6424 = vset.pattern.permute.xlu0 0
  %6425 = vperm.xlu0 %6424, %v1389
  %v6426 = vpop.permute.xlu0 %6425
  %6429 = vset.pattern.permute.xlu0 0
  %6430 = vperm.xlu0 %6429, %v1390
  %v6431 = vpop.permute.xlu0 %6430
  %6434 = vset.pattern.permute.xlu0 0
  %6435 = vperm.xlu0 %6434, %v1391
  %v6436 = vpop.permute.xlu0 %6435
  %6439 = vset.pattern.permute.xlu0 0
  %6440 = vperm.xlu0 %6439, %v1392
  %v6441 = vpop.permute.xlu0 %6440
  %6444 = vset.pattern.permute.xlu0 0
  %6445 = vperm.xlu0 %6444, %v1393
  %v6446 = vpop.permute.xlu0 %6445
  %6449 = vset.pattern.permute.xlu0 0
  %6450 = vperm.xlu0 %6449, %v1394
  %v6451 = vpop.permute.xlu0 %6450
  %v6453 = vmul.f32 %v6348, %v6381
  %v6454 = vmul.f32 %v6333, %v6381
  %v6455 = vmul.f32 %v6318, %v6381
  %v6456 = vmul.f32 %v6303, %v6381
  %v6457 = vmul.f32 %v6288, %v6381
  %v6458 = vmul.f32 %v6273, %v6381
  %v6459 = vmul.f32 %v6363, %v6381
  %v6460 = vmul.f32 %v6349, %v6386
  %v6461 = vmul.f32 %v6334, %v6386
  %v6462 = vmul.f32 %v6319, %v6386
  %v6463 = vmul.f32 %v6304, %v6386
  %v6464 = vmul.f32 %v6289, %v6386
  %v6465 = vmul.f32 %v6274, %v6386
  %v6466 = vmul.f32 %v6364, %v6386
  %v6467 = vmul.f32 %v6350, %v6391
  %v6468 = vmul.f32 %v6335, %v6391
  %v6469 = vmul.f32 %v6320, %v6391
  %v6470 = vmul.f32 %v6305, %v6391
  %v6471 = vmul.f32 %v6290, %v6391
  %v6472 = vmul.f32 %v6275, %v6391
  %v6473 = vmul.f32 %v6365, %v6391
  %v6474 = vmul.f32 %v6351, %v6396
  %v6475 = vmul.f32 %v6336, %v6396
  %v6476 = vmul.f32 %v6321, %v6396
  %v6477 = vmul.f32 %v6306, %v6396
  %v6478 = vmul.f32 %v6291, %v6396
  %v6479 = vmul.f32 %v6276, %v6396
  %v6480 = vmul.f32 %v6366, %v6396
  %v6481 = vmul.f32 %v6352, %v6401
  %v6482 = vmul.f32 %v6337, %v6401
  %v6483 = vmul.f32 %v6322, %v6401
  %v6484 = vmul.f32 %v6307, %v6401
  %v6485 = vmul.f32 %v6292, %v6401
  %v6486 = vmul.f32 %v6277, %v6401
  %v6487 = vmul.f32 %v6367, %v6401
  %v6488 = vmul.f32 %v6353, %v6406
  %v6489 = vmul.f32 %v6338, %v6406
  %v6490 = vmul.f32 %v6323, %v6406
  %v6491 = vmul.f32 %v6308, %v6406
  %v6492 = vmul.f32 %v6293, %v6406
  %v6493 = vmul.f32 %v6278, %v6406
  %v6494 = vmul.f32 %v6368, %v6406
  %v6495 = vmul.f32 %v6354, %v6411
  %v6496 = vmul.f32 %v6339, %v6411
  %v6497 = vmul.f32 %v6324, %v6411
  %v6498 = vmul.f32 %v6309, %v6411
  %v6499 = vmul.f32 %v6294, %v6411
  %v6500 = vmul.f32 %v6279, %v6411
  %v6501 = vmul.f32 %v6369, %v6411
  %v6502 = vmul.f32 %v6355, %v6416
  %v6503 = vmul.f32 %v6340, %v6416
  %v6504 = vmul.f32 %v6325, %v6416
  %v6505 = vmul.f32 %v6310, %v6416
  %v6506 = vmul.f32 %v6295, %v6416
  %v6507 = vmul.f32 %v6280, %v6416
  %v6508 = vmul.f32 %v6370, %v6416
  %v6509 = vmul.f32 %v6356, %v6421
  %v6510 = vmul.f32 %v6341, %v6421
  %v6511 = vmul.f32 %v6326, %v6421
  %v6512 = vmul.f32 %v6311, %v6421
  %v6513 = vmul.f32 %v6296, %v6421
  %v6514 = vmul.f32 %v6281, %v6421
  %v6515 = vmul.f32 %v6371, %v6421
  %v6516 = vmul.f32 %v6357, %v6426
  %v6517 = vmul.f32 %v6342, %v6426
  %v6518 = vmul.f32 %v6327, %v6426
  %v6519 = vmul.f32 %v6312, %v6426
  %v6520 = vmul.f32 %v6297, %v6426
  %v6521 = vmul.f32 %v6282, %v6426
  %v6522 = vmul.f32 %v6372, %v6426
  %v6523 = vmul.f32 %v6358, %v6431
  %v6524 = vmul.f32 %v6343, %v6431
  %v6525 = vmul.f32 %v6328, %v6431
  %v6526 = vmul.f32 %v6313, %v6431
  %v6527 = vmul.f32 %v6298, %v6431
  %v6528 = vmul.f32 %v6283, %v6431
  %v6529 = vmul.f32 %v6373, %v6431
  %v6530 = vmul.f32 %v6359, %v6436
  %v6531 = vmul.f32 %v6344, %v6436
  %v6532 = vmul.f32 %v6329, %v6436
  %v6533 = vmul.f32 %v6314, %v6436
  %v6534 = vmul.f32 %v6299, %v6436
  %v6535 = vmul.f32 %v6284, %v6436
  %v6536 = vmul.f32 %v6374, %v6436
  %v6537 = vmul.f32 %v6360, %v6441
  %v6538 = vmul.f32 %v6345, %v6441
  %v6539 = vmul.f32 %v6330, %v6441
  %v6540 = vmul.f32 %v6315, %v6441
  %v6541 = vmul.f32 %v6300, %v6441
  %v6542 = vmul.f32 %v6285, %v6441
  %v6543 = vmul.f32 %v6375, %v6441
  %v6544 = vmul.f32 %v6361, %v6446
  %v6545 = vmul.f32 %v6346, %v6446
  %v6546 = vmul.f32 %v6331, %v6446
  %v6547 = vmul.f32 %v6316, %v6446
  %v6548 = vmul.f32 %v6301, %v6446
  %v6549 = vmul.f32 %v6286, %v6446
  %v6550 = vmul.f32 %v6376, %v6446
  %v6551 = vmul.f32 %v6362, %v6451
  %v6552 = vmul.f32 %v6347, %v6451
  %v6553 = vmul.f32 %v6332, %v6451
  %v6554 = vmul.f32 %v6317, %v6451
  %v6555 = vmul.f32 %v6302, %v6451
  %v6556 = vmul.f32 %v6287, %v6451
  %v6557 = vmul.f32 %v6377, %v6451
  %v6558 = vadd.f32 %v5958, %v6453
  %v6559 = vadd.f32 %v5959, %v6454
  %v6560 = vadd.f32 %v5960, %v6455
  %v6561 = vadd.f32 %v5961, %v6456
  %v6562 = vadd.f32 %v5962, %v6457
  %v6563 = vadd.f32 %v5963, %v6458
  %v6564 = vadd.f32 %v5964, %v6459
  %v6565 = vadd.f32 %v5965, %v6460
  %v6566 = vadd.f32 %v5966, %v6461
  %v6567 = vadd.f32 %v5967, %v6462
  %v6568 = vadd.f32 %v5968, %v6463
  %v6569 = vadd.f32 %v5969, %v6464
  %v6570 = vadd.f32 %v5970, %v6465
  %v6571 = vadd.f32 %v5971, %v6466
  %v6572 = vadd.f32 %v5972, %v6467
  %v6573 = vadd.f32 %v5973, %v6468
  %v6574 = vadd.f32 %v5974, %v6469
  %v6575 = vadd.f32 %v5975, %v6470
  %v6576 = vadd.f32 %v5976, %v6471
  %v6577 = vadd.f32 %v5977, %v6472
  %v6578 = vadd.f32 %v5978, %v6473
  %v6579 = vadd.f32 %v5979, %v6474
  %v6580 = vadd.f32 %v5980, %v6475
  %v6581 = vadd.f32 %v5981, %v6476
  %v6582 = vadd.f32 %v5982, %v6477
  %v6583 = vadd.f32 %v5983, %v6478
  %v6584 = vadd.f32 %v5984, %v6479
  %v6585 = vadd.f32 %v5985, %v6480
  %v6586 = vadd.f32 %v5986, %v6481
  %v6587 = vadd.f32 %v5987, %v6482
  %v6588 = vadd.f32 %v5988, %v6483
  %v6589 = vadd.f32 %v5989, %v6484
  %v6590 = vadd.f32 %v5990, %v6485
  %v6591 = vadd.f32 %v5991, %v6486
  %v6592 = vadd.f32 %v5992, %v6487
  %v6593 = vadd.f32 %v5993, %v6488
  %v6594 = vadd.f32 %v5994, %v6489
  %v6595 = vadd.f32 %v5995, %v6490
  %v6596 = vadd.f32 %v5996, %v6491
  %v6597 = vadd.f32 %v5997, %v6492
  %v6598 = vadd.f32 %v5998, %v6493
  %v6599 = vadd.f32 %v5999, %v6494
  %v6600 = vadd.f32 %v6000, %v6495
  %v6601 = vadd.f32 %v6001, %v6496
  %v6602 = vadd.f32 %v6002, %v6497
  %v6603 = vadd.f32 %v6003, %v6498
  %v6604 = vadd.f32 %v6004, %v6499
  %v6605 = vadd.f32 %v6005, %v6500
  %v6606 = vadd.f32 %v6006, %v6501
  %v6607 = vadd.f32 %v6007, %v6502
  %v6608 = vadd.f32 %v6008, %v6503
  %v6609 = vadd.f32 %v6009, %v6504
  %v6610 = vadd.f32 %v6010, %v6505
  %v6611 = vadd.f32 %v6011, %v6506
  %v6612 = vadd.f32 %v6012, %v6507
  %v6613 = vadd.f32 %v6013, %v6508
  %v6614 = vadd.f32 %v6014, %v6509
  %v6615 = vadd.f32 %v6015, %v6510
  %v6616 = vadd.f32 %v6016, %v6511
  %v6617 = vadd.f32 %v6017, %v6512
  %v6618 = vadd.f32 %v6018, %v6513
  %v6619 = vadd.f32 %v6019, %v6514
  %v6620 = vadd.f32 %v6020, %v6515
  %v6621 = vadd.f32 %v6021, %v6516
  %v6622 = vadd.f32 %v6022, %v6517
  %v6623 = vadd.f32 %v6023, %v6518
  %v6624 = vadd.f32 %v6024, %v6519
  %v6625 = vadd.f32 %v6025, %v6520
  %v6626 = vadd.f32 %v6026, %v6521
  %v6627 = vadd.f32 %v6027, %v6522
  %v6628 = vadd.f32 %v6028, %v6523
  %v6629 = vadd.f32 %v6029, %v6524
  %v6630 = vadd.f32 %v6030, %v6525
  %v6631 = vadd.f32 %v6031, %v6526
  %v6632 = vadd.f32 %v6032, %v6527
  %v6633 = vadd.f32 %v6033, %v6528
  %v6634 = vadd.f32 %v6034, %v6529
  %v6635 = vadd.f32 %v6035, %v6530
  %v6636 = vadd.f32 %v6036, %v6531
  %v6637 = vadd.f32 %v6037, %v6532
  %v6638 = vadd.f32 %v6038, %v6533
  %v6639 = vadd.f32 %v6039, %v6534
  %v6640 = vadd.f32 %v6040, %v6535
  %v6641 = vadd.f32 %v6041, %v6536
  %v6642 = vadd.f32 %v6042, %v6537
  %v6643 = vadd.f32 %v6043, %v6538
  %v6644 = vadd.f32 %v6044, %v6539
  %v6645 = vadd.f32 %v6045, %v6540
  %v6646 = vadd.f32 %v6046, %v6541
  %v6647 = vadd.f32 %v6047, %v6542
  %v6648 = vadd.f32 %v6048, %v6543
  %v6649 = vadd.f32 %v6049, %v6544
  %v6650 = vadd.f32 %v6050, %v6545
  %v6651 = vadd.f32 %v6051, %v6546
  %v6652 = vadd.f32 %v6052, %v6547
  %v6653 = vadd.f32 %v6053, %v6548
  %v6654 = vadd.f32 %v6054, %v6549
  %v6655 = vadd.f32 %v6055, %v6550
  %v6656 = vadd.f32 %v6056, %v6551
  %v6657 = vadd.f32 %v6057, %v6552
  %v6658 = vadd.f32 %v6058, %v6553
  %v6659 = vadd.f32 %v6059, %v6554
  %v6660 = vadd.f32 %v6060, %v6555
  %v6661 = vadd.f32 %v6061, %v6556
  %v6662 = vadd.f32 %v6062, %v6557
  %v6663 = vmul.f32 %v6558, %v1115
  %v6664 = vmul.f32 %v6559, %v1119
  %v6665 = vmul.f32 %v6560, %v1123
  %v6666 = vmul.f32 %v6561, %v1127
  %v6667 = vmul.f32 %v6562, %v1131
  %v6668 = vmul.f32 %v6563, %v1135
  %v6669 = vmul.f32 %v6564, %v1139
  %v6670 = vmul.f32 %v6565, %v1115
  %v6671 = vmul.f32 %v6566, %v1119
  %v6672 = vmul.f32 %v6567, %v1123
  %v6673 = vmul.f32 %v6568, %v1127
  %v6674 = vmul.f32 %v6569, %v1131
  %v6675 = vmul.f32 %v6570, %v1135
  %v6676 = vmul.f32 %v6571, %v1139
  %v6677 = vmul.f32 %v6572, %v1115
  %v6678 = vmul.f32 %v6573, %v1119
  %v6679 = vmul.f32 %v6574, %v1123
  %v6680 = vmul.f32 %v6575, %v1127
  %v6681 = vmul.f32 %v6576, %v1131
  %v6682 = vmul.f32 %v6577, %v1135
  %v6683 = vmul.f32 %v6578, %v1139
  %v6684 = vmul.f32 %v6579, %v1115
  %v6685 = vmul.f32 %v6580, %v1119
  %v6686 = vmul.f32 %v6581, %v1123
  %v6687 = vmul.f32 %v6582, %v1127
  %v6688 = vmul.f32 %v6583, %v1131
  %v6689 = vmul.f32 %v6584, %v1135
  %v6690 = vmul.f32 %v6585, %v1139
  %v6691 = vmul.f32 %v6586, %v1115
  %v6692 = vmul.f32 %v6587, %v1119
  %v6693 = vmul.f32 %v6588, %v1123
  %v6694 = vmul.f32 %v6589, %v1127
  %v6695 = vmul.f32 %v6590, %v1131
  %v6696 = vmul.f32 %v6591, %v1135
  %v6697 = vmul.f32 %v6592, %v1139
  %v6698 = vmul.f32 %v6593, %v1115
  %v6699 = vmul.f32 %v6594, %v1119
  %v6700 = vmul.f32 %v6595, %v1123
  %v6701 = vmul.f32 %v6596, %v1127
  %v6702 = vmul.f32 %v6597, %v1131
  %v6703 = vmul.f32 %v6598, %v1135
  %v6704 = vmul.f32 %v6599, %v1139
  %v6705 = vmul.f32 %v6600, %v1115
  %v6706 = vmul.f32 %v6601, %v1119
  %v6707 = vmul.f32 %v6602, %v1123
  %v6708 = vmul.f32 %v6603, %v1127
  %v6709 = vmul.f32 %v6604, %v1131
  %v6710 = vmul.f32 %v6605, %v1135
  %v6711 = vmul.f32 %v6606, %v1139
  %v6712 = vmul.f32 %v6607, %v1115
  %v6713 = vmul.f32 %v6608, %v1119
  %v6714 = vmul.f32 %v6609, %v1123
  %v6715 = vmul.f32 %v6610, %v1127
  %v6716 = vmul.f32 %v6611, %v1131
  %v6717 = vmul.f32 %v6612, %v1135
  %v6718 = vmul.f32 %v6613, %v1139
  %v6719 = vmul.f32 %v6614, %v1115
  %v6720 = vmul.f32 %v6615, %v1119
  %v6721 = vmul.f32 %v6616, %v1123
  %v6722 = vmul.f32 %v6617, %v1127
  %v6723 = vmul.f32 %v6618, %v1131
  %v6724 = vmul.f32 %v6619, %v1135
  %v6725 = vmul.f32 %v6620, %v1139
  %v6726 = vmul.f32 %v6621, %v1115
  %v6727 = vmul.f32 %v6622, %v1119
  %v6728 = vmul.f32 %v6623, %v1123
  %v6729 = vmul.f32 %v6624, %v1127
  %v6730 = vmul.f32 %v6625, %v1131
  %v6731 = vmul.f32 %v6626, %v1135
  %v6732 = vmul.f32 %v6627, %v1139
  %v6733 = vmul.f32 %v6628, %v1115
  %v6734 = vmul.f32 %v6629, %v1119
  %v6735 = vmul.f32 %v6630, %v1123
  %v6736 = vmul.f32 %v6631, %v1127
  %v6737 = vmul.f32 %v6632, %v1131
  %v6738 = vmul.f32 %v6633, %v1135
  %v6739 = vmul.f32 %v6634, %v1139
  %v6740 = vmul.f32 %v6635, %v1115
  %v6741 = vmul.f32 %v6636, %v1119
  %v6742 = vmul.f32 %v6637, %v1123
  %v6743 = vmul.f32 %v6638, %v1127
  %v6744 = vmul.f32 %v6639, %v1131
  %v6745 = vmul.f32 %v6640, %v1135
  %v6746 = vmul.f32 %v6641, %v1139
  %v6747 = vmul.f32 %v6642, %v1115
  %v6748 = vmul.f32 %v6643, %v1119
  %v6749 = vmul.f32 %v6644, %v1123
  %v6750 = vmul.f32 %v6645, %v1127
  %v6751 = vmul.f32 %v6646, %v1131
  %v6752 = vmul.f32 %v6647, %v1135
  %v6753 = vmul.f32 %v6648, %v1139
  %v6754 = vmul.f32 %v6649, %v1115
  %v6755 = vmul.f32 %v6650, %v1119
  %v6756 = vmul.f32 %v6651, %v1123
  %v6757 = vmul.f32 %v6652, %v1127
  %v6758 = vmul.f32 %v6653, %v1131
  %v6759 = vmul.f32 %v6654, %v1135
  %v6760 = vmul.f32 %v6655, %v1139
  %v6761 = vmul.f32 %v6656, %v1115
  %v6762 = vmul.f32 %v6657, %v1119
  %v6763 = vmul.f32 %v6658, %v1123
  %v6764 = vmul.f32 %v6659, %v1127
  %v6765 = vmul.f32 %v6660, %v1131
  %v6766 = vmul.f32 %v6661, %v1135
  %v6767 = vmul.f32 %v6662, %v1139
  %v6768 = vadd.f32 %v6663, %v6664
  %v6769 = vadd.f32 %v6768, %v6665
  %v6770 = vadd.f32 %v6769, %v6666
  %v6771 = vadd.f32 %v6770, %v6667
  %v6772 = vadd.f32 %v6771, %v6668
  %v6773 = vadd.f32 %v6772, %v6669
  %6774 = vadd.xlane.f32.xlu0 %v6773
  %v6775 = vpop.xlane.xlu0 %6774
  %v6776 = vadd.f32 %v6670, %v6671
  %v6777 = vadd.f32 %v6776, %v6672
  %v6778 = vadd.f32 %v6777, %v6673
  %v6779 = vadd.f32 %v6778, %v6674
  %v6780 = vadd.f32 %v6779, %v6675
  %v6781 = vadd.f32 %v6780, %v6676
  %6782 = vadd.xlane.f32.xlu0 %v6781
  %v6783 = vpop.xlane.xlu0 %6782
  %v6784 = vadd.f32 %v6677, %v6678
  %v6785 = vadd.f32 %v6784, %v6679
  %v6786 = vadd.f32 %v6785, %v6680
  %v6787 = vadd.f32 %v6786, %v6681
  %v6788 = vadd.f32 %v6787, %v6682
  %v6789 = vadd.f32 %v6788, %v6683
  %6790 = vadd.xlane.f32.xlu0 %v6789
  %v6791 = vpop.xlane.xlu0 %6790
  %v6792 = vadd.f32 %v6684, %v6685
  %v6793 = vadd.f32 %v6792, %v6686
  %v6794 = vadd.f32 %v6793, %v6687
  %v6795 = vadd.f32 %v6794, %v6688
  %v6796 = vadd.f32 %v6795, %v6689
  %v6797 = vadd.f32 %v6796, %v6690
  %6798 = vadd.xlane.f32.xlu0 %v6797
  %v6799 = vpop.xlane.xlu0 %6798
  %v6800 = vadd.f32 %v6691, %v6692
  %v6801 = vadd.f32 %v6800, %v6693
  %v6802 = vadd.f32 %v6801, %v6694
  %v6803 = vadd.f32 %v6802, %v6695
  %v6804 = vadd.f32 %v6803, %v6696
  %v6805 = vadd.f32 %v6804, %v6697
  %6806 = vadd.xlane.f32.xlu0 %v6805
  %v6807 = vpop.xlane.xlu0 %6806
  %v6808 = vadd.f32 %v6698, %v6699
  %v6809 = vadd.f32 %v6808, %v6700
  %v6810 = vadd.f32 %v6809, %v6701
  %v6811 = vadd.f32 %v6810, %v6702
  %v6812 = vadd.f32 %v6811, %v6703
  %v6813 = vadd.f32 %v6812, %v6704
  %6814 = vadd.xlane.f32.xlu0 %v6813
  %v6815 = vpop.xlane.xlu0 %6814
  %v6816 = vadd.f32 %v6705, %v6706
  %v6817 = vadd.f32 %v6816, %v6707
  %v6818 = vadd.f32 %v6817, %v6708
  %v6819 = vadd.f32 %v6818, %v6709
  %v6820 = vadd.f32 %v6819, %v6710
  %v6821 = vadd.f32 %v6820, %v6711
  %6822 = vadd.xlane.f32.xlu0 %v6821
  %v6823 = vpop.xlane.xlu0 %6822
  %v6824 = vadd.f32 %v6712, %v6713
  %v6825 = vadd.f32 %v6824, %v6714
  %v6826 = vadd.f32 %v6825, %v6715
  %v6827 = vadd.f32 %v6826, %v6716
  %v6828 = vadd.f32 %v6827, %v6717
  %v6829 = vadd.f32 %v6828, %v6718
  %6830 = vadd.xlane.f32.xlu0 %v6829
  %v6831 = vpop.xlane.xlu0 %6830
  %v6832 = vadd.f32 %v6719, %v6720
  %v6833 = vadd.f32 %v6832, %v6721
  %v6834 = vadd.f32 %v6833, %v6722
  %v6835 = vadd.f32 %v6834, %v6723
  %v6836 = vadd.f32 %v6835, %v6724
  %v6837 = vadd.f32 %v6836, %v6725
  %6838 = vadd.xlane.f32.xlu0 %v6837
  %v6839 = vpop.xlane.xlu0 %6838
  %v6840 = vadd.f32 %v6726, %v6727
  %v6841 = vadd.f32 %v6840, %v6728
  %v6842 = vadd.f32 %v6841, %v6729
  %v6843 = vadd.f32 %v6842, %v6730
  %v6844 = vadd.f32 %v6843, %v6731
  %v6845 = vadd.f32 %v6844, %v6732
  %6846 = vadd.xlane.f32.xlu0 %v6845
  %v6847 = vpop.xlane.xlu0 %6846
  %v6848 = vadd.f32 %v6733, %v6734
  %v6849 = vadd.f32 %v6848, %v6735
  %v6850 = vadd.f32 %v6849, %v6736
  %v6851 = vadd.f32 %v6850, %v6737
  %v6852 = vadd.f32 %v6851, %v6738
  %v6853 = vadd.f32 %v6852, %v6739
  %6854 = vadd.xlane.f32.xlu0 %v6853
  %v6855 = vpop.xlane.xlu0 %6854
  %v6856 = vadd.f32 %v6740, %v6741
  %v6857 = vadd.f32 %v6856, %v6742
  %v6858 = vadd.f32 %v6857, %v6743
  %v6859 = vadd.f32 %v6858, %v6744
  %v6860 = vadd.f32 %v6859, %v6745
  %v6861 = vadd.f32 %v6860, %v6746
  %6862 = vadd.xlane.f32.xlu0 %v6861
  %v6863 = vpop.xlane.xlu0 %6862
  %v6864 = vadd.f32 %v6747, %v6748
  %v6865 = vadd.f32 %v6864, %v6749
  %v6866 = vadd.f32 %v6865, %v6750
  %v6867 = vadd.f32 %v6866, %v6751
  %v6868 = vadd.f32 %v6867, %v6752
  %v6869 = vadd.f32 %v6868, %v6753
  %6870 = vadd.xlane.f32.xlu0 %v6869
  %v6871 = vpop.xlane.xlu0 %6870
  %v6872 = vadd.f32 %v6754, %v6755
  %v6873 = vadd.f32 %v6872, %v6756
  %v6874 = vadd.f32 %v6873, %v6757
  %v6875 = vadd.f32 %v6874, %v6758
  %v6876 = vadd.f32 %v6875, %v6759
  %v6877 = vadd.f32 %v6876, %v6760
  %6878 = vadd.xlane.f32.xlu0 %v6877
  %v6879 = vpop.xlane.xlu0 %6878
  %v6880 = vadd.f32 %v6761, %v6762
  %v6881 = vadd.f32 %v6880, %v6763
  %v6882 = vadd.f32 %v6881, %v6764
  %v6883 = vadd.f32 %v6882, %v6765
  %v6884 = vadd.f32 %v6883, %v6766
  %v6885 = vadd.f32 %v6884, %v6767
  %6886 = vadd.xlane.f32.xlu0 %v6885
  %v6887 = vpop.xlane.xlu0 %6886
  %v6888 = vmul.f32 %v6663, %v6663
  %v6889 = vmul.f32 %v6664, %v6664
  %v6890 = vmul.f32 %v6665, %v6665
  %v6891 = vmul.f32 %v6666, %v6666
  %v6892 = vmul.f32 %v6667, %v6667
  %v6893 = vmul.f32 %v6668, %v6668
  %v6894 = vmul.f32 %v6669, %v6669
  %v6895 = vmul.f32 %v6670, %v6670
  %v6896 = vmul.f32 %v6671, %v6671
  %v6897 = vmul.f32 %v6672, %v6672
  %v6898 = vmul.f32 %v6673, %v6673
  %v6899 = vmul.f32 %v6674, %v6674
  %v6900 = vmul.f32 %v6675, %v6675
  %v6901 = vmul.f32 %v6676, %v6676
  %v6902 = vmul.f32 %v6677, %v6677
  %v6903 = vmul.f32 %v6678, %v6678
  %v6904 = vmul.f32 %v6679, %v6679
  %v6905 = vmul.f32 %v6680, %v6680
  %v6906 = vmul.f32 %v6681, %v6681
  %v6907 = vmul.f32 %v6682, %v6682
  %v6908 = vmul.f32 %v6683, %v6683
  %v6909 = vmul.f32 %v6684, %v6684
  %v6910 = vmul.f32 %v6685, %v6685
  %v6911 = vmul.f32 %v6686, %v6686
  %v6912 = vmul.f32 %v6687, %v6687
  %v6913 = vmul.f32 %v6688, %v6688
  %v6914 = vmul.f32 %v6689, %v6689
  %v6915 = vmul.f32 %v6690, %v6690
  %v6916 = vmul.f32 %v6691, %v6691
  %v6917 = vmul.f32 %v6692, %v6692
  %v6918 = vmul.f32 %v6693, %v6693
  %v6919 = vmul.f32 %v6694, %v6694
  %v6920 = vmul.f32 %v6695, %v6695
  %v6921 = vmul.f32 %v6696, %v6696
  %v6922 = vmul.f32 %v6697, %v6697
  %v6923 = vmul.f32 %v6698, %v6698
  %v6924 = vmul.f32 %v6699, %v6699
  %v6925 = vmul.f32 %v6700, %v6700
  %v6926 = vmul.f32 %v6701, %v6701
  %v6927 = vmul.f32 %v6702, %v6702
  %v6928 = vmul.f32 %v6703, %v6703
  %v6929 = vmul.f32 %v6704, %v6704
  %v6930 = vmul.f32 %v6705, %v6705
  %v6931 = vmul.f32 %v6706, %v6706
  %v6932 = vmul.f32 %v6707, %v6707
  %v6933 = vmul.f32 %v6708, %v6708
  %v6934 = vmul.f32 %v6709, %v6709
  %v6935 = vmul.f32 %v6710, %v6710
  %v6936 = vmul.f32 %v6711, %v6711
  %v6937 = vmul.f32 %v6712, %v6712
  %v6938 = vmul.f32 %v6713, %v6713
  %v6939 = vmul.f32 %v6714, %v6714
  %v6940 = vmul.f32 %v6715, %v6715
  %v6941 = vmul.f32 %v6716, %v6716
  %v6942 = vmul.f32 %v6717, %v6717
  %v6943 = vmul.f32 %v6718, %v6718
  %v6944 = vmul.f32 %v6719, %v6719
  %v6945 = vmul.f32 %v6720, %v6720
  %v6946 = vmul.f32 %v6721, %v6721
  %v6947 = vmul.f32 %v6722, %v6722
  %v6948 = vmul.f32 %v6723, %v6723
  %v6949 = vmul.f32 %v6724, %v6724
  %v6950 = vmul.f32 %v6725, %v6725
  %v6951 = vmul.f32 %v6726, %v6726
  %v6952 = vmul.f32 %v6727, %v6727
  %v6953 = vmul.f32 %v6728, %v6728
  %v6954 = vmul.f32 %v6729, %v6729
  %v6955 = vmul.f32 %v6730, %v6730
  %v6956 = vmul.f32 %v6731, %v6731
  %v6957 = vmul.f32 %v6732, %v6732
  %v6958 = vmul.f32 %v6733, %v6733
  %v6959 = vmul.f32 %v6734, %v6734
  %v6960 = vmul.f32 %v6735, %v6735
  %v6961 = vmul.f32 %v6736, %v6736
  %v6962 = vmul.f32 %v6737, %v6737
  %v6963 = vmul.f32 %v6738, %v6738
  %v6964 = vmul.f32 %v6739, %v6739
  %v6965 = vmul.f32 %v6740, %v6740
  %v6966 = vmul.f32 %v6741, %v6741
  %v6967 = vmul.f32 %v6742, %v6742
  %v6968 = vmul.f32 %v6743, %v6743
  %v6969 = vmul.f32 %v6744, %v6744
  %v6970 = vmul.f32 %v6745, %v6745
  %v6971 = vmul.f32 %v6746, %v6746
  %v6972 = vmul.f32 %v6747, %v6747
  %v6973 = vmul.f32 %v6748, %v6748
  %v6974 = vmul.f32 %v6749, %v6749
  %v6975 = vmul.f32 %v6750, %v6750
  %v6976 = vmul.f32 %v6751, %v6751
  %v6977 = vmul.f32 %v6752, %v6752
  %v6978 = vmul.f32 %v6753, %v6753
  %v6979 = vmul.f32 %v6754, %v6754
  %v6980 = vmul.f32 %v6755, %v6755
  %v6981 = vmul.f32 %v6756, %v6756
  %v6982 = vmul.f32 %v6757, %v6757
  %v6983 = vmul.f32 %v6758, %v6758
  %v6984 = vmul.f32 %v6759, %v6759
  %v6985 = vmul.f32 %v6760, %v6760
  %v6986 = vmul.f32 %v6761, %v6761
  %v6987 = vmul.f32 %v6762, %v6762
  %v6988 = vmul.f32 %v6763, %v6763
  %v6989 = vmul.f32 %v6764, %v6764
  %v6990 = vmul.f32 %v6765, %v6765
  %v6991 = vmul.f32 %v6766, %v6766
  %v6992 = vmul.f32 %v6767, %v6767
  %v6993 = vadd.f32 %v6888, %v6889
  %v6994 = vadd.f32 %v6993, %v6890
  %v6995 = vadd.f32 %v6994, %v6891
  %v6996 = vadd.f32 %v6995, %v6892
  %v6997 = vadd.f32 %v6996, %v6893
  %v6998 = vadd.f32 %v6997, %v6894
  %6999 = vadd.xlane.f32.xlu0 %v6998
  %v7000 = vpop.xlane.xlu0 %6999
  %v7001 = vadd.f32 %v6895, %v6896
  %v7002 = vadd.f32 %v7001, %v6897
  %v7003 = vadd.f32 %v7002, %v6898
  %v7004 = vadd.f32 %v7003, %v6899
  %v7005 = vadd.f32 %v7004, %v6900
  %v7006 = vadd.f32 %v7005, %v6901
  %7007 = vadd.xlane.f32.xlu0 %v7006
  %v7008 = vpop.xlane.xlu0 %7007
  %v7009 = vadd.f32 %v6902, %v6903
  %v7010 = vadd.f32 %v7009, %v6904
  %v7011 = vadd.f32 %v7010, %v6905
  %v7012 = vadd.f32 %v7011, %v6906
  %v7013 = vadd.f32 %v7012, %v6907
  %v7014 = vadd.f32 %v7013, %v6908
  %7015 = vadd.xlane.f32.xlu0 %v7014
  %v7016 = vpop.xlane.xlu0 %7015
  %v7017 = vadd.f32 %v6909, %v6910
  %v7018 = vadd.f32 %v7017, %v6911
  %v7019 = vadd.f32 %v7018, %v6912
  %v7020 = vadd.f32 %v7019, %v6913
  %v7021 = vadd.f32 %v7020, %v6914
  %v7022 = vadd.f32 %v7021, %v6915
  %7023 = vadd.xlane.f32.xlu0 %v7022
  %v7024 = vpop.xlane.xlu0 %7023
  %v7025 = vadd.f32 %v6916, %v6917
  %v7026 = vadd.f32 %v7025, %v6918
  %v7027 = vadd.f32 %v7026, %v6919
  %v7028 = vadd.f32 %v7027, %v6920
  %v7029 = vadd.f32 %v7028, %v6921
  %v7030 = vadd.f32 %v7029, %v6922
  %7031 = vadd.xlane.f32.xlu0 %v7030
  %v7032 = vpop.xlane.xlu0 %7031
  %v7033 = vadd.f32 %v6923, %v6924
  %v7034 = vadd.f32 %v7033, %v6925
  %v7035 = vadd.f32 %v7034, %v6926
  %v7036 = vadd.f32 %v7035, %v6927
  %v7037 = vadd.f32 %v7036, %v6928
  %v7038 = vadd.f32 %v7037, %v6929
  %7039 = vadd.xlane.f32.xlu0 %v7038
  %v7040 = vpop.xlane.xlu0 %7039
  %v7041 = vadd.f32 %v6930, %v6931
  %v7042 = vadd.f32 %v7041, %v6932
  %v7043 = vadd.f32 %v7042, %v6933
  %v7044 = vadd.f32 %v7043, %v6934
  %v7045 = vadd.f32 %v7044, %v6935
  %v7046 = vadd.f32 %v7045, %v6936
  %7047 = vadd.xlane.f32.xlu0 %v7046
  %v7048 = vpop.xlane.xlu0 %7047
  %v7049 = vadd.f32 %v6937, %v6938
  %v7050 = vadd.f32 %v7049, %v6939
  %v7051 = vadd.f32 %v7050, %v6940
  %v7052 = vadd.f32 %v7051, %v6941
  %v7053 = vadd.f32 %v7052, %v6942
  %v7054 = vadd.f32 %v7053, %v6943
  %7055 = vadd.xlane.f32.xlu0 %v7054
  %v7056 = vpop.xlane.xlu0 %7055
  %v7057 = vadd.f32 %v6944, %v6945
  %v7058 = vadd.f32 %v7057, %v6946
  %v7059 = vadd.f32 %v7058, %v6947
  %v7060 = vadd.f32 %v7059, %v6948
  %v7061 = vadd.f32 %v7060, %v6949
  %v7062 = vadd.f32 %v7061, %v6950
  %7063 = vadd.xlane.f32.xlu0 %v7062
  %v7064 = vpop.xlane.xlu0 %7063
  %v7065 = vadd.f32 %v6951, %v6952
  %v7066 = vadd.f32 %v7065, %v6953
  %v7067 = vadd.f32 %v7066, %v6954
  %v7068 = vadd.f32 %v7067, %v6955
  %v7069 = vadd.f32 %v7068, %v6956
  %v7070 = vadd.f32 %v7069, %v6957
  %7071 = vadd.xlane.f32.xlu0 %v7070
  %v7072 = vpop.xlane.xlu0 %7071
  %v7073 = vadd.f32 %v6958, %v6959
  %v7074 = vadd.f32 %v7073, %v6960
  %v7075 = vadd.f32 %v7074, %v6961
  %v7076 = vadd.f32 %v7075, %v6962
  %v7077 = vadd.f32 %v7076, %v6963
  %v7078 = vadd.f32 %v7077, %v6964
  %7079 = vadd.xlane.f32.xlu0 %v7078
  %v7080 = vpop.xlane.xlu0 %7079
  %v7081 = vadd.f32 %v6965, %v6966
  %v7082 = vadd.f32 %v7081, %v6967
  %v7083 = vadd.f32 %v7082, %v6968
  %v7084 = vadd.f32 %v7083, %v6969
  %v7085 = vadd.f32 %v7084, %v6970
  %v7086 = vadd.f32 %v7085, %v6971
  %7087 = vadd.xlane.f32.xlu0 %v7086
  %v7088 = vpop.xlane.xlu0 %7087
  %v7089 = vadd.f32 %v6972, %v6973
  %v7090 = vadd.f32 %v7089, %v6974
  %v7091 = vadd.f32 %v7090, %v6975
  %v7092 = vadd.f32 %v7091, %v6976
  %v7093 = vadd.f32 %v7092, %v6977
  %v7094 = vadd.f32 %v7093, %v6978
  %7095 = vadd.xlane.f32.xlu0 %v7094
  %v7096 = vpop.xlane.xlu0 %7095
  %v7097 = vadd.f32 %v6979, %v6980
  %v7098 = vadd.f32 %v7097, %v6981
  %v7099 = vadd.f32 %v7098, %v6982
  %v7100 = vadd.f32 %v7099, %v6983
  %v7101 = vadd.f32 %v7100, %v6984
  %v7102 = vadd.f32 %v7101, %v6985
  %7103 = vadd.xlane.f32.xlu0 %v7102
  %v7104 = vpop.xlane.xlu0 %7103
  %v7105 = vadd.f32 %v6986, %v6987
  %v7106 = vadd.f32 %v7105, %v6988
  %v7107 = vadd.f32 %v7106, %v6989
  %v7108 = vadd.f32 %v7107, %v6990
  %v7109 = vadd.f32 %v7108, %v6991
  %v7110 = vadd.f32 %v7109, %v6992
  %7111 = vadd.xlane.f32.xlu0 %v7110
  %v7112 = vpop.xlane.xlu0 %7111
  %v7113 = vmul.f32 %v6775, 0.0012755102
  %v7114 = vmul.f32 %v6783, 0.0012755102
  %v7115 = vmul.f32 %v6791, 0.0012755102
  %v7116 = vmul.f32 %v6799, 0.0012755102
  %v7117 = vmul.f32 %v6807, 0.0012755102
  %v7118 = vmul.f32 %v6815, 0.0012755102
  %v7119 = vmul.f32 %v6823, 0.0012755102
  %v7120 = vmul.f32 %v6831, 0.0012755102
  %v7121 = vmul.f32 %v6839, 0.0012755102
  %v7122 = vmul.f32 %v6847, 0.0012755102
  %v7123 = vmul.f32 %v6855, 0.0012755102
  %v7124 = vmul.f32 %v6863, 0.0012755102
  %v7125 = vmul.f32 %v6871, 0.0012755102
  %v7126 = vmul.f32 %v6879, 0.0012755102
  %v7127 = vmul.f32 %v6887, 0.0012755102
  %v7128 = vmul.f32 %v7000, 0.0012755102
  %v7129 = vmul.f32 %v7008, 0.0012755102
  %v7130 = vmul.f32 %v7016, 0.0012755102
  %v7131 = vmul.f32 %v7024, 0.0012755102
  %v7132 = vmul.f32 %v7032, 0.0012755102
  %v7133 = vmul.f32 %v7040, 0.0012755102
  %v7134 = vmul.f32 %v7048, 0.0012755102
  %v7135 = vmul.f32 %v7056, 0.0012755102
  %v7136 = vmul.f32 %v7064, 0.0012755102
  %v7137 = vmul.f32 %v7072, 0.0012755102
  %v7138 = vmul.f32 %v7080, 0.0012755102
  %v7139 = vmul.f32 %v7088, 0.0012755102
  %v7140 = vmul.f32 %v7096, 0.0012755102
  %v7141 = vmul.f32 %v7104, 0.0012755102
  %v7142 = vmul.f32 %v7112, 0.0012755102
  %v7143 = vmul.f32 %v7113, %v7113
  %v7144 = vmul.f32 %v7114, %v7114
  %v7145 = vmul.f32 %v7115, %v7115
  %v7146 = vmul.f32 %v7116, %v7116
  %v7147 = vmul.f32 %v7117, %v7117
  %v7148 = vmul.f32 %v7118, %v7118
  %v7149 = vmul.f32 %v7119, %v7119
  %v7150 = vmul.f32 %v7120, %v7120
  %v7151 = vmul.f32 %v7121, %v7121
  %v7152 = vmul.f32 %v7122, %v7122
  %v7153 = vmul.f32 %v7123, %v7123
  %v7154 = vmul.f32 %v7124, %v7124
  %v7155 = vmul.f32 %v7125, %v7125
  %v7156 = vmul.f32 %v7126, %v7126
  %v7157 = vmul.f32 %v7127, %v7127
  %v7158 = vsub.f32 %v7128, %v7143
  %v7159 = vsub.f32 %v7129, %v7144
  %v7160 = vsub.f32 %v7130, %v7145
  %v7161 = vsub.f32 %v7131, %v7146
  %v7162 = vsub.f32 %v7132, %v7147
  %v7163 = vsub.f32 %v7133, %v7148
  %v7164 = vsub.f32 %v7134, %v7149
  %v7165 = vsub.f32 %v7135, %v7150
  %v7166 = vsub.f32 %v7136, %v7151
  %v7167 = vsub.f32 %v7137, %v7152
  %v7168 = vsub.f32 %v7138, %v7153
  %v7169 = vsub.f32 %v7139, %v7154
  %v7170 = vsub.f32 %v7140, %v7155
  %v7171 = vsub.f32 %v7141, %v7156
  %v7172 = vsub.f32 %v7142, %v7157
  %v7173 = vld [vmem:[%s5] sm:$0xff]
  %v7174 = vld [vmem:[%s5 + $0x8] sm:$0xff]
  %v7175 = vld [vmem:[%s5 + $0x10] sm:$0xff]
  %v7176 = vld [vmem:[%s5 + $0x18] sm:$0xff]
  %v7177 = vld [vmem:[%s5 + $0x20] sm:$0xff]
  %v7178 = vld [vmem:[%s5 + $0x28] sm:$0xff]
  %v7179 = vld [vmem:[%s5 + $0x30] sm:$0xff]
  %v7180 = vld [vmem:[%s5 + $0x38] sm:$0xff]
  %v7181 = vld [vmem:[%s5 + $0x40] sm:$0xff]
  %v7182 = vld [vmem:[%s5 + $0x48] sm:$0xff]
  %v7183 = vld [vmem:[%s5 + $0x50] sm:$0xff]
  %v7184 = vld [vmem:[%s5 + $0x58] sm:$0xff]
  %v7185 = vld [vmem:[%s5 + $0x60] sm:$0xff]
  %v7186 = vld [vmem:[%s5 + $0x68] sm:$0xff]
  %v7187 = vld [vmem:[%s5 + $0x70] sm:$0xff]
  %v7188 = vadd.f32 %v7158, 1e-05
  %v7189 = vadd.f32 %v7159, 1e-05
  %v7190 = vadd.f32 %v7160, 1e-05
  %v7191 = vadd.f32 %v7161, 1e-05
  %v7192 = vadd.f32 %v7162, 1e-05
  %v7193 = vadd.f32 %v7163, 1e-05
  %v7194 = vadd.f32 %v7164, 1e-05
  %v7195 = vadd.f32 %v7165, 1e-05
  %v7196 = vadd.f32 %v7166, 1e-05
  %v7197 = vadd.f32 %v7167, 1e-05
  %v7198 = vadd.f32 %v7168, 1e-05
  %v7199 = vadd.f32 %v7169, 1e-05
  %v7200 = vadd.f32 %v7170, 1e-05
  %v7201 = vadd.f32 %v7171, 1e-05
  %v7202 = vadd.f32 %v7172, 1e-05
  %v7203 = vrsqrt.pop %v7188
  %v7204 = vrsqrt.pop %v7189
  %v7205 = vrsqrt.pop %v7190
  %v7206 = vrsqrt.pop %v7191
  %v7207 = vrsqrt.pop %v7192
  %v7208 = vrsqrt.pop %v7193
  %v7209 = vrsqrt.pop %v7194
  %v7210 = vrsqrt.pop %v7195
  %v7211 = vrsqrt.pop %v7196
  %v7212 = vrsqrt.pop %v7197
  %v7213 = vrsqrt.pop %v7198
  %v7214 = vrsqrt.pop %v7199
  %v7215 = vrsqrt.pop %v7200
  %v7216 = vrsqrt.pop %v7201
  %v7217 = vrsqrt.pop %v7202
  %v7218 = vmul.f32 %v7173, %v7203
  %v7219 = vmul.f32 %v7174, %v7204
  %v7220 = vmul.f32 %v7175, %v7205
  %v7221 = vmul.f32 %v7176, %v7206
  %v7222 = vmul.f32 %v7177, %v7207
  %v7223 = vmul.f32 %v7178, %v7208
  %v7224 = vmul.f32 %v7179, %v7209
  %v7225 = vmul.f32 %v7180, %v7210
  %v7226 = vmul.f32 %v7181, %v7211
  %v7227 = vmul.f32 %v7182, %v7212
  %v7228 = vmul.f32 %v7183, %v7213
  %v7229 = vmul.f32 %v7184, %v7214
  %v7230 = vmul.f32 %v7185, %v7215
  %v7231 = vmul.f32 %v7186, %v7216
  %v7232 = vmul.f32 %v7187, %v7217
  %v7233 = vld [vmem:[%s6] sm:$0xff]
  %v7234 = vld [vmem:[%s6 + $0x8] sm:$0xff]
  %v7235 = vld [vmem:[%s6 + $0x10] sm:$0xff]
  %v7236 = vld [vmem:[%s6 + $0x18] sm:$0xff]
  %v7237 = vld [vmem:[%s6 + $0x20] sm:$0xff]
  %v7238 = vld [vmem:[%s6 + $0x28] sm:$0xff]
  %v7239 = vld [vmem:[%s6 + $0x30] sm:$0xff]
  %v7240 = vld [vmem:[%s6 + $0x38] sm:$0xff]
  %v7241 = vld [vmem:[%s6 + $0x40] sm:$0xff]
  %v7242 = vld [vmem:[%s6 + $0x48] sm:$0xff]
  %v7243 = vld [vmem:[%s6 + $0x50] sm:$0xff]
  %v7244 = vld [vmem:[%s6 + $0x58] sm:$0xff]
  %v7245 = vld [vmem:[%s6 + $0x60] sm:$0xff]
  %v7246 = vld [vmem:[%s6 + $0x68] sm:$0xff]
  %v7247 = vld [vmem:[%s6 + $0x70] sm:$0xff]
  %v7248 = vmul.f32 %v7113, %v7218
  %v7249 = vmul.f32 %v7114, %v7219
  %v7250 = vmul.f32 %v7115, %v7220
  %v7251 = vmul.f32 %v7116, %v7221
  %v7252 = vmul.f32 %v7117, %v7222
  %v7253 = vmul.f32 %v7118, %v7223
  %v7254 = vmul.f32 %v7119, %v7224
  %v7255 = vmul.f32 %v7120, %v7225
  %v7256 = vmul.f32 %v7121, %v7226
  %v7257 = vmul.f32 %v7122, %v7227
  %v7258 = vmul.f32 %v7123, %v7228
  %v7259 = vmul.f32 %v7124, %v7229
  %v7260 = vmul.f32 %v7125, %v7230
  %v7261 = vmul.f32 %v7126, %v7231
  %v7262 = vmul.f32 %v7127, %v7232
  %v7263 = vsub.f32 %v7233, %v7248
  %v7264 = vsub.f32 %v7234, %v7249
  %v7265 = vsub.f32 %v7235, %v7250
  %v7266 = vsub.f32 %v7236, %v7251
  %v7267 = vsub.f32 %v7237, %v7252
  %v7268 = vsub.f32 %v7238, %v7253
  %v7269 = vsub.f32 %v7239, %v7254
  %v7270 = vsub.f32 %v7240, %v7255
  %v7271 = vsub.f32 %v7241, %v7256
  %v7272 = vsub.f32 %v7242, %v7257
  %v7273 = vsub.f32 %v7243, %v7258
  %v7274 = vsub.f32 %v7244, %v7259
  %v7275 = vsub.f32 %v7245, %v7260
  %v7276 = vsub.f32 %v7246, %v7261
  %v7277 = vsub.f32 %v7247, %v7262
  %7279 = vset.pattern.permute.xlu0 0
  %7280 = vperm.xlu0 %7279, %v7218
  %v7281 = vpop.permute.xlu0 %7280
  %7284 = vset.pattern.permute.xlu0 0
  %7285 = vperm.xlu0 %7284, %v7219
  %v7286 = vpop.permute.xlu0 %7285
  %7289 = vset.pattern.permute.xlu0 0
  %7290 = vperm.xlu0 %7289, %v7220
  %v7291 = vpop.permute.xlu0 %7290
  %7294 = vset.pattern.permute.xlu0 0
  %7295 = vperm.xlu0 %7294, %v7221
  %v7296 = vpop.permute.xlu0 %7295
  %7299 = vset.pattern.permute.xlu0 0
  %7300 = vperm.xlu0 %7299, %v7222
  %v7301 = vpop.permute.xlu0 %7300
  %7304 = vset.pattern.permute.xlu0 0
  %7305 = vperm.xlu0 %7304, %v7223
  %v7306 = vpop.permute.xlu0 %7305
  %7309 = vset.pattern.permute.xlu0 0
  %7310 = vperm.xlu0 %7309, %v7224
  %v7311 = vpop.permute.xlu0 %7310
  %7314 = vset.pattern.permute.xlu0 0
  %7315 = vperm.xlu0 %7314, %v7225
  %v7316 = vpop.permute.xlu0 %7315
  %7319 = vset.pattern.permute.xlu0 0
  %7320 = vperm.xlu0 %7319, %v7226
  %v7321 = vpop.permute.xlu0 %7320
  %7324 = vset.pattern.permute.xlu0 0
  %7325 = vperm.xlu0 %7324, %v7227
  %v7326 = vpop.permute.xlu0 %7325
  %7329 = vset.pattern.permute.xlu0 0
  %7330 = vperm.xlu0 %7329, %v7228
  %v7331 = vpop.permute.xlu0 %7330
  %7334 = vset.pattern.permute.xlu0 0
  %7335 = vperm.xlu0 %7334, %v7229
  %v7336 = vpop.permute.xlu0 %7335
  %7339 = vset.pattern.permute.xlu0 0
  %7340 = vperm.xlu0 %7339, %v7230
  %v7341 = vpop.permute.xlu0 %7340
  %7344 = vset.pattern.permute.xlu0 0
  %7345 = vperm.xlu0 %7344, %v7231
  %v7346 = vpop.permute.xlu0 %7345
  %7349 = vset.pattern.permute.xlu0 0
  %7350 = vperm.xlu0 %7349, %v7232
  %v7351 = vpop.permute.xlu0 %7350
  %v7353 = vmul.f32 %v6663, %v7281
  %v7354 = vmul.f32 %v6664, %v7281
  %v7355 = vmul.f32 %v6665, %v7281
  %v7356 = vmul.f32 %v6666, %v7281
  %v7357 = vmul.f32 %v6667, %v7281
  %v7358 = vmul.f32 %v6668, %v7281
  %v7359 = vmul.f32 %v6669, %v7281
  %v7360 = vmul.f32 %v6670, %v7286
  %v7361 = vmul.f32 %v6671, %v7286
  %v7362 = vmul.f32 %v6672, %v7286
  %v7363 = vmul.f32 %v6673, %v7286
  %v7364 = vmul.f32 %v6674, %v7286
  %v7365 = vmul.f32 %v6675, %v7286
  %v7366 = vmul.f32 %v6676, %v7286
  %v7367 = vmul.f32 %v6677, %v7291
  %v7368 = vmul.f32 %v6678, %v7291
  %v7369 = vmul.f32 %v6679, %v7291
  %v7370 = vmul.f32 %v6680, %v7291
  %v7371 = vmul.f32 %v6681, %v7291
  %v7372 = vmul.f32 %v6682, %v7291
  %v7373 = vmul.f32 %v6683, %v7291
  %v7374 = vmul.f32 %v6684, %v7296
  %v7375 = vmul.f32 %v6685, %v7296
  %v7376 = vmul.f32 %v6686, %v7296
  %v7377 = vmul.f32 %v6687, %v7296
  %v7378 = vmul.f32 %v6688, %v7296
  %v7379 = vmul.f32 %v6689, %v7296
  %v7380 = vmul.f32 %v6690, %v7296
  %v7381 = vmul.f32 %v6691, %v7301
  %v7382 = vmul.f32 %v6692, %v7301
  %v7383 = vmul.f32 %v6693, %v7301
  %v7384 = vmul.f32 %v6694, %v7301
  %v7385 = vmul.f32 %v6695, %v7301
  %v7386 = vmul.f32 %v6696, %v7301
  %v7387 = vmul.f32 %v6697, %v7301
  %v7388 = vmul.f32 %v6698, %v7306
  %v7389 = vmul.f32 %v6699, %v7306
  %v7390 = vmul.f32 %v6700, %v7306
  %v7391 = vmul.f32 %v6701, %v7306
  %v7392 = vmul.f32 %v6702, %v7306
  %v7393 = vmul.f32 %v6703, %v7306
  %v7394 = vmul.f32 %v6704, %v7306
  %v7395 = vmul.f32 %v6705, %v7311
  %v7396 = vmul.f32 %v6706, %v7311
  %v7397 = vmul.f32 %v6707, %v7311
  %v7398 = vmul.f32 %v6708, %v7311
  %v7399 = vmul.f32 %v6709, %v7311
  %v7400 = vmul.f32 %v6710, %v7311
  %v7401 = vmul.f32 %v6711, %v7311
  %v7402 = vmul.f32 %v6712, %v7316
  %v7403 = vmul.f32 %v6713, %v7316
  %v7404 = vmul.f32 %v6714, %v7316
  %v7405 = vmul.f32 %v6715, %v7316
  %v7406 = vmul.f32 %v6716, %v7316
  %v7407 = vmul.f32 %v6717, %v7316
  %v7408 = vmul.f32 %v6718, %v7316
  %v7409 = vmul.f32 %v6719, %v7321
  %v7410 = vmul.f32 %v6720, %v7321
  %v7411 = vmul.f32 %v6721, %v7321
  %v7412 = vmul.f32 %v6722, %v7321
  %v7413 = vmul.f32 %v6723, %v7321
  %v7414 = vmul.f32 %v6724, %v7321
  %v7415 = vmul.f32 %v6725, %v7321
  %v7416 = vmul.f32 %v6726, %v7326
  %v7417 = vmul.f32 %v6727, %v7326
  %v7418 = vmul.f32 %v6728, %v7326
  %v7419 = vmul.f32 %v6729, %v7326
  %v7420 = vmul.f32 %v6730, %v7326
  %v7421 = vmul.f32 %v6731, %v7326
  %v7422 = vmul.f32 %v6732, %v7326
  %v7423 = vmul.f32 %v6733, %v7331
  %v7424 = vmul.f32 %v6734, %v7331
  %v7425 = vmul.f32 %v6735, %v7331
  %v7426 = vmul.f32 %v6736, %v7331
  %v7427 = vmul.f32 %v6737, %v7331
  %v7428 = vmul.f32 %v6738, %v7331
  %v7429 = vmul.f32 %v6739, %v7331
  %v7430 = vmul.f32 %v6740, %v7336
  %v7431 = vmul.f32 %v6741, %v7336
  %v7432 = vmul.f32 %v6742, %v7336
  %v7433 = vmul.f32 %v6743, %v7336
  %v7434 = vmul.f32 %v6744, %v7336
  %v7435 = vmul.f32 %v6745, %v7336
  %v7436 = vmul.f32 %v6746, %v7336
  %v7437 = vmul.f32 %v6747, %v7341
  %v7438 = vmul.f32 %v6748, %v7341
  %v7439 = vmul.f32 %v6749, %v7341
  %v7440 = vmul.f32 %v6750, %v7341
  %v7441 = vmul.f32 %v6751, %v7341
  %v7442 = vmul.f32 %v6752, %v7341
  %v7443 = vmul.f32 %v6753, %v7341
  %v7444 = vmul.f32 %v6754, %v7346
  %v7445 = vmul.f32 %v6755, %v7346
  %v7446 = vmul.f32 %v6756, %v7346
  %v7447 = vmul.f32 %v6757, %v7346
  %v7448 = vmul.f32 %v6758, %v7346
  %v7449 = vmul.f32 %v6759, %v7346
  %v7450 = vmul.f32 %v6760, %v7346
  %v7451 = vmul.f32 %v6761, %v7351
  %v7452 = vmul.f32 %v6762, %v7351
  %v7453 = vmul.f32 %v6763, %v7351
  %v7454 = vmul.f32 %v6764, %v7351
  %v7455 = vmul.f32 %v6765, %v7351
  %v7456 = vmul.f32 %v6766, %v7351
  %v7457 = vmul.f32 %v6767, %v7351
  %7459 = vset.pattern.permute.xlu0 0
  %7460 = vperm.xlu0 %7459, %v7263
  %v7461 = vpop.permute.xlu0 %7460
  %7464 = vset.pattern.permute.xlu0 0
  %7465 = vperm.xlu0 %7464, %v7264
  %v7466 = vpop.permute.xlu0 %7465
  %7469 = vset.pattern.permute.xlu0 0
  %7470 = vperm.xlu0 %7469, %v7265
  %v7471 = vpop.permute.xlu0 %7470
  %7474 = vset.pattern.permute.xlu0 0
  %7475 = vperm.xlu0 %7474, %v7266
  %v7476 = vpop.permute.xlu0 %7475
  %7479 = vset.pattern.permute.xlu0 0
  %7480 = vperm.xlu0 %7479, %v7267
  %v7481 = vpop.permute.xlu0 %7480
  %7484 = vset.pattern.permute.xlu0 0
  %7485 = vperm.xlu0 %7484, %v7268
  %v7486 = vpop.permute.xlu0 %7485
  %7489 = vset.pattern.permute.xlu0 0
  %7490 = vperm.xlu0 %7489, %v7269
  %v7491 = vpop.permute.xlu0 %7490
  %7494 = vset.pattern.permute.xlu0 0
  %7495 = vperm.xlu0 %7494, %v7270
  %v7496 = vpop.permute.xlu0 %7495
  %7499 = vset.pattern.permute.xlu0 0
  %7500 = vperm.xlu0 %7499, %v7271
  %v7501 = vpop.permute.xlu0 %7500
  %7504 = vset.pattern.permute.xlu0 0
  %7505 = vperm.xlu0 %7504, %v7272
  %v7506 = vpop.permute.xlu0 %7505
  %7509 = vset.pattern.permute.xlu0 0
  %7510 = vperm.xlu0 %7509, %v7273
  %v7511 = vpop.permute.xlu0 %7510
  %7514 = vset.pattern.permute.xlu0 0
  %7515 = vperm.xlu0 %7514, %v7274
  %v7516 = vpop.permute.xlu0 %7515
  %7519 = vset.pattern.permute.xlu0 0
  %7520 = vperm.xlu0 %7519, %v7275
  %v7521 = vpop.permute.xlu0 %7520
  %7524 = vset.pattern.permute.xlu0 0
  %7525 = vperm.xlu0 %7524, %v7276
  %v7526 = vpop.permute.xlu0 %7525
  %7529 = vset.pattern.permute.xlu0 0
  %7530 = vperm.xlu0 %7529, %v7277
  %v7531 = vpop.permute.xlu0 %7530
  %v7533 = vadd.f32 %v7353, %v7461
  %v7534 = vadd.f32 %v7354, %v7461
  %v7535 = vadd.f32 %v7355, %v7461
  %v7536 = vadd.f32 %v7356, %v7461
  %v7537 = vadd.f32 %v7357, %v7461
  %v7538 = vadd.f32 %v7358, %v7461
  %v7539 = vadd.f32 %v7359, %v7461
  %v7540 = vadd.f32 %v7360, %v7466
  %v7541 = vadd.f32 %v7361, %v7466
  %v7542 = vadd.f32 %v7362, %v7466
  %v7543 = vadd.f32 %v7363, %v7466
  %v7544 = vadd.f32 %v7364, %v7466
  %v7545 = vadd.f32 %v7365, %v7466
  %v7546 = vadd.f32 %v7366, %v7466
  %v7547 = vadd.f32 %v7367, %v7471
  %v7548 = vadd.f32 %v7368, %v7471
  %v7549 = vadd.f32 %v7369, %v7471
  %v7550 = vadd.f32 %v7370, %v7471
  %v7551 = vadd.f32 %v7371, %v7471
  %v7552 = vadd.f32 %v7372, %v7471
  %v7553 = vadd.f32 %v7373, %v7471
  %v7554 = vadd.f32 %v7374, %v7476
  %v7555 = vadd.f32 %v7375, %v7476
  %v7556 = vadd.f32 %v7376, %v7476
  %v7557 = vadd.f32 %v7377, %v7476
  %v7558 = vadd.f32 %v7378, %v7476
  %v7559 = vadd.f32 %v7379, %v7476
  %v7560 = vadd.f32 %v7380, %v7476
  %v7561 = vadd.f32 %v7381, %v7481
  %v7562 = vadd.f32 %v7382, %v7481
  %v7563 = vadd.f32 %v7383, %v7481
  %v7564 = vadd.f32 %v7384, %v7481
  %v7565 = vadd.f32 %v7385, %v7481
  %v7566 = vadd.f32 %v7386, %v7481
  %v7567 = vadd.f32 %v7387, %v7481
  %v7568 = vadd.f32 %v7388, %v7486
  %v7569 = vadd.f32 %v7389, %v7486
  %v7570 = vadd.f32 %v7390, %v7486
  %v7571 = vadd.f32 %v7391, %v7486
  %v7572 = vadd.f32 %v7392, %v7486
  %v7573 = vadd.f32 %v7393, %v7486
  %v7574 = vadd.f32 %v7394, %v7486
  %v7575 = vadd.f32 %v7395, %v7491
  %v7576 = vadd.f32 %v7396, %v7491
  %v7577 = vadd.f32 %v7397, %v7491
  %v7578 = vadd.f32 %v7398, %v7491
  %v7579 = vadd.f32 %v7399, %v7491
  %v7580 = vadd.f32 %v7400, %v7491
  %v7581 = vadd.f32 %v7401, %v7491
  %v7582 = vadd.f32 %v7402, %v7496
  %v7583 = vadd.f32 %v7403, %v7496
  %v7584 = vadd.f32 %v7404, %v7496
  %v7585 = vadd.f32 %v7405, %v7496
  %v7586 = vadd.f32 %v7406, %v7496
  %v7587 = vadd.f32 %v7407, %v7496
  %v7588 = vadd.f32 %v7408, %v7496
  %v7589 = vadd.f32 %v7409, %v7501
  %v7590 = vadd.f32 %v7410, %v7501
  %v7591 = vadd.f32 %v7411, %v7501
  %v7592 = vadd.f32 %v7412, %v7501
  %v7593 = vadd.f32 %v7413, %v7501
  %v7594 = vadd.f32 %v7414, %v7501
  %v7595 = vadd.f32 %v7415, %v7501
  %v7596 = vadd.f32 %v7416, %v7506
  %v7597 = vadd.f32 %v7417, %v7506
  %v7598 = vadd.f32 %v7418, %v7506
  %v7599 = vadd.f32 %v7419, %v7506
  %v7600 = vadd.f32 %v7420, %v7506
  %v7601 = vadd.f32 %v7421, %v7506
  %v7602 = vadd.f32 %v7422, %v7506
  %v7603 = vadd.f32 %v7423, %v7511
  %v7604 = vadd.f32 %v7424, %v7511
  %v7605 = vadd.f32 %v7425, %v7511
  %v7606 = vadd.f32 %v7426, %v7511
  %v7607 = vadd.f32 %v7427, %v7511
  %v7608 = vadd.f32 %v7428, %v7511
  %v7609 = vadd.f32 %v7429, %v7511
  %v7610 = vadd.f32 %v7430, %v7516
  %v7611 = vadd.f32 %v7431, %v7516
  %v7612 = vadd.f32 %v7432, %v7516
  %v7613 = vadd.f32 %v7433, %v7516
  %v7614 = vadd.f32 %v7434, %v7516
  %v7615 = vadd.f32 %v7435, %v7516
  %v7616 = vadd.f32 %v7436, %v7516
  %v7617 = vadd.f32 %v7437, %v7521
  %v7618 = vadd.f32 %v7438, %v7521
  %v7619 = vadd.f32 %v7439, %v7521
  %v7620 = vadd.f32 %v7440, %v7521
  %v7621 = vadd.f32 %v7441, %v7521
  %v7622 = vadd.f32 %v7442, %v7521
  %v7623 = vadd.f32 %v7443, %v7521
  %v7624 = vadd.f32 %v7444, %v7526
  %v7625 = vadd.f32 %v7445, %v7526
  %v7626 = vadd.f32 %v7446, %v7526
  %v7627 = vadd.f32 %v7447, %v7526
  %v7628 = vadd.f32 %v7448, %v7526
  %v7629 = vadd.f32 %v7449, %v7526
  %v7630 = vadd.f32 %v7450, %v7526
  %v7631 = vadd.f32 %v7451, %v7531
  %v7632 = vadd.f32 %v7452, %v7531
  %v7633 = vadd.f32 %v7453, %v7531
  %v7634 = vadd.f32 %v7454, %v7531
  %v7635 = vadd.f32 %v7455, %v7531
  %v7636 = vadd.f32 %v7456, %v7531
  %v7637 = vadd.f32 %v7457, %v7531
  %v7638 = vmax.f32 %v7533, 0.0
  %v7639 = vmax.f32 %v7534, 0.0
  %v7640 = vmax.f32 %v7535, 0.0
  %v7641 = vmax.f32 %v7536, 0.0
  %v7642 = vmax.f32 %v7537, 0.0
  %v7643 = vmax.f32 %v7538, 0.0
  %v7644 = vmax.f32 %v7539, 0.0
  %v7645 = vmax.f32 %v7540, 0.0
  %v7646 = vmax.f32 %v7541, 0.0
  %v7647 = vmax.f32 %v7542, 0.0
  %v7648 = vmax.f32 %v7543, 0.0
  %v7649 = vmax.f32 %v7544, 0.0
  %v7650 = vmax.f32 %v7545, 0.0
  %v7651 = vmax.f32 %v7546, 0.0
  %v7652 = vmax.f32 %v7547, 0.0
  %v7653 = vmax.f32 %v7548, 0.0
  %v7654 = vmax.f32 %v7549, 0.0
  %v7655 = vmax.f32 %v7550, 0.0
  %v7656 = vmax.f32 %v7551, 0.0
  %v7657 = vmax.f32 %v7552, 0.0
  %v7658 = vmax.f32 %v7553, 0.0
  %v7659 = vmax.f32 %v7554, 0.0
  %v7660 = vmax.f32 %v7555, 0.0
  %v7661 = vmax.f32 %v7556, 0.0
  %v7662 = vmax.f32 %v7557, 0.0
  %v7663 = vmax.f32 %v7558, 0.0
  %v7664 = vmax.f32 %v7559, 0.0
  %v7665 = vmax.f32 %v7560, 0.0
  %v7666 = vmax.f32 %v7561, 0.0
  %v7667 = vmax.f32 %v7562, 0.0
  %v7668 = vmax.f32 %v7563, 0.0
  %v7669 = vmax.f32 %v7564, 0.0
  %v7670 = vmax.f32 %v7565, 0.0
  %v7671 = vmax.f32 %v7566, 0.0
  %v7672 = vmax.f32 %v7567, 0.0
  %v7673 = vmax.f32 %v7568, 0.0
  %v7674 = vmax.f32 %v7569, 0.0
  %v7675 = vmax.f32 %v7570, 0.0
  %v7676 = vmax.f32 %v7571, 0.0
  %v7677 = vmax.f32 %v7572, 0.0
  %v7678 = vmax.f32 %v7573, 0.0
  %v7679 = vmax.f32 %v7574, 0.0
  %v7680 = vmax.f32 %v7575, 0.0
  %v7681 = vmax.f32 %v7576, 0.0
  %v7682 = vmax.f32 %v7577, 0.0
  %v7683 = vmax.f32 %v7578, 0.0
  %v7684 = vmax.f32 %v7579, 0.0
  %v7685 = vmax.f32 %v7580, 0.0
  %v7686 = vmax.f32 %v7581, 0.0
  %v7687 = vmax.f32 %v7582, 0.0
  %v7688 = vmax.f32 %v7583, 0.0
  %v7689 = vmax.f32 %v7584, 0.0
  %v7690 = vmax.f32 %v7585, 0.0
  %v7691 = vmax.f32 %v7586, 0.0
  %v7692 = vmax.f32 %v7587, 0.0
  %v7693 = vmax.f32 %v7588, 0.0
  %v7694 = vmax.f32 %v7589, 0.0
  %v7695 = vmax.f32 %v7590, 0.0
  %v7696 = vmax.f32 %v7591, 0.0
  %v7697 = vmax.f32 %v7592, 0.0
  %v7698 = vmax.f32 %v7593, 0.0
  %v7699 = vmax.f32 %v7594, 0.0
  %v7700 = vmax.f32 %v7595, 0.0
  %v7701 = vmax.f32 %v7596, 0.0
  %v7702 = vmax.f32 %v7597, 0.0
  %v7703 = vmax.f32 %v7598, 0.0
  %v7704 = vmax.f32 %v7599, 0.0
  %v7705 = vmax.f32 %v7600, 0.0
  %v7706 = vmax.f32 %v7601, 0.0
  %v7707 = vmax.f32 %v7602, 0.0
  %v7708 = vmax.f32 %v7603, 0.0
  %v7709 = vmax.f32 %v7604, 0.0
  %v7710 = vmax.f32 %v7605, 0.0
  %v7711 = vmax.f32 %v7606, 0.0
  %v7712 = vmax.f32 %v7607, 0.0
  %v7713 = vmax.f32 %v7608, 0.0
  %v7714 = vmax.f32 %v7609, 0.0
  %v7715 = vmax.f32 %v7610, 0.0
  %v7716 = vmax.f32 %v7611, 0.0
  %v7717 = vmax.f32 %v7612, 0.0
  %v7718 = vmax.f32 %v7613, 0.0
  %v7719 = vmax.f32 %v7614, 0.0
  %v7720 = vmax.f32 %v7615, 0.0
  %v7721 = vmax.f32 %v7616, 0.0
  %v7722 = vmax.f32 %v7617, 0.0
  %v7723 = vmax.f32 %v7618, 0.0
  %v7724 = vmax.f32 %v7619, 0.0
  %v7725 = vmax.f32 %v7620, 0.0
  %v7726 = vmax.f32 %v7621, 0.0
  %v7727 = vmax.f32 %v7622, 0.0
  %v7728 = vmax.f32 %v7623, 0.0
  %v7729 = vmax.f32 %v7624, 0.0
  %v7730 = vmax.f32 %v7625, 0.0
  %v7731 = vmax.f32 %v7626, 0.0
  %v7732 = vmax.f32 %v7627, 0.0
  %v7733 = vmax.f32 %v7628, 0.0
  %v7734 = vmax.f32 %v7629, 0.0
  %v7735 = vmax.f32 %v7630, 0.0
  %v7736 = vmax.f32 %v7631, 0.0
  %v7737 = vmax.f32 %v7632, 0.0
  %v7738 = vmax.f32 %v7633, 0.0
  %v7739 = vmax.f32 %v7634, 0.0
  %v7740 = vmax.f32 %v7635, 0.0
  %v7741 = vmax.f32 %v7636, 0.0
  %v7742 = vmax.f32 %v7637, 0.0
  %7743 = vst [vmem:[%s7] sm:$0xff] %v7638
  %7744 = vst [vmem:[%s7 + $0x8] sm:$0xff] %v7639
  %7745 = vst [vmem:[%s7 + $0x10] sm:$0xff] %v7640
  %7746 = vst [vmem:[%s7 + $0x18] sm:$0xff] %v7641
  %7747 = vst [vmem:[%s7 + $0x20] sm:$0xff] %v7642
  %7748 = vst [vmem:[%s7 + $0x28] sm:$0xff] %v7643
  %vm7749 = vcmask 130048
  %7750 = vst.msk [vmem:[%s7 + $0x30] sm:$0xff] %vm7749, %v7644
  %7751 = vst [vmem:[%s7 + $0x38] sm:$0xff] %v7645
  %7752 = vst [vmem:[%s7 + $0x40] sm:$0xff] %v7646
  %7753 = vst [vmem:[%s7 + $0x48] sm:$0xff] %v7647
  %7754 = vst [vmem:[%s7 + $0x50] sm:$0xff] %v7648
  %7755 = vst [vmem:[%s7 + $0x58] sm:$0xff] %v7649
  %7756 = vst [vmem:[%s7 + $0x60] sm:$0xff] %v7650
  %7757 = vst.msk [vmem:[%s7 + $0x68] sm:$0xff] %vm7749, %v7651
  %7758 = vst [vmem:[%s7 + $0x70] sm:$0xff] %v7652
  %7759 = vst [vmem:[%s7 + $0x78] sm:$0xff] %v7653
  %7760 = vst [vmem:[%s7 + $0x80] sm:$0xff] %v7654
  %7761 = vst [vmem:[%s7 + $0x88] sm:$0xff] %v7655
  %7762 = vst [vmem:[%s7 + $0x90] sm:$0xff] %v7656
  %7763 = vst [vmem:[%s7 + $0x98] sm:$0xff] %v7657
  %7764 = vst.msk [vmem:[%s7 + $0xa0] sm:$0xff] %vm7749, %v7658
  %7765 = vst [vmem:[%s7 + $0xa8] sm:$0xff] %v7659
  %7766 = vst [vmem:[%s7 + $0xb0] sm:$0xff] %v7660
  %7767 = vst [vmem:[%s7 + $0xb8] sm:$0xff] %v7661
  %7768 = vst [vmem:[%s7 + $0xc0] sm:$0xff] %v7662
  %7769 = vst [vmem:[%s7 + $0xc8] sm:$0xff] %v7663
  %7770 = vst [vmem:[%s7 + $0xd0] sm:$0xff] %v7664
  %7771 = vst.msk [vmem:[%s7 + $0xd8] sm:$0xff] %vm7749, %v7665
  %7772 = vst [vmem:[%s7 + $0xe0] sm:$0xff] %v7666
  %7773 = vst [vmem:[%s7 + $0xe8] sm:$0xff] %v7667
  %7774 = vst [vmem:[%s7 + $0xf0] sm:$0xff] %v7668
  %7775 = vst [vmem:[%s7 + $0xf8] sm:$0xff] %v7669
  %7776 = vst [vmem:[%s7 + $0x100] sm:$0xff] %v7670
  %7777 = vst [vmem:[%s7 + $0x108] sm:$0xff] %v7671
  %7778 = vst.msk [vmem:[%s7 + $0x110] sm:$0xff] %vm7749, %v7672
  %7779 = vst [vmem:[%s7 + $0x118] sm:$0xff] %v7673
  %7780 = vst [vmem:[%s7 + $0x120] sm:$0xff] %v7674
  %7781 = vst [vmem:[%s7 + $0x128] sm:$0xff] %v7675
  %7782 = vst [vmem:[%s7 + $0x130] sm:$0xff] %v7676
  %7783 = vst [vmem:[%s7 + $0x138] sm:$0xff] %v7677
  %7784 = vst [vmem:[%s7 + $0x140] sm:$0xff] %v7678
  %7785 = vst.msk [vmem:[%s7 + $0x148] sm:$0xff] %vm7749, %v7679
  %7786 = vst [vmem:[%s7 + $0x150] sm:$0xff] %v7680
  %7787 = vst [vmem:[%s7 + $0x158] sm:$0xff] %v7681
  %7788 = vst [vmem:[%s7 + $0x160] sm:$0xff] %v7682
  %7789 = vst [vmem:[%s7 + $0x168] sm:$0xff] %v7683
  %7790 = vst [vmem:[%s7 + $0x170] sm:$0xff] %v7684
  %7791 = vst [vmem:[%s7 + $0x178] sm:$0xff] %v7685
  %7792 = vst.msk [vmem:[%s7 + $0x180] sm:$0xff] %vm7749, %v7686
  %7793 = vst [vmem:[%s7 + $0x188] sm:$0xff] %v7687
  %7794 = vst [vmem:[%s7 + $0x190] sm:$0xff] %v7688
  %7795 = vst [vmem:[%s7 + $0x198] sm:$0xff] %v7689
  %7796 = vst [vmem:[%s7 + $0x1a0] sm:$0xff] %v7690
  %7797 = vst [vmem:[%s7 + $0x1a8] sm:$0xff] %v7691
  %7798 = vst [vmem:[%s7 + $0x1b0] sm:$0xff] %v7692
  %7799 = vst.msk [vmem:[%s7 + $0x1b8] sm:$0xff] %vm7749, %v7693
  %7800 = vst [vmem:[%s7 + $0x1c0] sm:$0xff] %v7694
  %7801 = vst [vmem:[%s7 + $0x1c8] sm:$0xff] %v7695
  %7802 = vst [vmem:[%s7 + $0x1d0] sm:$0xff] %v7696
  %7803 = vst [vmem:[%s7 + $0x1d8] sm:$0xff] %v7697
  %7804 = vst [vmem:[%s7 + $0x1e0] sm:$0xff] %v7698
  %7805 = vst [vmem:[%s7 + $0x1e8] sm:$0xff] %v7699
  %7806 = vst.msk [vmem:[%s7 + $0x1f0] sm:$0xff] %vm7749, %v7700
  %7807 = vst [vmem:[%s7 + $0x1f8] sm:$0xff] %v7701
  %7808 = vst [vmem:[%s7 + $0x200] sm:$0xff] %v7702
  %7809 = vst [vmem:[%s7 + $0x208] sm:$0xff] %v7703
  %7810 = vst [vmem:[%s7 + $0x210] sm:$0xff] %v7704
  %7811 = vst [vmem:[%s7 + $0x218] sm:$0xff] %v7705
  %7812 = vst [vmem:[%s7 + $0x220] sm:$0xff] %v7706
  %7813 = vst.msk [vmem:[%s7 + $0x228] sm:$0xff] %vm7749, %v7707
  %7814 = vst [vmem:[%s7 + $0x230] sm:$0xff] %v7708
  %7815 = vst [vmem:[%s7 + $0x238] sm:$0xff] %v7709
  %7816 = vst [vmem:[%s7 + $0x240] sm:$0xff] %v7710
  %7817 = vst [vmem:[%s7 + $0x248] sm:$0xff] %v7711
  %7818 = vst [vmem:[%s7 + $0x250] sm:$0xff] %v7712
  %7819 = vst [vmem:[%s7 + $0x258] sm:$0xff] %v7713
  %7820 = vst.msk [vmem:[%s7 + $0x260] sm:$0xff] %vm7749, %v7714
  %7821 = vst [vmem:[%s7 + $0x268] sm:$0xff] %v7715
  %7822 = vst [vmem:[%s7 + $0x270] sm:$0xff] %v7716
  %7823 = vst [vmem:[%s7 + $0x278] sm:$0xff] %v7717
  %7824 = vst [vmem:[%s7 + $0x280] sm:$0xff] %v7718
  %7825 = vst [vmem:[%s7 + $0x288] sm:$0xff] %v7719
  %7826 = vst [vmem:[%s7 + $0x290] sm:$0xff] %v7720
  %7827 = vst.msk [vmem:[%s7 + $0x298] sm:$0xff] %vm7749, %v7721
  %7828 = vst [vmem:[%s7 + $0x2a0] sm:$0xff] %v7722
  %7829 = vst [vmem:[%s7 + $0x2a8] sm:$0xff] %v7723
  %7830 = vst [vmem:[%s7 + $0x2b0] sm:$0xff] %v7724
  %7831 = vst [vmem:[%s7 + $0x2b8] sm:$0xff] %v7725
  %7832 = vst [vmem:[%s7 + $0x2c0] sm:$0xff] %v7726
  %7833 = vst [vmem:[%s7 + $0x2c8] sm:$0xff] %v7727
  %7834 = vst.msk [vmem:[%s7 + $0x2d0] sm:$0xff] %vm7749, %v7728
  %7835 = vst [vmem:[%s7 + $0x2d8] sm:$0xff] %v7729
  %7836 = vst [vmem:[%s7 + $0x2e0] sm:$0xff] %v7730
  %7837 = vst [vmem:[%s7 + $0x2e8] sm:$0xff] %v7731
  %7838 = vst [vmem:[%s7 + $0x2f0] sm:$0xff] %v7732
  %7839 = vst [vmem:[%s7 + $0x2f8] sm:$0xff] %v7733
  %7840 = vst [vmem:[%s7 + $0x300] sm:$0xff] %v7734
  %7841 = vst.msk [vmem:[%s7 + $0x308] sm:$0xff] %vm7749, %v7735
  %7842 = vst [vmem:[%s7 + $0x310] sm:$0xff] %v7736
  %7843 = vst [vmem:[%s7 + $0x318] sm:$0xff] %v7737
  %7844 = vst [vmem:[%s7 + $0x320] sm:$0xff] %v7738
  %7845 = vst [vmem:[%s7 + $0x328] sm:$0xff] %v7739
  %7846 = vst [vmem:[%s7 + $0x330] sm:$0xff] %v7740
  %7847 = vst [vmem:[%s7 + $0x338] sm:$0xff] %v7741
  %7848 = vst.msk [vmem:[%s7 + $0x340] sm:$0xff] %vm7749, %v7742
  // Predicated region
  $region30: #{tpu_custom_call.1} parent=0 // pred_check
    _
  $region31: #{tpu_custom_call.1} parent=0 // pred_check_branch
    %7850 = sbr.rel (0) target = $region33
  $region32: #{tpu_custom_call.1} parent=0 // pred_region
    _
  $region33: #{tpu_custom_call.1} parent=0 // pred_fallthru
    _
  // Predicated region
  $region34: #{tpu_custom_call.1} parent=0 // pred_check
    _
  $region35: #{tpu_custom_call.1} parent=0 // pred_check_branch
    %7852 = sbr.rel (0) target = $region37
  $region36: #{tpu_custom_call.1} parent=0 // pred_region
    _
  $region37: #{tpu_custom_call.1} parent=0 // pred_fallthru
    _

</llo_original>
